<compile_context>
chip_gen: v6e
topology: v6e:2x2x1
jax: 0.10.0
libtpu: 0.0.40
codegen_flags: <defaults>
</compile_context>

<pallas_src>
import math
import functools

import jax
import jax.numpy as jnp
from jax.experimental import pallas as pl
from jax.experimental.pallas import tpu as pltpu


# ----------------------------------------------------------------------------
# Pallas kernels
# ----------------------------------------------------------------------------

def _round_up(x, m):
    return ((x + m - 1) // m) * m


def _matmul_kernel(a_ref, b_ref, o_ref, acc_ref):
    @pl.when(pl.program_id(2) == 0)
    def _():
        acc_ref[...] = jnp.zeros_like(acc_ref)
    acc_ref[...] += jnp.dot(a_ref[...], b_ref[...],
                            preferred_element_type=jnp.float32)

    @pl.when(pl.program_id(2) == pl.num_programs(2) - 1)
    def _():
        o_ref[...] = acc_ref[...]


def _matmul_bias_kernel(a_ref, b_ref, bias_ref, o_ref, acc_ref):
    @pl.when(pl.program_id(2) == 0)
    def _():
        acc_ref[...] = jnp.zeros_like(acc_ref)
    acc_ref[...] += jnp.dot(a_ref[...], b_ref[...],
                            preferred_element_type=jnp.float32)

    @pl.when(pl.program_id(2) == pl.num_programs(2) - 1)
    def _():
        o_ref[...] = acc_ref[...] + bias_ref[...]


def pallas_matmul(a, b, bias=None):
    """a @ b (+ bias). a: [M, K], b: [K, N], bias: [N] or None -> [M, N] f32.

    bf16 operands, f32 accumulation, M/N/K tiled grid with VMEM accumulator."""
    M, K = a.shape
    K2, N = b.shape
    assert K == K2

    Kp = _round_up(K, 128)
    Np = _round_up(N, 128)
    TM = min(256, _round_up(M, 16))          # adaptive M tile (small-M calls)
    Mp = _round_up(M, TM)
    TN = 256 if Np % 256 == 0 else 128
    TK = 512 if Kp % 512 == 0 else (256 if Kp % 256 == 0 else 128)

    a_p = jnp.pad(a.astype(jnp.bfloat16), ((0, Mp - M), (0, Kp - K)))
    b_p = jnp.pad(b.astype(jnp.bfloat16), ((0, Kp - K), (0, Np - N)))

    grid = (Mp // TM, Np // TN, Kp // TK)
    a_spec = pl.BlockSpec((TM, TK), lambda i, j, k: (i, k))
    b_spec = pl.BlockSpec((TK, TN), lambda i, j, k: (k, j))
    o_spec = pl.BlockSpec((TM, TN), lambda i, j, k: (i, j))
    scratch = [pltpu.VMEM((TM, TN), jnp.float32)]
    cparams = pltpu.CompilerParams(
        dimension_semantics=("parallel", "parallel", "arbitrary"))

    if bias is None:
        out = pl.pallas_call(
            _matmul_kernel,
            out_shape=jax.ShapeDtypeStruct((Mp, Np), jnp.float32),
            grid_spec=pltpu.PrefetchScalarGridSpec(
                num_scalar_prefetch=0, grid=grid,
                in_specs=[a_spec, b_spec], out_specs=o_spec,
                scratch_shapes=scratch),
            compiler_params=cparams,
        )(a_p, b_p)
    else:
        bias_p = jnp.pad(bias.astype(jnp.float32), (0, Np - N)).reshape(1, Np)
        bias_spec = pl.BlockSpec((1, TN), lambda i, j, k: (0, j))
        out = pl.pallas_call(
            _matmul_bias_kernel,
            out_shape=jax.ShapeDtypeStruct((Mp, Np), jnp.float32),
            grid_spec=pltpu.PrefetchScalarGridSpec(
                num_scalar_prefetch=0, grid=grid,
                in_specs=[a_spec, b_spec, bias_spec], out_specs=o_spec,
                scratch_shapes=scratch),
            compiler_params=cparams,
        )(a_p, b_p, bias_p)
    return out[:M, :N]


def _composite_kernel(layers_ref, bg_ref, out_ref):
    lay = layers_ref[...]            # (1, L*4, HW)   lane-dense slab
    acc = bg_ref[...]                # (1, 3, HW)
    n_layers = lay.shape[1] // 4
    for i in range(n_layers):        # static unroll; L is small
        rgb = lay[:, 4 * i:4 * i + 3]
        a = lay[:, 4 * i + 3:4 * i + 4]
        acc = (1.0 - a) * acc + a * rgb
    out_ref[...] = acc


def pallas_composite(layers, background):
    """Alpha-composite L RGBA layers over `background`.

    layers: [bs, L, 4, H, W]; background: [bs, 3, H, W] -> [bs, 3, H, W]."""
    bs, L, _, H, W = layers.shape
    hw = H * W
    layers_f = layers.reshape(bs, L * 4, hw).astype(jnp.float32)
    bg_f = background.reshape(bs, 3, hw).astype(jnp.float32)
    out = pl.pallas_call(
        _composite_kernel,
        out_shape=jax.ShapeDtypeStruct((bs, 3, hw), jnp.float32),
        grid_spec=pltpu.PrefetchScalarGridSpec(
            num_scalar_prefetch=0,
            grid=(bs,),
            in_specs=[
                pl.BlockSpec((1, L * 4, hw), lambda n: (n, 0, 0)),
                pl.BlockSpec((1, 3, hw), lambda n: (n, 0, 0)),
            ],
            out_specs=pl.BlockSpec((1, 3, hw), lambda n: (n, 0, 0)),
        ),
        compiler_params=pltpu.CompilerParams(
            dimension_semantics=("parallel",)),
    )(layers_f, bg_f)
    return out.reshape(bs, 3, H, W)


def _bg_mix_kernel(bgx_ref, strip_ref, out_ref, acc_ref):
    # bgx_ref: (bs, n_shift) f32 in SMEM; strip_ref: (4*canvas, 3*canvas) VMEM
    # out_ref: (1, canvas, 3*canvas); acc_ref: (canvas, 3*canvas) f32 scratch.
    b = pl.program_id(0)
    canvas = out_ref.shape[-2]
    n_shift = bgx_ref.shape[-1]
    acc_ref[...] = jnp.zeros_like(acc_ref)

    @pl.loop(0, n_shift)
    def _(k):
        win = strip_ref[pl.ds(k, canvas), :]            # shifted window k
        acc_ref[...] += bgx_ref[b, k] * win

    out_ref[...] = acc_ref[...][None]


def pallas_bg_mix(bg_x, bg0):
    """out[b, c, y, x] = sum_k bg_x[b, k] * bg0[c, y, x + k].

    bg_x: [bs, 3*canvas+1]; bg0: [3, canvas, 4*canvas] -> [bs, 3, canvas, canvas].
    Streams the shifted windows from VMEM instead of materializing them in HBM."""
    bs, n_shift = bg_x.shape
    c3, canvas, wwide = bg0.shape
    # strip2[w, c*canvas + y] = bg0[c, y, w]  (slide axis on sublanes)
    strip2 = jnp.transpose(bg0, (2, 0, 1)).reshape(wwide, c3 * canvas)
    out_t = pl.pallas_call(
        _bg_mix_kernel,
        out_shape=jax.ShapeDtypeStruct((bs, canvas, c3 * canvas), jnp.float32),
        grid_spec=pltpu.PrefetchScalarGridSpec(
            num_scalar_prefetch=0,
            grid=(bs,),
            in_specs=[
                pl.BlockSpec(memory_space=pltpu.MemorySpace.SMEM),
                pl.BlockSpec((wwide, c3 * canvas), lambda b: (0, 0)),
            ],
            out_specs=pl.BlockSpec((1, canvas, c3 * canvas), lambda b: (b, 0, 0)),
            scratch_shapes=[pltpu.VMEM((canvas, c3 * canvas), jnp.float32)]),
        compiler_params=pltpu.CompilerParams(
            dimension_semantics=("parallel",)),
    )(bg_x.astype(jnp.float32), strip2.astype(jnp.float32))
    # out_t[b, x, c*canvas + y] -> out[b, c, y, x]
    return jnp.transpose(out_t.reshape(bs, canvas, c3, canvas), (0, 2, 3, 1))


# ----------------------------------------------------------------------------
# NN building blocks (matmuls in Pallas, the rest is JAX glue)
# ----------------------------------------------------------------------------

def leaky_relu(x, slope=0.01):
    return jnp.where(x >= 0, x, slope * x)


def layer_norm(x, eps=1e-5):
    mean = jnp.mean(x, axis=-1, keepdims=True)
    var = jnp.mean((x - mean) ** 2, axis=-1, keepdims=True)
    return (x - mean) / jnp.sqrt(var + eps)


def group_norm(x, num_groups, weight, bias, eps=1e-5):
    shape = x.shape
    n, c = shape[0], shape[1]
    xg = x.reshape(n, num_groups, c // num_groups, -1)
    mean = jnp.mean(xg, axis=(2, 3), keepdims=True)
    var = jnp.mean((xg - mean) ** 2, axis=(2, 3), keepdims=True)
    xn = ((xg - mean) / jnp.sqrt(var + eps)).reshape(shape)
    bshape = (1, c) + (1,) * (len(shape) - 2)
    return xn * weight.reshape(bshape) + bias.reshape(bshape)


def linear(x, p):
    return pallas_matmul(x, p['W'].T, p['b'])


def _im2col(x, k, stride, padding):
    # TODO(synk): fuse im2col into the conv matmul kernel (read shifted windows
    # from a padded VMEM block) to avoid the k*k HBM amplification at large
    # canvas sizes; kept as JAX glue here.
    n, c, h, w = x.shape
    xp = jnp.pad(x, ((0, 0), (0, 0), (padding, padding), (padding, padding)))
    ho = (h + 2 * padding - k) // stride + 1
    wo = (w + 2 * padding - k) // stride + 1
    cols = []
    for i in range(k):
        for j in range(k):
            cols.append(xp[:, :, i:i + stride * (ho - 1) + 1:stride,
                           j:j + stride * (wo - 1) + 1:stride])
    cols = jnp.stack(cols, axis=2)                       # [n, c, k*k, ho, wo]
    cols = jnp.transpose(cols, (0, 3, 4, 1, 2)).reshape(n * ho * wo, c * k * k)
    return cols, ho, wo


def conv2d_pallas(x, w, stride, padding):
    """NCHW conv (no bias) via im2col + Pallas matmul. w: [O, C, k, k]."""
    o, c, k, _ = w.shape
    cols, ho, wo = _im2col(x, k, stride, padding)
    wm = w.reshape(o, c * k * k).T
    out = pallas_matmul(cols, wm)
    return jnp.transpose(out.reshape(x.shape[0], ho, wo, o), (0, 3, 1, 2))


def partial_conv2d(x, mask, w, b, stride, padding):
    """NVIDIA-style PartialConv2d (single-channel mask). Returns (out, new_mask)."""
    k = w.shape[-1]
    if mask is None:
        mask = jnp.ones((1, 1, x.shape[2], x.shape[3]), x.dtype)
    slide_winsize = float(k * k)
    mcols, ho, wo = _im2col(mask, k, stride, padding)
    update_mask = jnp.sum(mcols, axis=-1).reshape(mask.shape[0], 1, ho, wo)
    mask_ratio = slide_winsize / (update_mask + 1e-8)
    update_mask = jnp.clip(update_mask, 0.0, 1.0)
    mask_ratio = mask_ratio * update_mask
    raw = conv2d_pallas(x * mask, w, stride, padding)
    out = (raw * mask_ratio + b[None, :, None, None]) * update_mask
    return out, update_mask


def down_block(p, x, mask):
    y, mask = partial_conv2d(x, mask, p['conv1']['W'], p['conv1']['b'], 1, 1)
    y = leaky_relu(group_norm(y, 8, p['norm1']['w'], p['norm1']['b']))
    y, mask = partial_conv2d(y, mask, p['conv2']['W'], p['conv2']['b'], 2, 1)
    y = leaky_relu(group_norm(y, 8, p['norm2']['w'], p['norm2']['b']))
    return y, mask


def encoder_forward(p, x, layer_sizes, no_layernorm=False):
    out = [None] * len(layer_sizes)
    y, mask = x, None
    for bp in p['blocks']:
        y, mask = down_block(bp, y, mask)
        for i, l in enumerate(layer_sizes):
            if y.shape[-1] == l:
                hp = p['heads'][i]
                h, _ = partial_conv2d(y, mask, hp['W'], hp['b'], 1, 1)
                h = jnp.transpose(h, (0, 2, 3, 1))
                if not no_layernorm:
                    h = layer_norm(h)
                out[i] = h
    return out


def mlp_gn(p, x, final_act):
    h = linear(x, p['lin1'])
    h = group_norm(h, 8, p['gn_w'], p['gn_b'])
    h = leaky_relu(h)
    h = linear(h, p['lin2'])
    return final_act(h)


def _bilinear_shift_matrices(delta, size, zeros_pad):
    """W[m, out, in] s.t. (W @ v)[out] = bilinear sample of v at (out - delta[m]).

    Equivalent to F.grid_sample for a pure translation; padding is 'zeros' when
    zeros_pad else 'border' (corner-index clamping == coord clamping here)."""
    pos = jnp.arange(size, dtype=jnp.float32)[None, :] - delta[:, None]  # [M,S]
    x0 = jnp.floor(pos)
    w1 = pos - x0
    w0 = 1.0 - w1
    x0i = x0.astype(jnp.int32)
    x1i = x0i + 1
    if zeros_pad:
        m0 = ((x0i >= 0) & (x0i <= size - 1)).astype(jnp.float32)
        m1 = ((x1i >= 0) & (x1i <= size - 1)).astype(jnp.float32)
    else:
        m0 = jnp.ones_like(w0)
        m1 = jnp.ones_like(w1)
    x0c = jnp.clip(x0i, 0, size - 1)
    x1c = jnp.clip(x1i, 0, size - 1)
    oh0 = jax.nn.one_hot(x0c, size, dtype=jnp.float32)   # [M, S, S]
    oh1 = jax.nn.one_hot(x1c, size, dtype=jnp.float32)
    return (w0 * m0)[..., None] * oh0 + (w1 * m1)[..., None] * oh1


# ----------------------------------------------------------------------------
# Deterministic parameter initialization
# ----------------------------------------------------------------------------

class _Keys:
    def __init__(self, key):
        self._key = key

    def __call__(self):
        self._key, sub = jax.random.split(self._key)
        return sub


def _init_conv(kg, out_ch, in_ch, k=3):
    bound = 1.0 / math.sqrt(in_ch * k * k)
    return {'W': jax.random.uniform(kg(), (out_ch, in_ch, k, k),
                                    minval=-bound, maxval=bound),
            'b': jax.random.uniform(kg(), (out_ch,), minval=-bound, maxval=bound)}


def _init_linear(kg, in_f, out_f):
    bound = 1.0 / math.sqrt(in_f)
    return {'W': jax.random.uniform(kg(), (out_f, in_f), minval=-bound, maxval=bound),
            'b': jax.random.uniform(kg(), (out_f,), minval=-bound, maxval=bound)}


def _init_norm(dim):
    return {'w': jnp.ones((dim,), jnp.float32), 'b': jnp.zeros((dim,), jnp.float32)}


def init_encoder(kg, num_channels, canvas_size, layer_sizes, dim_z):
    num_ds = int(math.log2(canvas_size / min(layer_sizes)))
    blocks = []
    for i in range(num_ds):
        in_ch = num_channels if i == 0 else dim_z
        blocks.append({'conv1': _init_conv(kg, dim_z, in_ch),
                       'conv2': _init_conv(kg, dim_z, dim_z),
                       'norm1': _init_norm(dim_z),
                       'norm2': _init_norm(dim_z)})
    heads = []
    for i in range(num_ds):
        for lsize in layer_sizes:
            if canvas_size // 2 ** (i + 1) == lsize:
                heads.append(_init_conv(kg, dim_z, dim_z))
    return {'blocks': blocks, 'heads': heads}


def _init_mlp_gn(kg, dim_z, out_dim):
    return {'lin1': _init_linear(kg, dim_z, dim_z),
            'gn_w': jnp.ones((dim_z,), jnp.float32),
            'gn_b': jnp.zeros((dim_z,), jnp.float32),
            'lin2': _init_linear(kg, dim_z, out_dim)}


def init_model(key, layer_size, num_layers, canvas_size, dim_z, dict_size):
    kg = _Keys(key)
    patch_size = canvas_size // layer_size
    return {
        'im_encoder': init_encoder(kg, 3, canvas_size, [layer_size] * num_layers, dim_z),
        'encoder_xform': init_encoder(kg, 7, patch_size * 2, [1], dim_z),
        'bg_encoder': init_encoder(kg, 3, canvas_size, [1], dim_z),
        'project': _init_linear(kg, dim_z, dim_z),
        'probs': _init_mlp_gn(kg, dim_z, 1),
        'shifts': _init_mlp_gn(kg, dim_z, 2),
        'bg_x': _init_mlp_gn(kg, dim_z, 3 * canvas_size + 1),
        # learned_dict(): dictionary of RGBA patches + their codes.
        'learned_dict': jax.nn.sigmoid(
            jax.random.normal(kg(), (dict_size, 4, 2 * patch_size, 2 * patch_size))),
        'dict_codes': jax.random.normal(kg(), (dict_size, dim_z)),
        # TODO(synk): th.randperm(4) uses torch's global RNG; replaced by a fixed
        # deterministic permutation derived from the PRNGKey.
        'perm4': jax.random.permutation(kg(), 4),
    }


# ----------------------------------------------------------------------------
# Model forward (default path: hard=False, custom_dict=None, rng=None,
# custom_bg=None, texts=None, bg is not None, no_spatial_transformer=False,
# spatial_transformer_bg=False, shuffle_all=False, straight_through_probs=False)
# ----------------------------------------------------------------------------

def model_forward(params, im, bg, *, layer_size, num_layers, canvas_size, dim_z,
                  no_layernorm=False):
    # TODO(synk): GPT2 text-encoder branch (texts != None) omitted — unused on
    # the default path and requires pretrained weights.
    bs = im.shape[0]
    ls, nl, canvas = layer_size, num_layers, canvas_size
    p_size = canvas // ls
    p2 = p_size // 2

    learned_dict = params['learned_dict']             # [D, 4, 2p, 2p]
    dict_codes = params['dict_codes']                 # [D, dim_z]

    # --- image encoder -------------------------------------------------------
    enc_out = encoder_forward(params['im_encoder'], im, [ls] * nl, no_layernorm)
    im_codes = jnp.stack(enc_out, axis=1)              # [bs, nl, ls, ls, dim_z]
    flat_codes = im_codes.reshape(-1, dim_z)           # flatten(0, 3)

    probs = mlp_gn(params['probs'], flat_codes, jax.nn.sigmoid)      # [M, 1]

    proj = layer_norm(linear(flat_codes, params['project']))
    logits = pallas_matmul(proj, dict_codes.T) / math.sqrt(im_codes.shape[-1])
    weights_flat = jax.nn.softmax(logits, axis=-1)                   # [M, D]
    weights = weights_flat.reshape(bs, nl, ls, ls, -1)

    dict_flat = learned_dict.reshape(learned_dict.shape[0], -1)
    patches = pallas_matmul(weights_flat, dict_flat)
    patches = patches.reshape(-1, 4, 2 * p_size, 2 * p_size)         # [M, 4, 2p, 2p]

    # --- image patches (unfold) ----------------------------------------------
    imp = jnp.pad(im, ((0, 0), (0, 0), (p2, p2), (p2, p2)))
    rows = []
    for iy in range(ls):
        cols_ = [imp[:, :, iy * p_size:iy * p_size + 2 * p_size,
                     ix * p_size:ix * p_size + 2 * p_size] for ix in range(ls)]
        rows.append(jnp.stack(cols_, axis=2))                        # [bs,3,ls,2p,2p]
    im_patches = jnp.stack(rows, axis=2)                             # [bs,3,ls,ls,2p,2p]
    im_patches = jnp.transpose(im_patches, (0, 2, 3, 1, 4, 5))
    im_patches = jnp.broadcast_to(im_patches[:, None],
                                  (bs, nl) + im_patches.shape[1:])
    im_patches = im_patches.reshape(bs * nl * ls * ls, 3, 2 * p_size, 2 * p_size)

    xin = jnp.concatenate([im_patches, patches], axis=1)             # [M, 7, 2p, 2p]
    codes_xform = encoder_forward(params['encoder_xform'], xin, [1], no_layernorm)[0]
    codes_xform = codes_xform.reshape(-1, dim_z)                     # squeeze(-2,-2)

    patches = patches * probs[:, :, None, None]

    # --- spatial transformer (pure translation -> separable bilinear matmuls) -
    shifts = mlp_gn(params['shifts'], codes_xform, jnp.tanh) / 2.0   # [M, 2]
    size = 2 * p_size
    dx = shifts[:, 0] * p_size
    dy = shifts[:, 1] * p_size
    wy_b = _bilinear_shift_matrices(dy, size, zeros_pad=False)       # border
    wx_b = _bilinear_shift_matrices(dx, size, zeros_pad=False)
    wy_z = _bilinear_shift_matrices(dy, size, zeros_pad=True)        # zeros
    wx_z = _bilinear_shift_matrices(dx, size, zeros_pad=True)
    rgb_in = patches[:, :3]
    a_in = patches[:, 3:4]
    rgb_y = jnp.einsum('miu,mcuv->mciv', wy_b, rgb_in)
    patches_rgb = jnp.einsum('mciv,mjv->mcij', rgb_y, wx_b)
    a_y = jnp.einsum('miu,mcuv->mciv', wy_z, a_in)
    patches_a = jnp.einsum('mciv,mjv->mcij', a_y, wx_z)
    patches = jnp.concatenate([patches_rgb, patches_a], axis=1)

    # --- regroup patches into full-canvas layers ------------------------------
    pt = jnp.transpose(patches.reshape(bs, nl, ls, ls, 4, 2 * p_size, 2 * p_size),
                       (0, 1, 4, 2, 5, 3, 6))                        # [bs,nl,4,ls,2p,ls,2p]

    def to_canvas(sy, sx):
        return pt[:, :, :, sy::2, :, sx::2, :].reshape(bs, nl, 4, canvas, canvas)

    nopad = ((0, 0), (0, 0), (0, 0))
    g1 = jnp.pad(to_canvas(0, 0)[..., p2:, p2:], nopad + ((0, p2), (0, p2)))
    g2 = jnp.pad(to_canvas(1, 1)[..., :-p2, :-p2], nopad + ((p2, 0), (p2, 0)))
    g3 = jnp.pad(to_canvas(1, 0)[..., :-p2, p2:], nopad + ((p2, 0), (0, p2)))
    g4 = jnp.pad(to_canvas(0, 1)[..., p2:, :-p2], nopad + ((0, p2), (p2, 0)))
    layers = jnp.stack([g1, g2, g3, g4], axis=2)                     # [bs,nl,4,4,H,W]
    layers_out = layers

    perm4 = params['perm4']
    layers_sh = layers[:, :, perm4].reshape(bs, nl * 4, 4, canvas, canvas)

    # --- background (streaming window mix in Pallas) --------------------------
    bg_codes = encoder_forward(params['bg_encoder'], im, [1], no_layernorm)[0]
    bg_codes = bg_codes.reshape(bs, dim_z)
    bg_x = mlp_gn(params['bg_x'], bg_codes,
                  lambda z: jax.nn.softmax(z, axis=-1))              # [bs, 3*canvas+1]
    out_bg = pallas_bg_mix(bg_x, bg[0])                              # [bs,3,canvas,canvas]

    # --- alpha compositing (Pallas kernel, lane-dense) -------------------------
    recon = pallas_composite(layers_sh, out_bg)

    return {
        'weights': weights,
        'probs': probs.reshape(bs, nl, -1),
        'layers': layers_out,
        'patches': pt,
        'dict_codes': dict_codes,
        'im_codes': im_codes.reshape(bs * nl, ls, ls, dim_z),
        'reconstruction': recon,
        'dict': learned_dict,
        'background': bg,
        'shifts': shifts,
    }


if __name__ == "__main__":
    canvas_size = 16
    layer_size = 4
    num_layers = 1
    dim_z = 128          # must be divisible by 8 for GroupNorm(8, dim_z)
    dict_size = 16

    root = jax.random.PRNGKey(0)
    k_param, k_im, k_bg = jax.random.split(root, 3)
    params = init_model(k_param, layer_size, num_layers, canvas_size, dim_z, dict_size)

    im = jax.random.uniform(k_im, (2, 3, canvas_size, canvas_size), jnp.float32)
    # bg is a wide strip the model selects a canvas-wide window from:
    # width must be 4*canvas so that unfold gives 3*canvas+1 candidate windows.
    bg = jax.random.uniform(k_bg, (1, 3, canvas_size, 4 * canvas_size), jnp.float32)

    fwd = jax.jit(functools.partial(
        model_forward, layer_size=layer_size, num_layers=num_layers,
        canvas_size=canvas_size, dim_z=dim_z))
    ret = fwd(params, im, bg)
    jax.block_until_ready(ret)
    assert ret['reconstruction'].shape == (2, 3, canvas_size, canvas_size)
    assert ret['weights'].shape == (2, num_layers, layer_size, layer_size, dict_size)
    print("KERNEL_OK")
</pallas_src>

<mosaic_0001>
module attributes {stable_mosaic.version = 11 : i64} {
  func.func @_matmul_kernel(%arg0: i32, %arg1: i32, %arg2: i32, %arg3: memref<256x128xbf16, #tpu.memory_space<vmem>>, %arg4: memref<128x128xbf16, #tpu.memory_space<vmem>>, %arg5: memref<256x128xf32, #tpu.memory_space<vmem>>, %arg6: memref<256x128xf32, #tpu.memory_space<vmem>>) attributes {dimension_semantics = [#tpu.dimension_semantics<parallel>, #tpu.dimension_semantics<parallel>, #tpu.dimension_semantics<arbitrary>], iteration_bounds = array<i64: 2, 1, 1>, scalar_prefetch = 0 : i64, scratch_operands = 1 : i64, tpu.core_type = #tpu.core_type<tc>, window_params = [{transform_indices = @transform_0, window_bounds = array<i64: 256, 128>}, {transform_indices = @transform_1, window_bounds = array<i64: 128, 128>}, {transform_indices = @transform_2, window_bounds = array<i64: 256, 128>}]} {
    %c0_i32 = arith.constant 0 : i32
    %0 = arith.cmpi eq, %arg2, %c0_i32 : i32
    %1 = arith.extui %0 : i1 to i32
    %c0_i32_0 = arith.constant 0 : i32
    %2 = arith.cmpi ne, %1, %c0_i32_0 : i32
    scf.if %2 {
      %cst_10 = arith.constant 0.000000e+00 : f32
      %12 = vector.broadcast %cst_10 : f32 to vector<256x128xf32>
      %c0_11 = arith.constant 0 : index
      %c0_12 = arith.constant 0 : index
      %13 = vector.load %arg6[%c0_11, %c0_12] : memref<256x128xf32, #tpu.memory_space<vmem>>, vector<256x128xf32>
      tpu.vector_store %arg6[%c0_11, %c0_12], %12 {strides = array<i32>} : memref<256x128xf32, #tpu.memory_space<vmem>>, vector<256x128xf32>,
    } else {
    }
    %c0 = arith.constant 0 : index
    %c0_1 = arith.constant 0 : index
    %3 = vector.load %arg6[%c0, %c0_1] : memref<256x128xf32, #tpu.memory_space<vmem>>, vector<256x128xf32>
    %c0_2 = arith.constant 0 : index
    %c0_3 = arith.constant 0 : index
    %4 = vector.load %arg3[%c0_2, %c0_3] : memref<256x128xbf16, #tpu.memory_space<vmem>>, vector<256x128xbf16>
    %c0_4 = arith.constant 0 : index
    %c0_5 = arith.constant 0 : index
    %5 = vector.load %arg4[%c0_4, %c0_5] : memref<128x128xbf16, #tpu.memory_space<vmem>>, vector<128x128xbf16>
    %cst = arith.constant dense<0.000000e+00> : vector<256x128xf32>
    %6 = tpu.matmul %4, %5, %cst {dimension_numbers = #tpu.dot_dimension_numbers<[1], [0], [0], [1], [0, 0, 1, 1], [], []>} : vector<256x128xbf16>, vector<128x128xbf16>, vector<256x128xf32> -> vector<256x128xf32>
    %7 = arith.addf %3, %6 : vector<256x128xf32>
    %c0_6 = arith.constant 0 : index
    %c0_7 = arith.constant 0 : index
    %8 = vector.load %arg6[%c0_6, %c0_7] : memref<256x128xf32, #tpu.memory_space<vmem>>, vector<256x128xf32>
    tpu.vector_store %arg6[%c0_6, %c0_7], %7 {strides = array<i32>} : memref<256x128xf32, #tpu.memory_space<vmem>>, vector<256x128xf32>,
    %c0_i32_8 = arith.constant 0 : i32
    %9 = arith.cmpi eq, %arg2, %c0_i32_8 : i32
    %10 = arith.extui %9 : i1 to i32
    %c0_i32_9 = arith.constant 0 : i32
    %11 = arith.cmpi ne, %10, %c0_i32_9 : i32
    scf.if %11 {
      %c0_10 = arith.constant 0 : index
      %c0_11 = arith.constant 0 : index
      %12 = vector.load %arg6[%c0_10, %c0_11] : memref<256x128xf32, #tpu.memory_space<vmem>>, vector<256x128xf32>
      %c0_12 = arith.constant 0 : index
      %c0_13 = arith.constant 0 : index
      %13 = vector.load %arg5[%c0_12, %c0_13] : memref<256x128xf32, #tpu.memory_space<vmem>>, vector<256x128xf32>
      tpu.vector_store %arg5[%c0_12, %c0_13], %12 {strides = array<i32>} : memref<256x128xf32, #tpu.memory_space<vmem>>, vector<256x128xf32>,
    } else {
    }
    return
  }
  func.func @transform_0(%arg0: i32, %arg1: i32, %arg2: i32) -> (i32, i32) {
    %c0_i32 = arith.constant 0 : i32
    return %arg0, %arg2 : i32, i32
  }
  func.func @transform_1(%arg0: i32, %arg1: i32, %arg2: i32) -> (i32, i32) {
    %c0_i32 = arith.constant 0 : i32
    return %arg2, %arg1 : i32, i32
  }
  func.func @transform_2(%arg0: i32, %arg1: i32, %arg2: i32) -> (i32, i32) {
    %c0_i32 = arith.constant 0 : i32
    return %arg0, %arg1 : i32, i32
  }
}

module attributes {stable_mosaic.version = 11 : i64} {
  func.func @_matmul_kernel(%arg0: i32, %arg1: i32, %arg2: i32, %arg3: memref<128x128xbf16, #tpu.memory_space<vmem>>, %arg4: memref<128x128xbf16, #tpu.memory_space<vmem>>, %arg5: memref<128x128xf32, #tpu.memory_space<vmem>>, %arg6: memref<128x128xf32, #tpu.memory_space<vmem>>) attributes {dimension_semantics = [#tpu.dimension_semantics<parallel>, #tpu.dimension_semantics<parallel>, #tpu.dimension_semantics<arbitrary>], iteration_bounds = array<i64: 1, 1, 9>, scalar_prefetch = 0 : i64, scratch_operands = 1 : i64, tpu.core_type = #tpu.core_type<tc>, window_params = [{transform_indices = @transform_0, window_bounds = array<i64: 128, 128>}, {transform_indices = @transform_1, window_bounds = array<i64: 128, 128>}, {transform_indices = @transform_2, window_bounds = array<i64: 128, 128>}]} {
    %c0_i32 = arith.constant 0 : i32
    %0 = arith.cmpi eq, %arg2, %c0_i32 : i32
    %1 = arith.extui %0 : i1 to i32
    %c0_i32_0 = arith.constant 0 : i32
    %2 = arith.cmpi ne, %1, %c0_i32_0 : i32
    scf.if %2 {
      %cst_9 = arith.constant 0.000000e+00 : f32
      %12 = vector.broadcast %cst_9 : f32 to vector<128x128xf32>
      %c0_10 = arith.constant 0 : index
      %c0_11 = arith.constant 0 : index
      %13 = vector.load %arg6[%c0_10, %c0_11] : memref<128x128xf32, #tpu.memory_space<vmem>>, vector<128x128xf32>
      tpu.vector_store %arg6[%c0_10, %c0_11], %12 {strides = array<i32>} : memref<128x128xf32, #tpu.memory_space<vmem>>, vector<128x128xf32>,
    } else {
    }
    %c0 = arith.constant 0 : index
    %c0_1 = arith.constant 0 : index
    %3 = vector.load %arg6[%c0, %c0_1] : memref<128x128xf32, #tpu.memory_space<vmem>>, vector<128x128xf32>
    %c0_2 = arith.constant 0 : index
    %c0_3 = arith.constant 0 : index
    %4 = vector.load %arg3[%c0_2, %c0_3] : memref<128x128xbf16, #tpu.memory_space<vmem>>, vector<128x128xbf16>
    %c0_4 = arith.constant 0 : index
    %c0_5 = arith.constant 0 : index
    %5 = vector.load %arg4[%c0_4, %c0_5] : memref<128x128xbf16, #tpu.memory_space<vmem>>, vector<128x128xbf16>
    %cst = arith.constant dense<0.000000e+00> : vector<128x128xf32>
    %6 = tpu.matmul %4, %5, %cst {dimension_numbers = #tpu.dot_dimension_numbers<[1], [0], [0], [1], [0, 0, 1, 1], [], []>} : vector<128x128xbf16>, vector<128x128xbf16>, vector<128x128xf32> -> vector<128x128xf32>
    %7 = arith.addf %3, %6 : vector<128x128xf32>
    %c0_6 = arith.constant 0 : index
    %c0_7 = arith.constant 0 : index
    %8 = vector.load %arg6[%c0_6, %c0_7] : memref<128x128xf32, #tpu.memory_space<vmem>>, vector<128x128xf32>
    tpu.vector_store %arg6[%c0_6, %c0_7], %7 {strides = array<i32>} : memref<128x128xf32, #tpu.memory_space<vmem>>, vector<128x128xf32>,
    %c8_i32 = arith.constant 8 : i32
    %9 = arith.cmpi eq, %arg2, %c8_i32 : i32
    %10 = arith.extui %9 : i1 to i32
    %c0_i32_8 = arith.constant 0 : i32
    %11 = arith.cmpi ne, %10, %c0_i32_8 : i32
    scf.if %11 {
      %c0_9 = arith.constant 0 : index
      %c0_10 = arith.constant 0 : index
      %12 = vector.load %arg6[%c0_9, %c0_10] : memref<128x128xf32, #tpu.memory_space<vmem>>, vector<128x128xf32>
      %c0_11 = arith.constant 0 : index
      %c0_12 = arith.constant 0 : index
      %13 = vector.load %arg5[%c0_11, %c0_12] : memref<128x128xf32, #tpu.memory_space<vmem>>, vector<128x128xf32>
      tpu.vector_store %arg5[%c0_11, %c0_12], %12 {strides = array<i32>} : memref<128x128xf32, #tpu.memory_space<vmem>>, vector<128x128xf32>,
    } else {
    }
    return
  }
  func.func @transform_0(%arg0: i32, %arg1: i32, %arg2: i32) -> (i32, i32) {
    %c0_i32 = arith.constant 0 : i32
    return %arg0, %arg2 : i32, i32
  }
  func.func @transform_1(%arg0: i32, %arg1: i32, %arg2: i32) -> (i32, i32) {
    %c0_i32 = arith.constant 0 : i32
    return %arg2, %arg1 : i32, i32
  }
  func.func @transform_2(%arg0: i32, %arg1: i32, %arg2: i32) -> (i32, i32) {
    %c0_i32 = arith.constant 0 : i32
    return %arg0, %arg1 : i32, i32
  }
}

module attributes {stable_mosaic.version = 11 : i64} {
  func.func @_matmul_kernel(%arg0: i32, %arg1: i32, %arg2: i32, %arg3: memref<32x128xbf16, #tpu.memory_space<vmem>>, %arg4: memref<128x128xbf16, #tpu.memory_space<vmem>>, %arg5: memref<32x128xf32, #tpu.memory_space<vmem>>, %arg6: memref<32x128xf32, #tpu.memory_space<vmem>>) attributes {dimension_semantics = [#tpu.dimension_semantics<parallel>, #tpu.dimension_semantics<parallel>, #tpu.dimension_semantics<arbitrary>], iteration_bounds = array<i64: 1, 1, 9>, scalar_prefetch = 0 : i64, scratch_operands = 1 : i64, tpu.core_type = #tpu.core_type<tc>, window_params = [{transform_indices = @transform_0, window_bounds = array<i64: 32, 128>}, {transform_indices = @transform_1, window_bounds = array<i64: 128, 128>}, {transform_indices = @transform_2, window_bounds = array<i64: 32, 128>}]} {
    %c0_i32 = arith.constant 0 : i32
    %0 = arith.cmpi eq, %arg2, %c0_i32 : i32
    %1 = arith.extui %0 : i1 to i32
    %c0_i32_0 = arith.constant 0 : i32
    %2 = arith.cmpi ne, %1, %c0_i32_0 : i32
    scf.if %2 {
      %cst_9 = arith.constant 0.000000e+00 : f32
      %12 = vector.broadcast %cst_9 : f32 to vector<32x128xf32>
      %c0_10 = arith.constant 0 : index
      %c0_11 = arith.constant 0 : index
      %13 = vector.load %arg6[%c0_10, %c0_11] : memref<32x128xf32, #tpu.memory_space<vmem>>, vector<32x128xf32>
      tpu.vector_store %arg6[%c0_10, %c0_11], %12 {strides = array<i32>} : memref<32x128xf32, #tpu.memory_space<vmem>>, vector<32x128xf32>,
    } else {
    }
    %c0 = arith.constant 0 : index
    %c0_1 = arith.constant 0 : index
    %3 = vector.load %arg6[%c0, %c0_1] : memref<32x128xf32, #tpu.memory_space<vmem>>, vector<32x128xf32>
    %c0_2 = arith.constant 0 : index
    %c0_3 = arith.constant 0 : index
    %4 = vector.load %arg3[%c0_2, %c0_3] : memref<32x128xbf16, #tpu.memory_space<vmem>>, vector<32x128xbf16>
    %c0_4 = arith.constant 0 : index
    %c0_5 = arith.constant 0 : index
    %5 = vector.load %arg4[%c0_4, %c0_5] : memref<128x128xbf16, #tpu.memory_space<vmem>>, vector<128x128xbf16>
    %cst = arith.constant dense<0.000000e+00> : vector<32x128xf32>
    %6 = tpu.matmul %4, %5, %cst {dimension_numbers = #tpu.dot_dimension_numbers<[1], [0], [0], [1], [0, 0, 1, 1], [], []>} : vector<32x128xbf16>, vector<128x128xbf16>, vector<32x128xf32> -> vector<32x128xf32>
    %7 = arith.addf %3, %6 : vector<32x128xf32>
    %c0_6 = arith.constant 0 : index
    %c0_7 = arith.constant 0 : index
    %8 = vector.load %arg6[%c0_6, %c0_7] : memref<32x128xf32, #tpu.memory_space<vmem>>, vector<32x128xf32>
    tpu.vector_store %arg6[%c0_6, %c0_7], %7 {strides = array<i32>} : memref<32x128xf32, #tpu.memory_space<vmem>>, vector<32x128xf32>,
    %c8_i32 = arith.constant 8 : i32
    %9 = arith.cmpi eq, %arg2, %c8_i32 : i32
    %10 = arith.extui %9 : i1 to i32
    %c0_i32_8 = arith.constant 0 : i32
    %11 = arith.cmpi ne, %10, %c0_i32_8 : i32
    scf.if %11 {
      %c0_9 = arith.constant 0 : index
      %c0_10 = arith.constant 0 : index
      %12 = vector.load %arg6[%c0_9, %c0_10] : memref<32x128xf32, #tpu.memory_space<vmem>>, vector<32x128xf32>
      %c0_11 = arith.constant 0 : index
      %c0_12 = arith.constant 0 : index
      %13 = vector.load %arg5[%c0_11, %c0_12] : memref<32x128xf32, #tpu.memory_space<vmem>>, vector<32x128xf32>
      tpu.vector_store %arg5[%c0_11, %c0_12], %12 {strides = array<i32>} : memref<32x128xf32, #tpu.memory_space<vmem>>, vector<32x128xf32>,
    } else {
    }
    return
  }
  func.func @transform_0(%arg0: i32, %arg1: i32, %arg2: i32) -> (i32, i32) {
    %c0_i32 = arith.constant 0 : i32
    return %arg0, %arg2 : i32, i32
  }
  func.func @transform_1(%arg0: i32, %arg1: i32, %arg2: i32) -> (i32, i32) {
    %c0_i32 = arith.constant 0 : i32
    return %arg2, %arg1 : i32, i32
  }
  func.func @transform_2(%arg0: i32, %arg1: i32, %arg2: i32) -> (i32, i32) {
    %c0_i32 = arith.constant 0 : i32
    return %arg0, %arg1 : i32, i32
  }
}

module attributes {stable_mosaic.version = 11 : i64} {
  func.func @_matmul_kernel(%arg0: i32, %arg1: i32, %arg2: i32, %arg3: memref<16x128xbf16, #tpu.memory_space<vmem>>, %arg4: memref<128x128xbf16, #tpu.memory_space<vmem>>, %arg5: memref<16x128xf32, #tpu.memory_space<vmem>>, %arg6: memref<16x128xf32, #tpu.memory_space<vmem>>) attributes {dimension_semantics = [#tpu.dimension_semantics<parallel>, #tpu.dimension_semantics<parallel>, #tpu.dimension_semantics<arbitrary>], iteration_bounds = array<i64: 1, 1, 9>, scalar_prefetch = 0 : i64, scratch_operands = 1 : i64, tpu.core_type = #tpu.core_type<tc>, window_params = [{transform_indices = @transform_0, window_bounds = array<i64: 16, 128>}, {transform_indices = @transform_1, window_bounds = array<i64: 128, 128>}, {transform_indices = @transform_2, window_bounds = array<i64: 16, 128>}]} {
    %c0_i32 = arith.constant 0 : i32
    %0 = arith.cmpi eq, %arg2, %c0_i32 : i32
    %1 = arith.extui %0 : i1 to i32
    %c0_i32_0 = arith.constant 0 : i32
    %2 = arith.cmpi ne, %1, %c0_i32_0 : i32
    scf.if %2 {
      %cst_9 = arith.constant 0.000000e+00 : f32
      %12 = vector.broadcast %cst_9 : f32 to vector<16x128xf32>
      %c0_10 = arith.constant 0 : index
      %c0_11 = arith.constant 0 : index
      %13 = vector.load %arg6[%c0_10, %c0_11] : memref<16x128xf32, #tpu.memory_space<vmem>>, vector<16x128xf32>
      tpu.vector_store %arg6[%c0_10, %c0_11], %12 {strides = array<i32>} : memref<16x128xf32, #tpu.memory_space<vmem>>, vector<16x128xf32>,
    } else {
    }
    %c0 = arith.constant 0 : index
    %c0_1 = arith.constant 0 : index
    %3 = vector.load %arg6[%c0, %c0_1] : memref<16x128xf32, #tpu.memory_space<vmem>>, vector<16x128xf32>
    %c0_2 = arith.constant 0 : index
    %c0_3 = arith.constant 0 : index
    %4 = vector.load %arg3[%c0_2, %c0_3] : memref<16x128xbf16, #tpu.memory_space<vmem>>, vector<16x128xbf16>
    %c0_4 = arith.constant 0 : index
    %c0_5 = arith.constant 0 : index
    %5 = vector.load %arg4[%c0_4, %c0_5] : memref<128x128xbf16, #tpu.memory_space<vmem>>, vector<128x128xbf16>
    %cst = arith.constant dense<0.000000e+00> : vector<16x128xf32>
    %6 = tpu.matmul %4, %5, %cst {dimension_numbers = #tpu.dot_dimension_numbers<[1], [0], [0], [1], [0, 0, 1, 1], [], []>} : vector<16x128xbf16>, vector<128x128xbf16>, vector<16x128xf32> -> vector<16x128xf32>
    %7 = arith.addf %3, %6 : vector<16x128xf32>
    %c0_6 = arith.constant 0 : index
    %c0_7 = arith.constant 0 : index
    %8 = vector.load %arg6[%c0_6, %c0_7] : memref<16x128xf32, #tpu.memory_space<vmem>>, vector<16x128xf32>
    tpu.vector_store %arg6[%c0_6, %c0_7], %7 {strides = array<i32>} : memref<16x128xf32, #tpu.memory_space<vmem>>, vector<16x128xf32>,
    %c8_i32 = arith.constant 8 : i32
    %9 = arith.cmpi eq, %arg2, %c8_i32 : i32
    %10 = arith.extui %9 : i1 to i32
    %c0_i32_8 = arith.constant 0 : i32
    %11 = arith.cmpi ne, %10, %c0_i32_8 : i32
    scf.if %11 {
      %c0_9 = arith.constant 0 : index
      %c0_10 = arith.constant 0 : index
      %12 = vector.load %arg6[%c0_9, %c0_10] : memref<16x128xf32, #tpu.memory_space<vmem>>, vector<16x128xf32>
      %c0_11 = arith.constant 0 : index
      %c0_12 = arith.constant 0 : index
      %13 = vector.load %arg5[%c0_11, %c0_12] : memref<16x128xf32, #tpu.memory_space<vmem>>, vector<16x128xf32>
      tpu.vector_store %arg5[%c0_11, %c0_12], %12 {strides = array<i32>} : memref<16x128xf32, #tpu.memory_space<vmem>>, vector<16x128xf32>,
    } else {
    }
    return
  }
  func.func @transform_0(%arg0: i32, %arg1: i32, %arg2: i32) -> (i32, i32) {
    %c0_i32 = arith.constant 0 : i32
    return %arg0, %arg2 : i32, i32
  }
  func.func @transform_1(%arg0: i32, %arg1: i32, %arg2: i32) -> (i32, i32) {
    %c0_i32 = arith.constant 0 : i32
    return %arg2, %arg1 : i32, i32
  }
  func.func @transform_2(%arg0: i32, %arg1: i32, %arg2: i32) -> (i32, i32) {
    %c0_i32 = arith.constant 0 : i32
    return %arg0, %arg1 : i32, i32
  }
}

module attributes {stable_mosaic.version = 11 : i64} {
  func.func @_matmul_bias_kernel(%arg0: i32, %arg1: i32, %arg2: i32, %arg3: memref<16x128xbf16, #tpu.memory_space<vmem>>, %arg4: memref<128x128xbf16, #tpu.memory_space<vmem>>, %arg5: memref<1x128xf32, #tpu.memory_space<vmem>>, %arg6: memref<16x128xf32, #tpu.memory_space<vmem>>, %arg7: memref<16x128xf32, #tpu.memory_space<vmem>>) attributes {dimension_semantics = [#tpu.dimension_semantics<parallel>, #tpu.dimension_semantics<parallel>, #tpu.dimension_semantics<arbitrary>], iteration_bounds = array<i64: 1, 1, 1>, scalar_prefetch = 0 : i64, scratch_operands = 1 : i64, tpu.core_type = #tpu.core_type<tc>, window_params = [{transform_indices = @transform_0, window_bounds = array<i64: 16, 128>}, {transform_indices = @transform_1, window_bounds = array<i64: 128, 128>}, {transform_indices = @transform_2, window_bounds = array<i64: 1, 128>}, {transform_indices = @transform_3, window_bounds = array<i64: 16, 128>}]} {
    %c0_i32 = arith.constant 0 : i32
    %0 = arith.cmpi eq, %arg2, %c0_i32 : i32
    %1 = arith.extui %0 : i1 to i32
    %c0_i32_0 = arith.constant 0 : i32
    %2 = arith.cmpi ne, %1, %c0_i32_0 : i32
    scf.if %2 {
      %cst_10 = arith.constant 0.000000e+00 : f32
      %12 = vector.broadcast %cst_10 : f32 to vector<16x128xf32>
      %c0_11 = arith.constant 0 : index
      %c0_12 = arith.constant 0 : index
      %13 = vector.load %arg7[%c0_11, %c0_12] : memref<16x128xf32, #tpu.memory_space<vmem>>, vector<16x128xf32>
      tpu.vector_store %arg7[%c0_11, %c0_12], %12 {strides = array<i32>} : memref<16x128xf32, #tpu.memory_space<vmem>>, vector<16x128xf32>,
    } else {
    }
    %c0 = arith.constant 0 : index
    %c0_1 = arith.constant 0 : index
    %3 = vector.load %arg7[%c0, %c0_1] : memref<16x128xf32, #tpu.memory_space<vmem>>, vector<16x128xf32>
    %c0_2 = arith.constant 0 : index
    %c0_3 = arith.constant 0 : index
    %4 = vector.load %arg3[%c0_2, %c0_3] : memref<16x128xbf16, #tpu.memory_space<vmem>>, vector<16x128xbf16>
    %c0_4 = arith.constant 0 : index
    %c0_5 = arith.constant 0 : index
    %5 = vector.load %arg4[%c0_4, %c0_5] : memref<128x128xbf16, #tpu.memory_space<vmem>>, vector<128x128xbf16>
    %cst = arith.constant dense<0.000000e+00> : vector<16x128xf32>
    %6 = tpu.matmul %4, %5, %cst {dimension_numbers = #tpu.dot_dimension_numbers<[1], [0], [0], [1], [0, 0, 1, 1], [], []>} : vector<16x128xbf16>, vector<128x128xbf16>, vector<16x128xf32> -> vector<16x128xf32>
    %7 = arith.addf %3, %6 : vector<16x128xf32>
    %c0_6 = arith.constant 0 : index
    %c0_7 = arith.constant 0 : index
    %8 = vector.load %arg7[%c0_6, %c0_7] : memref<16x128xf32, #tpu.memory_space<vmem>>, vector<16x128xf32>
    tpu.vector_store %arg7[%c0_6, %c0_7], %7 {strides = array<i32>} : memref<16x128xf32, #tpu.memory_space<vmem>>, vector<16x128xf32>,
    %c0_i32_8 = arith.constant 0 : i32
    %9 = arith.cmpi eq, %arg2, %c0_i32_8 : i32
    %10 = arith.extui %9 : i1 to i32
    %c0_i32_9 = arith.constant 0 : i32
    %11 = arith.cmpi ne, %10, %c0_i32_9 : i32
    scf.if %11 {
      %c0_10 = arith.constant 0 : index
      %c0_11 = arith.constant 0 : index
      %12 = vector.load %arg7[%c0_10, %c0_11] : memref<16x128xf32, #tpu.memory_space<vmem>>, vector<16x128xf32>
      %c0_12 = arith.constant 0 : index
      %c0_13 = arith.constant 0 : index
      %13 = vector.load %arg5[%c0_12, %c0_13] : memref<1x128xf32, #tpu.memory_space<vmem>>, vector<1x128xf32>
      %14 = vector.broadcast %13 : vector<1x128xf32> to vector<16x128xf32>
      %15 = arith.addf %12, %14 : vector<16x128xf32>
      %c0_14 = arith.constant 0 : index
      %c0_15 = arith.constant 0 : index
      %16 = vector.load %arg6[%c0_14, %c0_15] : memref<16x128xf32, #tpu.memory_space<vmem>>, vector<16x128xf32>
      tpu.vector_store %arg6[%c0_14, %c0_15], %15 {strides = array<i32>} : memref<16x128xf32, #tpu.memory_space<vmem>>, vector<16x128xf32>,
    } else {
    }
    return
  }
  func.func @transform_0(%arg0: i32, %arg1: i32, %arg2: i32) -> (i32, i32) {
    %c0_i32 = arith.constant 0 : i32
    return %arg0, %arg2 : i32, i32
  }
  func.func @transform_1(%arg0: i32, %arg1: i32, %arg2: i32) -> (i32, i32) {
    %c0_i32 = arith.constant 0 : i32
    return %arg2, %arg1 : i32, i32
  }
  func.func @transform_2(%arg0: i32, %arg1: i32, %arg2: i32) -> (i32, i32) {
    %c0_i32 = arith.constant 0 : i32
    %c0_i32_0 = arith.constant 0 : i32
    return %c0_i32, %arg1 : i32, i32
  }
  func.func @transform_3(%arg0: i32, %arg1: i32, %arg2: i32) -> (i32, i32) {
    %c0_i32 = arith.constant 0 : i32
    return %arg0, %arg1 : i32, i32
  }
}

module attributes {stable_mosaic.version = 11 : i64} {
  func.func @_bg_mix_kernel(%arg0: i32, %arg1: memref<2x49xf32, #tpu.memory_space<smem>>, %arg2: memref<64x48xf32, #tpu.memory_space<vmem>>, %arg3: memref<1x16x48xf32, #tpu.memory_space<vmem>>, %arg4: memref<16x48xf32, #tpu.memory_space<vmem>>) attributes {dimension_semantics = [#tpu.dimension_semantics<parallel>], iteration_bounds = array<i64: 2>, scalar_prefetch = 0 : i64, scratch_operands = 1 : i64, tpu.core_type = #tpu.core_type<tc>, window_params = [{transform_indices = @transform_0, window_bounds = array<i64: 2, 49>}, {pipeline_mode = #tpu.pipeline_mode<synchronous>, transform_indices = @transform_1, window_bounds = array<i64: 64, 48>}, {transform_indices = @transform_2, window_bounds = array<i64: 1, 16, 48>}]} {
    %cst = arith.constant 0.000000e+00 : f32
    %0 = vector.broadcast %cst : f32 to vector<16x48xf32>
    %c0 = arith.constant 0 : index
    %c0_0 = arith.constant 0 : index
    %1 = vector.load %arg4[%c0, %c0_0] : memref<16x48xf32, #tpu.memory_space<vmem>>, vector<16x48xf32>
    tpu.vector_store %arg4[%c0, %c0_0], %0 {strides = array<i32>} : memref<16x48xf32, #tpu.memory_space<vmem>>, vector<16x48xf32>,
    %c0_i32 = arith.constant 0 : i32
    %c49_i32 = arith.constant 49 : i32
    %2 = arith.addi %c0_i32, %c49_i32 : i32
    %c1_i32 = arith.constant 1 : i32
    scf.for %arg5 = %c0_i32 to %2 step %c1_i32  : i32 {
      %c1_i32_7 = arith.constant 1 : i32
      %6 = arith.muli %arg5, %c1_i32_7 : i32
      %c0_i32_8 = arith.constant 0 : i32
      %7 = arith.addi %c0_i32_8, %6 : i32
      %8 = arith.index_cast %7 : i32 to index
      %c0_9 = arith.constant 0 : index
      %9 = vector.load %arg2[%8, %c0_9] : memref<64x48xf32, #tpu.memory_space<vmem>>, vector<16x48xf32>
      %c0_10 = arith.constant 0 : index
      %c0_11 = arith.constant 0 : index
      %10 = vector.load %arg4[%c0_10, %c0_11] : memref<16x48xf32, #tpu.memory_space<vmem>>, vector<16x48xf32>
      %11 = arith.index_cast %arg0 : i32 to index
      %12 = arith.index_cast %7 : i32 to index
      %13 = memref.load %arg1[%11, %12] : memref<2x49xf32, #tpu.memory_space<smem>>
      %14 = vector.broadcast %13 : f32 to vector<16x48xf32>
      %15 = arith.mulf %14, %9 : vector<16x48xf32>
      %16 = arith.addf %10, %15 : vector<16x48xf32>
      %c0_12 = arith.constant 0 : index
      %c0_13 = arith.constant 0 : index
      %17 = vector.load %arg4[%c0_12, %c0_13] : memref<16x48xf32, #tpu.memory_space<vmem>>, vector<16x48xf32>
      tpu.vector_store %arg4[%c0_12, %c0_13], %16 {strides = array<i32>} : memref<16x48xf32, #tpu.memory_space<vmem>>, vector<16x48xf32>,
    }
    %c49_i32_1 = arith.constant 49 : i32
    %c0_2 = arith.constant 0 : index
    %c0_3 = arith.constant 0 : index
    %3 = vector.load %arg4[%c0_2, %c0_3] : memref<16x48xf32, #tpu.memory_space<vmem>>, vector<16x48xf32>
    %4 = vector.shape_cast %3 : vector<16x48xf32> to vector<1x16x48xf32>
    %c0_4 = arith.constant 0 : index
    %c0_5 = arith.constant 0 : index
    %c0_6 = arith.constant 0 : index
    %5 = vector.load %arg3[%c0_4, %c0_5, %c0_6] : memref<1x16x48xf32, #tpu.memory_space<vmem>>, vector<1x16x48xf32>
    tpu.vector_store %arg3[%c0_4, %c0_5, %c0_6], %4 {strides = array<i32>} : memref<1x16x48xf32, #tpu.memory_space<vmem>>, vector<1x16x48xf32>,
    return
  }
  func.func @transform_0(%arg0: i32) -> (i32, i32) {
    %c0_i32 = arith.constant 0 : i32
    %c0_i32_0 = arith.constant 0 : i32
    %c0_i32_1 = arith.constant 0 : i32
    return %c0_i32, %c0_i32_0 : i32, i32
  }
  func.func @transform_1(%arg0: i32) -> (i32, i32) {
    %c0_i32 = arith.constant 0 : i32
    %c0_i32_0 = arith.constant 0 : i32
    %c0_i32_1 = arith.constant 0 : i32
    return %c0_i32, %c0_i32_0 : i32, i32
  }
  func.func @transform_2(%arg0: i32) -> (i32, i32, i32) {
    %c0_i32 = arith.constant 0 : i32
    %c0_i32_0 = arith.constant 0 : i32
    %c0_i32_1 = arith.constant 0 : i32
    return %arg0, %c0_i32, %c0_i32_0 : i32, i32, i32
  }
}

module attributes {stable_mosaic.version = 11 : i64} {
  func.func @_matmul_bias_kernel(%arg0: i32, %arg1: i32, %arg2: i32, %arg3: memref<32x128xbf16, #tpu.memory_space<vmem>>, %arg4: memref<128x128xbf16, #tpu.memory_space<vmem>>, %arg5: memref<1x128xf32, #tpu.memory_space<vmem>>, %arg6: memref<32x128xf32, #tpu.memory_space<vmem>>, %arg7: memref<32x128xf32, #tpu.memory_space<vmem>>) attributes {dimension_semantics = [#tpu.dimension_semantics<parallel>, #tpu.dimension_semantics<parallel>, #tpu.dimension_semantics<arbitrary>], iteration_bounds = array<i64: 1, 1, 1>, scalar_prefetch = 0 : i64, scratch_operands = 1 : i64, tpu.core_type = #tpu.core_type<tc>, window_params = [{transform_indices = @transform_0, window_bounds = array<i64: 32, 128>}, {transform_indices = @transform_1, window_bounds = array<i64: 128, 128>}, {transform_indices = @transform_2, window_bounds = array<i64: 1, 128>}, {transform_indices = @transform_3, window_bounds = array<i64: 32, 128>}]} {
    %c0_i32 = arith.constant 0 : i32
    %0 = arith.cmpi eq, %arg2, %c0_i32 : i32
    %1 = arith.extui %0 : i1 to i32
    %c0_i32_0 = arith.constant 0 : i32
    %2 = arith.cmpi ne, %1, %c0_i32_0 : i32
    scf.if %2 {
      %cst_10 = arith.constant 0.000000e+00 : f32
      %12 = vector.broadcast %cst_10 : f32 to vector<32x128xf32>
      %c0_11 = arith.constant 0 : index
      %c0_12 = arith.constant 0 : index
      %13 = vector.load %arg7[%c0_11, %c0_12] : memref<32x128xf32, #tpu.memory_space<vmem>>, vector<32x128xf32>
      tpu.vector_store %arg7[%c0_11, %c0_12], %12 {strides = array<i32>} : memref<32x128xf32, #tpu.memory_space<vmem>>, vector<32x128xf32>,
    } else {
    }
    %c0 = arith.constant 0 : index
    %c0_1 = arith.constant 0 : index
    %3 = vector.load %arg7[%c0, %c0_1] : memref<32x128xf32, #tpu.memory_space<vmem>>, vector<32x128xf32>
    %c0_2 = arith.constant 0 : index
    %c0_3 = arith.constant 0 : index
    %4 = vector.load %arg3[%c0_2, %c0_3] : memref<32x128xbf16, #tpu.memory_space<vmem>>, vector<32x128xbf16>
    %c0_4 = arith.constant 0 : index
    %c0_5 = arith.constant 0 : index
    %5 = vector.load %arg4[%c0_4, %c0_5] : memref<128x128xbf16, #tpu.memory_space<vmem>>, vector<128x128xbf16>
    %cst = arith.constant dense<0.000000e+00> : vector<32x128xf32>
    %6 = tpu.matmul %4, %5, %cst {dimension_numbers = #tpu.dot_dimension_numbers<[1], [0], [0], [1], [0, 0, 1, 1], [], []>} : vector<32x128xbf16>, vector<128x128xbf16>, vector<32x128xf32> -> vector<32x128xf32>
    %7 = arith.addf %3, %6 : vector<32x128xf32>
    %c0_6 = arith.constant 0 : index
    %c0_7 = arith.constant 0 : index
    %8 = vector.load %arg7[%c0_6, %c0_7] : memref<32x128xf32, #tpu.memory_space<vmem>>, vector<32x128xf32>
    tpu.vector_store %arg7[%c0_6, %c0_7], %7 {strides = array<i32>} : memref<32x128xf32, #tpu.memory_space<vmem>>, vector<32x128xf32>,
    %c0_i32_8 = arith.constant 0 : i32
    %9 = arith.cmpi eq, %arg2, %c0_i32_8 : i32
    %10 = arith.extui %9 : i1 to i32
    %c0_i32_9 = arith.constant 0 : i32
    %11 = arith.cmpi ne, %10, %c0_i32_9 : i32
    scf.if %11 {
      %c0_10 = arith.constant 0 : index
      %c0_11 = arith.constant 0 : index
      %12 = vector.load %arg7[%c0_10, %c0_11] : memref<32x128xf32, #tpu.memory_space<vmem>>, vector<32x128xf32>
      %c0_12 = arith.constant 0 : index
      %c0_13 = arith.constant 0 : index
      %13 = vector.load %arg5[%c0_12, %c0_13] : memref<1x128xf32, #tpu.memory_space<vmem>>, vector<1x128xf32>
      %14 = vector.broadcast %13 : vector<1x128xf32> to vector<32x128xf32>
      %15 = arith.addf %12, %14 : vector<32x128xf32>
      %c0_14 = arith.constant 0 : index
      %c0_15 = arith.constant 0 : index
      %16 = vector.load %arg6[%c0_14, %c0_15] : memref<32x128xf32, #tpu.memory_space<vmem>>, vector<32x128xf32>
      tpu.vector_store %arg6[%c0_14, %c0_15], %15 {strides = array<i32>} : memref<32x128xf32, #tpu.memory_space<vmem>>, vector<32x128xf32>,
    } else {
    }
    return
  }
  func.func @transform_0(%arg0: i32, %arg1: i32, %arg2: i32) -> (i32, i32) {
    %c0_i32 = arith.constant 0 : i32
    return %arg0, %arg2 : i32, i32
  }
  func.func @transform_1(%arg0: i32, %arg1: i32, %arg2: i32) -> (i32, i32) {
    %c0_i32 = arith.constant 0 : i32
    return %arg2, %arg1 : i32, i32
  }
  func.func @transform_2(%arg0: i32, %arg1: i32, %arg2: i32) -> (i32, i32) {
    %c0_i32 = arith.constant 0 : i32
    %c0_i32_0 = arith.constant 0 : i32
    return %c0_i32, %arg1 : i32, i32
  }
  func.func @transform_3(%arg0: i32, %arg1: i32, %arg2: i32) -> (i32, i32) {
    %c0_i32 = arith.constant 0 : i32
    return %arg0, %arg1 : i32, i32
  }
}

module attributes {stable_mosaic.version = 11 : i64} {
  func.func @_matmul_kernel(%arg0: i32, %arg1: i32, %arg2: i32, %arg3: memref<32x128xbf16, #tpu.memory_space<vmem>>, %arg4: memref<128x256xbf16, #tpu.memory_space<vmem>>, %arg5: memref<32x256xf32, #tpu.memory_space<vmem>>, %arg6: memref<32x256xf32, #tpu.memory_space<vmem>>) attributes {dimension_semantics = [#tpu.dimension_semantics<parallel>, #tpu.dimension_semantics<parallel>, #tpu.dimension_semantics<arbitrary>], iteration_bounds = array<i64: 1, 1, 1>, scalar_prefetch = 0 : i64, scratch_operands = 1 : i64, tpu.core_type = #tpu.core_type<tc>, window_params = [{transform_indices = @transform_0, window_bounds = array<i64: 32, 128>}, {transform_indices = @transform_1, window_bounds = array<i64: 128, 256>}, {transform_indices = @transform_2, window_bounds = array<i64: 32, 256>}]} {
    %c0_i32 = arith.constant 0 : i32
    %0 = arith.cmpi eq, %arg2, %c0_i32 : i32
    %1 = arith.extui %0 : i1 to i32
    %c0_i32_0 = arith.constant 0 : i32
    %2 = arith.cmpi ne, %1, %c0_i32_0 : i32
    scf.if %2 {
      %cst_10 = arith.constant 0.000000e+00 : f32
      %12 = vector.broadcast %cst_10 : f32 to vector<32x256xf32>
      %c0_11 = arith.constant 0 : index
      %c0_12 = arith.constant 0 : index
      %13 = vector.load %arg6[%c0_11, %c0_12] : memref<32x256xf32, #tpu.memory_space<vmem>>, vector<32x256xf32>
      tpu.vector_store %arg6[%c0_11, %c0_12], %12 {strides = array<i32>} : memref<32x256xf32, #tpu.memory_space<vmem>>, vector<32x256xf32>,
    } else {
    }
    %c0 = arith.constant 0 : index
    %c0_1 = arith.constant 0 : index
    %3 = vector.load %arg6[%c0, %c0_1] : memref<32x256xf32, #tpu.memory_space<vmem>>, vector<32x256xf32>
    %c0_2 = arith.constant 0 : index
    %c0_3 = arith.constant 0 : index
    %4 = vector.load %arg3[%c0_2, %c0_3] : memref<32x128xbf16, #tpu.memory_space<vmem>>, vector<32x128xbf16>
    %c0_4 = arith.constant 0 : index
    %c0_5 = arith.constant 0 : index
    %5 = vector.load %arg4[%c0_4, %c0_5] : memref<128x256xbf16, #tpu.memory_space<vmem>>, vector<128x256xbf16>
    %cst = arith.constant dense<0.000000e+00> : vector<32x256xf32>
    %6 = tpu.matmul %4, %5, %cst {dimension_numbers = #tpu.dot_dimension_numbers<[1], [0], [0], [1], [0, 0, 1, 1], [], []>} : vector<32x128xbf16>, vector<128x256xbf16>, vector<32x256xf32> -> vector<32x256xf32>
    %7 = arith.addf %3, %6 : vector<32x256xf32>
    %c0_6 = arith.constant 0 : index
    %c0_7 = arith.constant 0 : index
    %8 = vector.load %arg6[%c0_6, %c0_7] : memref<32x256xf32, #tpu.memory_space<vmem>>, vector<32x256xf32>
    tpu.vector_store %arg6[%c0_6, %c0_7], %7 {strides = array<i32>} : memref<32x256xf32, #tpu.memory_space<vmem>>, vector<32x256xf32>,
    %c0_i32_8 = arith.constant 0 : i32
    %9 = arith.cmpi eq, %arg2, %c0_i32_8 : i32
    %10 = arith.extui %9 : i1 to i32
    %c0_i32_9 = arith.constant 0 : i32
    %11 = arith.cmpi ne, %10, %c0_i32_9 : i32
    scf.if %11 {
      %c0_10 = arith.constant 0 : index
      %c0_11 = arith.constant 0 : index
      %12 = vector.load %arg6[%c0_10, %c0_11] : memref<32x256xf32, #tpu.memory_space<vmem>>, vector<32x256xf32>
      %c0_12 = arith.constant 0 : index
      %c0_13 = arith.constant 0 : index
      %13 = vector.load %arg5[%c0_12, %c0_13] : memref<32x256xf32, #tpu.memory_space<vmem>>, vector<32x256xf32>
      tpu.vector_store %arg5[%c0_12, %c0_13], %12 {strides = array<i32>} : memref<32x256xf32, #tpu.memory_space<vmem>>, vector<32x256xf32>,
    } else {
    }
    return
  }
  func.func @transform_0(%arg0: i32, %arg1: i32, %arg2: i32) -> (i32, i32) {
    %c0_i32 = arith.constant 0 : i32
    return %arg0, %arg2 : i32, i32
  }
  func.func @transform_1(%arg0: i32, %arg1: i32, %arg2: i32) -> (i32, i32) {
    %c0_i32 = arith.constant 0 : i32
    return %arg2, %arg1 : i32, i32
  }
  func.func @transform_2(%arg0: i32, %arg1: i32, %arg2: i32) -> (i32, i32) {
    %c0_i32 = arith.constant 0 : i32
    return %arg0, %arg1 : i32, i32
  }
}

module attributes {stable_mosaic.version = 11 : i64} {
  func.func @_matmul_kernel(%arg0: i32, %arg1: i32, %arg2: i32, %arg3: memref<32x128xbf16, #tpu.memory_space<vmem>>, %arg4: memref<128x128xbf16, #tpu.memory_space<vmem>>, %arg5: memref<32x128xf32, #tpu.memory_space<vmem>>, %arg6: memref<32x128xf32, #tpu.memory_space<vmem>>) attributes {dimension_semantics = [#tpu.dimension_semantics<parallel>, #tpu.dimension_semantics<parallel>, #tpu.dimension_semantics<arbitrary>], iteration_bounds = array<i64: 1, 1, 1>, scalar_prefetch = 0 : i64, scratch_operands = 1 : i64, tpu.core_type = #tpu.core_type<tc>, window_params = [{transform_indices = @transform_0, window_bounds = array<i64: 32, 128>}, {transform_indices = @transform_1, window_bounds = array<i64: 128, 128>}, {transform_indices = @transform_2, window_bounds = array<i64: 32, 128>}]} {
    %c0_i32 = arith.constant 0 : i32
    %0 = arith.cmpi eq, %arg2, %c0_i32 : i32
    %1 = arith.extui %0 : i1 to i32
    %c0_i32_0 = arith.constant 0 : i32
    %2 = arith.cmpi ne, %1, %c0_i32_0 : i32
    scf.if %2 {
      %cst_10 = arith.constant 0.000000e+00 : f32
      %12 = vector.broadcast %cst_10 : f32 to vector<32x128xf32>
      %c0_11 = arith.constant 0 : index
      %c0_12 = arith.constant 0 : index
      %13 = vector.load %arg6[%c0_11, %c0_12] : memref<32x128xf32, #tpu.memory_space<vmem>>, vector<32x128xf32>
      tpu.vector_store %arg6[%c0_11, %c0_12], %12 {strides = array<i32>} : memref<32x128xf32, #tpu.memory_space<vmem>>, vector<32x128xf32>,
    } else {
    }
    %c0 = arith.constant 0 : index
    %c0_1 = arith.constant 0 : index
    %3 = vector.load %arg6[%c0, %c0_1] : memref<32x128xf32, #tpu.memory_space<vmem>>, vector<32x128xf32>
    %c0_2 = arith.constant 0 : index
    %c0_3 = arith.constant 0 : index
    %4 = vector.load %arg3[%c0_2, %c0_3] : memref<32x128xbf16, #tpu.memory_space<vmem>>, vector<32x128xbf16>
    %c0_4 = arith.constant 0 : index
    %c0_5 = arith.constant 0 : index
    %5 = vector.load %arg4[%c0_4, %c0_5] : memref<128x128xbf16, #tpu.memory_space<vmem>>, vector<128x128xbf16>
    %cst = arith.constant dense<0.000000e+00> : vector<32x128xf32>
    %6 = tpu.matmul %4, %5, %cst {dimension_numbers = #tpu.dot_dimension_numbers<[1], [0], [0], [1], [0, 0, 1, 1], [], []>} : vector<32x128xbf16>, vector<128x128xbf16>, vector<32x128xf32> -> vector<32x128xf32>
    %7 = arith.addf %3, %6 : vector<32x128xf32>
    %c0_6 = arith.constant 0 : index
    %c0_7 = arith.constant 0 : index
    %8 = vector.load %arg6[%c0_6, %c0_7] : memref<32x128xf32, #tpu.memory_space<vmem>>, vector<32x128xf32>
    tpu.vector_store %arg6[%c0_6, %c0_7], %7 {strides = array<i32>} : memref<32x128xf32, #tpu.memory_space<vmem>>, vector<32x128xf32>,
    %c0_i32_8 = arith.constant 0 : i32
    %9 = arith.cmpi eq, %arg2, %c0_i32_8 : i32
    %10 = arith.extui %9 : i1 to i32
    %c0_i32_9 = arith.constant 0 : i32
    %11 = arith.cmpi ne, %10, %c0_i32_9 : i32
    scf.if %11 {
      %c0_10 = arith.constant 0 : index
      %c0_11 = arith.constant 0 : index
      %12 = vector.load %arg6[%c0_10, %c0_11] : memref<32x128xf32, #tpu.memory_space<vmem>>, vector<32x128xf32>
      %c0_12 = arith.constant 0 : index
      %c0_13 = arith.constant 0 : index
      %13 = vector.load %arg5[%c0_12, %c0_13] : memref<32x128xf32, #tpu.memory_space<vmem>>, vector<32x128xf32>
      tpu.vector_store %arg5[%c0_12, %c0_13], %12 {strides = array<i32>} : memref<32x128xf32, #tpu.memory_space<vmem>>, vector<32x128xf32>,
    } else {
    }
    return
  }
  func.func @transform_0(%arg0: i32, %arg1: i32, %arg2: i32) -> (i32, i32) {
    %c0_i32 = arith.constant 0 : i32
    return %arg0, %arg2 : i32, i32
  }
  func.func @transform_1(%arg0: i32, %arg1: i32, %arg2: i32) -> (i32, i32) {
    %c0_i32 = arith.constant 0 : i32
    return %arg2, %arg1 : i32, i32
  }
  func.func @transform_2(%arg0: i32, %arg1: i32, %arg2: i32) -> (i32, i32) {
    %c0_i32 = arith.constant 0 : i32
    return %arg0, %arg1 : i32, i32
  }
}

module attributes {stable_mosaic.version = 11 : i64} {
  func.func @_matmul_kernel(%arg0: i32, %arg1: i32, %arg2: i32, %arg3: memref<256x128xbf16, #tpu.memory_space<vmem>>, %arg4: memref<128x128xbf16, #tpu.memory_space<vmem>>, %arg5: memref<256x128xf32, #tpu.memory_space<vmem>>, %arg6: memref<256x128xf32, #tpu.memory_space<vmem>>) attributes {dimension_semantics = [#tpu.dimension_semantics<parallel>, #tpu.dimension_semantics<parallel>, #tpu.dimension_semantics<arbitrary>], iteration_bounds = array<i64: 8, 1, 1>, scalar_prefetch = 0 : i64, scratch_operands = 1 : i64, tpu.core_type = #tpu.core_type<tc>, window_params = [{transform_indices = @transform_0, window_bounds = array<i64: 256, 128>}, {transform_indices = @transform_1, window_bounds = array<i64: 128, 128>}, {transform_indices = @transform_2, window_bounds = array<i64: 256, 128>}]} {
    %c0_i32 = arith.constant 0 : i32
    %0 = arith.cmpi eq, %arg2, %c0_i32 : i32
    %1 = arith.extui %0 : i1 to i32
    %c0_i32_0 = arith.constant 0 : i32
    %2 = arith.cmpi ne, %1, %c0_i32_0 : i32
    scf.if %2 {
      %cst_10 = arith.constant 0.000000e+00 : f32
      %12 = vector.broadcast %cst_10 : f32 to vector<256x128xf32>
      %c0_11 = arith.constant 0 : index
      %c0_12 = arith.constant 0 : index
      %13 = vector.load %arg6[%c0_11, %c0_12] : memref<256x128xf32, #tpu.memory_space<vmem>>, vector<256x128xf32>
      tpu.vector_store %arg6[%c0_11, %c0_12], %12 {strides = array<i32>} : memref<256x128xf32, #tpu.memory_space<vmem>>, vector<256x128xf32>,
    } else {
    }
    %c0 = arith.constant 0 : index
    %c0_1 = arith.constant 0 : index
    %3 = vector.load %arg6[%c0, %c0_1] : memref<256x128xf32, #tpu.memory_space<vmem>>, vector<256x128xf32>
    %c0_2 = arith.constant 0 : index
    %c0_3 = arith.constant 0 : index
    %4 = vector.load %arg3[%c0_2, %c0_3] : memref<256x128xbf16, #tpu.memory_space<vmem>>, vector<256x128xbf16>
    %c0_4 = arith.constant 0 : index
    %c0_5 = arith.constant 0 : index
    %5 = vector.load %arg4[%c0_4, %c0_5] : memref<128x128xbf16, #tpu.memory_space<vmem>>, vector<128x128xbf16>
    %cst = arith.constant dense<0.000000e+00> : vector<256x128xf32>
    %6 = tpu.matmul %4, %5, %cst {dimension_numbers = #tpu.dot_dimension_numbers<[1], [0], [0], [1], [0, 0, 1, 1], [], []>} : vector<256x128xbf16>, vector<128x128xbf16>, vector<256x128xf32> -> vector<256x128xf32>
    %7 = arith.addf %3, %6 : vector<256x128xf32>
    %c0_6 = arith.constant 0 : index
    %c0_7 = arith.constant 0 : index
    %8 = vector.load %arg6[%c0_6, %c0_7] : memref<256x128xf32, #tpu.memory_space<vmem>>, vector<256x128xf32>
    tpu.vector_store %arg6[%c0_6, %c0_7], %7 {strides = array<i32>} : memref<256x128xf32, #tpu.memory_space<vmem>>, vector<256x128xf32>,
    %c0_i32_8 = arith.constant 0 : i32
    %9 = arith.cmpi eq, %arg2, %c0_i32_8 : i32
    %10 = arith.extui %9 : i1 to i32
    %c0_i32_9 = arith.constant 0 : i32
    %11 = arith.cmpi ne, %10, %c0_i32_9 : i32
    scf.if %11 {
      %c0_10 = arith.constant 0 : index
      %c0_11 = arith.constant 0 : index
      %12 = vector.load %arg6[%c0_10, %c0_11] : memref<256x128xf32, #tpu.memory_space<vmem>>, vector<256x128xf32>
      %c0_12 = arith.constant 0 : index
      %c0_13 = arith.constant 0 : index
      %13 = vector.load %arg5[%c0_12, %c0_13] : memref<256x128xf32, #tpu.memory_space<vmem>>, vector<256x128xf32>
      tpu.vector_store %arg5[%c0_12, %c0_13], %12 {strides = array<i32>} : memref<256x128xf32, #tpu.memory_space<vmem>>, vector<256x128xf32>,
    } else {
    }
    return
  }
  func.func @transform_0(%arg0: i32, %arg1: i32, %arg2: i32) -> (i32, i32) {
    %c0_i32 = arith.constant 0 : i32
    return %arg0, %arg2 : i32, i32
  }
  func.func @transform_1(%arg0: i32, %arg1: i32, %arg2: i32) -> (i32, i32) {
    %c0_i32 = arith.constant 0 : i32
    return %arg2, %arg1 : i32, i32
  }
  func.func @transform_2(%arg0: i32, %arg1: i32, %arg2: i32) -> (i32, i32) {
    %c0_i32 = arith.constant 0 : i32
    return %arg0, %arg1 : i32, i32
  }
}

module attributes {stable_mosaic.version = 11 : i64} {
  func.func @_matmul_kernel(%arg0: i32, %arg1: i32, %arg2: i32, %arg3: memref<256x128xbf16, #tpu.memory_space<vmem>>, %arg4: memref<128x128xbf16, #tpu.memory_space<vmem>>, %arg5: memref<256x128xf32, #tpu.memory_space<vmem>>, %arg6: memref<256x128xf32, #tpu.memory_space<vmem>>) attributes {dimension_semantics = [#tpu.dimension_semantics<parallel>, #tpu.dimension_semantics<parallel>, #tpu.dimension_semantics<arbitrary>], iteration_bounds = array<i64: 2, 1, 9>, scalar_prefetch = 0 : i64, scratch_operands = 1 : i64, tpu.core_type = #tpu.core_type<tc>, window_params = [{transform_indices = @transform_0, window_bounds = array<i64: 256, 128>}, {transform_indices = @transform_1, window_bounds = array<i64: 128, 128>}, {transform_indices = @transform_2, window_bounds = array<i64: 256, 128>}]} {
    %c0_i32 = arith.constant 0 : i32
    %0 = arith.cmpi eq, %arg2, %c0_i32 : i32
    %1 = arith.extui %0 : i1 to i32
    %c0_i32_0 = arith.constant 0 : i32
    %2 = arith.cmpi ne, %1, %c0_i32_0 : i32
    scf.if %2 {
      %cst_9 = arith.constant 0.000000e+00 : f32
      %12 = vector.broadcast %cst_9 : f32 to vector<256x128xf32>
      %c0_10 = arith.constant 0 : index
      %c0_11 = arith.constant 0 : index
      %13 = vector.load %arg6[%c0_10, %c0_11] : memref<256x128xf32, #tpu.memory_space<vmem>>, vector<256x128xf32>
      tpu.vector_store %arg6[%c0_10, %c0_11], %12 {strides = array<i32>} : memref<256x128xf32, #tpu.memory_space<vmem>>, vector<256x128xf32>,
    } else {
    }
    %c0 = arith.constant 0 : index
    %c0_1 = arith.constant 0 : index
    %3 = vector.load %arg6[%c0, %c0_1] : memref<256x128xf32, #tpu.memory_space<vmem>>, vector<256x128xf32>
    %c0_2 = arith.constant 0 : index
    %c0_3 = arith.constant 0 : index
    %4 = vector.load %arg3[%c0_2, %c0_3] : memref<256x128xbf16, #tpu.memory_space<vmem>>, vector<256x128xbf16>
    %c0_4 = arith.constant 0 : index
    %c0_5 = arith.constant 0 : index
    %5 = vector.load %arg4[%c0_4, %c0_5] : memref<128x128xbf16, #tpu.memory_space<vmem>>, vector<128x128xbf16>
    %cst = arith.constant dense<0.000000e+00> : vector<256x128xf32>
    %6 = tpu.matmul %4, %5, %cst {dimension_numbers = #tpu.dot_dimension_numbers<[1], [0], [0], [1], [0, 0, 1, 1], [], []>} : vector<256x128xbf16>, vector<128x128xbf16>, vector<256x128xf32> -> vector<256x128xf32>
    %7 = arith.addf %3, %6 : vector<256x128xf32>
    %c0_6 = arith.constant 0 : index
    %c0_7 = arith.constant 0 : index
    %8 = vector.load %arg6[%c0_6, %c0_7] : memref<256x128xf32, #tpu.memory_space<vmem>>, vector<256x128xf32>
    tpu.vector_store %arg6[%c0_6, %c0_7], %7 {strides = array<i32>} : memref<256x128xf32, #tpu.memory_space<vmem>>, vector<256x128xf32>,
    %c8_i32 = arith.constant 8 : i32
    %9 = arith.cmpi eq, %arg2, %c8_i32 : i32
    %10 = arith.extui %9 : i1 to i32
    %c0_i32_8 = arith.constant 0 : i32
    %11 = arith.cmpi ne, %10, %c0_i32_8 : i32
    scf.if %11 {
      %c0_9 = arith.constant 0 : index
      %c0_10 = arith.constant 0 : index
      %12 = vector.load %arg6[%c0_9, %c0_10] : memref<256x128xf32, #tpu.memory_space<vmem>>, vector<256x128xf32>
      %c0_11 = arith.constant 0 : index
      %c0_12 = arith.constant 0 : index
      %13 = vector.load %arg5[%c0_11, %c0_12] : memref<256x128xf32, #tpu.memory_space<vmem>>, vector<256x128xf32>
      tpu.vector_store %arg5[%c0_11, %c0_12], %12 {strides = array<i32>} : memref<256x128xf32, #tpu.memory_space<vmem>>, vector<256x128xf32>,
    } else {
    }
    return
  }
  func.func @transform_0(%arg0: i32, %arg1: i32, %arg2: i32) -> (i32, i32) {
    %c0_i32 = arith.constant 0 : i32
    return %arg0, %arg2 : i32, i32
  }
  func.func @transform_1(%arg0: i32, %arg1: i32, %arg2: i32) -> (i32, i32) {
    %c0_i32 = arith.constant 0 : i32
    return %arg2, %arg1 : i32, i32
  }
  func.func @transform_2(%arg0: i32, %arg1: i32, %arg2: i32) -> (i32, i32) {
    %c0_i32 = arith.constant 0 : i32
    return %arg0, %arg1 : i32, i32
  }
}

module attributes {stable_mosaic.version = 11 : i64} {
  func.func @_composite_kernel(%arg0: i32, %arg1: memref<1x16x256xf32, #tpu.memory_space<vmem>>, %arg2: memref<1x3x256xf32, #tpu.memory_space<vmem>>, %arg3: memref<1x3x256xf32, #tpu.memory_space<vmem>>) attributes {dimension_semantics = [#tpu.dimension_semantics<parallel>], iteration_bounds = array<i64: 2>, scalar_prefetch = 0 : i64, scratch_operands = 0 : i64, tpu.core_type = #tpu.core_type<tc>, window_params = [{transform_indices = @transform_0, window_bounds = array<i64: 1, 16, 256>}, {transform_indices = @transform_1, window_bounds = array<i64: 1, 3, 256>}, {transform_indices = @transform_2, window_bounds = array<i64: 1, 3, 256>}]} {
    %c0 = arith.constant 0 : index
    %c0_0 = arith.constant 0 : index
    %c0_1 = arith.constant 0 : index
    %0 = vector.load %arg1[%c0, %c0_0, %c0_1] : memref<1x16x256xf32, #tpu.memory_space<vmem>>, vector<1x16x256xf32>
    %c0_2 = arith.constant 0 : index
    %c0_3 = arith.constant 0 : index
    %c0_4 = arith.constant 0 : index
    %1 = vector.load %arg2[%c0_2, %c0_3, %c0_4] : memref<1x3x256xf32, #tpu.memory_space<vmem>>, vector<1x3x256xf32>
    %2 = vector.extract_strided_slice %0 {offsets = [0, 0, 0], sizes = [1, 3, 256], strides = [1, 1, 1]} : vector<1x16x256xf32> to vector<1x3x256xf32>
    %3 = vector.extract_strided_slice %0 {offsets = [0, 3, 0], sizes = [1, 1, 256], strides = [1, 1, 1]} : vector<1x16x256xf32> to vector<1x1x256xf32>
    %cst = arith.constant 1.000000e+00 : f32
    %4 = vector.broadcast %cst : f32 to vector<1x1x256xf32>
    %5 = arith.subf %4, %3 : vector<1x1x256xf32>
    %6 = vector.broadcast %5 : vector<1x1x256xf32> to vector<1x3x256xf32>
    %7 = arith.mulf %6, %1 : vector<1x3x256xf32>
    %8 = vector.broadcast %3 : vector<1x1x256xf32> to vector<1x3x256xf32>
    %9 = arith.mulf %8, %2 : vector<1x3x256xf32>
    %10 = arith.addf %7, %9 : vector<1x3x256xf32>
    %11 = vector.extract_strided_slice %0 {offsets = [0, 4, 0], sizes = [1, 3, 256], strides = [1, 1, 1]} : vector<1x16x256xf32> to vector<1x3x256xf32>
    %12 = vector.extract_strided_slice %0 {offsets = [0, 7, 0], sizes = [1, 1, 256], strides = [1, 1, 1]} : vector<1x16x256xf32> to vector<1x1x256xf32>
    %cst_5 = arith.constant 1.000000e+00 : f32
    %13 = vector.broadcast %cst_5 : f32 to vector<1x1x256xf32>
    %14 = arith.subf %13, %12 : vector<1x1x256xf32>
    %15 = vector.broadcast %14 : vector<1x1x256xf32> to vector<1x3x256xf32>
    %16 = arith.mulf %15, %10 : vector<1x3x256xf32>
    %17 = vector.broadcast %12 : vector<1x1x256xf32> to vector<1x3x256xf32>
    %18 = arith.mulf %17, %11 : vector<1x3x256xf32>
    %19 = arith.addf %16, %18 : vector<1x3x256xf32>
    %20 = vector.extract_strided_slice %0 {offsets = [0, 8, 0], sizes = [1, 3, 256], strides = [1, 1, 1]} : vector<1x16x256xf32> to vector<1x3x256xf32>
    %21 = vector.extract_strided_slice %0 {offsets = [0, 11, 0], sizes = [1, 1, 256], strides = [1, 1, 1]} : vector<1x16x256xf32> to vector<1x1x256xf32>
    %cst_6 = arith.constant 1.000000e+00 : f32
    %22 = vector.broadcast %cst_6 : f32 to vector<1x1x256xf32>
    %23 = arith.subf %22, %21 : vector<1x1x256xf32>
    %24 = vector.broadcast %23 : vector<1x1x256xf32> to vector<1x3x256xf32>
    %25 = arith.mulf %24, %19 : vector<1x3x256xf32>
    %26 = vector.broadcast %21 : vector<1x1x256xf32> to vector<1x3x256xf32>
    %27 = arith.mulf %26, %20 : vector<1x3x256xf32>
    %28 = arith.addf %25, %27 : vector<1x3x256xf32>
    %29 = vector.extract_strided_slice %0 {offsets = [0, 12, 0], sizes = [1, 3, 256], strides = [1, 1, 1]} : vector<1x16x256xf32> to vector<1x3x256xf32>
    %30 = vector.extract_strided_slice %0 {offsets = [0, 15, 0], sizes = [1, 1, 256], strides = [1, 1, 1]} : vector<1x16x256xf32> to vector<1x1x256xf32>
    %cst_7 = arith.constant 1.000000e+00 : f32
    %31 = vector.broadcast %cst_7 : f32 to vector<1x1x256xf32>
    %32 = arith.subf %31, %30 : vector<1x1x256xf32>
    %33 = vector.broadcast %32 : vector<1x1x256xf32> to vector<1x3x256xf32>
    %34 = arith.mulf %33, %28 : vector<1x3x256xf32>
    %35 = vector.broadcast %30 : vector<1x1x256xf32> to vector<1x3x256xf32>
    %36 = arith.mulf %35, %29 : vector<1x3x256xf32>
    %37 = arith.addf %34, %36 : vector<1x3x256xf32>
    %c0_8 = arith.constant 0 : index
    %c0_9 = arith.constant 0 : index
    %c0_10 = arith.constant 0 : index
    %38 = vector.load %arg3[%c0_8, %c0_9, %c0_10] : memref<1x3x256xf32, #tpu.memory_space<vmem>>, vector<1x3x256xf32>
    tpu.vector_store %arg3[%c0_8, %c0_9, %c0_10], %37 {strides = array<i32>} : memref<1x3x256xf32, #tpu.memory_space<vmem>>, vector<1x3x256xf32>,
    return
  }
  func.func @transform_0(%arg0: i32) -> (i32, i32, i32) {
    %c0_i32 = arith.constant 0 : i32
    %c0_i32_0 = arith.constant 0 : i32
    %c0_i32_1 = arith.constant 0 : i32
    return %arg0, %c0_i32, %c0_i32_0 : i32, i32, i32
  }
  func.func @transform_1(%arg0: i32) -> (i32, i32, i32) {
    %c0_i32 = arith.constant 0 : i32
    %c0_i32_0 = arith.constant 0 : i32
    %c0_i32_1 = arith.constant 0 : i32
    return %arg0, %c0_i32, %c0_i32_0 : i32, i32, i32
  }
  func.func @transform_2(%arg0: i32) -> (i32, i32, i32) {
    %c0_i32 = arith.constant 0 : i32
    %c0_i32_0 = arith.constant 0 : i32
    %c0_i32_1 = arith.constant 0 : i32
    return %arg0, %c0_i32, %c0_i32_0 : i32, i32, i32
  }
}

</mosaic_0001>

<llo_original>
// kernel: model_forward.51
$region0: #{model_forward.51}
  #allocation0 [shape = 'u32[]', space=smem, size = 0x4, offset = 0x4, fixed_abs, tag = 'smem constant byte address 0x4 - core index']
  #allocation1 [shape = 'u32[144,128]{1,0:T(1,128)}', space=vmem, size = 0x12000, scoped, tag = 'internal scratch']
  #allocation2 [shape = 'f32[256,128]{1,0:T(8,128)}', space=vmem, size = 0x20000, scoped, tag = 'scratch operand']
  %s0 = inlined_call_operand.vmem [shape: bf16[512,128], index: 0, kind: input, shape index: {}]
  %s1 = inlined_call_operand.vmem [shape: bf16[128,128], index: 1, kind: input, shape index: {}]
  %s2 = inlined_call_operand.vmem [shape: f32[512,128], index: 2, kind: output, shape index: {}]
  %s3 = sld [smem:[#allocation0]]
  $region49: #{model_forward.51} parent=0
    _
  %s5 = ssub.s32 1, %s3
  %s6 = scalar_select 0, %s5, %s3
  loop: start=0, step=1, limit=4
  $region2: #{model_forward.51} parent=0 // loop_pre_header
    _
  $region3: #{model_forward.51} parent=0 // loop_header
    %s8 = sphi 0, %s12
    %p9 = scmp.ge.s32.totalorder %s8, 4
    %s15 = sphi 0, %s34
    %s16 = sphi 0, %s30
    %s17 = sphi 0, %s26
    %s18 = sphi 0, %s15
    %s19 = sphi 0, %s16
    %s20 = sphi 0, %s17
    %s21 = sphi 0, %s18
    %s22 = sphi 0, %s19
    %s23 = sphi 0, %s20
    %s39 = sphi 0, %s41
    %s42 = sphi 0, %s39
    %s43 = sphi 0, %s42
    %s59 = sphi 0, %s43
    %s67 = sphi 0, %s69
    %s70 = sphi 0, %s67
    %s71 = sphi 0, %s70
    %s87 = sphi 0, %s71
    %s95 = sphi 0, %s97
    %s98 = sphi 0, %s95
    %s99 = sphi 0, %s98
    %s115 = sphi 0, %s99
  $region4: #{model_forward.51} parent=0 // loop_header_branch
    %11 = sbr.rel (%p9) target = $region8
  $region5: #{model_forward.51} parent=0 // loop_body
    %s13 = ssub.s32 %s8, 1
    %s14 = ssub.s32 %s8, 2
    %s24 = sadd.s32 1, %s17
    %p25 = scmp.ge.s32.totalorder %s24, 1
    %s26 = scalar_select %p25, 0, %s24
    %s27 = sadd.s32 1, %s16
    %s28 = scalar_select %p25, %s27, %s16
    %p29 = scmp.ge.s32.totalorder %s28, 1
    %s30 = scalar_select %p29, 0, %s28
    %s31 = sadd.s32 1, %s15
    %s32 = scalar_select %p29, %s31, %s15
    %p33 = scmp.ge.s32.totalorder %s32, 2
    %s34 = scalar_select %p33, 0, %s32
    %s35 = ssub.s32 %s15, %s34
    %s36 = ssub.s32 %s17, %s26
    %s37 = sor.u32 %s35, %s36
    %p38 = scmp.eq.s32.totalorder %s37, 0
    %s40 = sadd.s32 %s39, 1
    %s41 = scalar_select %p38, %s39, %s40
    %p44 = pneg %p38
    %p45 = scmp.eq.s32.totalorder %s8, 1
    %p46 = por %p44, %p45
    %p47 = scmp.ne.s32.totalorder %s39, %s42
    %p48 = scmp.eq.s32.totalorder %s8, 0
    %p49 = por %p47, %p48
    %p50 = scmp.ne.s32.totalorder %s39, %s42
    %p51 = scmp.eq.s32.totalorder %s13, 1
    %p52 = por %p50, %p51
    %p53 = scmp.ne.s32.totalorder %s42, %s43
    %p54 = scmp.eq.s32.totalorder %s13, 0
    %p55 = por %p53, %p54
    %p56 = scmp.ne.s32.totalorder %s42, %s43
    %p57 = scmp.eq.s32.totalorder %s14, 1
    %p58 = por %p56, %p57
    %p60 = scmp.ne.s32.totalorder %s43, %s59
    %p61 = scmp.eq.s32.totalorder %s14, 0
    %p62 = por %p60, %p61
    %s63 = ssub.s32 %s17, %s26
    %s64 = ssub.s32 %s16, %s30
    %s65 = sor.u32 %s63, %s64
    %p66 = scmp.eq.s32.totalorder %s65, 0
    %s68 = sadd.s32 %s67, 1
    %s69 = scalar_select %p66, %s67, %s68
    %p72 = pneg %p66
    %p73 = scmp.eq.s32.totalorder %s8, 1
    %p74 = por %p72, %p73
    %p75 = scmp.ne.s32.totalorder %s67, %s70
    %p76 = scmp.eq.s32.totalorder %s8, 0
    %p77 = por %p75, %p76
    %p78 = scmp.ne.s32.totalorder %s67, %s70
    %p79 = scmp.eq.s32.totalorder %s13, 1
    %p80 = por %p78, %p79
    %p81 = scmp.ne.s32.totalorder %s70, %s71
    %p82 = scmp.eq.s32.totalorder %s13, 0
    %p83 = por %p81, %p82
    %p84 = scmp.ne.s32.totalorder %s70, %s71
    %p85 = scmp.eq.s32.totalorder %s14, 1
    %p86 = por %p84, %p85
    %p88 = scmp.ne.s32.totalorder %s71, %s87
    %p89 = scmp.eq.s32.totalorder %s14, 0
    %p90 = por %p88, %p89
    %s91 = ssub.s32 %s15, %s34
    %s92 = ssub.s32 %s16, %s30
    %s93 = sor.u32 %s91, %s92
    %p94 = scmp.eq.s32.totalorder %s93, 0
    %s96 = sadd.s32 %s95, 1
    %s97 = scalar_select %p94, %s95, %s96
    %p100 = pneg %p94
    %p101 = scmp.eq.s32.totalorder %s8, 1
    %p102 = por %p100, %p101
    %p103 = scmp.ne.s32.totalorder %s95, %s98
    %p104 = scmp.eq.s32.totalorder %s8, 0
    %p105 = por %p103, %p104
    %p106 = scmp.ne.s32.totalorder %s95, %s98
    %p107 = scmp.eq.s32.totalorder %s13, 1
    %p108 = por %p106, %p107
    %p109 = scmp.ne.s32.totalorder %s98, %s99
    %p110 = scmp.eq.s32.totalorder %s13, 0
    %p111 = por %p109, %p110
    %p112 = scmp.ne.s32.totalorder %s98, %s99
    %p113 = scmp.eq.s32.totalorder %s14, 1
    %p114 = por %p112, %p113
    %p116 = scmp.ne.s32.totalorder %s99, %s115
    %p117 = scmp.eq.s32.totalorder %s14, 0
    %p118 = por %p116, %p117
    %p119 = scmp.le.s32.totalorder 1, %s8
    %p120 = scmp.lt.s32.totalorder %s8, 3
    %p121 = pnand %p119, %p120
    %p122 = pneg %p121
    // Predicated region
    $region9: #{model_forward.51} parent=5 // pred_check
      _
    $region10: #{model_forward.51} parent=5 // pred_check_branch
      %124 = sbr.rel (%p121) target = $region12
    $region11: #{model_forward.51} parent=5 // pred_region
      %s125 = ssub.s32 %s8, 1
      // Predicated region
      $region13: #{model_forward.51} parent=11 // pred_check
        %p126 = pneg %p83
      $region14: #{model_forward.51} parent=11 // pred_check_branch
        %128 = sbr.rel (%p126) target = $region16
      $region15: #{model_forward.51} parent=11 // pred_region
        %s129 = smul.u32 16, %s20
        %p130 = scmp.lt.s32.totalorder %s129, 15
        %s131 = scalar_select %p130, %s129, 15
        %p132 = scmp.lt.s32.totalorder %s19, 0
        %s133 = scalar_select %p132, %s19, 0
        %s134 = sadd.s32 %s133, %s131
        %s135 = smul.addr %s134, 4
        %s136 = scalar_lea.vmem %s1, %s135
        %s137 = smul.u32 16, %s20
      $region16: #{model_forward.51} parent=11 // pred_fallthru
        _
    $region12: #{model_forward.51} parent=5 // pred_fallthru
      _
    %p138 = scmp.lt.s32.totalorder %s8, 2
    // Predicated region
    $region17: #{model_forward.51} parent=5 // pred_check
      %p139 = pneg %p138
    $region18: #{model_forward.51} parent=5 // pred_check_branch
      %141 = sbr.rel (%p139) target = $region20
    $region19: #{model_forward.51} parent=5 // pred_region
      // Predicated region
      $region21: #{model_forward.51} parent=19 // pred_check
        %p142 = pneg %p49
      $region22: #{model_forward.51} parent=19 // pred_check_branch
        %144 = sbr.rel (%p142) target = $region24
      $region23: #{model_forward.51} parent=19 // pred_region
        %s145 = smul.u32 32, %s15
        %p146 = scmp.lt.s32.totalorder %s145, 63
        %s147 = scalar_select %p146, %s145, 63
        %p148 = scmp.lt.s32.totalorder %s17, 0
        %s149 = scalar_select %p148, %s17, 0
        %s150 = sadd.s32 %s149, %s147
        %s151 = smul.addr %s150, 4
        %s152 = scalar_lea.vmem %s0, %s151
        %s153 = smul.u32 32, %s15
      $region24: #{model_forward.51} parent=19 // pred_fallthru
        _
    $region20: #{model_forward.51} parent=5 // pred_fallthru
      _
    %p154 = scmp.le.s32.totalorder 1, %s8
    %p155 = scmp.lt.s32.totalorder %s8, 3
    %p156 = pnand %p154, %p155
    %p157 = pneg %p156
    // Predicated region
    $region25: #{model_forward.51} parent=5 // pred_check
      _
    $region26: #{model_forward.51} parent=5 // pred_check_branch
      %159 = sbr.rel (%p156) target = $region28
    $region27: #{model_forward.51} parent=5 // pred_region
      %s160 = ssub.s32 %s8, 1
      %s161 = smul.u32 32, %s18
      %p162 = scmp.lt.s32.totalorder %s161, 63
      %s163 = scalar_select %p162, %s161, 63
      %p164 = scmp.lt.s32.totalorder %s20, 0
      %s165 = scalar_select %p164, %s20, 0
      %s166 = sadd.s32 %s165, %s163
      %s167 = smul.addr %s166, 4
      %s168 = scalar_lea.vmem %s0, %s167
      %p169 = pneg %p55
      %p170 = pneg %p52
      %s171 = smul.u32 16, %s20
      %p172 = scmp.lt.s32.totalorder %s171, 15
      %s173 = scalar_select %p172, %s171, 15
      %p174 = scmp.lt.s32.totalorder %s19, 0
      %s175 = scalar_select %p174, %s19, 0
      %s176 = sadd.s32 %s175, %s173
      %s177 = smul.addr %s176, 4
      %s178 = scalar_lea.vmem %s1, %s177
      %p179 = pneg %p83
      %p180 = pneg %p80
      %p181 = pneg %p111
      %p182 = pneg %p108
      %s183 = smul.u32 32, %s18
      %p184 = scmp.lt.s32.totalorder %s183, 63
      %s185 = scalar_select %p184, %s183, 63
      %p186 = scmp.lt.s32.totalorder %s19, 0
      %s187 = scalar_select %p186, %s19, 0
      %s188 = sadd.s32 %s187, %s185
      %s189 = smul.addr %s188, 8
      %s190 = scalar_lea.vmem %s2, %s189
      %s191 = smul.u32 32, %s18
      %p192 = scmp.lt.s32.totalorder %s191, 63
      %s193 = scalar_select %p192, %s191, 63
      %p194 = scmp.lt.s32.totalorder %s20, 0
      %s195 = scalar_select %p194, %s20, 0
      %s196 = sadd.s32 %s195, %s193
      %s197 = smul.addr %s196, 4
      %s198 = scalar_lea.vmem %s0, %s197
      %s199 = smul.u32 32, %s18
      %s200 = smul.u32 16, %s20
      %p201 = scmp.lt.s32.totalorder %s200, 15
      %s202 = scalar_select %p201, %s200, 15
      %p203 = scmp.lt.s32.totalorder %s19, 0
      %s204 = scalar_select %p203, %s19, 0
      %s205 = sadd.s32 %s204, %s202
      %s206 = smul.addr %s205, 4
      %s207 = scalar_lea.vmem %s1, %s206
      %s208 = smul.u32 16, %s20
      %s209 = smul.u32 32, %s18
      %p210 = scmp.lt.s32.totalorder %s209, 63
      %s211 = scalar_select %p210, %s209, 63
      %p212 = scmp.lt.s32.totalorder %s19, 0
      %s213 = scalar_select %p212, %s19, 0
      %s214 = sadd.s32 %s213, %s211
      %s215 = smul.addr %s214, 8
      %s216 = scalar_lea.vmem %s2, %s215
      %s217 = smul.u32 32, %s18
      %p219 = scmp.eq.s32.totalorder %s20, 0
      // Predicated region
      $region29: #{model_forward.51} parent=27 // pred_check
        %p220 = pneg %p219
      $region30: #{model_forward.51} parent=27 // pred_check_branch
        %222 = sbr.rel (%p220) target = $region32
      $region31: #{model_forward.51} parent=27 // pred_region
        %223 = vst [vmem:[#allocation2] sm:$0xff] 0.0
        %224 = vst [vmem:[#allocation2 + $0x8] sm:$0xff] 0.0
        %225 = vst [vmem:[#allocation2 + $0x10] sm:$0xff] 0.0
        %226 = vst [vmem:[#allocation2 + $0x18] sm:$0xff] 0.0
        %227 = vst [vmem:[#allocation2 + $0x20] sm:$0xff] 0.0
        %228 = vst [vmem:[#allocation2 + $0x28] sm:$0xff] 0.0
        %229 = vst [vmem:[#allocation2 + $0x30] sm:$0xff] 0.0
        %230 = vst [vmem:[#allocation2 + $0x38] sm:$0xff] 0.0
        %231 = vst [vmem:[#allocation2 + $0x40] sm:$0xff] 0.0
        %232 = vst [vmem:[#allocation2 + $0x48] sm:$0xff] 0.0
        %233 = vst [vmem:[#allocation2 + $0x50] sm:$0xff] 0.0
        %234 = vst [vmem:[#allocation2 + $0x58] sm:$0xff] 0.0
        %235 = vst [vmem:[#allocation2 + $0x60] sm:$0xff] 0.0
        %236 = vst [vmem:[#allocation2 + $0x68] sm:$0xff] 0.0
        %237 = vst [vmem:[#allocation2 + $0x70] sm:$0xff] 0.0
        %238 = vst [vmem:[#allocation2 + $0x78] sm:$0xff] 0.0
        %239 = vst [vmem:[#allocation2 + $0x80] sm:$0xff] 0.0
        %240 = vst [vmem:[#allocation2 + $0x88] sm:$0xff] 0.0
        %241 = vst [vmem:[#allocation2 + $0x90] sm:$0xff] 0.0
        %242 = vst [vmem:[#allocation2 + $0x98] sm:$0xff] 0.0
        %243 = vst [vmem:[#allocation2 + $0xa0] sm:$0xff] 0.0
        %244 = vst [vmem:[#allocation2 + $0xa8] sm:$0xff] 0.0
        %245 = vst [vmem:[#allocation2 + $0xb0] sm:$0xff] 0.0
        %246 = vst [vmem:[#allocation2 + $0xb8] sm:$0xff] 0.0
        %247 = vst [vmem:[#allocation2 + $0xc0] sm:$0xff] 0.0
        %248 = vst [vmem:[#allocation2 + $0xc8] sm:$0xff] 0.0
        %249 = vst [vmem:[#allocation2 + $0xd0] sm:$0xff] 0.0
        %250 = vst [vmem:[#allocation2 + $0xd8] sm:$0xff] 0.0
        %251 = vst [vmem:[#allocation2 + $0xe0] sm:$0xff] 0.0
        %252 = vst [vmem:[#allocation2 + $0xe8] sm:$0xff] 0.0
        %253 = vst [vmem:[#allocation2 + $0xf0] sm:$0xff] 0.0
        %254 = vst [vmem:[#allocation2 + $0xf8] sm:$0xff] 0.0
      $region32: #{model_forward.51} parent=27 // pred_fallthru
        _
      %v255 = vld [vmem:[#allocation2] sm:$0xff]
      %v256 = vld [vmem:[#allocation2 + $0x8] sm:$0xff]
      %v257 = vld [vmem:[#allocation2 + $0x10] sm:$0xff]
      %v258 = vld [vmem:[#allocation2 + $0x18] sm:$0xff]
      %v259 = vld [vmem:[#allocation2 + $0x20] sm:$0xff]
      %v260 = vld [vmem:[#allocation2 + $0x28] sm:$0xff]
      %v261 = vld [vmem:[#allocation2 + $0x30] sm:$0xff]
      %v262 = vld [vmem:[#allocation2 + $0x38] sm:$0xff]
      %v263 = vld [vmem:[#allocation2 + $0x40] sm:$0xff]
      %v264 = vld [vmem:[#allocation2 + $0x48] sm:$0xff]
      %v265 = vld [vmem:[#allocation2 + $0x50] sm:$0xff]
      %v266 = vld [vmem:[#allocation2 + $0x58] sm:$0xff]
      %v267 = vld [vmem:[#allocation2 + $0x60] sm:$0xff]
      %v268 = vld [vmem:[#allocation2 + $0x68] sm:$0xff]
      %v269 = vld [vmem:[#allocation2 + $0x70] sm:$0xff]
      %v270 = vld [vmem:[#allocation2 + $0x78] sm:$0xff]
      %v271 = vld [vmem:[#allocation2 + $0x80] sm:$0xff]
      %v272 = vld [vmem:[#allocation2 + $0x88] sm:$0xff]
      %v273 = vld [vmem:[#allocation2 + $0x90] sm:$0xff]
      %v274 = vld [vmem:[#allocation2 + $0x98] sm:$0xff]
      %v275 = vld [vmem:[#allocation2 + $0xa0] sm:$0xff]
      %v276 = vld [vmem:[#allocation2 + $0xa8] sm:$0xff]
      %v277 = vld [vmem:[#allocation2 + $0xb0] sm:$0xff]
      %v278 = vld [vmem:[#allocation2 + $0xb8] sm:$0xff]
      %v279 = vld [vmem:[#allocation2 + $0xc0] sm:$0xff]
      %v280 = vld [vmem:[#allocation2 + $0xc8] sm:$0xff]
      %v281 = vld [vmem:[#allocation2 + $0xd0] sm:$0xff]
      %v282 = vld [vmem:[#allocation2 + $0xd8] sm:$0xff]
      %v283 = vld [vmem:[#allocation2 + $0xe0] sm:$0xff]
      %v284 = vld [vmem:[#allocation2 + $0xe8] sm:$0xff]
      %v285 = vld [vmem:[#allocation2 + $0xf0] sm:$0xff]
      %v286 = vld [vmem:[#allocation2 + $0xf8] sm:$0xff]
      %v287 = vld [vmem:[%s198] sm:$0xf]
      %v288 = vld [vmem:[%s198 + $0x4] sm:$0xf]
      %v289 = vld [vmem:[%s198 + $0x8] sm:$0xf]
      %v290 = vld [vmem:[%s198 + $0xc] sm:$0xf]
      %v291 = vld [vmem:[%s198 + $0x10] sm:$0xf]
      %v292 = vld [vmem:[%s198 + $0x14] sm:$0xf]
      %v293 = vld [vmem:[%s198 + $0x18] sm:$0xf]
      %v294 = vld [vmem:[%s198 + $0x1c] sm:$0xf]
      %v295 = vld [vmem:[%s198 + $0x20] sm:$0xf]
      %v296 = vld [vmem:[%s198 + $0x24] sm:$0xf]
      %v297 = vld [vmem:[%s198 + $0x28] sm:$0xf]
      %v298 = vld [vmem:[%s198 + $0x2c] sm:$0xf]
      %v299 = vld [vmem:[%s198 + $0x30] sm:$0xf]
      %v300 = vld [vmem:[%s198 + $0x34] sm:$0xf]
      %v301 = vld [vmem:[%s198 + $0x38] sm:$0xf]
      %v302 = vld [vmem:[%s198 + $0x3c] sm:$0xf]
      %v303 = vld [vmem:[%s198 + $0x40] sm:$0xf]
      %v304 = vld [vmem:[%s198 + $0x44] sm:$0xf]
      %v305 = vld [vmem:[%s198 + $0x48] sm:$0xf]
      %v306 = vld [vmem:[%s198 + $0x4c] sm:$0xf]
      %v307 = vld [vmem:[%s198 + $0x50] sm:$0xf]
      %v308 = vld [vmem:[%s198 + $0x54] sm:$0xf]
      %v309 = vld [vmem:[%s198 + $0x58] sm:$0xf]
      %v310 = vld [vmem:[%s198 + $0x5c] sm:$0xf]
      %v311 = vld [vmem:[%s198 + $0x60] sm:$0xf]
      %v312 = vld [vmem:[%s198 + $0x64] sm:$0xf]
      %v313 = vld [vmem:[%s198 + $0x68] sm:$0xf]
      %v314 = vld [vmem:[%s198 + $0x6c] sm:$0xf]
      %v315 = vld [vmem:[%s198 + $0x70] sm:$0xf]
      %v316 = vld [vmem:[%s198 + $0x74] sm:$0xf]
      %v317 = vld [vmem:[%s198 + $0x78] sm:$0xf]
      %v318 = vld [vmem:[%s198 + $0x7c] sm:$0xf]
      %v319 = vld [vmem:[%s207] sm:$0xf]
      %v320 = vld [vmem:[%s207 + $0x4] sm:$0xf]
      %v321 = vld [vmem:[%s207 + $0x8] sm:$0xf]
      %v322 = vld [vmem:[%s207 + $0xc] sm:$0xf]
      %v323 = vld [vmem:[%s207 + $0x10] sm:$0xf]
      %v324 = vld [vmem:[%s207 + $0x14] sm:$0xf]
      %v325 = vld [vmem:[%s207 + $0x18] sm:$0xf]
      %v326 = vld [vmem:[%s207 + $0x1c] sm:$0xf]
      %v327 = vld [vmem:[%s207 + $0x20] sm:$0xf]
      %v328 = vld [vmem:[%s207 + $0x24] sm:$0xf]
      %v329 = vld [vmem:[%s207 + $0x28] sm:$0xf]
      %v330 = vld [vmem:[%s207 + $0x2c] sm:$0xf]
      %v331 = vld [vmem:[%s207 + $0x30] sm:$0xf]
      %v332 = vld [vmem:[%s207 + $0x34] sm:$0xf]
      %v333 = vld [vmem:[%s207 + $0x38] sm:$0xf]
      %v334 = vld [vmem:[%s207 + $0x3c] sm:$0xf]
      %v367 = vunpack.c.l.b16 %v287
      %v368 = vunpack.c.l.b16 %v288
      %v369 = vunpack.c.l.b16 %v289
      %v370 = vunpack.c.l.b16 %v290
      %v371 = vunpack.c.l.b16 %v291
      %v372 = vunpack.c.l.b16 %v292
      %v373 = vunpack.c.l.b16 %v293
      %v374 = vunpack.c.l.b16 %v294
      %v375 = vunpack.c.l.b16 %v295
      %v376 = vunpack.c.l.b16 %v296
      %v377 = vunpack.c.l.b16 %v297
      %v378 = vunpack.c.l.b16 %v298
      %v379 = vunpack.c.l.b16 %v299
      %v380 = vunpack.c.l.b16 %v300
      %v381 = vunpack.c.l.b16 %v301
      %v382 = vunpack.c.l.b16 %v302
      %v383 = vunpack.c.l.b16 %v303
      %v384 = vunpack.c.l.b16 %v304
      %v385 = vunpack.c.l.b16 %v305
      %v386 = vunpack.c.l.b16 %v306
      %v387 = vunpack.c.l.b16 %v307
      %v388 = vunpack.c.l.b16 %v308
      %v389 = vunpack.c.l.b16 %v309
      %v390 = vunpack.c.l.b16 %v310
      %v391 = vunpack.c.l.b16 %v311
      %v392 = vunpack.c.l.b16 %v312
      %v393 = vunpack.c.l.b16 %v313
      %v394 = vunpack.c.l.b16 %v314
      %v395 = vunpack.c.l.b16 %v315
      %v396 = vunpack.c.l.b16 %v316
      %v397 = vunpack.c.l.b16 %v317
      %v398 = vunpack.c.l.b16 %v318
      %v399 = vpack.c.b16 %v368, %v367
      %v400 = vpack.c.b16 %v370, %v369
      %v401 = vpack.c.b16 %v372, %v371
      %v402 = vpack.c.b16 %v374, %v373
      %v403 = vpack.c.b16 %v376, %v375
      %v404 = vpack.c.b16 %v378, %v377
      %v405 = vpack.c.b16 %v380, %v379
      %v406 = vpack.c.b16 %v382, %v381
      %v407 = vpack.c.b16 %v384, %v383
      %v408 = vpack.c.b16 %v386, %v385
      %v409 = vpack.c.b16 %v388, %v387
      %v410 = vpack.c.b16 %v390, %v389
      %v411 = vpack.c.b16 %v392, %v391
      %v412 = vpack.c.b16 %v394, %v393
      %v413 = vpack.c.b16 %v396, %v395
      %v414 = vpack.c.b16 %v398, %v397
      %v447 = vunpack.c.l.b16 %v319
      %v448 = vunpack.c.l.b16 %v320
      %v449 = vunpack.c.l.b16 %v321
      %v450 = vunpack.c.l.b16 %v322
      %v451 = vunpack.c.l.b16 %v323
      %v452 = vunpack.c.l.b16 %v324
      %v453 = vunpack.c.l.b16 %v325
      %v454 = vunpack.c.l.b16 %v326
      %v455 = vunpack.c.l.b16 %v327
      %v456 = vunpack.c.l.b16 %v328
      %v457 = vunpack.c.l.b16 %v329
      %v458 = vunpack.c.l.b16 %v330
      %v459 = vunpack.c.l.b16 %v331
      %v460 = vunpack.c.l.b16 %v332
      %v461 = vunpack.c.l.b16 %v333
      %v462 = vunpack.c.l.b16 %v334
      %v463 = vpack.c.b16 %v448, %v447
      %v464 = vpack.c.b16 %v450, %v449
      %v465 = vpack.c.b16 %v452, %v451
      %v466 = vpack.c.b16 %v454, %v453
      %v467 = vpack.c.b16 %v456, %v455
      %v468 = vpack.c.b16 %v458, %v457
      %v469 = vpack.c.b16 %v460, %v459
      %v470 = vpack.c.b16 %v462, %v461
      %479 = vmatprep.subr.bf16.mxu0 0
      %480 = vmatpush1.bf16.msra.mxu0 %v470
      %481 = vmatprep.subr.bf16.mxu0 0
      %482 = vmatpush1.bf16.msra.mxu0 %v469
      %483 = vmatprep.subr.bf16.mxu0 0
      %484 = vmatpush1.bf16.msra.mxu0 %v468
      %485 = vmatprep.subr.bf16.mxu0 0
      %486 = vmatpush1.bf16.msra.mxu0 %v467
      %487 = vmatprep.subr.bf16.mxu0 0
      %488 = vmatpush1.bf16.msra.mxu0 %v466
      %489 = vmatprep.subr.bf16.mxu0 0
      %490 = vmatpush1.bf16.msra.mxu0 %v465
      %491 = vmatprep.subr.bf16.mxu0 0
      %492 = vmatpush1.bf16.msra.mxu0 %v464
      %493 = vmatprep.subr.bf16.mxu0 0
      %494 = vmatpush1.bf16.msra.mxu0 %v463
      %495 = vmatprep.subr.bf16.mxu0 0
      %496 = vmatpush2.bf16.msra.mxu0 0
      %497 = vmatprep.subr.bf16.mxu0 0
      %498 = vmatpush2.bf16.msra.mxu0 0
      %499 = vmatprep.subr.bf16.mxu0 0
      %500 = vmatpush2.bf16.msra.mxu0 0
      %501 = vmatprep.subr.bf16.mxu0 0
      %502 = vmatpush2.bf16.msra.mxu0 0
      %503 = vmatprep.subr.bf16.mxu0 0
      %504 = vmatpush2.bf16.msra.mxu0 0
      %505 = vmatprep.subr.bf16.mxu0 0
      %506 = vmatpush2.bf16.msra.mxu0 0
      %507 = vmatprep.subr.bf16.mxu0 0
      %508 = vmatpush2.bf16.msra.mxu0 0
      %509 = vmatprep.subr.bf16.mxu0 0
      %510 = vmatpush2.bf16.msra.mxu0 0
      %511 = vmatprep.mubr.bf16.mxu0 0
      %512 = vmatmul.mubr.bf16.gmra.mxu0 %v399
      %v513 = vpop.f32.mrf.mxu0
      %v514 = vadd.f32 0.0, %v513
      %v515 = vpop.f32.mrf.mxu0
      %v516 = vpop.f32.mrf.mxu0
      %v517 = vadd.f32 0.0, %v516
      %v518 = vpop.f32.mrf.mxu0
      %519 = vmatprep.mubr.bf16.mxu0 0
      %520 = vmatmul.mubr.bf16.gmra.mxu0 %v400
      %v521 = vpop.f32.mrf.mxu0
      %v522 = vadd.f32 0.0, %v521
      %v523 = vpop.f32.mrf.mxu0
      %v524 = vpop.f32.mrf.mxu0
      %v525 = vadd.f32 0.0, %v524
      %v526 = vpop.f32.mrf.mxu0
      %527 = vmatprep.mubr.bf16.mxu0 0
      %528 = vmatmul.mubr.bf16.gmra.mxu0 %v401
      %v529 = vpop.f32.mrf.mxu0
      %v530 = vadd.f32 0.0, %v529
      %v531 = vpop.f32.mrf.mxu0
      %v532 = vpop.f32.mrf.mxu0
      %v533 = vadd.f32 0.0, %v532
      %v534 = vpop.f32.mrf.mxu0
      %535 = vmatprep.mubr.bf16.mxu0 0
      %536 = vmatmul.mubr.bf16.gmra.mxu0 %v402
      %v537 = vpop.f32.mrf.mxu0
      %v538 = vadd.f32 0.0, %v537
      %v539 = vpop.f32.mrf.mxu0
      %v540 = vpop.f32.mrf.mxu0
      %v541 = vadd.f32 0.0, %v540
      %v542 = vpop.f32.mrf.mxu0
      %543 = vmatprep.mubr.bf16.mxu0 0
      %544 = vmatmul.mubr.bf16.gmra.mxu0 %v403
      %v545 = vpop.f32.mrf.mxu0
      %v546 = vadd.f32 0.0, %v545
      %v547 = vpop.f32.mrf.mxu0
      %v548 = vpop.f32.mrf.mxu0
      %v549 = vadd.f32 0.0, %v548
      %v550 = vpop.f32.mrf.mxu0
      %551 = vmatprep.mubr.bf16.mxu0 0
      %552 = vmatmul.mubr.bf16.gmra.mxu0 %v404
      %v553 = vpop.f32.mrf.mxu0
      %v554 = vadd.f32 0.0, %v553
      %v555 = vpop.f32.mrf.mxu0
      %v556 = vpop.f32.mrf.mxu0
      %v557 = vadd.f32 0.0, %v556
      %v558 = vpop.f32.mrf.mxu0
      %559 = vmatprep.mubr.bf16.mxu0 0
      %560 = vmatmul.mubr.bf16.gmra.mxu0 %v405
      %v561 = vpop.f32.mrf.mxu0
      %v562 = vadd.f32 0.0, %v561
      %v563 = vpop.f32.mrf.mxu0
      %v564 = vpop.f32.mrf.mxu0
      %v565 = vadd.f32 0.0, %v564
      %v566 = vpop.f32.mrf.mxu0
      %567 = vmatprep.mubr.bf16.mxu0 0
      %568 = vmatmul.mubr.bf16.gmra.mxu0 %v406
      %v569 = vpop.f32.mrf.mxu0
      %v570 = vadd.f32 0.0, %v569
      %v571 = vpop.f32.mrf.mxu0
      %v572 = vpop.f32.mrf.mxu0
      %v573 = vadd.f32 0.0, %v572
      %v574 = vpop.f32.mrf.mxu0
      %575 = vmatprep.mubr.bf16.mxu0 0
      %576 = vmatmul.mubr.bf16.gmra.mxu0 %v407
      %v577 = vpop.f32.mrf.mxu0
      %v578 = vadd.f32 0.0, %v577
      %v579 = vpop.f32.mrf.mxu0
      %v580 = vpop.f32.mrf.mxu0
      %v581 = vadd.f32 0.0, %v580
      %v582 = vpop.f32.mrf.mxu0
      %583 = vmatprep.mubr.bf16.mxu0 0
      %584 = vmatmul.mubr.bf16.gmra.mxu0 %v408
      %v585 = vpop.f32.mrf.mxu0
      %v586 = vadd.f32 0.0, %v585
      %v587 = vpop.f32.mrf.mxu0
      %v588 = vpop.f32.mrf.mxu0
      %v589 = vadd.f32 0.0, %v588
      %v590 = vpop.f32.mrf.mxu0
      %591 = vmatprep.mubr.bf16.mxu0 0
      %592 = vmatmul.mubr.bf16.gmra.mxu0 %v409
      %v593 = vpop.f32.mrf.mxu0
      %v594 = vadd.f32 0.0, %v593
      %v595 = vpop.f32.mrf.mxu0
      %v596 = vpop.f32.mrf.mxu0
      %v597 = vadd.f32 0.0, %v596
      %v598 = vpop.f32.mrf.mxu0
      %599 = vmatprep.mubr.bf16.mxu0 0
      %600 = vmatmul.mubr.bf16.gmra.mxu0 %v410
      %v601 = vpop.f32.mrf.mxu0
      %v602 = vadd.f32 0.0, %v601
      %v603 = vpop.f32.mrf.mxu0
      %v604 = vpop.f32.mrf.mxu0
      %v605 = vadd.f32 0.0, %v604
      %v606 = vpop.f32.mrf.mxu0
      %607 = vmatprep.mubr.bf16.mxu0 0
      %608 = vmatmul.mubr.bf16.gmra.mxu0 %v411
      %v609 = vpop.f32.mrf.mxu0
      %v610 = vadd.f32 0.0, %v609
      %v611 = vpop.f32.mrf.mxu0
      %v612 = vpop.f32.mrf.mxu0
      %v613 = vadd.f32 0.0, %v612
      %v614 = vpop.f32.mrf.mxu0
      %615 = vmatprep.mubr.bf16.mxu0 0
      %616 = vmatmul.mubr.bf16.gmra.mxu0 %v412
      %v617 = vpop.f32.mrf.mxu0
      %v618 = vadd.f32 0.0, %v617
      %v619 = vpop.f32.mrf.mxu0
      %v620 = vpop.f32.mrf.mxu0
      %v621 = vadd.f32 0.0, %v620
      %v622 = vpop.f32.mrf.mxu0
      %623 = vmatprep.mubr.bf16.mxu0 0
      %624 = vmatmul.mubr.bf16.gmra.mxu0 %v413
      %v625 = vpop.f32.mrf.mxu0
      %v626 = vadd.f32 0.0, %v625
      %v627 = vpop.f32.mrf.mxu0
      %v628 = vpop.f32.mrf.mxu0
      %v629 = vadd.f32 0.0, %v628
      %v630 = vpop.f32.mrf.mxu0
      %631 = vmatprep.mubr.bf16.mxu0 0
      %632 = vmatmul.mubr.bf16.gmra.mxu0 %v414
      %v633 = vpop.f32.mrf.mxu0
      %v634 = vadd.f32 0.0, %v633
      %v635 = vpop.f32.mrf.mxu0
      %v636 = vpop.f32.mrf.mxu0
      %v637 = vadd.f32 0.0, %v636
      %v638 = vpop.f32.mrf.mxu0
      %639 = vdwg.mxu0
      %v640 = vadd.f32 %v255, %v514
      %v641 = vadd.f32 %v256, %v517
      %v642 = vadd.f32 %v257, %v522
      %v643 = vadd.f32 %v258, %v525
      %v644 = vadd.f32 %v259, %v530
      %v645 = vadd.f32 %v260, %v533
      %v646 = vadd.f32 %v261, %v538
      %v647 = vadd.f32 %v262, %v541
      %v648 = vadd.f32 %v263, %v546
      %v649 = vadd.f32 %v264, %v549
      %v650 = vadd.f32 %v265, %v554
      %v651 = vadd.f32 %v266, %v557
      %v652 = vadd.f32 %v267, %v562
      %v653 = vadd.f32 %v268, %v565
      %v654 = vadd.f32 %v269, %v570
      %v655 = vadd.f32 %v270, %v573
      %v656 = vadd.f32 %v271, %v578
      %v657 = vadd.f32 %v272, %v581
      %v658 = vadd.f32 %v273, %v586
      %v659 = vadd.f32 %v274, %v589
      %v660 = vadd.f32 %v275, %v594
      %v661 = vadd.f32 %v276, %v597
      %v662 = vadd.f32 %v277, %v602
      %v663 = vadd.f32 %v278, %v605
      %v664 = vadd.f32 %v279, %v610
      %v665 = vadd.f32 %v280, %v613
      %v666 = vadd.f32 %v281, %v618
      %v667 = vadd.f32 %v282, %v621
      %v668 = vadd.f32 %v283, %v626
      %v669 = vadd.f32 %v284, %v629
      %v670 = vadd.f32 %v285, %v634
      %v671 = vadd.f32 %v286, %v637
      %672 = vst [vmem:[#allocation2] sm:$0xff] %v640
      %673 = vst [vmem:[#allocation2 + $0x8] sm:$0xff] %v641
      %674 = vst [vmem:[#allocation2 + $0x10] sm:$0xff] %v642
      %675 = vst [vmem:[#allocation2 + $0x18] sm:$0xff] %v643
      %676 = vst [vmem:[#allocation2 + $0x20] sm:$0xff] %v644
      %677 = vst [vmem:[#allocation2 + $0x28] sm:$0xff] %v645
      %678 = vst [vmem:[#allocation2 + $0x30] sm:$0xff] %v646
      %679 = vst [vmem:[#allocation2 + $0x38] sm:$0xff] %v647
      %680 = vst [vmem:[#allocation2 + $0x40] sm:$0xff] %v648
      %681 = vst [vmem:[#allocation2 + $0x48] sm:$0xff] %v649
      %682 = vst [vmem:[#allocation2 + $0x50] sm:$0xff] %v650
      %683 = vst [vmem:[#allocation2 + $0x58] sm:$0xff] %v651
      %684 = vst [vmem:[#allocation2 + $0x60] sm:$0xff] %v652
      %685 = vst [vmem:[#allocation2 + $0x68] sm:$0xff] %v653
      %686 = vst [vmem:[#allocation2 + $0x70] sm:$0xff] %v654
      %687 = vst [vmem:[#allocation2 + $0x78] sm:$0xff] %v655
      %688 = vst [vmem:[#allocation2 + $0x80] sm:$0xff] %v656
      %689 = vst [vmem:[#allocation2 + $0x88] sm:$0xff] %v657
      %690 = vst [vmem:[#allocation2 + $0x90] sm:$0xff] %v658
      %691 = vst [vmem:[#allocation2 + $0x98] sm:$0xff] %v659
      %692 = vst [vmem:[#allocation2 + $0xa0] sm:$0xff] %v660
      %693 = vst [vmem:[#allocation2 + $0xa8] sm:$0xff] %v661
      %694 = vst [vmem:[#allocation2 + $0xb0] sm:$0xff] %v662
      %695 = vst [vmem:[#allocation2 + $0xb8] sm:$0xff] %v663
      %696 = vst [vmem:[#allocation2 + $0xc0] sm:$0xff] %v664
      %697 = vst [vmem:[#allocation2 + $0xc8] sm:$0xff] %v665
      %698 = vst [vmem:[#allocation2 + $0xd0] sm:$0xff] %v666
      %699 = vst [vmem:[#allocation2 + $0xd8] sm:$0xff] %v667
      %700 = vst [vmem:[#allocation2 + $0xe0] sm:$0xff] %v668
      %701 = vst [vmem:[#allocation2 + $0xe8] sm:$0xff] %v669
      %702 = vst [vmem:[#allocation2 + $0xf0] sm:$0xff] %v670
      %703 = vst [vmem:[#allocation2 + $0xf8] sm:$0xff] %v671
      // Predicated region
      $region33: #{model_forward.51} parent=27 // pred_check
        %p704 = pneg %p219
      $region34: #{model_forward.51} parent=27 // pred_check_branch
        %706 = sbr.rel (%p704) target = $region36
      $region35: #{model_forward.51} parent=27 // pred_region
        %v707 = vld [vmem:[#allocation2] sm:$0xff]
        %v708 = vld [vmem:[#allocation2 + $0x8] sm:$0xff]
        %v709 = vld [vmem:[#allocation2 + $0x10] sm:$0xff]
        %v710 = vld [vmem:[#allocation2 + $0x18] sm:$0xff]
        %v711 = vld [vmem:[#allocation2 + $0x20] sm:$0xff]
        %v712 = vld [vmem:[#allocation2 + $0x28] sm:$0xff]
        %v713 = vld [vmem:[#allocation2 + $0x30] sm:$0xff]
        %v714 = vld [vmem:[#allocation2 + $0x38] sm:$0xff]
        %v715 = vld [vmem:[#allocation2 + $0x40] sm:$0xff]
        %v716 = vld [vmem:[#allocation2 + $0x48] sm:$0xff]
        %v717 = vld [vmem:[#allocation2 + $0x50] sm:$0xff]
        %v718 = vld [vmem:[#allocation2 + $0x58] sm:$0xff]
        %v719 = vld [vmem:[#allocation2 + $0x60] sm:$0xff]
        %v720 = vld [vmem:[#allocation2 + $0x68] sm:$0xff]
        %v721 = vld [vmem:[#allocation2 + $0x70] sm:$0xff]
        %v722 = vld [vmem:[#allocation2 + $0x78] sm:$0xff]
        %v723 = vld [vmem:[#allocation2 + $0x80] sm:$0xff]
        %v724 = vld [vmem:[#allocation2 + $0x88] sm:$0xff]
        %v725 = vld [vmem:[#allocation2 + $0x90] sm:$0xff]
        %v726 = vld [vmem:[#allocation2 + $0x98] sm:$0xff]
        %v727 = vld [vmem:[#allocation2 + $0xa0] sm:$0xff]
        %v728 = vld [vmem:[#allocation2 + $0xa8] sm:$0xff]
        %v729 = vld [vmem:[#allocation2 + $0xb0] sm:$0xff]
        %v730 = vld [vmem:[#allocation2 + $0xb8] sm:$0xff]
        %v731 = vld [vmem:[#allocation2 + $0xc0] sm:$0xff]
        %v732 = vld [vmem:[#allocation2 + $0xc8] sm:$0xff]
        %v733 = vld [vmem:[#allocation2 + $0xd0] sm:$0xff]
        %v734 = vld [vmem:[#allocation2 + $0xd8] sm:$0xff]
        %v735 = vld [vmem:[#allocation2 + $0xe0] sm:$0xff]
        %v736 = vld [vmem:[#allocation2 + $0xe8] sm:$0xff]
        %v737 = vld [vmem:[#allocation2 + $0xf0] sm:$0xff]
        %v738 = vld [vmem:[#allocation2 + $0xf8] sm:$0xff]
        %739 = vst [vmem:[%s216] sm:$0xff] %v707
        %740 = vst [vmem:[%s216 + $0x8] sm:$0xff] %v708
        %741 = vst [vmem:[%s216 + $0x10] sm:$0xff] %v709
        %742 = vst [vmem:[%s216 + $0x18] sm:$0xff] %v710
        %743 = vst [vmem:[%s216 + $0x20] sm:$0xff] %v711
        %744 = vst [vmem:[%s216 + $0x28] sm:$0xff] %v712
        %745 = vst [vmem:[%s216 + $0x30] sm:$0xff] %v713
        %746 = vst [vmem:[%s216 + $0x38] sm:$0xff] %v714
        %747 = vst [vmem:[%s216 + $0x40] sm:$0xff] %v715
        %748 = vst [vmem:[%s216 + $0x48] sm:$0xff] %v716
        %749 = vst [vmem:[%s216 + $0x50] sm:$0xff] %v717
        %750 = vst [vmem:[%s216 + $0x58] sm:$0xff] %v718
        %751 = vst [vmem:[%s216 + $0x60] sm:$0xff] %v719
        %752 = vst [vmem:[%s216 + $0x68] sm:$0xff] %v720
        %753 = vst [vmem:[%s216 + $0x70] sm:$0xff] %v721
        %754 = vst [vmem:[%s216 + $0x78] sm:$0xff] %v722
        %755 = vst [vmem:[%s216 + $0x80] sm:$0xff] %v723
        %756 = vst [vmem:[%s216 + $0x88] sm:$0xff] %v724
        %757 = vst [vmem:[%s216 + $0x90] sm:$0xff] %v725
        %758 = vst [vmem:[%s216 + $0x98] sm:$0xff] %v726
        %759 = vst [vmem:[%s216 + $0xa0] sm:$0xff] %v727
        %760 = vst [vmem:[%s216 + $0xa8] sm:$0xff] %v728
        %761 = vst [vmem:[%s216 + $0xb0] sm:$0xff] %v729
        %762 = vst [vmem:[%s216 + $0xb8] sm:$0xff] %v730
        %763 = vst [vmem:[%s216 + $0xc0] sm:$0xff] %v731
        %764 = vst [vmem:[%s216 + $0xc8] sm:$0xff] %v732
        %765 = vst [vmem:[%s216 + $0xd0] sm:$0xff] %v733
        %766 = vst [vmem:[%s216 + $0xd8] sm:$0xff] %v734
        %767 = vst [vmem:[%s216 + $0xe0] sm:$0xff] %v735
        %768 = vst [vmem:[%s216 + $0xe8] sm:$0xff] %v736
        %769 = vst [vmem:[%s216 + $0xf0] sm:$0xff] %v737
        %770 = vst [vmem:[%s216 + $0xf8] sm:$0xff] %v738
      $region36: #{model_forward.51} parent=27 // pred_fallthru
        _
      %s771 = smul.u32 32, %s18
      %p772 = scmp.lt.s32.totalorder %s771, 63
      %s773 = scalar_select %p772, %s771, 63
      %p774 = scmp.lt.s32.totalorder %s19, 0
      %s775 = scalar_select %p774, %s19, 0
      %s776 = sadd.s32 %s775, %s773
      %s777 = smul.addr %s776, 8
      %s778 = scalar_lea.vmem %s2, %s777
      // Predicated region
      $region37: #{model_forward.51} parent=27 // pred_check
        %p779 = pneg %p108
      $region38: #{model_forward.51} parent=27 // pred_check_branch
        %781 = sbr.rel (%p779) target = $region40
      $region39: #{model_forward.51} parent=27 // pred_region
        %s782 = smul.u32 32, %s18
      $region40: #{model_forward.51} parent=27 // pred_fallthru
        _
    $region28: #{model_forward.51} parent=5 // pred_fallthru
      _
    %p783 = scmp.le.s32.totalorder 2, %s8
    // Predicated region
    $region41: #{model_forward.51} parent=5 // pred_check
      %p784 = pneg %p783
    $region42: #{model_forward.51} parent=5 // pred_check_branch
      %786 = sbr.rel (%p784) target = $region44
    $region43: #{model_forward.51} parent=5 // pred_region
      %s787 = ssub.s32 %s8, 2
      // Predicated region
      $region45: #{model_forward.51} parent=43 // pred_check
        %p788 = pneg %p114
      $region46: #{model_forward.51} parent=43 // pred_check_branch
        %790 = sbr.rel (%p788) target = $region48
      $region47: #{model_forward.51} parent=43 // pred_region
        %s791 = smul.u32 32, %s21
        %p792 = scmp.lt.s32.totalorder %s791, 63
        %s793 = scalar_select %p792, %s791, 63
        %p794 = scmp.lt.s32.totalorder %s22, 0
        %s795 = scalar_select %p794, %s22, 0
        %s796 = sadd.s32 %s795, %s793
        %s797 = smul.addr %s796, 8
        %s798 = scalar_lea.vmem %s2, %s797
      $region48: #{model_forward.51} parent=43 // pred_fallthru
        _
    $region44: #{model_forward.51} parent=5 // pred_fallthru
      _
  $region6: #{model_forward.51} parent=0 // loop_footer
    %s12 = sadd.s32 1, %s8
  $region7: #{model_forward.51} parent=0 // loop_footer_branch
    %7 = sbr.rel target = $region3
  $region8: #{model_forward.51} parent=0 // loop_exit
    _

// kernel: model_forward.33
$region0: #{model_forward.33}
  #allocation0 [shape = 'u32[]', space=smem, size = 0x4, offset = 0x4, fixed_abs, tag = 'smem constant byte address 0x4 - core index']
  #allocation1 [shape = 'u32[144,128]{1,0:T(1,128)}', space=vmem, size = 0x12000, scoped, tag = 'internal scratch']
  #allocation2 [shape = 'f32[128,128]{1,0:T(8,128)}', space=vmem, size = 0x10000, scoped, tag = 'scratch operand']
  %s0 = inlined_call_operand.vmem [shape: bf16[128,1152], index: 0, kind: input, shape index: {}]
  %s1 = inlined_call_operand.vmem [shape: bf16[1152,128], index: 1, kind: input, shape index: {}]
  %s2 = inlined_call_operand.vmem [shape: f32[128,128], index: 2, kind: output, shape index: {}]
  %s3 = sld [smem:[#allocation0]]
  $region90: #{model_forward.33} parent=0
    _
  %s5 = ssub.s32 1, %s3
  %s6 = scalar_select 0, %s5, %s3
  $region1: #{model_forward.33} parent=0
    #allocation3 [shape = 'u8[65536]{0}', space=vmem, size = 0x10000, scoped, tag = 'input window, operand 0']
    loop: start=0, step=1, limit=11
    $region2: #{model_forward.33} parent=1 // loop_pre_header
      _
    $region3: #{model_forward.33} parent=1 // loop_header
      %s8 = sphi 0, %s12
      %p9 = scmp.ge.s32.totalorder %s8, 11
      %s15 = sphi 0, %s34
      %s16 = sphi 0, %s30
      %s17 = sphi 0, %s26
      %s18 = sphi 0, %s15
      %s19 = sphi 0, %s16
      %s20 = sphi 0, %s17
      %s21 = sphi 0, %s18
      %s22 = sphi 0, %s19
      %s23 = sphi 0, %s20
      %s39 = sphi 0, %s41
      %s42 = sphi 0, %s39
      %s43 = sphi 0, %s42
      %s59 = sphi 0, %s43
      %s67 = sphi 0, %s69
      %s70 = sphi 0, %s67
      %s71 = sphi 0, %s70
      %s87 = sphi 0, %s71
      %s95 = sphi 0, %s97
      %s98 = sphi 0, %s95
      %s99 = sphi 0, %s98
      %s115 = sphi 0, %s99
    $region4: #{model_forward.33} parent=1 // loop_header_branch
      %11 = sbr.rel (%p9) target = $region8
    $region5: #{model_forward.33} parent=1 // loop_body
      %s13 = ssub.s32 %s8, 1
      %s14 = ssub.s32 %s8, 2
      %s24 = sadd.s32 1, %s17
      %p25 = scmp.ge.s32.totalorder %s24, 9
      %s26 = scalar_select %p25, 0, %s24
      %s27 = sadd.s32 1, %s16
      %s28 = scalar_select %p25, %s27, %s16
      %p29 = scmp.ge.s32.totalorder %s28, 1
      %s30 = scalar_select %p29, 0, %s28
      %s31 = sadd.s32 1, %s15
      %s32 = scalar_select %p29, %s31, %s15
      %p33 = scmp.ge.s32.totalorder %s32, 1
      %s34 = scalar_select %p33, 0, %s32
      %s35 = ssub.s32 %s15, %s34
      %s36 = ssub.s32 %s17, %s26
      %s37 = sor.u32 %s35, %s36
      %p38 = scmp.eq.s32.totalorder %s37, 0
      %s40 = sadd.s32 %s39, 1
      %s41 = scalar_select %p38, %s39, %s40
      %p44 = pneg %p38
      %p45 = scmp.eq.s32.totalorder %s8, 8
      %p46 = por %p44, %p45
      %p47 = scmp.ne.s32.totalorder %s39, %s42
      %p48 = scmp.eq.s32.totalorder %s8, 0
      %p49 = por %p47, %p48
      %p50 = scmp.ne.s32.totalorder %s39, %s42
      %p51 = scmp.eq.s32.totalorder %s13, 8
      %p52 = por %p50, %p51
      %p53 = scmp.ne.s32.totalorder %s42, %s43
      %p54 = scmp.eq.s32.totalorder %s13, 0
      %p55 = por %p53, %p54
      %p56 = scmp.ne.s32.totalorder %s42, %s43
      %p57 = scmp.eq.s32.totalorder %s14, 8
      %p58 = por %p56, %p57
      %p60 = scmp.ne.s32.totalorder %s43, %s59
      %p61 = scmp.eq.s32.totalorder %s14, 0
      %p62 = por %p60, %p61
      %s63 = ssub.s32 %s17, %s26
      %s64 = ssub.s32 %s16, %s30
      %s65 = sor.u32 %s63, %s64
      %p66 = scmp.eq.s32.totalorder %s65, 0
      %s68 = sadd.s32 %s67, 1
      %s69 = scalar_select %p66, %s67, %s68
      %p72 = pneg %p66
      %p73 = scmp.eq.s32.totalorder %s8, 8
      %p74 = por %p72, %p73
      %p75 = scmp.ne.s32.totalorder %s67, %s70
      %p76 = scmp.eq.s32.totalorder %s8, 0
      %p77 = por %p75, %p76
      %p78 = scmp.ne.s32.totalorder %s67, %s70
      %p79 = scmp.eq.s32.totalorder %s13, 8
      %p80 = por %p78, %p79
      %p81 = scmp.ne.s32.totalorder %s70, %s71
      %p82 = scmp.eq.s32.totalorder %s13, 0
      %p83 = por %p81, %p82
      %p84 = scmp.ne.s32.totalorder %s70, %s71
      %p85 = scmp.eq.s32.totalorder %s14, 8
      %p86 = por %p84, %p85
      %p88 = scmp.ne.s32.totalorder %s71, %s87
      %p89 = scmp.eq.s32.totalorder %s14, 0
      %p90 = por %p88, %p89
      %s91 = ssub.s32 %s15, %s34
      %s92 = ssub.s32 %s16, %s30
      %s93 = sor.u32 %s91, %s92
      %p94 = scmp.eq.s32.totalorder %s93, 0
      %s96 = sadd.s32 %s95, 1
      %s97 = scalar_select %p94, %s95, %s96
      %p100 = pneg %p94
      %p101 = scmp.eq.s32.totalorder %s8, 8
      %p102 = por %p100, %p101
      %p103 = scmp.ne.s32.totalorder %s95, %s98
      %p104 = scmp.eq.s32.totalorder %s8, 0
      %p105 = por %p103, %p104
      %p106 = scmp.ne.s32.totalorder %s95, %s98
      %p107 = scmp.eq.s32.totalorder %s13, 8
      %p108 = por %p106, %p107
      %p109 = scmp.ne.s32.totalorder %s98, %s99
      %p110 = scmp.eq.s32.totalorder %s13, 0
      %p111 = por %p109, %p110
      %p112 = scmp.ne.s32.totalorder %s98, %s99
      %p113 = scmp.eq.s32.totalorder %s14, 8
      %p114 = por %p112, %p113
      %p116 = scmp.ne.s32.totalorder %s99, %s115
      %p117 = scmp.eq.s32.totalorder %s14, 0
      %p118 = por %p116, %p117
      %p119 = scmp.le.s32.totalorder 1, %s8
      %p120 = scmp.lt.s32.totalorder %s8, 10
      %p121 = pnand %p119, %p120
      %p122 = pneg %p121
      // Predicated region
      $region9: #{model_forward.33} parent=5 // pred_check
        _
      $region10: #{model_forward.33} parent=5 // pred_check_branch
        %124 = sbr.rel (%p121) target = $region12
      $region11: #{model_forward.33} parent=5 // pred_region
        %s125 = ssub.s32 %s8, 1
      $region12: #{model_forward.33} parent=5 // pred_fallthru
        _
      %p126 = scmp.lt.s32.totalorder %s8, 9
      // Predicated region
      $region13: #{model_forward.33} parent=5 // pred_check
        %p127 = pneg %p126
      $region14: #{model_forward.33} parent=5 // pred_check_branch
        %129 = sbr.rel (%p127) target = $region16
      $region15: #{model_forward.33} parent=5 // pred_region
        // Predicated region
        $region17: #{model_forward.33} parent=15 // pred_check
          %p130 = pneg %p49
        $region18: #{model_forward.33} parent=15 // pred_check_branch
          %132 = sbr.rel (%p130) target = $region20
        $region19: #{model_forward.33} parent=15 // pred_region
          %s133 = sand.u32 %s39, 1
          %s134 = sand.u32 %s39, 1
          %s135 = smul.addr %s134, 64
          %s136 = scalar_lea.vmem [#allocation3], %s135
          %s137 = smul.u32 16, %s15
          %s138 = smul.addr %s137, 9
          %s139 = sadd.s32 %s17, %s138
          %s140 = smul.addr %s139, 4
          %s141 = scalar_lea.vmem %s0, %s140
          // Predicated region
          $region21: #{model_forward.33} parent=19 // pred_check
            _
          $region22: #{model_forward.33} parent=19 // pred_check_branch
            %143 = sbr.rel (0) target = $region24
          $region23: #{model_forward.33} parent=19 // pred_region
            // Predicated region
            $region25: #{model_forward.33} parent=23 // pred_check
              _
            $region26: #{model_forward.33} parent=23 // pred_check_branch
              %145 = sbr.rel target = $region28
            $region27: #{model_forward.33} parent=23 // pred_region
              // Predicated region
              $region40: #{model_forward.33} parent=27 // pred_check
                _
              $region41: #{model_forward.33} parent=27 // pred_check_branch
                %191 = sbr.rel (0) target = $region43
              $region42: #{model_forward.33} parent=27 // pred_region
                loop: start=0, step=1, limit=1
                $region44: #{model_forward.33} parent=42 // loop_pre_header
                  _
                $region45: #{model_forward.33} parent=42 // loop_header
                  %s193 = sphi 0, %s197
                  %p194 = scmp.ge.s32.totalorder %s193, 1
                  %s198 = sphi %s141, %s141
                  %s199 = sphi %s136, %s136
                $region46: #{model_forward.33} parent=42 // loop_header_branch
                  %196 = sbr.rel (%p194) target = $region50
                $region47: #{model_forward.33} parent=42 // loop_body
                  _
                $region48: #{model_forward.33} parent=42 // loop_footer
                  %s197 = sadd.s32 1, %s193
                $region49: #{model_forward.33} parent=42 // loop_footer_branch
                  %192 = sbr.rel target = $region45
                $region50: #{model_forward.33} parent=42 // loop_exit
                  _
                %s201 = ssub.s32 16, 1
                loop: start=0, step=1, limit=1
                $region51: #{model_forward.33} parent=42 // loop_pre_header
                  _
                $region52: #{model_forward.33} parent=42 // loop_header
                  %s203 = sphi 0, %s207
                  %p204 = scmp.ge.s32.totalorder %s203, 1
                  %s208 = sphi %s141, %s141
                  %s209 = sphi %s136, %s136
                $region53: #{model_forward.33} parent=42 // loop_header_branch
                  %206 = sbr.rel (%p204) target = $region57
                $region54: #{model_forward.33} parent=42 // loop_body
                  %v210 = vld [vmem:[%s208] sm:%s201]
                  %211 = vst [vmem:[%s209] sm:%s201] %v210
                  %v212 = vld [vmem:[%s208 + $0x24] sm:%s201]
                  %213 = vst [vmem:[%s209 + $0x4] sm:%s201] %v212
                  %v214 = vld [vmem:[%s208 + $0x48] sm:%s201]
                  %215 = vst [vmem:[%s209 + $0x8] sm:%s201] %v214
                  %v216 = vld [vmem:[%s208 + $0x6c] sm:%s201]
                  %217 = vst [vmem:[%s209 + $0xc] sm:%s201] %v216
                  %v218 = vld [vmem:[%s208 + $0x90] sm:%s201]
                  %219 = vst [vmem:[%s209 + $0x10] sm:%s201] %v218
                  %v220 = vld [vmem:[%s208 + $0xb4] sm:%s201]
                  %221 = vst [vmem:[%s209 + $0x14] sm:%s201] %v220
                  %v222 = vld [vmem:[%s208 + $0xd8] sm:%s201]
                  %223 = vst [vmem:[%s209 + $0x18] sm:%s201] %v222
                  %v224 = vld [vmem:[%s208 + $0xfc] sm:%s201]
                  %225 = vst [vmem:[%s209 + $0x1c] sm:%s201] %v224
                  %v226 = vld [vmem:[%s208 + $0x120] sm:%s201]
                  %227 = vst [vmem:[%s209 + $0x20] sm:%s201] %v226
                  %v228 = vld [vmem:[%s208 + $0x144] sm:%s201]
                  %229 = vst [vmem:[%s209 + $0x24] sm:%s201] %v228
                  %v230 = vld [vmem:[%s208 + $0x168] sm:%s201]
                  %231 = vst [vmem:[%s209 + $0x28] sm:%s201] %v230
                  %v232 = vld [vmem:[%s208 + $0x18c] sm:%s201]
                  %233 = vst [vmem:[%s209 + $0x2c] sm:%s201] %v232
                  %v234 = vld [vmem:[%s208 + $0x1b0] sm:%s201]
                  %235 = vst [vmem:[%s209 + $0x30] sm:%s201] %v234
                  %v236 = vld [vmem:[%s208 + $0x1d4] sm:%s201]
                  %237 = vst [vmem:[%s209 + $0x34] sm:%s201] %v236
                  %v238 = vld [vmem:[%s208 + $0x1f8] sm:%s201]
                  %239 = vst [vmem:[%s209 + $0x38] sm:%s201] %v238
                  %v240 = vld [vmem:[%s208 + $0x21c] sm:%s201]
                  %241 = vst [vmem:[%s209 + $0x3c] sm:%s201] %v240
                $region55: #{model_forward.33} parent=42 // loop_footer
                  %s207 = sadd.s32 1, %s203
                $region56: #{model_forward.33} parent=42 // loop_footer_branch
                  %202 = sbr.rel target = $region52
                $region57: #{model_forward.33} parent=42 // loop_exit
                  _
              $region43: #{model_forward.33} parent=27 // pred_fallthru
                _
            $region28: #{model_forward.33} parent=23 // pred_fallthru
              _
            // Predicated region
            $region29: #{model_forward.33} parent=23 // pred_check
              _
            $region30: #{model_forward.33} parent=23 // pred_check_branch
              %147 = sbr.rel (0) target = $region32
            $region31: #{model_forward.33} parent=23 // pred_region
              %s149 = ssub.s32 16, 1
              loop: start=0, step=1, limit=1
              $region33: #{model_forward.33} parent=31 // loop_pre_header
                _
              $region34: #{model_forward.33} parent=31 // loop_header
                %s151 = sphi 0, %s155
                %p152 = scmp.ge.s32.totalorder %s151, 1
                %s156 = sphi %s141, %s141
                %s157 = sphi %s136, %s136
              $region35: #{model_forward.33} parent=31 // loop_header_branch
                %154 = sbr.rel (%p152) target = $region39
              $region36: #{model_forward.33} parent=31 // loop_body
                %v158 = vld [vmem:[%s156] sm:%s149]
                %159 = vst [vmem:[%s157] sm:%s149] %v158
                %v160 = vld [vmem:[%s156 + $0x24] sm:%s149]
                %161 = vst [vmem:[%s157 + $0x4] sm:%s149] %v160
                %v162 = vld [vmem:[%s156 + $0x48] sm:%s149]
                %163 = vst [vmem:[%s157 + $0x8] sm:%s149] %v162
                %v164 = vld [vmem:[%s156 + $0x6c] sm:%s149]
                %165 = vst [vmem:[%s157 + $0xc] sm:%s149] %v164
                %v166 = vld [vmem:[%s156 + $0x90] sm:%s149]
                %167 = vst [vmem:[%s157 + $0x10] sm:%s149] %v166
                %v168 = vld [vmem:[%s156 + $0xb4] sm:%s149]
                %169 = vst [vmem:[%s157 + $0x14] sm:%s149] %v168
                %v170 = vld [vmem:[%s156 + $0xd8] sm:%s149]
                %171 = vst [vmem:[%s157 + $0x18] sm:%s149] %v170
                %v172 = vld [vmem:[%s156 + $0xfc] sm:%s149]
                %173 = vst [vmem:[%s157 + $0x1c] sm:%s149] %v172
                %v174 = vld [vmem:[%s156 + $0x120] sm:%s149]
                %175 = vst [vmem:[%s157 + $0x20] sm:%s149] %v174
                %v176 = vld [vmem:[%s156 + $0x144] sm:%s149]
                %177 = vst [vmem:[%s157 + $0x24] sm:%s149] %v176
                %v178 = vld [vmem:[%s156 + $0x168] sm:%s149]
                %179 = vst [vmem:[%s157 + $0x28] sm:%s149] %v178
                %v180 = vld [vmem:[%s156 + $0x18c] sm:%s149]
                %181 = vst [vmem:[%s157 + $0x2c] sm:%s149] %v180
                %v182 = vld [vmem:[%s156 + $0x1b0] sm:%s149]
                %183 = vst [vmem:[%s157 + $0x30] sm:%s149] %v182
                %v184 = vld [vmem:[%s156 + $0x1d4] sm:%s149]
                %185 = vst [vmem:[%s157 + $0x34] sm:%s149] %v184
                %v186 = vld [vmem:[%s156 + $0x1f8] sm:%s149]
                %187 = vst [vmem:[%s157 + $0x38] sm:%s149] %v186
                %v188 = vld [vmem:[%s156 + $0x21c] sm:%s149]
                %189 = vst [vmem:[%s157 + $0x3c] sm:%s149] %v188
              $region37: #{model_forward.33} parent=31 // loop_footer
                %s155 = sadd.s32 1, %s151
              $region38: #{model_forward.33} parent=31 // loop_footer_branch
                %150 = sbr.rel target = $region34
              $region39: #{model_forward.33} parent=31 // loop_exit
                _
            $region32: #{model_forward.33} parent=23 // pred_fallthru
              _
          $region24: #{model_forward.33} parent=19 // pred_fallthru
            _
          %242 = vnop
        $region20: #{model_forward.33} parent=15 // pred_fallthru
          _
        // Predicated region
        $region58: #{model_forward.33} parent=15 // pred_check
          %p243 = pneg %p77
        $region59: #{model_forward.33} parent=15 // pred_check_branch
          %245 = sbr.rel (%p243) target = $region61
        $region60: #{model_forward.33} parent=15 // pred_region
          %s246 = smul.u32 16, %s17
          %p247 = scmp.lt.s32.totalorder %s246, 143
          %s248 = scalar_select %p247, %s246, 143
          %p249 = scmp.lt.s32.totalorder %s16, 0
          %s250 = scalar_select %p249, %s16, 0
          %s251 = sadd.s32 %s250, %s248
          %s252 = smul.addr %s251, 4
          %s253 = scalar_lea.vmem %s1, %s252
          %s254 = smul.u32 16, %s17
        $region61: #{model_forward.33} parent=15 // pred_fallthru
          _
      $region16: #{model_forward.33} parent=5 // pred_fallthru
        _
      %p255 = scmp.le.s32.totalorder 1, %s8
      %p256 = scmp.lt.s32.totalorder %s8, 10
      %p257 = pnand %p255, %p256
      %p258 = pneg %p257
      // Predicated region
      $region62: #{model_forward.33} parent=5 // pred_check
        _
      $region63: #{model_forward.33} parent=5 // pred_check_branch
        %260 = sbr.rel (%p257) target = $region65
      $region64: #{model_forward.33} parent=5 // pred_region
        %s261 = ssub.s32 %s8, 1
        %s262 = sand.u32 %s42, 1
        %s263 = sand.u32 %s42, 1
        %s264 = smul.addr %s263, 64
        %s265 = scalar_lea.vmem [#allocation3], %s264
        // Predicated region
        $region66: #{model_forward.33} parent=64 // pred_check
          %p266 = pneg %p55
        $region67: #{model_forward.33} parent=64 // pred_check_branch
          %268 = sbr.rel (%p266) target = $region69
        $region68: #{model_forward.33} parent=64 // pred_region
          _
        $region69: #{model_forward.33} parent=64 // pred_fallthru
          _
        %s269 = sand.u32 %s42, 1
        %s270 = sand.u32 %s42, 1
        %s271 = smul.addr %s270, 64
        %s272 = scalar_lea.vmem [#allocation3], %s271
        %p273 = pneg %p55
        %p274 = pneg %p52
        %s275 = smul.u32 16, %s20
        %p276 = scmp.lt.s32.totalorder %s275, 143
        %s277 = scalar_select %p276, %s275, 143
        %p278 = scmp.lt.s32.totalorder %s19, 0
        %s279 = scalar_select %p278, %s19, 0
        %s280 = sadd.s32 %s279, %s277
        %s281 = smul.addr %s280, 4
        %s282 = scalar_lea.vmem %s1, %s281
        %p283 = pneg %p83
        %p284 = pneg %p80
        %p285 = pneg %p111
        %p286 = pneg %p108
        %s287 = smul.u32 16, %s18
        %p288 = scmp.lt.s32.totalorder %s287, 15
        %s289 = scalar_select %p288, %s287, 15
        %p290 = scmp.lt.s32.totalorder %s19, 0
        %s291 = scalar_select %p290, %s19, 0
        %s292 = sadd.s32 %s291, %s289
        %s293 = smul.addr %s292, 8
        %s294 = scalar_lea.vmem %s2, %s293
        %s295 = smul.u32 16, %s18
        %s296 = smul.u32 16, %s20
        %p297 = scmp.lt.s32.totalorder %s296, 143
        %s298 = scalar_select %p297, %s296, 143
        %p299 = scmp.lt.s32.totalorder %s19, 0
        %s300 = scalar_select %p299, %s19, 0
        %s301 = sadd.s32 %s300, %s298
        %s302 = smul.addr %s301, 4
        %s303 = scalar_lea.vmem %s1, %s302
        %s304 = smul.u32 16, %s20
        %s305 = smul.u32 16, %s18
        %p306 = scmp.lt.s32.totalorder %s305, 15
        %s307 = scalar_select %p306, %s305, 15
        %p308 = scmp.lt.s32.totalorder %s19, 0
        %s309 = scalar_select %p308, %s19, 0
        %s310 = sadd.s32 %s309, %s307
        %s311 = smul.addr %s310, 8
        %s312 = scalar_lea.vmem %s2, %s311
        %s313 = smul.u32 16, %s18
        %p315 = scmp.eq.s32.totalorder %s20, 0
        // Predicated region
        $region70: #{model_forward.33} parent=64 // pred_check
          %p316 = pneg %p315
        $region71: #{model_forward.33} parent=64 // pred_check_branch
          %318 = sbr.rel (%p316) target = $region73
        $region72: #{model_forward.33} parent=64 // pred_region
          %319 = vst [vmem:[#allocation2] sm:$0xff] 0.0
          %320 = vst [vmem:[#allocation2 + $0x8] sm:$0xff] 0.0
          %321 = vst [vmem:[#allocation2 + $0x10] sm:$0xff] 0.0
          %322 = vst [vmem:[#allocation2 + $0x18] sm:$0xff] 0.0
          %323 = vst [vmem:[#allocation2 + $0x20] sm:$0xff] 0.0
          %324 = vst [vmem:[#allocation2 + $0x28] sm:$0xff] 0.0
          %325 = vst [vmem:[#allocation2 + $0x30] sm:$0xff] 0.0
          %326 = vst [vmem:[#allocation2 + $0x38] sm:$0xff] 0.0
          %327 = vst [vmem:[#allocation2 + $0x40] sm:$0xff] 0.0
          %328 = vst [vmem:[#allocation2 + $0x48] sm:$0xff] 0.0
          %329 = vst [vmem:[#allocation2 + $0x50] sm:$0xff] 0.0
          %330 = vst [vmem:[#allocation2 + $0x58] sm:$0xff] 0.0
          %331 = vst [vmem:[#allocation2 + $0x60] sm:$0xff] 0.0
          %332 = vst [vmem:[#allocation2 + $0x68] sm:$0xff] 0.0
          %333 = vst [vmem:[#allocation2 + $0x70] sm:$0xff] 0.0
          %334 = vst [vmem:[#allocation2 + $0x78] sm:$0xff] 0.0
        $region73: #{model_forward.33} parent=64 // pred_fallthru
          _
        %v335 = vld [vmem:[#allocation2] sm:$0xff]
        %v336 = vld [vmem:[#allocation2 + $0x8] sm:$0xff]
        %v337 = vld [vmem:[#allocation2 + $0x10] sm:$0xff]
        %v338 = vld [vmem:[#allocation2 + $0x18] sm:$0xff]
        %v339 = vld [vmem:[#allocation2 + $0x20] sm:$0xff]
        %v340 = vld [vmem:[#allocation2 + $0x28] sm:$0xff]
        %v341 = vld [vmem:[#allocation2 + $0x30] sm:$0xff]
        %v342 = vld [vmem:[#allocation2 + $0x38] sm:$0xff]
        %v343 = vld [vmem:[#allocation2 + $0x40] sm:$0xff]
        %v344 = vld [vmem:[#allocation2 + $0x48] sm:$0xff]
        %v345 = vld [vmem:[#allocation2 + $0x50] sm:$0xff]
        %v346 = vld [vmem:[#allocation2 + $0x58] sm:$0xff]
        %v347 = vld [vmem:[#allocation2 + $0x60] sm:$0xff]
        %v348 = vld [vmem:[#allocation2 + $0x68] sm:$0xff]
        %v349 = vld [vmem:[#allocation2 + $0x70] sm:$0xff]
        %v350 = vld [vmem:[#allocation2 + $0x78] sm:$0xff]
        %v351 = vld [vmem:[%s265] sm:$0xf]
        %v352 = vld [vmem:[%s265 + $0x4] sm:$0xf]
        %v353 = vld [vmem:[%s265 + $0x8] sm:$0xf]
        %v354 = vld [vmem:[%s265 + $0xc] sm:$0xf]
        %v355 = vld [vmem:[%s265 + $0x10] sm:$0xf]
        %v356 = vld [vmem:[%s265 + $0x14] sm:$0xf]
        %v357 = vld [vmem:[%s265 + $0x18] sm:$0xf]
        %v358 = vld [vmem:[%s265 + $0x1c] sm:$0xf]
        %v359 = vld [vmem:[%s265 + $0x20] sm:$0xf]
        %v360 = vld [vmem:[%s265 + $0x24] sm:$0xf]
        %v361 = vld [vmem:[%s265 + $0x28] sm:$0xf]
        %v362 = vld [vmem:[%s265 + $0x2c] sm:$0xf]
        %v363 = vld [vmem:[%s265 + $0x30] sm:$0xf]
        %v364 = vld [vmem:[%s265 + $0x34] sm:$0xf]
        %v365 = vld [vmem:[%s265 + $0x38] sm:$0xf]
        %v366 = vld [vmem:[%s265 + $0x3c] sm:$0xf]
        %v367 = vld [vmem:[%s303] sm:$0xf]
        %v368 = vld [vmem:[%s303 + $0x4] sm:$0xf]
        %v369 = vld [vmem:[%s303 + $0x8] sm:$0xf]
        %v370 = vld [vmem:[%s303 + $0xc] sm:$0xf]
        %v371 = vld [vmem:[%s303 + $0x10] sm:$0xf]
        %v372 = vld [vmem:[%s303 + $0x14] sm:$0xf]
        %v373 = vld [vmem:[%s303 + $0x18] sm:$0xf]
        %v374 = vld [vmem:[%s303 + $0x1c] sm:$0xf]
        %v375 = vld [vmem:[%s303 + $0x20] sm:$0xf]
        %v376 = vld [vmem:[%s303 + $0x24] sm:$0xf]
        %v377 = vld [vmem:[%s303 + $0x28] sm:$0xf]
        %v378 = vld [vmem:[%s303 + $0x2c] sm:$0xf]
        %v379 = vld [vmem:[%s303 + $0x30] sm:$0xf]
        %v380 = vld [vmem:[%s303 + $0x34] sm:$0xf]
        %v381 = vld [vmem:[%s303 + $0x38] sm:$0xf]
        %v382 = vld [vmem:[%s303 + $0x3c] sm:$0xf]
        %v399 = vunpack.c.l.b16 %v351
        %v400 = vunpack.c.l.b16 %v352
        %v401 = vunpack.c.l.b16 %v353
        %v402 = vunpack.c.l.b16 %v354
        %v403 = vunpack.c.l.b16 %v355
        %v404 = vunpack.c.l.b16 %v356
        %v405 = vunpack.c.l.b16 %v357
        %v406 = vunpack.c.l.b16 %v358
        %v407 = vunpack.c.l.b16 %v359
        %v408 = vunpack.c.l.b16 %v360
        %v409 = vunpack.c.l.b16 %v361
        %v410 = vunpack.c.l.b16 %v362
        %v411 = vunpack.c.l.b16 %v363
        %v412 = vunpack.c.l.b16 %v364
        %v413 = vunpack.c.l.b16 %v365
        %v414 = vunpack.c.l.b16 %v366
        %v415 = vpack.c.b16 %v400, %v399
        %v416 = vpack.c.b16 %v402, %v401
        %v417 = vpack.c.b16 %v404, %v403
        %v418 = vpack.c.b16 %v406, %v405
        %v419 = vpack.c.b16 %v408, %v407
        %v420 = vpack.c.b16 %v410, %v409
        %v421 = vpack.c.b16 %v412, %v411
        %v422 = vpack.c.b16 %v414, %v413
        %v447 = vunpack.c.l.b16 %v367
        %v448 = vunpack.c.l.b16 %v368
        %v449 = vunpack.c.l.b16 %v369
        %v450 = vunpack.c.l.b16 %v370
        %v451 = vunpack.c.l.b16 %v371
        %v452 = vunpack.c.l.b16 %v372
        %v453 = vunpack.c.l.b16 %v373
        %v454 = vunpack.c.l.b16 %v374
        %v455 = vunpack.c.l.b16 %v375
        %v456 = vunpack.c.l.b16 %v376
        %v457 = vunpack.c.l.b16 %v377
        %v458 = vunpack.c.l.b16 %v378
        %v459 = vunpack.c.l.b16 %v379
        %v460 = vunpack.c.l.b16 %v380
        %v461 = vunpack.c.l.b16 %v381
        %v462 = vunpack.c.l.b16 %v382
        %v463 = vpack.c.b16 %v448, %v447
        %v464 = vpack.c.b16 %v450, %v449
        %v465 = vpack.c.b16 %v452, %v451
        %v466 = vpack.c.b16 %v454, %v453
        %v467 = vpack.c.b16 %v456, %v455
        %v468 = vpack.c.b16 %v458, %v457
        %v469 = vpack.c.b16 %v460, %v459
        %v470 = vpack.c.b16 %v462, %v461
        %479 = vmatprep.subr.bf16.mxu0 0
        %480 = vmatpush1.bf16.msra.mxu0 %v470
        %481 = vmatprep.subr.bf16.mxu0 0
        %482 = vmatpush1.bf16.msra.mxu0 %v469
        %483 = vmatprep.subr.bf16.mxu0 0
        %484 = vmatpush1.bf16.msra.mxu0 %v468
        %485 = vmatprep.subr.bf16.mxu0 0
        %486 = vmatpush1.bf16.msra.mxu0 %v467
        %487 = vmatprep.subr.bf16.mxu0 0
        %488 = vmatpush1.bf16.msra.mxu0 %v466
        %489 = vmatprep.subr.bf16.mxu0 0
        %490 = vmatpush1.bf16.msra.mxu0 %v465
        %491 = vmatprep.subr.bf16.mxu0 0
        %492 = vmatpush1.bf16.msra.mxu0 %v464
        %493 = vmatprep.subr.bf16.mxu0 0
        %494 = vmatpush1.bf16.msra.mxu0 %v463
        %495 = vmatprep.subr.bf16.mxu0 0
        %496 = vmatpush2.bf16.msra.mxu0 0
        %497 = vmatprep.subr.bf16.mxu0 0
        %498 = vmatpush2.bf16.msra.mxu0 0
        %499 = vmatprep.subr.bf16.mxu0 0
        %500 = vmatpush2.bf16.msra.mxu0 0
        %501 = vmatprep.subr.bf16.mxu0 0
        %502 = vmatpush2.bf16.msra.mxu0 0
        %503 = vmatprep.subr.bf16.mxu0 0
        %504 = vmatpush2.bf16.msra.mxu0 0
        %505 = vmatprep.subr.bf16.mxu0 0
        %506 = vmatpush2.bf16.msra.mxu0 0
        %507 = vmatprep.subr.bf16.mxu0 0
        %508 = vmatpush2.bf16.msra.mxu0 0
        %509 = vmatprep.subr.bf16.mxu0 0
        %510 = vmatpush2.bf16.msra.mxu0 0
        %511 = vmatprep.mubr.bf16.mxu0 0
        %512 = vmatmul.mubr.bf16.gmra.mxu0 %v415
        %v513 = vpop.f32.mrf.mxu0
        %v514 = vadd.f32 0.0, %v513
        %v515 = vpop.f32.mrf.mxu0
        %v516 = vpop.f32.mrf.mxu0
        %v517 = vadd.f32 0.0, %v516
        %v518 = vpop.f32.mrf.mxu0
        %519 = vmatprep.mubr.bf16.mxu0 0
        %520 = vmatmul.mubr.bf16.gmra.mxu0 %v416
        %v521 = vpop.f32.mrf.mxu0
        %v522 = vadd.f32 0.0, %v521
        %v523 = vpop.f32.mrf.mxu0
        %v524 = vpop.f32.mrf.mxu0
        %v525 = vadd.f32 0.0, %v524
        %v526 = vpop.f32.mrf.mxu0
        %527 = vmatprep.mubr.bf16.mxu0 0
        %528 = vmatmul.mubr.bf16.gmra.mxu0 %v417
        %v529 = vpop.f32.mrf.mxu0
        %v530 = vadd.f32 0.0, %v529
        %v531 = vpop.f32.mrf.mxu0
        %v532 = vpop.f32.mrf.mxu0
        %v533 = vadd.f32 0.0, %v532
        %v534 = vpop.f32.mrf.mxu0
        %535 = vmatprep.mubr.bf16.mxu0 0
        %536 = vmatmul.mubr.bf16.gmra.mxu0 %v418
        %v537 = vpop.f32.mrf.mxu0
        %v538 = vadd.f32 0.0, %v537
        %v539 = vpop.f32.mrf.mxu0
        %v540 = vpop.f32.mrf.mxu0
        %v541 = vadd.f32 0.0, %v540
        %v542 = vpop.f32.mrf.mxu0
        %543 = vmatprep.mubr.bf16.mxu0 0
        %544 = vmatmul.mubr.bf16.gmra.mxu0 %v419
        %v545 = vpop.f32.mrf.mxu0
        %v546 = vadd.f32 0.0, %v545
        %v547 = vpop.f32.mrf.mxu0
        %v548 = vpop.f32.mrf.mxu0
        %v549 = vadd.f32 0.0, %v548
        %v550 = vpop.f32.mrf.mxu0
        %551 = vmatprep.mubr.bf16.mxu0 0
        %552 = vmatmul.mubr.bf16.gmra.mxu0 %v420
        %v553 = vpop.f32.mrf.mxu0
        %v554 = vadd.f32 0.0, %v553
        %v555 = vpop.f32.mrf.mxu0
        %v556 = vpop.f32.mrf.mxu0
        %v557 = vadd.f32 0.0, %v556
        %v558 = vpop.f32.mrf.mxu0
        %559 = vmatprep.mubr.bf16.mxu0 0
        %560 = vmatmul.mubr.bf16.gmra.mxu0 %v421
        %v561 = vpop.f32.mrf.mxu0
        %v562 = vadd.f32 0.0, %v561
        %v563 = vpop.f32.mrf.mxu0
        %v564 = vpop.f32.mrf.mxu0
        %v565 = vadd.f32 0.0, %v564
        %v566 = vpop.f32.mrf.mxu0
        %567 = vmatprep.mubr.bf16.mxu0 0
        %568 = vmatmul.mubr.bf16.gmra.mxu0 %v422
        %v569 = vpop.f32.mrf.mxu0
        %v570 = vadd.f32 0.0, %v569
        %v571 = vpop.f32.mrf.mxu0
        %v572 = vpop.f32.mrf.mxu0
        %v573 = vadd.f32 0.0, %v572
        %v574 = vpop.f32.mrf.mxu0
        %575 = vdwg.mxu0
        %v576 = vadd.f32 %v335, %v514
        %v577 = vadd.f32 %v336, %v517
        %v578 = vadd.f32 %v337, %v522
        %v579 = vadd.f32 %v338, %v525
        %v580 = vadd.f32 %v339, %v530
        %v581 = vadd.f32 %v340, %v533
        %v582 = vadd.f32 %v341, %v538
        %v583 = vadd.f32 %v342, %v541
        %v584 = vadd.f32 %v343, %v546
        %v585 = vadd.f32 %v344, %v549
        %v586 = vadd.f32 %v345, %v554
        %v587 = vadd.f32 %v346, %v557
        %v588 = vadd.f32 %v347, %v562
        %v589 = vadd.f32 %v348, %v565
        %v590 = vadd.f32 %v349, %v570
        %v591 = vadd.f32 %v350, %v573
        %592 = vst [vmem:[#allocation2] sm:$0xff] %v576
        %593 = vst [vmem:[#allocation2 + $0x8] sm:$0xff] %v577
        %594 = vst [vmem:[#allocation2 + $0x10] sm:$0xff] %v578
        %595 = vst [vmem:[#allocation2 + $0x18] sm:$0xff] %v579
        %596 = vst [vmem:[#allocation2 + $0x20] sm:$0xff] %v580
        %597 = vst [vmem:[#allocation2 + $0x28] sm:$0xff] %v581
        %598 = vst [vmem:[#allocation2 + $0x30] sm:$0xff] %v582
        %599 = vst [vmem:[#allocation2 + $0x38] sm:$0xff] %v583
        %600 = vst [vmem:[#allocation2 + $0x40] sm:$0xff] %v584
        %601 = vst [vmem:[#allocation2 + $0x48] sm:$0xff] %v585
        %602 = vst [vmem:[#allocation2 + $0x50] sm:$0xff] %v586
        %603 = vst [vmem:[#allocation2 + $0x58] sm:$0xff] %v587
        %604 = vst [vmem:[#allocation2 + $0x60] sm:$0xff] %v588
        %605 = vst [vmem:[#allocation2 + $0x68] sm:$0xff] %v589
        %606 = vst [vmem:[#allocation2 + $0x70] sm:$0xff] %v590
        %607 = vst [vmem:[#allocation2 + $0x78] sm:$0xff] %v591
        %p608 = scmp.eq.s32.totalorder %s20, 8
        // Predicated region
        $region74: #{model_forward.33} parent=64 // pred_check
          %p609 = pneg %p608
        $region75: #{model_forward.33} parent=64 // pred_check_branch
          %611 = sbr.rel (%p609) target = $region77
        $region76: #{model_forward.33} parent=64 // pred_region
          %v612 = vld [vmem:[#allocation2] sm:$0xff]
          %v613 = vld [vmem:[#allocation2 + $0x8] sm:$0xff]
          %v614 = vld [vmem:[#allocation2 + $0x10] sm:$0xff]
          %v615 = vld [vmem:[#allocation2 + $0x18] sm:$0xff]
          %v616 = vld [vmem:[#allocation2 + $0x20] sm:$0xff]
          %v617 = vld [vmem:[#allocation2 + $0x28] sm:$0xff]
          %v618 = vld [vmem:[#allocation2 + $0x30] sm:$0xff]
          %v619 = vld [vmem:[#allocation2 + $0x38] sm:$0xff]
          %v620 = vld [vmem:[#allocation2 + $0x40] sm:$0xff]
          %v621 = vld [vmem:[#allocation2 + $0x48] sm:$0xff]
          %v622 = vld [vmem:[#allocation2 + $0x50] sm:$0xff]
          %v623 = vld [vmem:[#allocation2 + $0x58] sm:$0xff]
          %v624 = vld [vmem:[#allocation2 + $0x60] sm:$0xff]
          %v625 = vld [vmem:[#allocation2 + $0x68] sm:$0xff]
          %v626 = vld [vmem:[#allocation2 + $0x70] sm:$0xff]
          %v627 = vld [vmem:[#allocation2 + $0x78] sm:$0xff]
          %628 = vst [vmem:[%s312] sm:$0xff] %v612
          %629 = vst [vmem:[%s312 + $0x8] sm:$0xff] %v613
          %630 = vst [vmem:[%s312 + $0x10] sm:$0xff] %v614
          %631 = vst [vmem:[%s312 + $0x18] sm:$0xff] %v615
          %632 = vst [vmem:[%s312 + $0x20] sm:$0xff] %v616
          %633 = vst [vmem:[%s312 + $0x28] sm:$0xff] %v617
          %634 = vst [vmem:[%s312 + $0x30] sm:$0xff] %v618
          %635 = vst [vmem:[%s312 + $0x38] sm:$0xff] %v619
          %636 = vst [vmem:[%s312 + $0x40] sm:$0xff] %v620
          %637 = vst [vmem:[%s312 + $0x48] sm:$0xff] %v621
          %638 = vst [vmem:[%s312 + $0x50] sm:$0xff] %v622
          %639 = vst [vmem:[%s312 + $0x58] sm:$0xff] %v623
          %640 = vst [vmem:[%s312 + $0x60] sm:$0xff] %v624
          %641 = vst [vmem:[%s312 + $0x68] sm:$0xff] %v625
          %642 = vst [vmem:[%s312 + $0x70] sm:$0xff] %v626
          %643 = vst [vmem:[%s312 + $0x78] sm:$0xff] %v627
        $region77: #{model_forward.33} parent=64 // pred_fallthru
          _
        %s644 = smul.u32 16, %s18
        %p645 = scmp.lt.s32.totalorder %s644, 15
        %s646 = scalar_select %p645, %s644, 15
        %p647 = scmp.lt.s32.totalorder %s19, 0
        %s648 = scalar_select %p647, %s19, 0
        %s649 = sadd.s32 %s648, %s646
        %s650 = smul.addr %s649, 8
        %s651 = scalar_lea.vmem %s2, %s650
        // Predicated region
        $region78: #{model_forward.33} parent=64 // pred_check
          %p652 = pneg %p108
        $region79: #{model_forward.33} parent=64 // pred_check_branch
          %654 = sbr.rel (%p652) target = $region81
        $region80: #{model_forward.33} parent=64 // pred_region
          %s655 = smul.u32 16, %s18
        $region81: #{model_forward.33} parent=64 // pred_fallthru
          _
        // Predicated region
        $region82: #{model_forward.33} parent=64 // pred_check
          %p656 = pneg %p108
        $region83: #{model_forward.33} parent=64 // pred_check_branch
          %658 = sbr.rel (%p656) target = $region85
        $region84: #{model_forward.33} parent=64 // pred_region
          %s659 = smul.u32 16, %s18
          %p660 = scmp.lt.s32.totalorder %s659, 15
          %s661 = scalar_select %p660, %s659, 15
          %p662 = scmp.lt.s32.totalorder %s19, 0
          %s663 = scalar_select %p662, %s19, 0
          %s664 = sadd.s32 %s663, %s661
          %s665 = smul.addr %s664, 8
          %s666 = scalar_lea.vmem %s2, %s665
        $region85: #{model_forward.33} parent=64 // pred_fallthru
          _
      $region65: #{model_forward.33} parent=5 // pred_fallthru
        _
      %p667 = scmp.le.s32.totalorder 2, %s8
      // Predicated region
      $region86: #{model_forward.33} parent=5 // pred_check
        %p668 = pneg %p667
      $region87: #{model_forward.33} parent=5 // pred_check_branch
        %670 = sbr.rel (%p668) target = $region89
      $region88: #{model_forward.33} parent=5 // pred_region
        %s671 = ssub.s32 %s8, 2
      $region89: #{model_forward.33} parent=5 // pred_fallthru
        _
    $region6: #{model_forward.33} parent=1 // loop_footer
      %s12 = sadd.s32 1, %s8
    $region7: #{model_forward.33} parent=1 // loop_footer_branch
      %7 = sbr.rel target = $region3
    $region8: #{model_forward.33} parent=1 // loop_exit
      _

// kernel: model_forward.35
$region0: #{model_forward.35}
  #allocation0 [shape = 'u32[]', space=smem, size = 0x4, offset = 0x4, fixed_abs, tag = 'smem constant byte address 0x4 - core index']
  #allocation1 [shape = 'u32[144,128]{1,0:T(1,128)}', space=vmem, size = 0x12000, scoped, tag = 'internal scratch']
  #allocation2 [shape = 'f32[32,128]{1,0:T(8,128)}', space=vmem, size = 0x4000, scoped, tag = 'scratch operand']
  %s0 = inlined_call_operand.vmem [shape: bf16[32,1152], index: 0, kind: input, shape index: {}]
  %s1 = inlined_call_operand.vmem [shape: bf16[1152,128], index: 1, kind: input, shape index: {}]
  %s2 = inlined_call_operand.vmem [shape: f32[32,128], index: 2, kind: output, shape index: {}]
  %s3 = sld [smem:[#allocation0]]
  $region90: #{model_forward.35} parent=0
    _
  %s5 = ssub.s32 1, %s3
  %s6 = scalar_select 0, %s5, %s3
  $region1: #{model_forward.35} parent=0
    #allocation3 [shape = 'u8[16384]{0}', space=vmem, size = 0x4000, scoped, tag = 'input window, operand 0']
    loop: start=0, step=1, limit=11
    $region2: #{model_forward.35} parent=1 // loop_pre_header
      _
    $region3: #{model_forward.35} parent=1 // loop_header
      %s8 = sphi 0, %s12
      %p9 = scmp.ge.s32.totalorder %s8, 11
      %s15 = sphi 0, %s34
      %s16 = sphi 0, %s30
      %s17 = sphi 0, %s26
      %s18 = sphi 0, %s15
      %s19 = sphi 0, %s16
      %s20 = sphi 0, %s17
      %s21 = sphi 0, %s18
      %s22 = sphi 0, %s19
      %s23 = sphi 0, %s20
      %s39 = sphi 0, %s41
      %s42 = sphi 0, %s39
      %s43 = sphi 0, %s42
      %s59 = sphi 0, %s43
      %s67 = sphi 0, %s69
      %s70 = sphi 0, %s67
      %s71 = sphi 0, %s70
      %s87 = sphi 0, %s71
      %s95 = sphi 0, %s97
      %s98 = sphi 0, %s95
      %s99 = sphi 0, %s98
      %s115 = sphi 0, %s99
    $region4: #{model_forward.35} parent=1 // loop_header_branch
      %11 = sbr.rel (%p9) target = $region8
    $region5: #{model_forward.35} parent=1 // loop_body
      %s13 = ssub.s32 %s8, 1
      %s14 = ssub.s32 %s8, 2
      %s24 = sadd.s32 1, %s17
      %p25 = scmp.ge.s32.totalorder %s24, 9
      %s26 = scalar_select %p25, 0, %s24
      %s27 = sadd.s32 1, %s16
      %s28 = scalar_select %p25, %s27, %s16
      %p29 = scmp.ge.s32.totalorder %s28, 1
      %s30 = scalar_select %p29, 0, %s28
      %s31 = sadd.s32 1, %s15
      %s32 = scalar_select %p29, %s31, %s15
      %p33 = scmp.ge.s32.totalorder %s32, 1
      %s34 = scalar_select %p33, 0, %s32
      %s35 = ssub.s32 %s15, %s34
      %s36 = ssub.s32 %s17, %s26
      %s37 = sor.u32 %s35, %s36
      %p38 = scmp.eq.s32.totalorder %s37, 0
      %s40 = sadd.s32 %s39, 1
      %s41 = scalar_select %p38, %s39, %s40
      %p44 = pneg %p38
      %p45 = scmp.eq.s32.totalorder %s8, 8
      %p46 = por %p44, %p45
      %p47 = scmp.ne.s32.totalorder %s39, %s42
      %p48 = scmp.eq.s32.totalorder %s8, 0
      %p49 = por %p47, %p48
      %p50 = scmp.ne.s32.totalorder %s39, %s42
      %p51 = scmp.eq.s32.totalorder %s13, 8
      %p52 = por %p50, %p51
      %p53 = scmp.ne.s32.totalorder %s42, %s43
      %p54 = scmp.eq.s32.totalorder %s13, 0
      %p55 = por %p53, %p54
      %p56 = scmp.ne.s32.totalorder %s42, %s43
      %p57 = scmp.eq.s32.totalorder %s14, 8
      %p58 = por %p56, %p57
      %p60 = scmp.ne.s32.totalorder %s43, %s59
      %p61 = scmp.eq.s32.totalorder %s14, 0
      %p62 = por %p60, %p61
      %s63 = ssub.s32 %s17, %s26
      %s64 = ssub.s32 %s16, %s30
      %s65 = sor.u32 %s63, %s64
      %p66 = scmp.eq.s32.totalorder %s65, 0
      %s68 = sadd.s32 %s67, 1
      %s69 = scalar_select %p66, %s67, %s68
      %p72 = pneg %p66
      %p73 = scmp.eq.s32.totalorder %s8, 8
      %p74 = por %p72, %p73
      %p75 = scmp.ne.s32.totalorder %s67, %s70
      %p76 = scmp.eq.s32.totalorder %s8, 0
      %p77 = por %p75, %p76
      %p78 = scmp.ne.s32.totalorder %s67, %s70
      %p79 = scmp.eq.s32.totalorder %s13, 8
      %p80 = por %p78, %p79
      %p81 = scmp.ne.s32.totalorder %s70, %s71
      %p82 = scmp.eq.s32.totalorder %s13, 0
      %p83 = por %p81, %p82
      %p84 = scmp.ne.s32.totalorder %s70, %s71
      %p85 = scmp.eq.s32.totalorder %s14, 8
      %p86 = por %p84, %p85
      %p88 = scmp.ne.s32.totalorder %s71, %s87
      %p89 = scmp.eq.s32.totalorder %s14, 0
      %p90 = por %p88, %p89
      %s91 = ssub.s32 %s15, %s34
      %s92 = ssub.s32 %s16, %s30
      %s93 = sor.u32 %s91, %s92
      %p94 = scmp.eq.s32.totalorder %s93, 0
      %s96 = sadd.s32 %s95, 1
      %s97 = scalar_select %p94, %s95, %s96
      %p100 = pneg %p94
      %p101 = scmp.eq.s32.totalorder %s8, 8
      %p102 = por %p100, %p101
      %p103 = scmp.ne.s32.totalorder %s95, %s98
      %p104 = scmp.eq.s32.totalorder %s8, 0
      %p105 = por %p103, %p104
      %p106 = scmp.ne.s32.totalorder %s95, %s98
      %p107 = scmp.eq.s32.totalorder %s13, 8
      %p108 = por %p106, %p107
      %p109 = scmp.ne.s32.totalorder %s98, %s99
      %p110 = scmp.eq.s32.totalorder %s13, 0
      %p111 = por %p109, %p110
      %p112 = scmp.ne.s32.totalorder %s98, %s99
      %p113 = scmp.eq.s32.totalorder %s14, 8
      %p114 = por %p112, %p113
      %p116 = scmp.ne.s32.totalorder %s99, %s115
      %p117 = scmp.eq.s32.totalorder %s14, 0
      %p118 = por %p116, %p117
      %p119 = scmp.le.s32.totalorder 1, %s8
      %p120 = scmp.lt.s32.totalorder %s8, 10
      %p121 = pnand %p119, %p120
      %p122 = pneg %p121
      // Predicated region
      $region9: #{model_forward.35} parent=5 // pred_check
        _
      $region10: #{model_forward.35} parent=5 // pred_check_branch
        %124 = sbr.rel (%p121) target = $region12
      $region11: #{model_forward.35} parent=5 // pred_region
        %s125 = ssub.s32 %s8, 1
      $region12: #{model_forward.35} parent=5 // pred_fallthru
        _
      %p126 = scmp.lt.s32.totalorder %s8, 9
      // Predicated region
      $region13: #{model_forward.35} parent=5 // pred_check
        %p127 = pneg %p126
      $region14: #{model_forward.35} parent=5 // pred_check_branch
        %129 = sbr.rel (%p127) target = $region16
      $region15: #{model_forward.35} parent=5 // pred_region
        // Predicated region
        $region17: #{model_forward.35} parent=15 // pred_check
          %p130 = pneg %p49
        $region18: #{model_forward.35} parent=15 // pred_check_branch
          %132 = sbr.rel (%p130) target = $region20
        $region19: #{model_forward.35} parent=15 // pred_region
          %s133 = sand.u32 %s39, 1
          %s134 = sand.u32 %s39, 1
          %s135 = smul.addr %s134, 16
          %s136 = scalar_lea.vmem [#allocation3], %s135
          %s137 = smul.u32 4, %s15
          %s138 = smul.addr %s137, 9
          %s139 = sadd.s32 %s17, %s138
          %s140 = smul.addr %s139, 4
          %s141 = scalar_lea.vmem %s0, %s140
          // Predicated region
          $region21: #{model_forward.35} parent=19 // pred_check
            _
          $region22: #{model_forward.35} parent=19 // pred_check_branch
            %143 = sbr.rel (0) target = $region24
          $region23: #{model_forward.35} parent=19 // pred_region
            // Predicated region
            $region25: #{model_forward.35} parent=23 // pred_check
              _
            $region26: #{model_forward.35} parent=23 // pred_check_branch
              %145 = sbr.rel target = $region28
            $region27: #{model_forward.35} parent=23 // pred_region
              // Predicated region
              $region40: #{model_forward.35} parent=27 // pred_check
                _
              $region41: #{model_forward.35} parent=27 // pred_check_branch
                %167 = sbr.rel (0) target = $region43
              $region42: #{model_forward.35} parent=27 // pred_region
                loop: start=0, step=1, limit=1
                $region44: #{model_forward.35} parent=42 // loop_pre_header
                  _
                $region45: #{model_forward.35} parent=42 // loop_header
                  %s169 = sphi 0, %s173
                  %p170 = scmp.ge.s32.totalorder %s169, 1
                  %s174 = sphi %s141, %s141
                  %s175 = sphi %s136, %s136
                $region46: #{model_forward.35} parent=42 // loop_header_branch
                  %172 = sbr.rel (%p170) target = $region50
                $region47: #{model_forward.35} parent=42 // loop_body
                  _
                $region48: #{model_forward.35} parent=42 // loop_footer
                  %s173 = sadd.s32 1, %s169
                $region49: #{model_forward.35} parent=42 // loop_footer_branch
                  %168 = sbr.rel target = $region45
                $region50: #{model_forward.35} parent=42 // loop_exit
                  _
                %s177 = ssub.s32 16, 1
                loop: start=0, step=1, limit=1
                $region51: #{model_forward.35} parent=42 // loop_pre_header
                  _
                $region52: #{model_forward.35} parent=42 // loop_header
                  %s179 = sphi 0, %s183
                  %p180 = scmp.ge.s32.totalorder %s179, 1
                  %s184 = sphi %s141, %s141
                  %s185 = sphi %s136, %s136
                $region53: #{model_forward.35} parent=42 // loop_header_branch
                  %182 = sbr.rel (%p180) target = $region57
                $region54: #{model_forward.35} parent=42 // loop_body
                  %v186 = vld [vmem:[%s184] sm:%s177]
                  %187 = vst [vmem:[%s185] sm:%s177] %v186
                  %v188 = vld [vmem:[%s184 + $0x24] sm:%s177]
                  %189 = vst [vmem:[%s185 + $0x4] sm:%s177] %v188
                  %v190 = vld [vmem:[%s184 + $0x48] sm:%s177]
                  %191 = vst [vmem:[%s185 + $0x8] sm:%s177] %v190
                  %v192 = vld [vmem:[%s184 + $0x6c] sm:%s177]
                  %193 = vst [vmem:[%s185 + $0xc] sm:%s177] %v192
                $region55: #{model_forward.35} parent=42 // loop_footer
                  %s183 = sadd.s32 1, %s179
                $region56: #{model_forward.35} parent=42 // loop_footer_branch
                  %178 = sbr.rel target = $region52
                $region57: #{model_forward.35} parent=42 // loop_exit
                  _
              $region43: #{model_forward.35} parent=27 // pred_fallthru
                _
            $region28: #{model_forward.35} parent=23 // pred_fallthru
              _
            // Predicated region
            $region29: #{model_forward.35} parent=23 // pred_check
              _
            $region30: #{model_forward.35} parent=23 // pred_check_branch
              %147 = sbr.rel (0) target = $region32
            $region31: #{model_forward.35} parent=23 // pred_region
              %s149 = ssub.s32 16, 1
              loop: start=0, step=1, limit=1
              $region33: #{model_forward.35} parent=31 // loop_pre_header
                _
              $region34: #{model_forward.35} parent=31 // loop_header
                %s151 = sphi 0, %s155
                %p152 = scmp.ge.s32.totalorder %s151, 1
                %s156 = sphi %s141, %s141
                %s157 = sphi %s136, %s136
              $region35: #{model_forward.35} parent=31 // loop_header_branch
                %154 = sbr.rel (%p152) target = $region39
              $region36: #{model_forward.35} parent=31 // loop_body
                %v158 = vld [vmem:[%s156] sm:%s149]
                %159 = vst [vmem:[%s157] sm:%s149] %v158
                %v160 = vld [vmem:[%s156 + $0x24] sm:%s149]
                %161 = vst [vmem:[%s157 + $0x4] sm:%s149] %v160
                %v162 = vld [vmem:[%s156 + $0x48] sm:%s149]
                %163 = vst [vmem:[%s157 + $0x8] sm:%s149] %v162
                %v164 = vld [vmem:[%s156 + $0x6c] sm:%s149]
                %165 = vst [vmem:[%s157 + $0xc] sm:%s149] %v164
              $region37: #{model_forward.35} parent=31 // loop_footer
                %s155 = sadd.s32 1, %s151
              $region38: #{model_forward.35} parent=31 // loop_footer_branch
                %150 = sbr.rel target = $region34
              $region39: #{model_forward.35} parent=31 // loop_exit
                _
            $region32: #{model_forward.35} parent=23 // pred_fallthru
              _
          $region24: #{model_forward.35} parent=19 // pred_fallthru
            _
          %194 = vnop
        $region20: #{model_forward.35} parent=15 // pred_fallthru
          _
        // Predicated region
        $region58: #{model_forward.35} parent=15 // pred_check
          %p195 = pneg %p77
        $region59: #{model_forward.35} parent=15 // pred_check_branch
          %197 = sbr.rel (%p195) target = $region61
        $region60: #{model_forward.35} parent=15 // pred_region
          %s198 = smul.u32 16, %s17
          %p199 = scmp.lt.s32.totalorder %s198, 143
          %s200 = scalar_select %p199, %s198, 143
          %p201 = scmp.lt.s32.totalorder %s16, 0
          %s202 = scalar_select %p201, %s16, 0
          %s203 = sadd.s32 %s202, %s200
          %s204 = smul.addr %s203, 4
          %s205 = scalar_lea.vmem %s1, %s204
          %s206 = smul.u32 16, %s17
        $region61: #{model_forward.35} parent=15 // pred_fallthru
          _
      $region16: #{model_forward.35} parent=5 // pred_fallthru
        _
      %p207 = scmp.le.s32.totalorder 1, %s8
      %p208 = scmp.lt.s32.totalorder %s8, 10
      %p209 = pnand %p207, %p208
      %p210 = pneg %p209
      // Predicated region
      $region62: #{model_forward.35} parent=5 // pred_check
        _
      $region63: #{model_forward.35} parent=5 // pred_check_branch
        %212 = sbr.rel (%p209) target = $region65
      $region64: #{model_forward.35} parent=5 // pred_region
        %s213 = ssub.s32 %s8, 1
        %s214 = sand.u32 %s42, 1
        %s215 = sand.u32 %s42, 1
        %s216 = smul.addr %s215, 16
        %s217 = scalar_lea.vmem [#allocation3], %s216
        // Predicated region
        $region66: #{model_forward.35} parent=64 // pred_check
          %p218 = pneg %p55
        $region67: #{model_forward.35} parent=64 // pred_check_branch
          %220 = sbr.rel (%p218) target = $region69
        $region68: #{model_forward.35} parent=64 // pred_region
          _
        $region69: #{model_forward.35} parent=64 // pred_fallthru
          _
        %s221 = sand.u32 %s42, 1
        %s222 = sand.u32 %s42, 1
        %s223 = smul.addr %s222, 16
        %s224 = scalar_lea.vmem [#allocation3], %s223
        %p225 = pneg %p55
        %p226 = pneg %p52
        %s227 = smul.u32 16, %s20
        %p228 = scmp.lt.s32.totalorder %s227, 143
        %s229 = scalar_select %p228, %s227, 143
        %p230 = scmp.lt.s32.totalorder %s19, 0
        %s231 = scalar_select %p230, %s19, 0
        %s232 = sadd.s32 %s231, %s229
        %s233 = smul.addr %s232, 4
        %s234 = scalar_lea.vmem %s1, %s233
        %p235 = pneg %p83
        %p236 = pneg %p80
        %p237 = pneg %p111
        %p238 = pneg %p108
        %s239 = smul.u32 4, %s18
        %p240 = scmp.lt.s32.totalorder %s239, 3
        %s241 = scalar_select %p240, %s239, 3
        %p242 = scmp.lt.s32.totalorder %s19, 0
        %s243 = scalar_select %p242, %s19, 0
        %s244 = sadd.s32 %s243, %s241
        %s245 = smul.addr %s244, 8
        %s246 = scalar_lea.vmem %s2, %s245
        %s247 = smul.u32 4, %s18
        %s248 = smul.u32 16, %s20
        %p249 = scmp.lt.s32.totalorder %s248, 143
        %s250 = scalar_select %p249, %s248, 143
        %p251 = scmp.lt.s32.totalorder %s19, 0
        %s252 = scalar_select %p251, %s19, 0
        %s253 = sadd.s32 %s252, %s250
        %s254 = smul.addr %s253, 4
        %s255 = scalar_lea.vmem %s1, %s254
        %s256 = smul.u32 16, %s20
        %s257 = smul.u32 4, %s18
        %p258 = scmp.lt.s32.totalorder %s257, 3
        %s259 = scalar_select %p258, %s257, 3
        %p260 = scmp.lt.s32.totalorder %s19, 0
        %s261 = scalar_select %p260, %s19, 0
        %s262 = sadd.s32 %s261, %s259
        %s263 = smul.addr %s262, 8
        %s264 = scalar_lea.vmem %s2, %s263
        %s265 = smul.u32 4, %s18
        %p267 = scmp.eq.s32.totalorder %s20, 0
        // Predicated region
        $region70: #{model_forward.35} parent=64 // pred_check
          %p268 = pneg %p267
        $region71: #{model_forward.35} parent=64 // pred_check_branch
          %270 = sbr.rel (%p268) target = $region73
        $region72: #{model_forward.35} parent=64 // pred_region
          %271 = vst [vmem:[#allocation2] sm:$0xff] 0.0
          %272 = vst [vmem:[#allocation2 + $0x8] sm:$0xff] 0.0
          %273 = vst [vmem:[#allocation2 + $0x10] sm:$0xff] 0.0
          %274 = vst [vmem:[#allocation2 + $0x18] sm:$0xff] 0.0
        $region73: #{model_forward.35} parent=64 // pred_fallthru
          _
        %v275 = vld [vmem:[#allocation2] sm:$0xff]
        %v276 = vld [vmem:[#allocation2 + $0x8] sm:$0xff]
        %v277 = vld [vmem:[#allocation2 + $0x10] sm:$0xff]
        %v278 = vld [vmem:[#allocation2 + $0x18] sm:$0xff]
        %v279 = vld [vmem:[%s217] sm:$0xf]
        %v280 = vld [vmem:[%s217 + $0x4] sm:$0xf]
        %v281 = vld [vmem:[%s217 + $0x8] sm:$0xf]
        %v282 = vld [vmem:[%s217 + $0xc] sm:$0xf]
        %v283 = vld [vmem:[%s255] sm:$0xf]
        %v284 = vld [vmem:[%s255 + $0x4] sm:$0xf]
        %v285 = vld [vmem:[%s255 + $0x8] sm:$0xf]
        %v286 = vld [vmem:[%s255 + $0xc] sm:$0xf]
        %v287 = vld [vmem:[%s255 + $0x10] sm:$0xf]
        %v288 = vld [vmem:[%s255 + $0x14] sm:$0xf]
        %v289 = vld [vmem:[%s255 + $0x18] sm:$0xf]
        %v290 = vld [vmem:[%s255 + $0x1c] sm:$0xf]
        %v291 = vld [vmem:[%s255 + $0x20] sm:$0xf]
        %v292 = vld [vmem:[%s255 + $0x24] sm:$0xf]
        %v293 = vld [vmem:[%s255 + $0x28] sm:$0xf]
        %v294 = vld [vmem:[%s255 + $0x2c] sm:$0xf]
        %v295 = vld [vmem:[%s255 + $0x30] sm:$0xf]
        %v296 = vld [vmem:[%s255 + $0x34] sm:$0xf]
        %v297 = vld [vmem:[%s255 + $0x38] sm:$0xf]
        %v298 = vld [vmem:[%s255 + $0x3c] sm:$0xf]
        %v303 = vunpack.c.l.b16 %v279
        %v304 = vunpack.c.l.b16 %v280
        %v305 = vunpack.c.l.b16 %v281
        %v306 = vunpack.c.l.b16 %v282
        %v307 = vpack.c.b16 %v304, %v303
        %v308 = vpack.c.b16 %v306, %v305
        %v327 = vunpack.c.l.b16 %v283
        %v328 = vunpack.c.l.b16 %v284
        %v329 = vunpack.c.l.b16 %v285
        %v330 = vunpack.c.l.b16 %v286
        %v331 = vunpack.c.l.b16 %v287
        %v332 = vunpack.c.l.b16 %v288
        %v333 = vunpack.c.l.b16 %v289
        %v334 = vunpack.c.l.b16 %v290
        %v335 = vunpack.c.l.b16 %v291
        %v336 = vunpack.c.l.b16 %v292
        %v337 = vunpack.c.l.b16 %v293
        %v338 = vunpack.c.l.b16 %v294
        %v339 = vunpack.c.l.b16 %v295
        %v340 = vunpack.c.l.b16 %v296
        %v341 = vunpack.c.l.b16 %v297
        %v342 = vunpack.c.l.b16 %v298
        %v343 = vpack.c.b16 %v328, %v327
        %v344 = vpack.c.b16 %v330, %v329
        %v345 = vpack.c.b16 %v332, %v331
        %v346 = vpack.c.b16 %v334, %v333
        %v347 = vpack.c.b16 %v336, %v335
        %v348 = vpack.c.b16 %v338, %v337
        %v349 = vpack.c.b16 %v340, %v339
        %v350 = vpack.c.b16 %v342, %v341
        %359 = vmatprep.subr.bf16.mxu0 0
        %360 = vmatpush1.bf16.msra.mxu0 %v350
        %361 = vmatprep.subr.bf16.mxu0 0
        %362 = vmatpush1.bf16.msra.mxu0 %v349
        %363 = vmatprep.subr.bf16.mxu0 0
        %364 = vmatpush1.bf16.msra.mxu0 %v348
        %365 = vmatprep.subr.bf16.mxu0 0
        %366 = vmatpush1.bf16.msra.mxu0 %v347
        %367 = vmatprep.subr.bf16.mxu0 0
        %368 = vmatpush1.bf16.msra.mxu0 %v346
        %369 = vmatprep.subr.bf16.mxu0 0
        %370 = vmatpush1.bf16.msra.mxu0 %v345
        %371 = vmatprep.subr.bf16.mxu0 0
        %372 = vmatpush1.bf16.msra.mxu0 %v344
        %373 = vmatprep.subr.bf16.mxu0 0
        %374 = vmatpush1.bf16.msra.mxu0 %v343
        %375 = vmatprep.subr.bf16.mxu0 0
        %376 = vmatpush2.bf16.msra.mxu0 0
        %377 = vmatprep.subr.bf16.mxu0 0
        %378 = vmatpush2.bf16.msra.mxu0 0
        %379 = vmatprep.subr.bf16.mxu0 0
        %380 = vmatpush2.bf16.msra.mxu0 0
        %381 = vmatprep.subr.bf16.mxu0 0
        %382 = vmatpush2.bf16.msra.mxu0 0
        %383 = vmatprep.subr.bf16.mxu0 0
        %384 = vmatpush2.bf16.msra.mxu0 0
        %385 = vmatprep.subr.bf16.mxu0 0
        %386 = vmatpush2.bf16.msra.mxu0 0
        %387 = vmatprep.subr.bf16.mxu0 0
        %388 = vmatpush2.bf16.msra.mxu0 0
        %389 = vmatprep.subr.bf16.mxu0 0
        %390 = vmatpush2.bf16.msra.mxu0 0
        %391 = vmatprep.mubr.bf16.mxu0 0
        %392 = vmatmul.mubr.bf16.gmra.mxu0 %v307
        %v393 = vpop.f32.mrf.mxu0
        %v394 = vadd.f32 0.0, %v393
        %v395 = vpop.f32.mrf.mxu0
        %v396 = vpop.f32.mrf.mxu0
        %v397 = vadd.f32 0.0, %v396
        %v398 = vpop.f32.mrf.mxu0
        %399 = vmatprep.mubr.bf16.mxu0 0
        %400 = vmatmul.mubr.bf16.gmra.mxu0 %v308
        %v401 = vpop.f32.mrf.mxu0
        %v402 = vadd.f32 0.0, %v401
        %v403 = vpop.f32.mrf.mxu0
        %v404 = vpop.f32.mrf.mxu0
        %v405 = vadd.f32 0.0, %v404
        %v406 = vpop.f32.mrf.mxu0
        %407 = vdwg.mxu0
        %v408 = vadd.f32 %v275, %v394
        %v409 = vadd.f32 %v276, %v397
        %v410 = vadd.f32 %v277, %v402
        %v411 = vadd.f32 %v278, %v405
        %412 = vst [vmem:[#allocation2] sm:$0xff] %v408
        %413 = vst [vmem:[#allocation2 + $0x8] sm:$0xff] %v409
        %414 = vst [vmem:[#allocation2 + $0x10] sm:$0xff] %v410
        %415 = vst [vmem:[#allocation2 + $0x18] sm:$0xff] %v411
        %p416 = scmp.eq.s32.totalorder %s20, 8
        // Predicated region
        $region74: #{model_forward.35} parent=64 // pred_check
          %p417 = pneg %p416
        $region75: #{model_forward.35} parent=64 // pred_check_branch
          %419 = sbr.rel (%p417) target = $region77
        $region76: #{model_forward.35} parent=64 // pred_region
          %v420 = vld [vmem:[#allocation2] sm:$0xff]
          %v421 = vld [vmem:[#allocation2 + $0x8] sm:$0xff]
          %v422 = vld [vmem:[#allocation2 + $0x10] sm:$0xff]
          %v423 = vld [vmem:[#allocation2 + $0x18] sm:$0xff]
          %424 = vst [vmem:[%s264] sm:$0xff] %v420
          %425 = vst [vmem:[%s264 + $0x8] sm:$0xff] %v421
          %426 = vst [vmem:[%s264 + $0x10] sm:$0xff] %v422
          %427 = vst [vmem:[%s264 + $0x18] sm:$0xff] %v423
        $region77: #{model_forward.35} parent=64 // pred_fallthru
          _
        %s428 = smul.u32 4, %s18
        %p429 = scmp.lt.s32.totalorder %s428, 3
        %s430 = scalar_select %p429, %s428, 3
        %p431 = scmp.lt.s32.totalorder %s19, 0
        %s432 = scalar_select %p431, %s19, 0
        %s433 = sadd.s32 %s432, %s430
        %s434 = smul.addr %s433, 8
        %s435 = scalar_lea.vmem %s2, %s434
        // Predicated region
        $region78: #{model_forward.35} parent=64 // pred_check
          %p436 = pneg %p108
        $region79: #{model_forward.35} parent=64 // pred_check_branch
          %438 = sbr.rel (%p436) target = $region81
        $region80: #{model_forward.35} parent=64 // pred_region
          %s439 = smul.u32 4, %s18
        $region81: #{model_forward.35} parent=64 // pred_fallthru
          _
        // Predicated region
        $region82: #{model_forward.35} parent=64 // pred_check
          %p440 = pneg %p108
        $region83: #{model_forward.35} parent=64 // pred_check_branch
          %442 = sbr.rel (%p440) target = $region85
        $region84: #{model_forward.35} parent=64 // pred_region
          %s443 = smul.u32 4, %s18
          %p444 = scmp.lt.s32.totalorder %s443, 3
          %s445 = scalar_select %p444, %s443, 3
          %p446 = scmp.lt.s32.totalorder %s19, 0
          %s447 = scalar_select %p446, %s19, 0
          %s448 = sadd.s32 %s447, %s445
          %s449 = smul.addr %s448, 8
          %s450 = scalar_lea.vmem %s2, %s449
        $region85: #{model_forward.35} parent=64 // pred_fallthru
          _
      $region65: #{model_forward.35} parent=5 // pred_fallthru
        _
      %p451 = scmp.le.s32.totalorder 2, %s8
      // Predicated region
      $region86: #{model_forward.35} parent=5 // pred_check
        %p452 = pneg %p451
      $region87: #{model_forward.35} parent=5 // pred_check_branch
        %454 = sbr.rel (%p452) target = $region89
      $region88: #{model_forward.35} parent=5 // pred_region
        %s455 = ssub.s32 %s8, 2
      $region89: #{model_forward.35} parent=5 // pred_fallthru
        _
    $region6: #{model_forward.35} parent=1 // loop_footer
      %s12 = sadd.s32 1, %s8
    $region7: #{model_forward.35} parent=1 // loop_footer_branch
      %7 = sbr.rel target = $region3
    $region8: #{model_forward.35} parent=1 // loop_exit
      _

// kernel: model_forward.56
$region0: #{model_forward.56}
  #allocation0 [shape = 'u32[]', space=smem, size = 0x4, offset = 0x4, fixed_abs, tag = 'smem constant byte address 0x4 - core index']
  #allocation1 [shape = 'u32[144,128]{1,0:T(1,128)}', space=vmem, size = 0x12000, scoped, tag = 'internal scratch']
  #allocation2 [shape = 'f32[16,128]{1,0:T(8,128)}', space=vmem, size = 0x2000, scoped, tag = 'scratch operand']
  %s0 = inlined_call_operand.vmem [shape: bf16[16,1152], index: 0, kind: input, shape index: {}]
  %s1 = inlined_call_operand.vmem [shape: bf16[1152,128], index: 1, kind: input, shape index: {}]
  %s2 = inlined_call_operand.vmem [shape: f32[16,128], index: 2, kind: output, shape index: {}]
  %s3 = sld [smem:[#allocation0]]
  $region90: #{model_forward.56} parent=0
    _
  %s5 = ssub.s32 1, %s3
  %s6 = scalar_select 0, %s5, %s3
  $region1: #{model_forward.56} parent=0
    #allocation3 [shape = 'u8[8192]{0}', space=vmem, size = 0x2000, scoped, tag = 'input window, operand 0']
    loop: start=0, step=1, limit=11
    $region2: #{model_forward.56} parent=1 // loop_pre_header
      _
    $region3: #{model_forward.56} parent=1 // loop_header
      %s8 = sphi 0, %s12
      %p9 = scmp.ge.s32.totalorder %s8, 11
      %s15 = sphi 0, %s34
      %s16 = sphi 0, %s30
      %s17 = sphi 0, %s26
      %s18 = sphi 0, %s15
      %s19 = sphi 0, %s16
      %s20 = sphi 0, %s17
      %s21 = sphi 0, %s18
      %s22 = sphi 0, %s19
      %s23 = sphi 0, %s20
      %s39 = sphi 0, %s41
      %s42 = sphi 0, %s39
      %s43 = sphi 0, %s42
      %s59 = sphi 0, %s43
      %s67 = sphi 0, %s69
      %s70 = sphi 0, %s67
      %s71 = sphi 0, %s70
      %s87 = sphi 0, %s71
      %s95 = sphi 0, %s97
      %s98 = sphi 0, %s95
      %s99 = sphi 0, %s98
      %s115 = sphi 0, %s99
    $region4: #{model_forward.56} parent=1 // loop_header_branch
      %11 = sbr.rel (%p9) target = $region8
    $region5: #{model_forward.56} parent=1 // loop_body
      %s13 = ssub.s32 %s8, 1
      %s14 = ssub.s32 %s8, 2
      %s24 = sadd.s32 1, %s17
      %p25 = scmp.ge.s32.totalorder %s24, 9
      %s26 = scalar_select %p25, 0, %s24
      %s27 = sadd.s32 1, %s16
      %s28 = scalar_select %p25, %s27, %s16
      %p29 = scmp.ge.s32.totalorder %s28, 1
      %s30 = scalar_select %p29, 0, %s28
      %s31 = sadd.s32 1, %s15
      %s32 = scalar_select %p29, %s31, %s15
      %p33 = scmp.ge.s32.totalorder %s32, 1
      %s34 = scalar_select %p33, 0, %s32
      %s35 = ssub.s32 %s15, %s34
      %s36 = ssub.s32 %s17, %s26
      %s37 = sor.u32 %s35, %s36
      %p38 = scmp.eq.s32.totalorder %s37, 0
      %s40 = sadd.s32 %s39, 1
      %s41 = scalar_select %p38, %s39, %s40
      %p44 = pneg %p38
      %p45 = scmp.eq.s32.totalorder %s8, 8
      %p46 = por %p44, %p45
      %p47 = scmp.ne.s32.totalorder %s39, %s42
      %p48 = scmp.eq.s32.totalorder %s8, 0
      %p49 = por %p47, %p48
      %p50 = scmp.ne.s32.totalorder %s39, %s42
      %p51 = scmp.eq.s32.totalorder %s13, 8
      %p52 = por %p50, %p51
      %p53 = scmp.ne.s32.totalorder %s42, %s43
      %p54 = scmp.eq.s32.totalorder %s13, 0
      %p55 = por %p53, %p54
      %p56 = scmp.ne.s32.totalorder %s42, %s43
      %p57 = scmp.eq.s32.totalorder %s14, 8
      %p58 = por %p56, %p57
      %p60 = scmp.ne.s32.totalorder %s43, %s59
      %p61 = scmp.eq.s32.totalorder %s14, 0
      %p62 = por %p60, %p61
      %s63 = ssub.s32 %s17, %s26
      %s64 = ssub.s32 %s16, %s30
      %s65 = sor.u32 %s63, %s64
      %p66 = scmp.eq.s32.totalorder %s65, 0
      %s68 = sadd.s32 %s67, 1
      %s69 = scalar_select %p66, %s67, %s68
      %p72 = pneg %p66
      %p73 = scmp.eq.s32.totalorder %s8, 8
      %p74 = por %p72, %p73
      %p75 = scmp.ne.s32.totalorder %s67, %s70
      %p76 = scmp.eq.s32.totalorder %s8, 0
      %p77 = por %p75, %p76
      %p78 = scmp.ne.s32.totalorder %s67, %s70
      %p79 = scmp.eq.s32.totalorder %s13, 8
      %p80 = por %p78, %p79
      %p81 = scmp.ne.s32.totalorder %s70, %s71
      %p82 = scmp.eq.s32.totalorder %s13, 0
      %p83 = por %p81, %p82
      %p84 = scmp.ne.s32.totalorder %s70, %s71
      %p85 = scmp.eq.s32.totalorder %s14, 8
      %p86 = por %p84, %p85
      %p88 = scmp.ne.s32.totalorder %s71, %s87
      %p89 = scmp.eq.s32.totalorder %s14, 0
      %p90 = por %p88, %p89
      %s91 = ssub.s32 %s15, %s34
      %s92 = ssub.s32 %s16, %s30
      %s93 = sor.u32 %s91, %s92
      %p94 = scmp.eq.s32.totalorder %s93, 0
      %s96 = sadd.s32 %s95, 1
      %s97 = scalar_select %p94, %s95, %s96
      %p100 = pneg %p94
      %p101 = scmp.eq.s32.totalorder %s8, 8
      %p102 = por %p100, %p101
      %p103 = scmp.ne.s32.totalorder %s95, %s98
      %p104 = scmp.eq.s32.totalorder %s8, 0
      %p105 = por %p103, %p104
      %p106 = scmp.ne.s32.totalorder %s95, %s98
      %p107 = scmp.eq.s32.totalorder %s13, 8
      %p108 = por %p106, %p107
      %p109 = scmp.ne.s32.totalorder %s98, %s99
      %p110 = scmp.eq.s32.totalorder %s13, 0
      %p111 = por %p109, %p110
      %p112 = scmp.ne.s32.totalorder %s98, %s99
      %p113 = scmp.eq.s32.totalorder %s14, 8
      %p114 = por %p112, %p113
      %p116 = scmp.ne.s32.totalorder %s99, %s115
      %p117 = scmp.eq.s32.totalorder %s14, 0
      %p118 = por %p116, %p117
      %p119 = scmp.le.s32.totalorder 1, %s8
      %p120 = scmp.lt.s32.totalorder %s8, 10
      %p121 = pnand %p119, %p120
      %p122 = pneg %p121
      // Predicated region
      $region9: #{model_forward.56} parent=5 // pred_check
        _
      $region10: #{model_forward.56} parent=5 // pred_check_branch
        %124 = sbr.rel (%p121) target = $region12
      $region11: #{model_forward.56} parent=5 // pred_region
        %s125 = ssub.s32 %s8, 1
      $region12: #{model_forward.56} parent=5 // pred_fallthru
        _
      %p126 = scmp.lt.s32.totalorder %s8, 9
      // Predicated region
      $region13: #{model_forward.56} parent=5 // pred_check
        %p127 = pneg %p126
      $region14: #{model_forward.56} parent=5 // pred_check_branch
        %129 = sbr.rel (%p127) target = $region16
      $region15: #{model_forward.56} parent=5 // pred_region
        // Predicated region
        $region17: #{model_forward.56} parent=15 // pred_check
          %p130 = pneg %p49
        $region18: #{model_forward.56} parent=15 // pred_check_branch
          %132 = sbr.rel (%p130) target = $region20
        $region19: #{model_forward.56} parent=15 // pred_region
          %s133 = sand.u32 %s39, 1
          %s134 = sand.u32 %s39, 1
          %s135 = smul.addr %s134, 8
          %s136 = scalar_lea.vmem [#allocation3], %s135
          %s137 = smul.u32 2, %s15
          %s138 = smul.addr %s137, 9
          %s139 = sadd.s32 %s17, %s138
          %s140 = smul.addr %s139, 4
          %s141 = scalar_lea.vmem %s0, %s140
          // Predicated region
          $region21: #{model_forward.56} parent=19 // pred_check
            _
          $region22: #{model_forward.56} parent=19 // pred_check_branch
            %143 = sbr.rel (0) target = $region24
          $region23: #{model_forward.56} parent=19 // pred_region
            // Predicated region
            $region25: #{model_forward.56} parent=23 // pred_check
              _
            $region26: #{model_forward.56} parent=23 // pred_check_branch
              %145 = sbr.rel target = $region28
            $region27: #{model_forward.56} parent=23 // pred_region
              // Predicated region
              $region40: #{model_forward.56} parent=27 // pred_check
                _
              $region41: #{model_forward.56} parent=27 // pred_check_branch
                %163 = sbr.rel (0) target = $region43
              $region42: #{model_forward.56} parent=27 // pred_region
                loop: start=0, step=1, limit=1
                $region44: #{model_forward.56} parent=42 // loop_pre_header
                  _
                $region45: #{model_forward.56} parent=42 // loop_header
                  %s165 = sphi 0, %s169
                  %p166 = scmp.ge.s32.totalorder %s165, 1
                  %s170 = sphi %s141, %s141
                  %s171 = sphi %s136, %s136
                $region46: #{model_forward.56} parent=42 // loop_header_branch
                  %168 = sbr.rel (%p166) target = $region50
                $region47: #{model_forward.56} parent=42 // loop_body
                  _
                $region48: #{model_forward.56} parent=42 // loop_footer
                  %s169 = sadd.s32 1, %s165
                $region49: #{model_forward.56} parent=42 // loop_footer_branch
                  %164 = sbr.rel target = $region45
                $region50: #{model_forward.56} parent=42 // loop_exit
                  _
                %s173 = ssub.s32 16, 1
                loop: start=0, step=1, limit=1
                $region51: #{model_forward.56} parent=42 // loop_pre_header
                  _
                $region52: #{model_forward.56} parent=42 // loop_header
                  %s175 = sphi 0, %s179
                  %p176 = scmp.ge.s32.totalorder %s175, 1
                  %s180 = sphi %s141, %s141
                  %s181 = sphi %s136, %s136
                $region53: #{model_forward.56} parent=42 // loop_header_branch
                  %178 = sbr.rel (%p176) target = $region57
                $region54: #{model_forward.56} parent=42 // loop_body
                  %v182 = vld [vmem:[%s180] sm:%s173]
                  %183 = vst [vmem:[%s181] sm:%s173] %v182
                  %v184 = vld [vmem:[%s180 + $0x24] sm:%s173]
                  %185 = vst [vmem:[%s181 + $0x4] sm:%s173] %v184
                $region55: #{model_forward.56} parent=42 // loop_footer
                  %s179 = sadd.s32 1, %s175
                $region56: #{model_forward.56} parent=42 // loop_footer_branch
                  %174 = sbr.rel target = $region52
                $region57: #{model_forward.56} parent=42 // loop_exit
                  _
              $region43: #{model_forward.56} parent=27 // pred_fallthru
                _
            $region28: #{model_forward.56} parent=23 // pred_fallthru
              _
            // Predicated region
            $region29: #{model_forward.56} parent=23 // pred_check
              _
            $region30: #{model_forward.56} parent=23 // pred_check_branch
              %147 = sbr.rel (0) target = $region32
            $region31: #{model_forward.56} parent=23 // pred_region
              %s149 = ssub.s32 16, 1
              loop: start=0, step=1, limit=1
              $region33: #{model_forward.56} parent=31 // loop_pre_header
                _
              $region34: #{model_forward.56} parent=31 // loop_header
                %s151 = sphi 0, %s155
                %p152 = scmp.ge.s32.totalorder %s151, 1
                %s156 = sphi %s141, %s141
                %s157 = sphi %s136, %s136
              $region35: #{model_forward.56} parent=31 // loop_header_branch
                %154 = sbr.rel (%p152) target = $region39
              $region36: #{model_forward.56} parent=31 // loop_body
                %v158 = vld [vmem:[%s156] sm:%s149]
                %159 = vst [vmem:[%s157] sm:%s149] %v158
                %v160 = vld [vmem:[%s156 + $0x24] sm:%s149]
                %161 = vst [vmem:[%s157 + $0x4] sm:%s149] %v160
              $region37: #{model_forward.56} parent=31 // loop_footer
                %s155 = sadd.s32 1, %s151
              $region38: #{model_forward.56} parent=31 // loop_footer_branch
                %150 = sbr.rel target = $region34
              $region39: #{model_forward.56} parent=31 // loop_exit
                _
            $region32: #{model_forward.56} parent=23 // pred_fallthru
              _
          $region24: #{model_forward.56} parent=19 // pred_fallthru
            _
          %186 = vnop
        $region20: #{model_forward.56} parent=15 // pred_fallthru
          _
        // Predicated region
        $region58: #{model_forward.56} parent=15 // pred_check
          %p187 = pneg %p77
        $region59: #{model_forward.56} parent=15 // pred_check_branch
          %189 = sbr.rel (%p187) target = $region61
        $region60: #{model_forward.56} parent=15 // pred_region
          %s190 = smul.u32 16, %s17
          %p191 = scmp.lt.s32.totalorder %s190, 143
          %s192 = scalar_select %p191, %s190, 143
          %p193 = scmp.lt.s32.totalorder %s16, 0
          %s194 = scalar_select %p193, %s16, 0
          %s195 = sadd.s32 %s194, %s192
          %s196 = smul.addr %s195, 4
          %s197 = scalar_lea.vmem %s1, %s196
          %s198 = smul.u32 16, %s17
        $region61: #{model_forward.56} parent=15 // pred_fallthru
          _
      $region16: #{model_forward.56} parent=5 // pred_fallthru
        _
      %p199 = scmp.le.s32.totalorder 1, %s8
      %p200 = scmp.lt.s32.totalorder %s8, 10
      %p201 = pnand %p199, %p200
      %p202 = pneg %p201
      // Predicated region
      $region62: #{model_forward.56} parent=5 // pred_check
        _
      $region63: #{model_forward.56} parent=5 // pred_check_branch
        %204 = sbr.rel (%p201) target = $region65
      $region64: #{model_forward.56} parent=5 // pred_region
        %s205 = ssub.s32 %s8, 1
        %s206 = sand.u32 %s42, 1
        %s207 = sand.u32 %s42, 1
        %s208 = smul.addr %s207, 8
        %s209 = scalar_lea.vmem [#allocation3], %s208
        // Predicated region
        $region66: #{model_forward.56} parent=64 // pred_check
          %p210 = pneg %p55
        $region67: #{model_forward.56} parent=64 // pred_check_branch
          %212 = sbr.rel (%p210) target = $region69
        $region68: #{model_forward.56} parent=64 // pred_region
          _
        $region69: #{model_forward.56} parent=64 // pred_fallthru
          _
        %s213 = sand.u32 %s42, 1
        %s214 = sand.u32 %s42, 1
        %s215 = smul.addr %s214, 8
        %s216 = scalar_lea.vmem [#allocation3], %s215
        %p217 = pneg %p55
        %p218 = pneg %p52
        %s219 = smul.u32 16, %s20
        %p220 = scmp.lt.s32.totalorder %s219, 143
        %s221 = scalar_select %p220, %s219, 143
        %p222 = scmp.lt.s32.totalorder %s19, 0
        %s223 = scalar_select %p222, %s19, 0
        %s224 = sadd.s32 %s223, %s221
        %s225 = smul.addr %s224, 4
        %s226 = scalar_lea.vmem %s1, %s225
        %p227 = pneg %p83
        %p228 = pneg %p80
        %p229 = pneg %p111
        %p230 = pneg %p108
        %s231 = smul.u32 2, %s18
        %p232 = scmp.lt.s32.totalorder %s231, 1
        %s233 = scalar_select %p232, %s231, 1
        %p234 = scmp.lt.s32.totalorder %s19, 0
        %s235 = scalar_select %p234, %s19, 0
        %s236 = sadd.s32 %s235, %s233
        %s237 = smul.addr %s236, 8
        %s238 = scalar_lea.vmem %s2, %s237
        %s239 = smul.u32 2, %s18
        %s240 = smul.u32 16, %s20
        %p241 = scmp.lt.s32.totalorder %s240, 143
        %s242 = scalar_select %p241, %s240, 143
        %p243 = scmp.lt.s32.totalorder %s19, 0
        %s244 = scalar_select %p243, %s19, 0
        %s245 = sadd.s32 %s244, %s242
        %s246 = smul.addr %s245, 4
        %s247 = scalar_lea.vmem %s1, %s246
        %s248 = smul.u32 16, %s20
        %s249 = smul.u32 2, %s18
        %p250 = scmp.lt.s32.totalorder %s249, 1
        %s251 = scalar_select %p250, %s249, 1
        %p252 = scmp.lt.s32.totalorder %s19, 0
        %s253 = scalar_select %p252, %s19, 0
        %s254 = sadd.s32 %s253, %s251
        %s255 = smul.addr %s254, 8
        %s256 = scalar_lea.vmem %s2, %s255
        %s257 = smul.u32 2, %s18
        %p259 = scmp.eq.s32.totalorder %s20, 0
        // Predicated region
        $region70: #{model_forward.56} parent=64 // pred_check
          %p260 = pneg %p259
        $region71: #{model_forward.56} parent=64 // pred_check_branch
          %262 = sbr.rel (%p260) target = $region73
        $region72: #{model_forward.56} parent=64 // pred_region
          %263 = vst [vmem:[#allocation2] sm:$0xff] 0.0
          %264 = vst [vmem:[#allocation2 + $0x8] sm:$0xff] 0.0
        $region73: #{model_forward.56} parent=64 // pred_fallthru
          _
        %v265 = vld [vmem:[#allocation2] sm:$0xff]
        %v266 = vld [vmem:[#allocation2 + $0x8] sm:$0xff]
        %v267 = vld [vmem:[%s209] sm:$0xf]
        %v268 = vld [vmem:[%s209 + $0x4] sm:$0xf]
        %v269 = vld [vmem:[%s247] sm:$0xf]
        %v270 = vld [vmem:[%s247 + $0x4] sm:$0xf]
        %v271 = vld [vmem:[%s247 + $0x8] sm:$0xf]
        %v272 = vld [vmem:[%s247 + $0xc] sm:$0xf]
        %v273 = vld [vmem:[%s247 + $0x10] sm:$0xf]
        %v274 = vld [vmem:[%s247 + $0x14] sm:$0xf]
        %v275 = vld [vmem:[%s247 + $0x18] sm:$0xf]
        %v276 = vld [vmem:[%s247 + $0x1c] sm:$0xf]
        %v277 = vld [vmem:[%s247 + $0x20] sm:$0xf]
        %v278 = vld [vmem:[%s247 + $0x24] sm:$0xf]
        %v279 = vld [vmem:[%s247 + $0x28] sm:$0xf]
        %v280 = vld [vmem:[%s247 + $0x2c] sm:$0xf]
        %v281 = vld [vmem:[%s247 + $0x30] sm:$0xf]
        %v282 = vld [vmem:[%s247 + $0x34] sm:$0xf]
        %v283 = vld [vmem:[%s247 + $0x38] sm:$0xf]
        %v284 = vld [vmem:[%s247 + $0x3c] sm:$0xf]
        %v287 = vunpack.c.l.b16 %v267
        %v288 = vunpack.c.l.b16 %v268
        %v289 = vpack.c.b16 %v288, %v287
        %v307 = vunpack.c.l.b16 %v269
        %v308 = vunpack.c.l.b16 %v270
        %v309 = vunpack.c.l.b16 %v271
        %v310 = vunpack.c.l.b16 %v272
        %v311 = vunpack.c.l.b16 %v273
        %v312 = vunpack.c.l.b16 %v274
        %v313 = vunpack.c.l.b16 %v275
        %v314 = vunpack.c.l.b16 %v276
        %v315 = vunpack.c.l.b16 %v277
        %v316 = vunpack.c.l.b16 %v278
        %v317 = vunpack.c.l.b16 %v279
        %v318 = vunpack.c.l.b16 %v280
        %v319 = vunpack.c.l.b16 %v281
        %v320 = vunpack.c.l.b16 %v282
        %v321 = vunpack.c.l.b16 %v283
        %v322 = vunpack.c.l.b16 %v284
        %v323 = vpack.c.b16 %v308, %v307
        %v324 = vpack.c.b16 %v310, %v309
        %v325 = vpack.c.b16 %v312, %v311
        %v326 = vpack.c.b16 %v314, %v313
        %v327 = vpack.c.b16 %v316, %v315
        %v328 = vpack.c.b16 %v318, %v317
        %v329 = vpack.c.b16 %v320, %v319
        %v330 = vpack.c.b16 %v322, %v321
        %339 = vmatprep.subr.bf16.mxu0 0
        %340 = vmatpush1.bf16.msra.mxu0 %v330
        %341 = vmatprep.subr.bf16.mxu0 0
        %342 = vmatpush1.bf16.msra.mxu0 %v329
        %343 = vmatprep.subr.bf16.mxu0 0
        %344 = vmatpush1.bf16.msra.mxu0 %v328
        %345 = vmatprep.subr.bf16.mxu0 0
        %346 = vmatpush1.bf16.msra.mxu0 %v327
        %347 = vmatprep.subr.bf16.mxu0 0
        %348 = vmatpush1.bf16.msra.mxu0 %v326
        %349 = vmatprep.subr.bf16.mxu0 0
        %350 = vmatpush1.bf16.msra.mxu0 %v325
        %351 = vmatprep.subr.bf16.mxu0 0
        %352 = vmatpush1.bf16.msra.mxu0 %v324
        %353 = vmatprep.subr.bf16.mxu0 0
        %354 = vmatpush1.bf16.msra.mxu0 %v323
        %355 = vmatprep.subr.bf16.mxu0 0
        %356 = vmatpush2.bf16.msra.mxu0 0
        %357 = vmatprep.subr.bf16.mxu0 0
        %358 = vmatpush2.bf16.msra.mxu0 0
        %359 = vmatprep.subr.bf16.mxu0 0
        %360 = vmatpush2.bf16.msra.mxu0 0
        %361 = vmatprep.subr.bf16.mxu0 0
        %362 = vmatpush2.bf16.msra.mxu0 0
        %363 = vmatprep.subr.bf16.mxu0 0
        %364 = vmatpush2.bf16.msra.mxu0 0
        %365 = vmatprep.subr.bf16.mxu0 0
        %366 = vmatpush2.bf16.msra.mxu0 0
        %367 = vmatprep.subr.bf16.mxu0 0
        %368 = vmatpush2.bf16.msra.mxu0 0
        %369 = vmatprep.subr.bf16.mxu0 0
        %370 = vmatpush2.bf16.msra.mxu0 0
        %371 = vmatprep.mubr.bf16.mxu0 0
        %372 = vmatmul.mubr.bf16.gmra.mxu0 %v289
        %v373 = vpop.f32.mrf.mxu0
        %v374 = vadd.f32 0.0, %v373
        %v375 = vpop.f32.mrf.mxu0
        %v376 = vpop.f32.mrf.mxu0
        %v377 = vadd.f32 0.0, %v376
        %v378 = vpop.f32.mrf.mxu0
        %379 = vdwg.mxu0
        %v380 = vadd.f32 %v265, %v374
        %v381 = vadd.f32 %v266, %v377
        %382 = vst [vmem:[#allocation2] sm:$0xff] %v380
        %383 = vst [vmem:[#allocation2 + $0x8] sm:$0xff] %v381
        %p384 = scmp.eq.s32.totalorder %s20, 8
        // Predicated region
        $region74: #{model_forward.56} parent=64 // pred_check
          %p385 = pneg %p384
        $region75: #{model_forward.56} parent=64 // pred_check_branch
          %387 = sbr.rel (%p385) target = $region77
        $region76: #{model_forward.56} parent=64 // pred_region
          %v388 = vld [vmem:[#allocation2] sm:$0xff]
          %v389 = vld [vmem:[#allocation2 + $0x8] sm:$0xff]
          %390 = vst [vmem:[%s256] sm:$0xff] %v388
          %391 = vst [vmem:[%s256 + $0x8] sm:$0xff] %v389
        $region77: #{model_forward.56} parent=64 // pred_fallthru
          _
        %s392 = smul.u32 2, %s18
        %p393 = scmp.lt.s32.totalorder %s392, 1
        %s394 = scalar_select %p393, %s392, 1
        %p395 = scmp.lt.s32.totalorder %s19, 0
        %s396 = scalar_select %p395, %s19, 0
        %s397 = sadd.s32 %s396, %s394
        %s398 = smul.addr %s397, 8
        %s399 = scalar_lea.vmem %s2, %s398
        // Predicated region
        $region78: #{model_forward.56} parent=64 // pred_check
          %p400 = pneg %p108
        $region79: #{model_forward.56} parent=64 // pred_check_branch
          %402 = sbr.rel (%p400) target = $region81
        $region80: #{model_forward.56} parent=64 // pred_region
          %s403 = smul.u32 2, %s18
        $region81: #{model_forward.56} parent=64 // pred_fallthru
          _
        // Predicated region
        $region82: #{model_forward.56} parent=64 // pred_check
          %p404 = pneg %p108
        $region83: #{model_forward.56} parent=64 // pred_check_branch
          %406 = sbr.rel (%p404) target = $region85
        $region84: #{model_forward.56} parent=64 // pred_region
          %s407 = smul.u32 2, %s18
          %p408 = scmp.lt.s32.totalorder %s407, 1
          %s409 = scalar_select %p408, %s407, 1
          %p410 = scmp.lt.s32.totalorder %s19, 0
          %s411 = scalar_select %p410, %s19, 0
          %s412 = sadd.s32 %s411, %s409
          %s413 = smul.addr %s412, 8
          %s414 = scalar_lea.vmem %s2, %s413
        $region85: #{model_forward.56} parent=64 // pred_fallthru
          _
      $region65: #{model_forward.56} parent=5 // pred_fallthru
        _
      %p415 = scmp.le.s32.totalorder 2, %s8
      // Predicated region
      $region86: #{model_forward.56} parent=5 // pred_check
        %p416 = pneg %p415
      $region87: #{model_forward.56} parent=5 // pred_check_branch
        %418 = sbr.rel (%p416) target = $region89
      $region88: #{model_forward.56} parent=5 // pred_region
        %s419 = ssub.s32 %s8, 2
      $region89: #{model_forward.56} parent=5 // pred_fallthru
        _
    $region6: #{model_forward.56} parent=1 // loop_footer
      %s12 = sadd.s32 1, %s8
    $region7: #{model_forward.56} parent=1 // loop_footer_branch
      %7 = sbr.rel target = $region3
    $region8: #{model_forward.56} parent=1 // loop_exit
      _

// kernel: model_forward.60
$region0: #{model_forward.60}
  #allocation0 [shape = 'u32[]', space=smem, size = 0x4, offset = 0x4, fixed_abs, tag = 'smem constant byte address 0x4 - core index']
  #allocation1 [shape = 'u32[144,128]{1,0:T(1,128)}', space=vmem, size = 0x12000, scoped, tag = 'internal scratch']
  #allocation2 [shape = 'f32[16,128]{1,0:T(8,128)}', space=vmem, size = 0x2000, scoped, tag = 'scratch operand']
  %s0 = inlined_call_operand.vmem [shape: bf16[16,128], index: 0, kind: input, shape index: {}]
  %s1 = inlined_call_operand.vmem [shape: bf16[128,128], index: 1, kind: input, shape index: {}]
  %s2 = inlined_call_operand.vmem [shape: f32[1,128], index: 2, kind: input, shape index: {}]
  %s3 = inlined_call_operand.vmem [shape: f32[16,128], index: 3, kind: output, shape index: {}]
  %s4 = sld [smem:[#allocation0]]
  $region30: #{model_forward.60} parent=0
    _
  %s6 = ssub.s32 1, %s4
  %s7 = scalar_select 0, %s6, %s4
  // Predicated region
  $region2: #{model_forward.60} parent=0 // pred_check
    _
  $region3: #{model_forward.60} parent=0 // pred_check_branch
    %9 = sbr.rel (0) target = $region5
  $region4: #{model_forward.60} parent=0 // pred_region
    _
  $region5: #{model_forward.60} parent=0 // pred_fallthru
    _
  // Predicated region
  $region6: #{model_forward.60} parent=0 // pred_check
    _
  $region7: #{model_forward.60} parent=0 // pred_check_branch
    %11 = sbr.rel (0) target = $region9
  $region8: #{model_forward.60} parent=0 // pred_region
    _
  $region9: #{model_forward.60} parent=0 // pred_fallthru
    _
  // Predicated region
  $region10: #{model_forward.60} parent=0 // pred_check
    _
  $region11: #{model_forward.60} parent=0 // pred_check_branch
    %13 = sbr.rel (0) target = $region13
  $region12: #{model_forward.60} parent=0 // pred_region
    _
  $region13: #{model_forward.60} parent=0 // pred_fallthru
    _
  %p15 = scmp.eq.s32.totalorder 0, 0
  // Predicated region
  $region14: #{model_forward.60} parent=0 // pred_check
    %p16 = pneg %p15
  $region15: #{model_forward.60} parent=0 // pred_check_branch
    %18 = sbr.rel (%p16) target = $region17
  $region16: #{model_forward.60} parent=0 // pred_region
    %19 = vst [vmem:[#allocation2] sm:$0xff] 0.0
    %20 = vst [vmem:[#allocation2 + $0x8] sm:$0xff] 0.0
  $region17: #{model_forward.60} parent=0 // pred_fallthru
    _
  %v21 = vld [vmem:[#allocation2] sm:$0xff]
  %v22 = vld [vmem:[#allocation2 + $0x8] sm:$0xff]
  %v23 = vld [vmem:[%s0] sm:$0xf]
  %v24 = vld [vmem:[%s0 + $0x4] sm:$0xf]
  %v25 = vld [vmem:[%s1] sm:$0xf]
  %v26 = vld [vmem:[%s1 + $0x4] sm:$0xf]
  %v27 = vld [vmem:[%s1 + $0x8] sm:$0xf]
  %v28 = vld [vmem:[%s1 + $0xc] sm:$0xf]
  %v29 = vld [vmem:[%s1 + $0x10] sm:$0xf]
  %v30 = vld [vmem:[%s1 + $0x14] sm:$0xf]
  %v31 = vld [vmem:[%s1 + $0x18] sm:$0xf]
  %v32 = vld [vmem:[%s1 + $0x1c] sm:$0xf]
  %v33 = vld [vmem:[%s1 + $0x20] sm:$0xf]
  %v34 = vld [vmem:[%s1 + $0x24] sm:$0xf]
  %v35 = vld [vmem:[%s1 + $0x28] sm:$0xf]
  %v36 = vld [vmem:[%s1 + $0x2c] sm:$0xf]
  %v37 = vld [vmem:[%s1 + $0x30] sm:$0xf]
  %v38 = vld [vmem:[%s1 + $0x34] sm:$0xf]
  %v39 = vld [vmem:[%s1 + $0x38] sm:$0xf]
  %v40 = vld [vmem:[%s1 + $0x3c] sm:$0xf]
  %v43 = vunpack.c.l.b16 %v23
  %v44 = vunpack.c.l.b16 %v24
  %v45 = vpack.c.b16 %v44, %v43
  %v63 = vunpack.c.l.b16 %v25
  %v64 = vunpack.c.l.b16 %v26
  %v65 = vunpack.c.l.b16 %v27
  %v66 = vunpack.c.l.b16 %v28
  %v67 = vunpack.c.l.b16 %v29
  %v68 = vunpack.c.l.b16 %v30
  %v69 = vunpack.c.l.b16 %v31
  %v70 = vunpack.c.l.b16 %v32
  %v71 = vunpack.c.l.b16 %v33
  %v72 = vunpack.c.l.b16 %v34
  %v73 = vunpack.c.l.b16 %v35
  %v74 = vunpack.c.l.b16 %v36
  %v75 = vunpack.c.l.b16 %v37
  %v76 = vunpack.c.l.b16 %v38
  %v77 = vunpack.c.l.b16 %v39
  %v78 = vunpack.c.l.b16 %v40
  %v79 = vpack.c.b16 %v64, %v63
  %v80 = vpack.c.b16 %v66, %v65
  %v81 = vpack.c.b16 %v68, %v67
  %v82 = vpack.c.b16 %v70, %v69
  %v83 = vpack.c.b16 %v72, %v71
  %v84 = vpack.c.b16 %v74, %v73
  %v85 = vpack.c.b16 %v76, %v75
  %v86 = vpack.c.b16 %v78, %v77
  %95 = vmatprep.subr.bf16.mxu0 0
  %96 = vmatpush1.bf16.msra.mxu0 %v86
  %97 = vmatprep.subr.bf16.mxu0 0
  %98 = vmatpush1.bf16.msra.mxu0 %v85
  %99 = vmatprep.subr.bf16.mxu0 0
  %100 = vmatpush1.bf16.msra.mxu0 %v84
  %101 = vmatprep.subr.bf16.mxu0 0
  %102 = vmatpush1.bf16.msra.mxu0 %v83
  %103 = vmatprep.subr.bf16.mxu0 0
  %104 = vmatpush1.bf16.msra.mxu0 %v82
  %105 = vmatprep.subr.bf16.mxu0 0
  %106 = vmatpush1.bf16.msra.mxu0 %v81
  %107 = vmatprep.subr.bf16.mxu0 0
  %108 = vmatpush1.bf16.msra.mxu0 %v80
  %109 = vmatprep.subr.bf16.mxu0 0
  %110 = vmatpush1.bf16.msra.mxu0 %v79
  %111 = vmatprep.subr.bf16.mxu0 0
  %112 = vmatpush2.bf16.msra.mxu0 0
  %113 = vmatprep.subr.bf16.mxu0 0
  %114 = vmatpush2.bf16.msra.mxu0 0
  %115 = vmatprep.subr.bf16.mxu0 0
  %116 = vmatpush2.bf16.msra.mxu0 0
  %117 = vmatprep.subr.bf16.mxu0 0
  %118 = vmatpush2.bf16.msra.mxu0 0
  %119 = vmatprep.subr.bf16.mxu0 0
  %120 = vmatpush2.bf16.msra.mxu0 0
  %121 = vmatprep.subr.bf16.mxu0 0
  %122 = vmatpush2.bf16.msra.mxu0 0
  %123 = vmatprep.subr.bf16.mxu0 0
  %124 = vmatpush2.bf16.msra.mxu0 0
  %125 = vmatprep.subr.bf16.mxu0 0
  %126 = vmatpush2.bf16.msra.mxu0 0
  %127 = vmatprep.mubr.bf16.mxu0 0
  %128 = vmatmul.mubr.bf16.gmra.mxu0 %v45
  %v129 = vpop.f32.mrf.mxu0
  %v130 = vadd.f32 0.0, %v129
  %v131 = vpop.f32.mrf.mxu0
  %v132 = vpop.f32.mrf.mxu0
  %v133 = vadd.f32 0.0, %v132
  %v134 = vpop.f32.mrf.mxu0
  %135 = vdwg.mxu0
  %v136 = vadd.f32 %v21, %v130
  %v137 = vadd.f32 %v22, %v133
  %138 = vst [vmem:[#allocation2] sm:$0xff] %v136
  %139 = vst [vmem:[#allocation2 + $0x8] sm:$0xff] %v137
  // Predicated region
  $region18: #{model_forward.60} parent=0 // pred_check
    %p140 = pneg %p15
  $region19: #{model_forward.60} parent=0 // pred_check_branch
    %142 = sbr.rel (%p140) target = $region21
  $region20: #{model_forward.60} parent=0 // pred_region
    %v143 = vld [vmem:[#allocation2] sm:$0xff]
    %v144 = vld [vmem:[#allocation2 + $0x8] sm:$0xff]
    %v145 = vld [vmem:[%s2] sm:$0x1]
    %v147 = vlaneseq
    %v148 = vshrl.u32 %v147, 7
    %v149 = vsub.s32 0, %v148
    %v150 = vrot.slane %v145, %v149
    %v152 = vadd.f32 %v143, %v150
    %v153 = vadd.f32 %v144, %v150
    %154 = vst [vmem:[%s3] sm:$0xff] %v152
    %155 = vst [vmem:[%s3 + $0x8] sm:$0xff] %v153
  $region21: #{model_forward.60} parent=0 // pred_fallthru
    _
  // Predicated region
  $region22: #{model_forward.60} parent=0 // pred_check
    _
  $region23: #{model_forward.60} parent=0 // pred_check_branch
    %157 = sbr.rel (0) target = $region25
  $region24: #{model_forward.60} parent=0 // pred_region
    _
  $region25: #{model_forward.60} parent=0 // pred_fallthru
    _
  // Predicated region
  $region26: #{model_forward.60} parent=0 // pred_check
    _
  $region27: #{model_forward.60} parent=0 // pred_check_branch
    %159 = sbr.rel (0) target = $region29
  $region28: #{model_forward.60} parent=0 // pred_region
    _
  $region29: #{model_forward.60} parent=0 // pred_fallthru
    _

// kernel: model_forward.62
$region0: #{model_forward.62}
  #allocation0 [shape = 'u32[]', space=smem, size = 0x4, offset = 0x4, fixed_abs, tag = 'smem constant byte address 0x4 - core index']
  #allocation1 [shape = 'u32[144,128]{1,0:T(1,128)}', space=vmem, size = 0x12000, scoped, tag = 'internal scratch']
  #allocation2 [shape = 'f32[16,48]{1,0:T(8,128)}', space=vmem, size = 0x2000, scoped, tag = 'scratch operand']
  %s0 = inlined_call_operand.vmem [shape: f32[2,49], index: 0, kind: input, shape index: {}]
  %s1 = inlined_call_operand.vmem [shape: f32[64,48], index: 1, kind: input, shape index: {}]
  %s2 = inlined_call_operand.vmem [shape: f32[2,16,48], index: 2, kind: output, shape index: {}]
  %s3 = sld [smem:[#allocation0]]
  $region52: #{model_forward.62} parent=0
    _
  %s5 = ssub.s32 1, %s3
  %s6 = scalar_select 0, %s5, %s3
  $region1: #{model_forward.62} parent=0
    #allocation3 [shape = 'u8[1024]{0}', space=smem, size = 0x400, scoped, tag = 'input window, operand 0, single buffered']
    #allocation4 [shape = 's32[2]{0}', space=sflag, size = 0x8, scoped, tag = 'scoped memory for model_forward.62']
    %7 = vsyncpa [#allocation4], 0
    loop: start=0, step=1, limit=4
    $region2: #{model_forward.62} parent=1 // loop_pre_header
      _
    $region3: #{model_forward.62} parent=1 // loop_header
      %s9 = sphi 0, %s13
      %p10 = scmp.ge.s32.totalorder %s9, 4
      %s17 = sphi 0, %s17
      %s19 = sphi 0, %s17
      %s20 = sphi 0, %s19
      %s34 = sphi 0, %s20
      %s38 = sphi 0, %s38
      %s40 = sphi 0, %s38
      %s41 = sphi 0, %s40
      %s55 = sphi 0, %s41
      %s61 = sphi 0, %s63
      %s64 = sphi 0, %s61
      %s65 = sphi 0, %s64
      %s81 = sphi 0, %s65
    $region4: #{model_forward.62} parent=1 // loop_header_branch
      %12 = sbr.rel (%p10) target = $region8
    $region5: #{model_forward.62} parent=1 // loop_body
      %s14 = ssub.s32 %s9, 1
      %s15 = ssub.s32 %s9, 2
      %s16 = sadd.s32 %s9, 1
      %s18 = sadd.s32 %s17, 1
      %p21 = scmp.eq.s32.totalorder %s9, 1
      %p22 = scmp.ne.s32.totalorder %s17, %s19
      %p23 = scmp.eq.s32.totalorder %s9, 0
      %p24 = por %p22, %p23
      %p25 = scmp.ne.s32.totalorder %s17, %s19
      %p26 = scmp.eq.s32.totalorder %s14, 1
      %p27 = por %p25, %p26
      %p28 = scmp.ne.s32.totalorder %s19, %s20
      %p29 = scmp.eq.s32.totalorder %s14, 0
      %p30 = por %p28, %p29
      %p31 = scmp.ne.s32.totalorder %s19, %s20
      %p32 = scmp.eq.s32.totalorder %s15, 1
      %p33 = por %p31, %p32
      %p35 = scmp.ne.s32.totalorder %s20, %s34
      %p36 = scmp.eq.s32.totalorder %s15, 0
      %p37 = por %p35, %p36
      %s39 = sadd.s32 %s38, 1
      %p42 = scmp.eq.s32.totalorder %s9, 1
      %p43 = scmp.ne.s32.totalorder %s38, %s40
      %p44 = scmp.eq.s32.totalorder %s9, 0
      %p45 = por %p43, %p44
      %p46 = scmp.ne.s32.totalorder %s38, %s40
      %p47 = scmp.eq.s32.totalorder %s14, 1
      %p48 = por %p46, %p47
      %p49 = scmp.ne.s32.totalorder %s40, %s41
      %p50 = scmp.eq.s32.totalorder %s14, 0
      %p51 = por %p49, %p50
      %p52 = scmp.ne.s32.totalorder %s40, %s41
      %p53 = scmp.eq.s32.totalorder %s15, 1
      %p54 = por %p52, %p53
      %p56 = scmp.ne.s32.totalorder %s41, %s55
      %p57 = scmp.eq.s32.totalorder %s15, 0
      %p58 = por %p56, %p57
      %s59 = ssub.s32 %s9, %s16
      %p60 = scmp.eq.s32.totalorder %s59, 0
      %s62 = sadd.s32 %s61, 1
      %s63 = scalar_select %p60, %s61, %s62
      %p66 = pneg %p60
      %p67 = scmp.eq.s32.totalorder %s9, 1
      %p68 = por %p66, %p67
      %p69 = scmp.ne.s32.totalorder %s61, %s64
      %p70 = scmp.eq.s32.totalorder %s9, 0
      %p71 = por %p69, %p70
      %p72 = scmp.ne.s32.totalorder %s61, %s64
      %p73 = scmp.eq.s32.totalorder %s14, 1
      %p74 = por %p72, %p73
      %p75 = scmp.ne.s32.totalorder %s64, %s65
      %p76 = scmp.eq.s32.totalorder %s14, 0
      %p77 = por %p75, %p76
      %p78 = scmp.ne.s32.totalorder %s64, %s65
      %p79 = scmp.eq.s32.totalorder %s15, 1
      %p80 = por %p78, %p79
      %p82 = scmp.ne.s32.totalorder %s65, %s81
      %p83 = scmp.eq.s32.totalorder %s15, 0
      %p84 = por %p82, %p83
      %p85 = scmp.le.s32.totalorder 1, %s9
      %p86 = scmp.lt.s32.totalorder %s9, 3
      %p87 = pnand %p85, %p86
      %p88 = pneg %p87
      // Predicated region
      $region9: #{model_forward.62} parent=5 // pred_check
        _
      $region10: #{model_forward.62} parent=5 // pred_check_branch
        %90 = sbr.rel (%p87) target = $region12
      $region11: #{model_forward.62} parent=5 // pred_region
        %s91 = ssub.s32 %s9, 1
        // Predicated region
        $region13: #{model_forward.62} parent=11 // pred_check
          %p92 = pneg %p30
        $region14: #{model_forward.62} parent=11 // pred_check_branch
          %94 = sbr.rel (%p92) target = $region16
        $region15: #{model_forward.62} parent=11 // pred_region
          %s96 = ssub.s32 32, 32
          %97 = vsyncadd [#allocation4], %s96
          %s99 = sshll.u32 %s0, 4
          %s100 = int_to_ptr.vmem [resolvable:$true] %s99
          %102 = dma.vmem_to_smem %s100, 32, [#allocation3], [#allocation4]
        $region16: #{model_forward.62} parent=11 // pred_fallthru
          _
        // Predicated region
        $region17: #{model_forward.62} parent=11 // pred_check
          %p103 = pneg %p51
        $region18: #{model_forward.62} parent=11 // pred_check_branch
          %105 = sbr.rel (%p103) target = $region20
        $region19: #{model_forward.62} parent=11 // pred_region
          _
        $region20: #{model_forward.62} parent=11 // pred_fallthru
          _
      $region12: #{model_forward.62} parent=5 // pred_fallthru
        _
      %p106 = scmp.lt.s32.totalorder %s9, 2
      // Predicated region
      $region21: #{model_forward.62} parent=5 // pred_check
        %p107 = pneg %p106
      $region22: #{model_forward.62} parent=5 // pred_check_branch
        %109 = sbr.rel (%p107) target = $region24
      $region23: #{model_forward.62} parent=5 // pred_region
        _
      $region24: #{model_forward.62} parent=5 // pred_fallthru
        _
      %p110 = scmp.le.s32.totalorder 1, %s9
      %p111 = scmp.lt.s32.totalorder %s9, 3
      %p112 = pnand %p110, %p111
      %p113 = pneg %p112
      // Predicated region
      $region25: #{model_forward.62} parent=5 // pred_check
        _
      $region26: #{model_forward.62} parent=5 // pred_check_branch
        %115 = sbr.rel (%p112) target = $region28
      $region27: #{model_forward.62} parent=5 // pred_region
        %s116 = ssub.s32 %s9, 1
        // Predicated region
        $region29: #{model_forward.62} parent=27 // pred_check
          %p117 = pneg %p30
        $region30: #{model_forward.62} parent=27 // pred_check_branch
          %119 = sbr.rel (%p117) target = $region32
        $region31: #{model_forward.62} parent=27 // pred_region
          %120 = dma.done [#allocation4], 32
        $region32: #{model_forward.62} parent=27 // pred_fallthru
          _
        %121 = sfence
        %p122 = pneg %p30
        %p123 = pneg %p27
        %p124 = pneg %p51
        %p125 = pneg %p48
        %p126 = pneg %p77
        %p127 = pneg %p74
        %p128 = scmp.lt.s32.totalorder %s14, 1
        %s129 = scalar_select %p128, %s14, 1
        %s130 = smul.addr %s129, 2
        %s131 = smul.addr %s130, 8
        %s132 = scalar_lea.vmem %s2, %s131
        %p133 = scmp.lt.s32.totalorder %s14, 1
        %s134 = scalar_select %p133, %s14, 1
        %s135 = smul.addr %s134, 2
        %s136 = smul.addr %s135, 8
        %s137 = scalar_lea.vmem %s2, %s136
        %vm138 = vcmask 392192
        %139 = vst.msk [vmem:[#allocation2] sm:$0xff] %vm138, 0.0
        %140 = vst.msk [vmem:[#allocation2 + $0x8] sm:$0xff] %vm138, 0.0
        loop: start=0, step=1, limit=49
        $region33: #{model_forward.62} parent=27 // loop_pre_header
          _
        $region34: #{model_forward.62} parent=27 // loop_header
          %s142 = sphi 0, %s146
          %p143 = scmp.ge.s32.totalorder %s142, 49
        $region35: #{model_forward.62} parent=27 // loop_header_branch
          %145 = sbr.rel (%p143) target = $region39
        $region36: #{model_forward.62} parent=27 // loop_body
          %s147 = scalar_lea.vmem %s1, %s142
          %v148 = vld [vmem:[%s147] sm:$0xff]
          %v149 = vld [vmem:[%s147 + $0x8] sm:$0xff]
          %v150 = vld [vmem:[#allocation2] sm:$0xff]
          %v151 = vld [vmem:[#allocation2 + $0x8] sm:$0xff]
          %s152 = sshra.s32 %s142, 7
          %s153 = sand.u32 %s142, 127
          %s154 = sadd.s32 %s152, %s14
          %s155 = smul.u32 %s154, 128
          %s156 = sshra.s32 %s142, 7
          %s157 = sand.u32 %s142, 127
          %s158 = sadd.s32 %s155, %s157
          %s159 = sld [smem:[#allocation3 + %s158]]
          %v160 = vstv %s159
          %v161 = vmul.f32 %v160, %v148
          %v162 = vmul.f32 %v160, %v149
          %v163 = vadd.f32 %v150, %v161
          %v164 = vadd.f32 %v151, %v162
          %165 = vst.msk [vmem:[#allocation2] sm:$0xff] %vm138, %v163
          %166 = vst.msk [vmem:[#allocation2 + $0x8] sm:$0xff] %vm138, %v164
        $region37: #{model_forward.62} parent=27 // loop_footer
          %s146 = sadd.s32 1, %s142
        $region38: #{model_forward.62} parent=27 // loop_footer_branch
          %141 = sbr.rel target = $region34
        $region39: #{model_forward.62} parent=27 // loop_exit
          _
        %v167 = vld [vmem:[#allocation2] sm:$0xff]
        %v168 = vld [vmem:[#allocation2 + $0x8] sm:$0xff]
        %169 = vst.msk [vmem:[%s137] sm:$0xff] %vm138, %v167
        %170 = vst.msk [vmem:[%s137 + $0x8] sm:$0xff] %vm138, %v168
        %p171 = scmp.lt.s32.totalorder %s14, 1
        %s172 = scalar_select %p171, %s14, 1
        %s173 = smul.addr %s172, 2
        %s174 = smul.addr %s173, 8
        %s175 = scalar_lea.vmem %s2, %s174
        // Predicated region
        $region40: #{model_forward.62} parent=27 // pred_check
          %p176 = pneg %p74
        $region41: #{model_forward.62} parent=27 // pred_check_branch
          %178 = sbr.rel (%p176) target = $region43
        $region42: #{model_forward.62} parent=27 // pred_region
          _
        $region43: #{model_forward.62} parent=27 // pred_fallthru
          _
      $region28: #{model_forward.62} parent=5 // pred_fallthru
        _
      %p179 = scmp.le.s32.totalorder 2, %s9
      // Predicated region
      $region44: #{model_forward.62} parent=5 // pred_check
        %p180 = pneg %p179
      $region45: #{model_forward.62} parent=5 // pred_check_branch
        %182 = sbr.rel (%p180) target = $region47
      $region46: #{model_forward.62} parent=5 // pred_region
        %s183 = ssub.s32 %s9, 2
        // Predicated region
        $region48: #{model_forward.62} parent=46 // pred_check
          %p184 = pneg %p80
        $region49: #{model_forward.62} parent=46 // pred_check_branch
          %186 = sbr.rel (%p184) target = $region51
        $region50: #{model_forward.62} parent=46 // pred_region
          %p187 = scmp.lt.s32.totalorder %s15, 1
          %s188 = scalar_select %p187, %s15, 1
          %s189 = smul.addr %s188, 2
          %s190 = smul.addr %s189, 8
          %s191 = scalar_lea.vmem %s2, %s190
        $region51: #{model_forward.62} parent=46 // pred_fallthru
          _
      $region47: #{model_forward.62} parent=5 // pred_fallthru
        _
    $region6: #{model_forward.62} parent=1 // loop_footer
      %s13 = sadd.s32 1, %s9
    $region7: #{model_forward.62} parent=1 // loop_footer_branch
      %8 = sbr.rel target = $region3
    $region8: #{model_forward.62} parent=1 // loop_exit
      _
    %192 = vsyncpa [#allocation4], 1
    %s193 = scalar_lea.sflag [#allocation4], 1
    %194 = vsyncpa %s193, 1

// kernel: model_forward.39
$region0: #{model_forward.39}
  #allocation0 [shape = 'u32[]', space=smem, size = 0x4, offset = 0x4, fixed_abs, tag = 'smem constant byte address 0x4 - core index']
  #allocation1 [shape = 'u32[144,128]{1,0:T(1,128)}', space=vmem, size = 0x12000, scoped, tag = 'internal scratch']
  #allocation2 [shape = 'f32[32,128]{1,0:T(8,128)}', space=vmem, size = 0x4000, scoped, tag = 'scratch operand']
  %s0 = inlined_call_operand.vmem [shape: bf16[32,128], index: 0, kind: input, shape index: {}]
  %s1 = inlined_call_operand.vmem [shape: bf16[128,128], index: 1, kind: input, shape index: {}]
  %s2 = inlined_call_operand.vmem [shape: f32[1,128], index: 2, kind: input, shape index: {}]
  %s3 = inlined_call_operand.vmem [shape: f32[32,128], index: 3, kind: output, shape index: {}]
  %s4 = sld [smem:[#allocation0]]
  $region30: #{model_forward.39} parent=0
    _
  %s6 = ssub.s32 1, %s4
  %s7 = scalar_select 0, %s6, %s4
  // Predicated region
  $region2: #{model_forward.39} parent=0 // pred_check
    _
  $region3: #{model_forward.39} parent=0 // pred_check_branch
    %9 = sbr.rel (0) target = $region5
  $region4: #{model_forward.39} parent=0 // pred_region
    _
  $region5: #{model_forward.39} parent=0 // pred_fallthru
    _
  // Predicated region
  $region6: #{model_forward.39} parent=0 // pred_check
    _
  $region7: #{model_forward.39} parent=0 // pred_check_branch
    %11 = sbr.rel (0) target = $region9
  $region8: #{model_forward.39} parent=0 // pred_region
    _
  $region9: #{model_forward.39} parent=0 // pred_fallthru
    _
  // Predicated region
  $region10: #{model_forward.39} parent=0 // pred_check
    _
  $region11: #{model_forward.39} parent=0 // pred_check_branch
    %13 = sbr.rel (0) target = $region13
  $region12: #{model_forward.39} parent=0 // pred_region
    _
  $region13: #{model_forward.39} parent=0 // pred_fallthru
    _
  %p15 = scmp.eq.s32.totalorder 0, 0
  // Predicated region
  $region14: #{model_forward.39} parent=0 // pred_check
    %p16 = pneg %p15
  $region15: #{model_forward.39} parent=0 // pred_check_branch
    %18 = sbr.rel (%p16) target = $region17
  $region16: #{model_forward.39} parent=0 // pred_region
    %19 = vst [vmem:[#allocation2] sm:$0xff] 0.0
    %20 = vst [vmem:[#allocation2 + $0x8] sm:$0xff] 0.0
    %21 = vst [vmem:[#allocation2 + $0x10] sm:$0xff] 0.0
    %22 = vst [vmem:[#allocation2 + $0x18] sm:$0xff] 0.0
  $region17: #{model_forward.39} parent=0 // pred_fallthru
    _
  %v23 = vld [vmem:[#allocation2] sm:$0xff]
  %v24 = vld [vmem:[#allocation2 + $0x8] sm:$0xff]
  %v25 = vld [vmem:[#allocation2 + $0x10] sm:$0xff]
  %v26 = vld [vmem:[#allocation2 + $0x18] sm:$0xff]
  %v27 = vld [vmem:[%s0] sm:$0xf]
  %v28 = vld [vmem:[%s0 + $0x4] sm:$0xf]
  %v29 = vld [vmem:[%s0 + $0x8] sm:$0xf]
  %v30 = vld [vmem:[%s0 + $0xc] sm:$0xf]
  %v31 = vld [vmem:[%s1] sm:$0xf]
  %v32 = vld [vmem:[%s1 + $0x4] sm:$0xf]
  %v33 = vld [vmem:[%s1 + $0x8] sm:$0xf]
  %v34 = vld [vmem:[%s1 + $0xc] sm:$0xf]
  %v35 = vld [vmem:[%s1 + $0x10] sm:$0xf]
  %v36 = vld [vmem:[%s1 + $0x14] sm:$0xf]
  %v37 = vld [vmem:[%s1 + $0x18] sm:$0xf]
  %v38 = vld [vmem:[%s1 + $0x1c] sm:$0xf]
  %v39 = vld [vmem:[%s1 + $0x20] sm:$0xf]
  %v40 = vld [vmem:[%s1 + $0x24] sm:$0xf]
  %v41 = vld [vmem:[%s1 + $0x28] sm:$0xf]
  %v42 = vld [vmem:[%s1 + $0x2c] sm:$0xf]
  %v43 = vld [vmem:[%s1 + $0x30] sm:$0xf]
  %v44 = vld [vmem:[%s1 + $0x34] sm:$0xf]
  %v45 = vld [vmem:[%s1 + $0x38] sm:$0xf]
  %v46 = vld [vmem:[%s1 + $0x3c] sm:$0xf]
  %v51 = vunpack.c.l.b16 %v27
  %v52 = vunpack.c.l.b16 %v28
  %v53 = vunpack.c.l.b16 %v29
  %v54 = vunpack.c.l.b16 %v30
  %v55 = vpack.c.b16 %v52, %v51
  %v56 = vpack.c.b16 %v54, %v53
  %v75 = vunpack.c.l.b16 %v31
  %v76 = vunpack.c.l.b16 %v32
  %v77 = vunpack.c.l.b16 %v33
  %v78 = vunpack.c.l.b16 %v34
  %v79 = vunpack.c.l.b16 %v35
  %v80 = vunpack.c.l.b16 %v36
  %v81 = vunpack.c.l.b16 %v37
  %v82 = vunpack.c.l.b16 %v38
  %v83 = vunpack.c.l.b16 %v39
  %v84 = vunpack.c.l.b16 %v40
  %v85 = vunpack.c.l.b16 %v41
  %v86 = vunpack.c.l.b16 %v42
  %v87 = vunpack.c.l.b16 %v43
  %v88 = vunpack.c.l.b16 %v44
  %v89 = vunpack.c.l.b16 %v45
  %v90 = vunpack.c.l.b16 %v46
  %v91 = vpack.c.b16 %v76, %v75
  %v92 = vpack.c.b16 %v78, %v77
  %v93 = vpack.c.b16 %v80, %v79
  %v94 = vpack.c.b16 %v82, %v81
  %v95 = vpack.c.b16 %v84, %v83
  %v96 = vpack.c.b16 %v86, %v85
  %v97 = vpack.c.b16 %v88, %v87
  %v98 = vpack.c.b16 %v90, %v89
  %107 = vmatprep.subr.bf16.mxu0 0
  %108 = vmatpush1.bf16.msra.mxu0 %v98
  %109 = vmatprep.subr.bf16.mxu0 0
  %110 = vmatpush1.bf16.msra.mxu0 %v97
  %111 = vmatprep.subr.bf16.mxu0 0
  %112 = vmatpush1.bf16.msra.mxu0 %v96
  %113 = vmatprep.subr.bf16.mxu0 0
  %114 = vmatpush1.bf16.msra.mxu0 %v95
  %115 = vmatprep.subr.bf16.mxu0 0
  %116 = vmatpush1.bf16.msra.mxu0 %v94
  %117 = vmatprep.subr.bf16.mxu0 0
  %118 = vmatpush1.bf16.msra.mxu0 %v93
  %119 = vmatprep.subr.bf16.mxu0 0
  %120 = vmatpush1.bf16.msra.mxu0 %v92
  %121 = vmatprep.subr.bf16.mxu0 0
  %122 = vmatpush1.bf16.msra.mxu0 %v91
  %123 = vmatprep.subr.bf16.mxu0 0
  %124 = vmatpush2.bf16.msra.mxu0 0
  %125 = vmatprep.subr.bf16.mxu0 0
  %126 = vmatpush2.bf16.msra.mxu0 0
  %127 = vmatprep.subr.bf16.mxu0 0
  %128 = vmatpush2.bf16.msra.mxu0 0
  %129 = vmatprep.subr.bf16.mxu0 0
  %130 = vmatpush2.bf16.msra.mxu0 0
  %131 = vmatprep.subr.bf16.mxu0 0
  %132 = vmatpush2.bf16.msra.mxu0 0
  %133 = vmatprep.subr.bf16.mxu0 0
  %134 = vmatpush2.bf16.msra.mxu0 0
  %135 = vmatprep.subr.bf16.mxu0 0
  %136 = vmatpush2.bf16.msra.mxu0 0
  %137 = vmatprep.subr.bf16.mxu0 0
  %138 = vmatpush2.bf16.msra.mxu0 0
  %139 = vmatprep.mubr.bf16.mxu0 0
  %140 = vmatmul.mubr.bf16.gmra.mxu0 %v55
  %v141 = vpop.f32.mrf.mxu0
  %v142 = vadd.f32 0.0, %v141
  %v143 = vpop.f32.mrf.mxu0
  %v144 = vpop.f32.mrf.mxu0
  %v145 = vadd.f32 0.0, %v144
  %v146 = vpop.f32.mrf.mxu0
  %147 = vmatprep.mubr.bf16.mxu0 0
  %148 = vmatmul.mubr.bf16.gmra.mxu0 %v56
  %v149 = vpop.f32.mrf.mxu0
  %v150 = vadd.f32 0.0, %v149
  %v151 = vpop.f32.mrf.mxu0
  %v152 = vpop.f32.mrf.mxu0
  %v153 = vadd.f32 0.0, %v152
  %v154 = vpop.f32.mrf.mxu0
  %155 = vdwg.mxu0
  %v156 = vadd.f32 %v23, %v142
  %v157 = vadd.f32 %v24, %v145
  %v158 = vadd.f32 %v25, %v150
  %v159 = vadd.f32 %v26, %v153
  %160 = vst [vmem:[#allocation2] sm:$0xff] %v156
  %161 = vst [vmem:[#allocation2 + $0x8] sm:$0xff] %v157
  %162 = vst [vmem:[#allocation2 + $0x10] sm:$0xff] %v158
  %163 = vst [vmem:[#allocation2 + $0x18] sm:$0xff] %v159
  // Predicated region
  $region18: #{model_forward.39} parent=0 // pred_check
    %p164 = pneg %p15
  $region19: #{model_forward.39} parent=0 // pred_check_branch
    %166 = sbr.rel (%p164) target = $region21
  $region20: #{model_forward.39} parent=0 // pred_region
    %v167 = vld [vmem:[#allocation2] sm:$0xff]
    %v168 = vld [vmem:[#allocation2 + $0x8] sm:$0xff]
    %v169 = vld [vmem:[#allocation2 + $0x10] sm:$0xff]
    %v170 = vld [vmem:[#allocation2 + $0x18] sm:$0xff]
    %v171 = vld [vmem:[%s2] sm:$0x1]
    %v173 = vlaneseq
    %v174 = vshrl.u32 %v173, 7
    %v175 = vsub.s32 0, %v174
    %v176 = vrot.slane %v171, %v175
    %v178 = vadd.f32 %v167, %v176
    %v179 = vadd.f32 %v168, %v176
    %v180 = vadd.f32 %v169, %v176
    %v181 = vadd.f32 %v170, %v176
    %182 = vst [vmem:[%s3] sm:$0xff] %v178
    %183 = vst [vmem:[%s3 + $0x8] sm:$0xff] %v179
    %184 = vst [vmem:[%s3 + $0x10] sm:$0xff] %v180
    %185 = vst [vmem:[%s3 + $0x18] sm:$0xff] %v181
  $region21: #{model_forward.39} parent=0 // pred_fallthru
    _
  // Predicated region
  $region22: #{model_forward.39} parent=0 // pred_check
    _
  $region23: #{model_forward.39} parent=0 // pred_check_branch
    %187 = sbr.rel (0) target = $region25
  $region24: #{model_forward.39} parent=0 // pred_region
    _
  $region25: #{model_forward.39} parent=0 // pred_fallthru
    _
  // Predicated region
  $region26: #{model_forward.39} parent=0 // pred_check
    _
  $region27: #{model_forward.39} parent=0 // pred_check_branch
    %189 = sbr.rel (0) target = $region29
  $region28: #{model_forward.39} parent=0 // pred_region
    _
  $region29: #{model_forward.39} parent=0 // pred_fallthru
    _

// kernel: model_forward.41
$region0: #{model_forward.41}
  #allocation0 [shape = 'u32[]', space=smem, size = 0x4, offset = 0x4, fixed_abs, tag = 'smem constant byte address 0x4 - core index']
  #allocation1 [shape = 'u32[144,128]{1,0:T(1,128)}', space=vmem, size = 0x12000, scoped, tag = 'internal scratch']
  #allocation2 [shape = 'f32[32,256]{1,0:T(8,128)}', space=vmem, size = 0x8000, scoped, tag = 'scratch operand']
  %s0 = inlined_call_operand.vmem [shape: bf16[32,128], index: 0, kind: input, shape index: {}]
  %s1 = inlined_call_operand.vmem [shape: bf16[128,256], index: 1, kind: input, shape index: {}]
  %s2 = inlined_call_operand.vmem [shape: f32[32,256], index: 2, kind: output, shape index: {}]
  %s3 = sld [smem:[#allocation0]]
  $region26: #{model_forward.41} parent=0
    _
  %s5 = ssub.s32 1, %s3
  %s6 = scalar_select 0, %s5, %s3
  // Predicated region
  $region2: #{model_forward.41} parent=0 // pred_check
    _
  $region3: #{model_forward.41} parent=0 // pred_check_branch
    %8 = sbr.rel (0) target = $region5
  $region4: #{model_forward.41} parent=0 // pred_region
    _
  $region5: #{model_forward.41} parent=0 // pred_fallthru
    _
  // Predicated region
  $region6: #{model_forward.41} parent=0 // pred_check
    _
  $region7: #{model_forward.41} parent=0 // pred_check_branch
    %10 = sbr.rel (0) target = $region9
  $region8: #{model_forward.41} parent=0 // pred_region
    _
  $region9: #{model_forward.41} parent=0 // pred_fallthru
    _
  %p12 = scmp.eq.s32.totalorder 0, 0
  // Predicated region
  $region10: #{model_forward.41} parent=0 // pred_check
    %p13 = pneg %p12
  $region11: #{model_forward.41} parent=0 // pred_check_branch
    %15 = sbr.rel (%p13) target = $region13
  $region12: #{model_forward.41} parent=0 // pred_region
    %16 = vst [vmem:[#allocation2] sm:$0xff] 0.0
    %17 = vst [vmem:[#allocation2 + $0x8] sm:$0xff] 0.0
    %18 = vst [vmem:[#allocation2 + $0x10] sm:$0xff] 0.0
    %19 = vst [vmem:[#allocation2 + $0x18] sm:$0xff] 0.0
    %20 = vst [vmem:[#allocation2 + $0x20] sm:$0xff] 0.0
    %21 = vst [vmem:[#allocation2 + $0x28] sm:$0xff] 0.0
    %22 = vst [vmem:[#allocation2 + $0x30] sm:$0xff] 0.0
    %23 = vst [vmem:[#allocation2 + $0x38] sm:$0xff] 0.0
  $region13: #{model_forward.41} parent=0 // pred_fallthru
    _
  %v24 = vld [vmem:[#allocation2] sm:$0xff]
  %v25 = vld [vmem:[#allocation2 + $0x8] sm:$0xff]
  %v26 = vld [vmem:[#allocation2 + $0x10] sm:$0xff]
  %v27 = vld [vmem:[#allocation2 + $0x18] sm:$0xff]
  %v28 = vld [vmem:[#allocation2 + $0x20] sm:$0xff]
  %v29 = vld [vmem:[#allocation2 + $0x28] sm:$0xff]
  %v30 = vld [vmem:[#allocation2 + $0x30] sm:$0xff]
  %v31 = vld [vmem:[#allocation2 + $0x38] sm:$0xff]
  %v32 = vld [vmem:[%s0] sm:$0xf]
  %v33 = vld [vmem:[%s0 + $0x4] sm:$0xf]
  %v34 = vld [vmem:[%s0 + $0x8] sm:$0xf]
  %v35 = vld [vmem:[%s0 + $0xc] sm:$0xf]
  %v36 = vld [vmem:[%s1] sm:$0xff]
  %v37 = vld [vmem:[%s1 + $0x8] sm:$0xff]
  %v38 = vld [vmem:[%s1 + $0x10] sm:$0xff]
  %v39 = vld [vmem:[%s1 + $0x18] sm:$0xff]
  %v40 = vld [vmem:[%s1 + $0x20] sm:$0xff]
  %v41 = vld [vmem:[%s1 + $0x28] sm:$0xff]
  %v42 = vld [vmem:[%s1 + $0x30] sm:$0xff]
  %v43 = vld [vmem:[%s1 + $0x38] sm:$0xff]
  %v44 = vld [vmem:[%s1 + $0x40] sm:$0xff]
  %v45 = vld [vmem:[%s1 + $0x48] sm:$0xff]
  %v46 = vld [vmem:[%s1 + $0x50] sm:$0xff]
  %v47 = vld [vmem:[%s1 + $0x58] sm:$0xff]
  %v48 = vld [vmem:[%s1 + $0x60] sm:$0xff]
  %v49 = vld [vmem:[%s1 + $0x68] sm:$0xff]
  %v50 = vld [vmem:[%s1 + $0x70] sm:$0xff]
  %v51 = vld [vmem:[%s1 + $0x78] sm:$0xff]
  %v56 = vunpack.c.l.b16 %v32
  %v57 = vunpack.c.l.b16 %v33
  %v58 = vunpack.c.l.b16 %v34
  %v59 = vunpack.c.l.b16 %v35
  %v60 = vpack.c.b16 %v57, %v56
  %v61 = vpack.c.b16 %v59, %v58
  %v80 = vunpack.c.l.b16 %v36
  %v81 = vunpack.c.h.b16 %v36
  %v82 = vunpack.c.l.b16 %v37
  %v83 = vunpack.c.h.b16 %v37
  %v84 = vunpack.c.l.b16 %v38
  %v85 = vunpack.c.h.b16 %v38
  %v86 = vunpack.c.l.b16 %v39
  %v87 = vunpack.c.h.b16 %v39
  %v88 = vunpack.c.l.b16 %v40
  %v89 = vunpack.c.h.b16 %v40
  %v90 = vunpack.c.l.b16 %v41
  %v91 = vunpack.c.h.b16 %v41
  %v92 = vunpack.c.l.b16 %v42
  %v93 = vunpack.c.h.b16 %v42
  %v94 = vunpack.c.l.b16 %v43
  %v95 = vunpack.c.h.b16 %v43
  %v96 = vunpack.c.l.b16 %v44
  %v97 = vunpack.c.h.b16 %v44
  %v98 = vunpack.c.l.b16 %v45
  %v99 = vunpack.c.h.b16 %v45
  %v100 = vunpack.c.l.b16 %v46
  %v101 = vunpack.c.h.b16 %v46
  %v102 = vunpack.c.l.b16 %v47
  %v103 = vunpack.c.h.b16 %v47
  %v104 = vunpack.c.l.b16 %v48
  %v105 = vunpack.c.h.b16 %v48
  %v106 = vunpack.c.l.b16 %v49
  %v107 = vunpack.c.h.b16 %v49
  %v108 = vunpack.c.l.b16 %v50
  %v109 = vunpack.c.h.b16 %v50
  %v110 = vunpack.c.l.b16 %v51
  %v111 = vunpack.c.h.b16 %v51
  %v112 = vpack.c.b16 %v82, %v80
  %v113 = vpack.c.b16 %v83, %v81
  %v114 = vpack.c.b16 %v86, %v84
  %v115 = vpack.c.b16 %v87, %v85
  %v116 = vpack.c.b16 %v90, %v88
  %v117 = vpack.c.b16 %v91, %v89
  %v118 = vpack.c.b16 %v94, %v92
  %v119 = vpack.c.b16 %v95, %v93
  %v120 = vpack.c.b16 %v98, %v96
  %v121 = vpack.c.b16 %v99, %v97
  %v122 = vpack.c.b16 %v102, %v100
  %v123 = vpack.c.b16 %v103, %v101
  %v124 = vpack.c.b16 %v106, %v104
  %v125 = vpack.c.b16 %v107, %v105
  %v126 = vpack.c.b16 %v110, %v108
  %v127 = vpack.c.b16 %v111, %v109
  %144 = vmatprep.subr.bf16.mxu0 %v127
  %145 = vmatpush1.bf16.msra.mxu0 %v126
  %146 = vmatprep.subr.bf16.mxu0 %v125
  %147 = vmatpush1.bf16.msra.mxu0 %v124
  %148 = vmatprep.subr.bf16.mxu0 %v123
  %149 = vmatpush1.bf16.msra.mxu0 %v122
  %150 = vmatprep.subr.bf16.mxu0 %v121
  %151 = vmatpush1.bf16.msra.mxu0 %v120
  %152 = vmatprep.subr.bf16.mxu0 %v119
  %153 = vmatpush1.bf16.msra.mxu0 %v118
  %154 = vmatprep.subr.bf16.mxu0 %v117
  %155 = vmatpush1.bf16.msra.mxu0 %v116
  %156 = vmatprep.subr.bf16.mxu0 %v115
  %157 = vmatpush1.bf16.msra.mxu0 %v114
  %158 = vmatprep.subr.bf16.mxu0 %v113
  %159 = vmatpush1.bf16.msra.mxu0 %v112
  %160 = vmatprep.subr.bf16.mxu0 0
  %161 = vmatpush2.bf16.msra.mxu0 0
  %162 = vmatprep.subr.bf16.mxu0 0
  %163 = vmatpush2.bf16.msra.mxu0 0
  %164 = vmatprep.subr.bf16.mxu0 0
  %165 = vmatpush2.bf16.msra.mxu0 0
  %166 = vmatprep.subr.bf16.mxu0 0
  %167 = vmatpush2.bf16.msra.mxu0 0
  %168 = vmatprep.subr.bf16.mxu0 0
  %169 = vmatpush2.bf16.msra.mxu0 0
  %170 = vmatprep.subr.bf16.mxu0 0
  %171 = vmatpush2.bf16.msra.mxu0 0
  %172 = vmatprep.subr.bf16.mxu0 0
  %173 = vmatpush2.bf16.msra.mxu0 0
  %174 = vmatprep.subr.bf16.mxu0 0
  %175 = vmatpush2.bf16.msra.mxu0 0
  %176 = vmatprep.mubr.bf16.mxu0 0
  %177 = vmatmul.mubr.bf16.gmra.mxu0 %v60
  %v178 = vpop.f32.mrf.mxu0
  %v179 = vadd.f32 0.0, %v178
  %v180 = vpop.f32.mrf.mxu0
  %v181 = vadd.f32 0.0, %v180
  %v182 = vpop.f32.mrf.mxu0
  %v183 = vadd.f32 0.0, %v182
  %v184 = vpop.f32.mrf.mxu0
  %v185 = vadd.f32 0.0, %v184
  %186 = vmatprep.mubr.bf16.mxu0 0
  %187 = vmatmul.mubr.bf16.gmra.mxu0 %v61
  %v188 = vpop.f32.mrf.mxu0
  %v189 = vadd.f32 0.0, %v188
  %v190 = vpop.f32.mrf.mxu0
  %v191 = vadd.f32 0.0, %v190
  %v192 = vpop.f32.mrf.mxu0
  %v193 = vadd.f32 0.0, %v192
  %v194 = vpop.f32.mrf.mxu0
  %v195 = vadd.f32 0.0, %v194
  %196 = vdwg.mxu0
  %v197 = vadd.f32 %v24, %v179
  %v198 = vadd.f32 %v25, %v181
  %v199 = vadd.f32 %v26, %v183
  %v200 = vadd.f32 %v27, %v185
  %v201 = vadd.f32 %v28, %v189
  %v202 = vadd.f32 %v29, %v191
  %v203 = vadd.f32 %v30, %v193
  %v204 = vadd.f32 %v31, %v195
  %205 = vst [vmem:[#allocation2] sm:$0xff] %v197
  %206 = vst [vmem:[#allocation2 + $0x8] sm:$0xff] %v198
  %207 = vst [vmem:[#allocation2 + $0x10] sm:$0xff] %v199
  %208 = vst [vmem:[#allocation2 + $0x18] sm:$0xff] %v200
  %209 = vst [vmem:[#allocation2 + $0x20] sm:$0xff] %v201
  %210 = vst [vmem:[#allocation2 + $0x28] sm:$0xff] %v202
  %211 = vst [vmem:[#allocation2 + $0x30] sm:$0xff] %v203
  %212 = vst [vmem:[#allocation2 + $0x38] sm:$0xff] %v204
  // Predicated region
  $region14: #{model_forward.41} parent=0 // pred_check
    %p213 = pneg %p12
  $region15: #{model_forward.41} parent=0 // pred_check_branch
    %215 = sbr.rel (%p213) target = $region17
  $region16: #{model_forward.41} parent=0 // pred_region
    %v216 = vld [vmem:[#allocation2] sm:$0xff]
    %v217 = vld [vmem:[#allocation2 + $0x8] sm:$0xff]
    %v218 = vld [vmem:[#allocation2 + $0x10] sm:$0xff]
    %v219 = vld [vmem:[#allocation2 + $0x18] sm:$0xff]
    %v220 = vld [vmem:[#allocation2 + $0x20] sm:$0xff]
    %v221 = vld [vmem:[#allocation2 + $0x28] sm:$0xff]
    %v222 = vld [vmem:[#allocation2 + $0x30] sm:$0xff]
    %v223 = vld [vmem:[#allocation2 + $0x38] sm:$0xff]
    %224 = vst [vmem:[%s2] sm:$0xff] %v216
    %225 = vst [vmem:[%s2 + $0x8] sm:$0xff] %v217
    %226 = vst [vmem:[%s2 + $0x10] sm:$0xff] %v218
    %227 = vst [vmem:[%s2 + $0x18] sm:$0xff] %v219
    %228 = vst [vmem:[%s2 + $0x20] sm:$0xff] %v220
    %229 = vst [vmem:[%s2 + $0x28] sm:$0xff] %v221
    %230 = vst [vmem:[%s2 + $0x30] sm:$0xff] %v222
    %231 = vst [vmem:[%s2 + $0x38] sm:$0xff] %v223
  $region17: #{model_forward.41} parent=0 // pred_fallthru
    _
  // Predicated region
  $region18: #{model_forward.41} parent=0 // pred_check
    _
  $region19: #{model_forward.41} parent=0 // pred_check_branch
    %233 = sbr.rel (0) target = $region21
  $region20: #{model_forward.41} parent=0 // pred_region
    _
  $region21: #{model_forward.41} parent=0 // pred_fallthru
    _
  // Predicated region
  $region22: #{model_forward.41} parent=0 // pred_check
    _
  $region23: #{model_forward.41} parent=0 // pred_check_branch
    %235 = sbr.rel (0) target = $region25
  $region24: #{model_forward.41} parent=0 // pred_region
    _
  $region25: #{model_forward.41} parent=0 // pred_fallthru
    _

// kernel: model_forward.40
$region0: #{model_forward.40}
  #allocation0 [shape = 'u32[]', space=smem, size = 0x4, offset = 0x4, fixed_abs, tag = 'smem constant byte address 0x4 - core index']
  #allocation1 [shape = 'u32[144,128]{1,0:T(1,128)}', space=vmem, size = 0x12000, scoped, tag = 'internal scratch']
  #allocation2 [shape = 'f32[32,128]{1,0:T(8,128)}', space=vmem, size = 0x4000, scoped, tag = 'scratch operand']
  %s0 = inlined_call_operand.vmem [shape: bf16[32,128], index: 0, kind: input, shape index: {}]
  %s1 = inlined_call_operand.vmem [shape: bf16[128,128], index: 1, kind: input, shape index: {}]
  %s2 = inlined_call_operand.vmem [shape: f32[32,128], index: 2, kind: output, shape index: {}]
  %s3 = sld [smem:[#allocation0]]
  $region26: #{model_forward.40} parent=0
    _
  %s5 = ssub.s32 1, %s3
  %s6 = scalar_select 0, %s5, %s3
  // Predicated region
  $region2: #{model_forward.40} parent=0 // pred_check
    _
  $region3: #{model_forward.40} parent=0 // pred_check_branch
    %8 = sbr.rel (0) target = $region5
  $region4: #{model_forward.40} parent=0 // pred_region
    _
  $region5: #{model_forward.40} parent=0 // pred_fallthru
    _
  // Predicated region
  $region6: #{model_forward.40} parent=0 // pred_check
    _
  $region7: #{model_forward.40} parent=0 // pred_check_branch
    %10 = sbr.rel (0) target = $region9
  $region8: #{model_forward.40} parent=0 // pred_region
    _
  $region9: #{model_forward.40} parent=0 // pred_fallthru
    _
  %p12 = scmp.eq.s32.totalorder 0, 0
  // Predicated region
  $region10: #{model_forward.40} parent=0 // pred_check
    %p13 = pneg %p12
  $region11: #{model_forward.40} parent=0 // pred_check_branch
    %15 = sbr.rel (%p13) target = $region13
  $region12: #{model_forward.40} parent=0 // pred_region
    %16 = vst [vmem:[#allocation2] sm:$0xff] 0.0
    %17 = vst [vmem:[#allocation2 + $0x8] sm:$0xff] 0.0
    %18 = vst [vmem:[#allocation2 + $0x10] sm:$0xff] 0.0
    %19 = vst [vmem:[#allocation2 + $0x18] sm:$0xff] 0.0
  $region13: #{model_forward.40} parent=0 // pred_fallthru
    _
  %v20 = vld [vmem:[#allocation2] sm:$0xff]
  %v21 = vld [vmem:[#allocation2 + $0x8] sm:$0xff]
  %v22 = vld [vmem:[#allocation2 + $0x10] sm:$0xff]
  %v23 = vld [vmem:[#allocation2 + $0x18] sm:$0xff]
  %v24 = vld [vmem:[%s0] sm:$0xf]
  %v25 = vld [vmem:[%s0 + $0x4] sm:$0xf]
  %v26 = vld [vmem:[%s0 + $0x8] sm:$0xf]
  %v27 = vld [vmem:[%s0 + $0xc] sm:$0xf]
  %v28 = vld [vmem:[%s1] sm:$0xf]
  %v29 = vld [vmem:[%s1 + $0x4] sm:$0xf]
  %v30 = vld [vmem:[%s1 + $0x8] sm:$0xf]
  %v31 = vld [vmem:[%s1 + $0xc] sm:$0xf]
  %v32 = vld [vmem:[%s1 + $0x10] sm:$0xf]
  %v33 = vld [vmem:[%s1 + $0x14] sm:$0xf]
  %v34 = vld [vmem:[%s1 + $0x18] sm:$0xf]
  %v35 = vld [vmem:[%s1 + $0x1c] sm:$0xf]
  %v36 = vld [vmem:[%s1 + $0x20] sm:$0xf]
  %v37 = vld [vmem:[%s1 + $0x24] sm:$0xf]
  %v38 = vld [vmem:[%s1 + $0x28] sm:$0xf]
  %v39 = vld [vmem:[%s1 + $0x2c] sm:$0xf]
  %v40 = vld [vmem:[%s1 + $0x30] sm:$0xf]
  %v41 = vld [vmem:[%s1 + $0x34] sm:$0xf]
  %v42 = vld [vmem:[%s1 + $0x38] sm:$0xf]
  %v43 = vld [vmem:[%s1 + $0x3c] sm:$0xf]
  %v48 = vunpack.c.l.b16 %v24
  %v49 = vunpack.c.l.b16 %v25
  %v50 = vunpack.c.l.b16 %v26
  %v51 = vunpack.c.l.b16 %v27
  %v52 = vpack.c.b16 %v49, %v48
  %v53 = vpack.c.b16 %v51, %v50
  %v72 = vunpack.c.l.b16 %v28
  %v73 = vunpack.c.l.b16 %v29
  %v74 = vunpack.c.l.b16 %v30
  %v75 = vunpack.c.l.b16 %v31
  %v76 = vunpack.c.l.b16 %v32
  %v77 = vunpack.c.l.b16 %v33
  %v78 = vunpack.c.l.b16 %v34
  %v79 = vunpack.c.l.b16 %v35
  %v80 = vunpack.c.l.b16 %v36
  %v81 = vunpack.c.l.b16 %v37
  %v82 = vunpack.c.l.b16 %v38
  %v83 = vunpack.c.l.b16 %v39
  %v84 = vunpack.c.l.b16 %v40
  %v85 = vunpack.c.l.b16 %v41
  %v86 = vunpack.c.l.b16 %v42
  %v87 = vunpack.c.l.b16 %v43
  %v88 = vpack.c.b16 %v73, %v72
  %v89 = vpack.c.b16 %v75, %v74
  %v90 = vpack.c.b16 %v77, %v76
  %v91 = vpack.c.b16 %v79, %v78
  %v92 = vpack.c.b16 %v81, %v80
  %v93 = vpack.c.b16 %v83, %v82
  %v94 = vpack.c.b16 %v85, %v84
  %v95 = vpack.c.b16 %v87, %v86
  %104 = vmatprep.subr.bf16.mxu0 0
  %105 = vmatpush1.bf16.msra.mxu0 %v95
  %106 = vmatprep.subr.bf16.mxu0 0
  %107 = vmatpush1.bf16.msra.mxu0 %v94
  %108 = vmatprep.subr.bf16.mxu0 0
  %109 = vmatpush1.bf16.msra.mxu0 %v93
  %110 = vmatprep.subr.bf16.mxu0 0
  %111 = vmatpush1.bf16.msra.mxu0 %v92
  %112 = vmatprep.subr.bf16.mxu0 0
  %113 = vmatpush1.bf16.msra.mxu0 %v91
  %114 = vmatprep.subr.bf16.mxu0 0
  %115 = vmatpush1.bf16.msra.mxu0 %v90
  %116 = vmatprep.subr.bf16.mxu0 0
  %117 = vmatpush1.bf16.msra.mxu0 %v89
  %118 = vmatprep.subr.bf16.mxu0 0
  %119 = vmatpush1.bf16.msra.mxu0 %v88
  %120 = vmatprep.subr.bf16.mxu0 0
  %121 = vmatpush2.bf16.msra.mxu0 0
  %122 = vmatprep.subr.bf16.mxu0 0
  %123 = vmatpush2.bf16.msra.mxu0 0
  %124 = vmatprep.subr.bf16.mxu0 0
  %125 = vmatpush2.bf16.msra.mxu0 0
  %126 = vmatprep.subr.bf16.mxu0 0
  %127 = vmatpush2.bf16.msra.mxu0 0
  %128 = vmatprep.subr.bf16.mxu0 0
  %129 = vmatpush2.bf16.msra.mxu0 0
  %130 = vmatprep.subr.bf16.mxu0 0
  %131 = vmatpush2.bf16.msra.mxu0 0
  %132 = vmatprep.subr.bf16.mxu0 0
  %133 = vmatpush2.bf16.msra.mxu0 0
  %134 = vmatprep.subr.bf16.mxu0 0
  %135 = vmatpush2.bf16.msra.mxu0 0
  %136 = vmatprep.mubr.bf16.mxu0 0
  %137 = vmatmul.mubr.bf16.gmra.mxu0 %v52
  %v138 = vpop.f32.mrf.mxu0
  %v139 = vadd.f32 0.0, %v138
  %v140 = vpop.f32.mrf.mxu0
  %v141 = vpop.f32.mrf.mxu0
  %v142 = vadd.f32 0.0, %v141
  %v143 = vpop.f32.mrf.mxu0
  %144 = vmatprep.mubr.bf16.mxu0 0
  %145 = vmatmul.mubr.bf16.gmra.mxu0 %v53
  %v146 = vpop.f32.mrf.mxu0
  %v147 = vadd.f32 0.0, %v146
  %v148 = vpop.f32.mrf.mxu0
  %v149 = vpop.f32.mrf.mxu0
  %v150 = vadd.f32 0.0, %v149
  %v151 = vpop.f32.mrf.mxu0
  %152 = vdwg.mxu0
  %v153 = vadd.f32 %v20, %v139
  %v154 = vadd.f32 %v21, %v142
  %v155 = vadd.f32 %v22, %v147
  %v156 = vadd.f32 %v23, %v150
  %157 = vst [vmem:[#allocation2] sm:$0xff] %v153
  %158 = vst [vmem:[#allocation2 + $0x8] sm:$0xff] %v154
  %159 = vst [vmem:[#allocation2 + $0x10] sm:$0xff] %v155
  %160 = vst [vmem:[#allocation2 + $0x18] sm:$0xff] %v156
  // Predicated region
  $region14: #{model_forward.40} parent=0 // pred_check
    %p161 = pneg %p12
  $region15: #{model_forward.40} parent=0 // pred_check_branch
    %163 = sbr.rel (%p161) target = $region17
  $region16: #{model_forward.40} parent=0 // pred_region
    %v164 = vld [vmem:[#allocation2] sm:$0xff]
    %v165 = vld [vmem:[#allocation2 + $0x8] sm:$0xff]
    %v166 = vld [vmem:[#allocation2 + $0x10] sm:$0xff]
    %v167 = vld [vmem:[#allocation2 + $0x18] sm:$0xff]
    %168 = vst [vmem:[%s2] sm:$0xff] %v164
    %169 = vst [vmem:[%s2 + $0x8] sm:$0xff] %v165
    %170 = vst [vmem:[%s2 + $0x10] sm:$0xff] %v166
    %171 = vst [vmem:[%s2 + $0x18] sm:$0xff] %v167
  $region17: #{model_forward.40} parent=0 // pred_fallthru
    _
  // Predicated region
  $region18: #{model_forward.40} parent=0 // pred_check
    _
  $region19: #{model_forward.40} parent=0 // pred_check_branch
    %173 = sbr.rel (0) target = $region21
  $region20: #{model_forward.40} parent=0 // pred_region
    _
  $region21: #{model_forward.40} parent=0 // pred_fallthru
    _
  // Predicated region
  $region22: #{model_forward.40} parent=0 // pred_check
    _
  $region23: #{model_forward.40} parent=0 // pred_check_branch
    %175 = sbr.rel (0) target = $region25
  $region24: #{model_forward.40} parent=0 // pred_region
    _
  $region25: #{model_forward.40} parent=0 // pred_fallthru
    _

// kernel: model_forward.42
$region0: #{model_forward.42}
  #allocation0 [shape = 'u32[]', space=smem, size = 0x4, offset = 0x4, fixed_abs, tag = 'smem constant byte address 0x4 - core index']
  #allocation1 [shape = 'u32[144,128]{1,0:T(1,128)}', space=vmem, size = 0x12000, scoped, tag = 'internal scratch']
  #allocation2 [shape = 'f32[256,128]{1,0:T(8,128)}', space=vmem, size = 0x20000, scoped, tag = 'scratch operand']
  %s0 = inlined_call_operand.vmem [shape: bf16[2048,128], index: 0, kind: input, shape index: {}]
  %s1 = inlined_call_operand.vmem [shape: bf16[128,128], index: 1, kind: input, shape index: {}]
  %s2 = inlined_call_operand.vmem [shape: f32[2048,128], index: 2, kind: output, shape index: {}]
  %s3 = sld [smem:[#allocation0]]
  $region49: #{model_forward.42} parent=0
    _
  %s5 = ssub.s32 1, %s3
  %s6 = scalar_select 0, %s5, %s3
  loop: start=0, step=1, limit=10
  $region2: #{model_forward.42} parent=0 // loop_pre_header
    _
  $region3: #{model_forward.42} parent=0 // loop_header
    %s8 = sphi 0, %s12
    %p9 = scmp.ge.s32.totalorder %s8, 10
    %s15 = sphi 0, %s34
    %s16 = sphi 0, %s30
    %s17 = sphi 0, %s26
    %s18 = sphi 0, %s15
    %s19 = sphi 0, %s16
    %s20 = sphi 0, %s17
    %s21 = sphi 0, %s18
    %s22 = sphi 0, %s19
    %s23 = sphi 0, %s20
    %s39 = sphi 0, %s41
    %s42 = sphi 0, %s39
    %s43 = sphi 0, %s42
    %s59 = sphi 0, %s43
    %s67 = sphi 0, %s69
    %s70 = sphi 0, %s67
    %s71 = sphi 0, %s70
    %s87 = sphi 0, %s71
    %s95 = sphi 0, %s97
    %s98 = sphi 0, %s95
    %s99 = sphi 0, %s98
    %s115 = sphi 0, %s99
  $region4: #{model_forward.42} parent=0 // loop_header_branch
    %11 = sbr.rel (%p9) target = $region8
  $region5: #{model_forward.42} parent=0 // loop_body
    %s13 = ssub.s32 %s8, 1
    %s14 = ssub.s32 %s8, 2
    %s24 = sadd.s32 1, %s17
    %p25 = scmp.ge.s32.totalorder %s24, 1
    %s26 = scalar_select %p25, 0, %s24
    %s27 = sadd.s32 1, %s16
    %s28 = scalar_select %p25, %s27, %s16
    %p29 = scmp.ge.s32.totalorder %s28, 1
    %s30 = scalar_select %p29, 0, %s28
    %s31 = sadd.s32 1, %s15
    %s32 = scalar_select %p29, %s31, %s15
    %p33 = scmp.ge.s32.totalorder %s32, 8
    %s34 = scalar_select %p33, 0, %s32
    %s35 = ssub.s32 %s15, %s34
    %s36 = ssub.s32 %s17, %s26
    %s37 = sor.u32 %s35, %s36
    %p38 = scmp.eq.s32.totalorder %s37, 0
    %s40 = sadd.s32 %s39, 1
    %s41 = scalar_select %p38, %s39, %s40
    %p44 = pneg %p38
    %p45 = scmp.eq.s32.totalorder %s8, 7
    %p46 = por %p44, %p45
    %p47 = scmp.ne.s32.totalorder %s39, %s42
    %p48 = scmp.eq.s32.totalorder %s8, 0
    %p49 = por %p47, %p48
    %p50 = scmp.ne.s32.totalorder %s39, %s42
    %p51 = scmp.eq.s32.totalorder %s13, 7
    %p52 = por %p50, %p51
    %p53 = scmp.ne.s32.totalorder %s42, %s43
    %p54 = scmp.eq.s32.totalorder %s13, 0
    %p55 = por %p53, %p54
    %p56 = scmp.ne.s32.totalorder %s42, %s43
    %p57 = scmp.eq.s32.totalorder %s14, 7
    %p58 = por %p56, %p57
    %p60 = scmp.ne.s32.totalorder %s43, %s59
    %p61 = scmp.eq.s32.totalorder %s14, 0
    %p62 = por %p60, %p61
    %s63 = ssub.s32 %s17, %s26
    %s64 = ssub.s32 %s16, %s30
    %s65 = sor.u32 %s63, %s64
    %p66 = scmp.eq.s32.totalorder %s65, 0
    %s68 = sadd.s32 %s67, 1
    %s69 = scalar_select %p66, %s67, %s68
    %p72 = pneg %p66
    %p73 = scmp.eq.s32.totalorder %s8, 7
    %p74 = por %p72, %p73
    %p75 = scmp.ne.s32.totalorder %s67, %s70
    %p76 = scmp.eq.s32.totalorder %s8, 0
    %p77 = por %p75, %p76
    %p78 = scmp.ne.s32.totalorder %s67, %s70
    %p79 = scmp.eq.s32.totalorder %s13, 7
    %p80 = por %p78, %p79
    %p81 = scmp.ne.s32.totalorder %s70, %s71
    %p82 = scmp.eq.s32.totalorder %s13, 0
    %p83 = por %p81, %p82
    %p84 = scmp.ne.s32.totalorder %s70, %s71
    %p85 = scmp.eq.s32.totalorder %s14, 7
    %p86 = por %p84, %p85
    %p88 = scmp.ne.s32.totalorder %s71, %s87
    %p89 = scmp.eq.s32.totalorder %s14, 0
    %p90 = por %p88, %p89
    %s91 = ssub.s32 %s15, %s34
    %s92 = ssub.s32 %s16, %s30
    %s93 = sor.u32 %s91, %s92
    %p94 = scmp.eq.s32.totalorder %s93, 0
    %s96 = sadd.s32 %s95, 1
    %s97 = scalar_select %p94, %s95, %s96
    %p100 = pneg %p94
    %p101 = scmp.eq.s32.totalorder %s8, 7
    %p102 = por %p100, %p101
    %p103 = scmp.ne.s32.totalorder %s95, %s98
    %p104 = scmp.eq.s32.totalorder %s8, 0
    %p105 = por %p103, %p104
    %p106 = scmp.ne.s32.totalorder %s95, %s98
    %p107 = scmp.eq.s32.totalorder %s13, 7
    %p108 = por %p106, %p107
    %p109 = scmp.ne.s32.totalorder %s98, %s99
    %p110 = scmp.eq.s32.totalorder %s13, 0
    %p111 = por %p109, %p110
    %p112 = scmp.ne.s32.totalorder %s98, %s99
    %p113 = scmp.eq.s32.totalorder %s14, 7
    %p114 = por %p112, %p113
    %p116 = scmp.ne.s32.totalorder %s99, %s115
    %p117 = scmp.eq.s32.totalorder %s14, 0
    %p118 = por %p116, %p117
    %p119 = scmp.le.s32.totalorder 1, %s8
    %p120 = scmp.lt.s32.totalorder %s8, 9
    %p121 = pnand %p119, %p120
    %p122 = pneg %p121
    // Predicated region
    $region9: #{model_forward.42} parent=5 // pred_check
      _
    $region10: #{model_forward.42} parent=5 // pred_check_branch
      %124 = sbr.rel (%p121) target = $region12
    $region11: #{model_forward.42} parent=5 // pred_region
      %s125 = ssub.s32 %s8, 1
      // Predicated region
      $region13: #{model_forward.42} parent=11 // pred_check
        %p126 = pneg %p83
      $region14: #{model_forward.42} parent=11 // pred_check_branch
        %128 = sbr.rel (%p126) target = $region16
      $region15: #{model_forward.42} parent=11 // pred_region
        %s129 = smul.u32 16, %s20
        %p130 = scmp.lt.s32.totalorder %s129, 15
        %s131 = scalar_select %p130, %s129, 15
        %p132 = scmp.lt.s32.totalorder %s19, 0
        %s133 = scalar_select %p132, %s19, 0
        %s134 = sadd.s32 %s133, %s131
        %s135 = smul.addr %s134, 4
        %s136 = scalar_lea.vmem %s1, %s135
        %s137 = smul.u32 16, %s20
      $region16: #{model_forward.42} parent=11 // pred_fallthru
        _
    $region12: #{model_forward.42} parent=5 // pred_fallthru
      _
    %p138 = scmp.lt.s32.totalorder %s8, 8
    // Predicated region
    $region17: #{model_forward.42} parent=5 // pred_check
      %p139 = pneg %p138
    $region18: #{model_forward.42} parent=5 // pred_check_branch
      %141 = sbr.rel (%p139) target = $region20
    $region19: #{model_forward.42} parent=5 // pred_region
      // Predicated region
      $region21: #{model_forward.42} parent=19 // pred_check
        %p142 = pneg %p49
      $region22: #{model_forward.42} parent=19 // pred_check_branch
        %144 = sbr.rel (%p142) target = $region24
      $region23: #{model_forward.42} parent=19 // pred_region
        %s145 = smul.u32 32, %s15
        %p146 = scmp.lt.s32.totalorder %s145, 255
        %s147 = scalar_select %p146, %s145, 255
        %p148 = scmp.lt.s32.totalorder %s17, 0
        %s149 = scalar_select %p148, %s17, 0
        %s150 = sadd.s32 %s149, %s147
        %s151 = smul.addr %s150, 4
        %s152 = scalar_lea.vmem %s0, %s151
        %s153 = smul.u32 32, %s15
      $region24: #{model_forward.42} parent=19 // pred_fallthru
        _
    $region20: #{model_forward.42} parent=5 // pred_fallthru
      _
    %p154 = scmp.le.s32.totalorder 1, %s8
    %p155 = scmp.lt.s32.totalorder %s8, 9
    %p156 = pnand %p154, %p155
    %p157 = pneg %p156
    // Predicated region
    $region25: #{model_forward.42} parent=5 // pred_check
      _
    $region26: #{model_forward.42} parent=5 // pred_check_branch
      %159 = sbr.rel (%p156) target = $region28
    $region27: #{model_forward.42} parent=5 // pred_region
      %s160 = ssub.s32 %s8, 1
      %s161 = smul.u32 32, %s18
      %p162 = scmp.lt.s32.totalorder %s161, 255
      %s163 = scalar_select %p162, %s161, 255
      %p164 = scmp.lt.s32.totalorder %s20, 0
      %s165 = scalar_select %p164, %s20, 0
      %s166 = sadd.s32 %s165, %s163
      %s167 = smul.addr %s166, 4
      %s168 = scalar_lea.vmem %s0, %s167
      %p169 = pneg %p55
      %p170 = pneg %p52
      %s171 = smul.u32 16, %s20
      %p172 = scmp.lt.s32.totalorder %s171, 15
      %s173 = scalar_select %p172, %s171, 15
      %p174 = scmp.lt.s32.totalorder %s19, 0
      %s175 = scalar_select %p174, %s19, 0
      %s176 = sadd.s32 %s175, %s173
      %s177 = smul.addr %s176, 4
      %s178 = scalar_lea.vmem %s1, %s177
      %p179 = pneg %p83
      %p180 = pneg %p80
      %p181 = pneg %p111
      %p182 = pneg %p108
      %s183 = smul.u32 32, %s18
      %p184 = scmp.lt.s32.totalorder %s183, 255
      %s185 = scalar_select %p184, %s183, 255
      %p186 = scmp.lt.s32.totalorder %s19, 0
      %s187 = scalar_select %p186, %s19, 0
      %s188 = sadd.s32 %s187, %s185
      %s189 = smul.addr %s188, 8
      %s190 = scalar_lea.vmem %s2, %s189
      %s191 = smul.u32 32, %s18
      %p192 = scmp.lt.s32.totalorder %s191, 255
      %s193 = scalar_select %p192, %s191, 255
      %p194 = scmp.lt.s32.totalorder %s20, 0
      %s195 = scalar_select %p194, %s20, 0
      %s196 = sadd.s32 %s195, %s193
      %s197 = smul.addr %s196, 4
      %s198 = scalar_lea.vmem %s0, %s197
      %s199 = smul.u32 32, %s18
      %s200 = smul.u32 16, %s20
      %p201 = scmp.lt.s32.totalorder %s200, 15
      %s202 = scalar_select %p201, %s200, 15
      %p203 = scmp.lt.s32.totalorder %s19, 0
      %s204 = scalar_select %p203, %s19, 0
      %s205 = sadd.s32 %s204, %s202
      %s206 = smul.addr %s205, 4
      %s207 = scalar_lea.vmem %s1, %s206
      %s208 = smul.u32 16, %s20
      %s209 = smul.u32 32, %s18
      %p210 = scmp.lt.s32.totalorder %s209, 255
      %s211 = scalar_select %p210, %s209, 255
      %p212 = scmp.lt.s32.totalorder %s19, 0
      %s213 = scalar_select %p212, %s19, 0
      %s214 = sadd.s32 %s213, %s211
      %s215 = smul.addr %s214, 8
      %s216 = scalar_lea.vmem %s2, %s215
      %s217 = smul.u32 32, %s18
      %p219 = scmp.eq.s32.totalorder %s20, 0
      // Predicated region
      $region29: #{model_forward.42} parent=27 // pred_check
        %p220 = pneg %p219
      $region30: #{model_forward.42} parent=27 // pred_check_branch
        %222 = sbr.rel (%p220) target = $region32
      $region31: #{model_forward.42} parent=27 // pred_region
        %223 = vst [vmem:[#allocation2] sm:$0xff] 0.0
        %224 = vst [vmem:[#allocation2 + $0x8] sm:$0xff] 0.0
        %225 = vst [vmem:[#allocation2 + $0x10] sm:$0xff] 0.0
        %226 = vst [vmem:[#allocation2 + $0x18] sm:$0xff] 0.0
        %227 = vst [vmem:[#allocation2 + $0x20] sm:$0xff] 0.0
        %228 = vst [vmem:[#allocation2 + $0x28] sm:$0xff] 0.0
        %229 = vst [vmem:[#allocation2 + $0x30] sm:$0xff] 0.0
        %230 = vst [vmem:[#allocation2 + $0x38] sm:$0xff] 0.0
        %231 = vst [vmem:[#allocation2 + $0x40] sm:$0xff] 0.0
        %232 = vst [vmem:[#allocation2 + $0x48] sm:$0xff] 0.0
        %233 = vst [vmem:[#allocation2 + $0x50] sm:$0xff] 0.0
        %234 = vst [vmem:[#allocation2 + $0x58] sm:$0xff] 0.0
        %235 = vst [vmem:[#allocation2 + $0x60] sm:$0xff] 0.0
        %236 = vst [vmem:[#allocation2 + $0x68] sm:$0xff] 0.0
        %237 = vst [vmem:[#allocation2 + $0x70] sm:$0xff] 0.0
        %238 = vst [vmem:[#allocation2 + $0x78] sm:$0xff] 0.0
        %239 = vst [vmem:[#allocation2 + $0x80] sm:$0xff] 0.0
        %240 = vst [vmem:[#allocation2 + $0x88] sm:$0xff] 0.0
        %241 = vst [vmem:[#allocation2 + $0x90] sm:$0xff] 0.0
        %242 = vst [vmem:[#allocation2 + $0x98] sm:$0xff] 0.0
        %243 = vst [vmem:[#allocation2 + $0xa0] sm:$0xff] 0.0
        %244 = vst [vmem:[#allocation2 + $0xa8] sm:$0xff] 0.0
        %245 = vst [vmem:[#allocation2 + $0xb0] sm:$0xff] 0.0
        %246 = vst [vmem:[#allocation2 + $0xb8] sm:$0xff] 0.0
        %247 = vst [vmem:[#allocation2 + $0xc0] sm:$0xff] 0.0
        %248 = vst [vmem:[#allocation2 + $0xc8] sm:$0xff] 0.0
        %249 = vst [vmem:[#allocation2 + $0xd0] sm:$0xff] 0.0
        %250 = vst [vmem:[#allocation2 + $0xd8] sm:$0xff] 0.0
        %251 = vst [vmem:[#allocation2 + $0xe0] sm:$0xff] 0.0
        %252 = vst [vmem:[#allocation2 + $0xe8] sm:$0xff] 0.0
        %253 = vst [vmem:[#allocation2 + $0xf0] sm:$0xff] 0.0
        %254 = vst [vmem:[#allocation2 + $0xf8] sm:$0xff] 0.0
      $region32: #{model_forward.42} parent=27 // pred_fallthru
        _
      %v255 = vld [vmem:[#allocation2] sm:$0xff]
      %v256 = vld [vmem:[#allocation2 + $0x8] sm:$0xff]
      %v257 = vld [vmem:[#allocation2 + $0x10] sm:$0xff]
      %v258 = vld [vmem:[#allocation2 + $0x18] sm:$0xff]
      %v259 = vld [vmem:[#allocation2 + $0x20] sm:$0xff]
      %v260 = vld [vmem:[#allocation2 + $0x28] sm:$0xff]
      %v261 = vld [vmem:[#allocation2 + $0x30] sm:$0xff]
      %v262 = vld [vmem:[#allocation2 + $0x38] sm:$0xff]
      %v263 = vld [vmem:[#allocation2 + $0x40] sm:$0xff]
      %v264 = vld [vmem:[#allocation2 + $0x48] sm:$0xff]
      %v265 = vld [vmem:[#allocation2 + $0x50] sm:$0xff]
      %v266 = vld [vmem:[#allocation2 + $0x58] sm:$0xff]
      %v267 = vld [vmem:[#allocation2 + $0x60] sm:$0xff]
      %v268 = vld [vmem:[#allocation2 + $0x68] sm:$0xff]
      %v269 = vld [vmem:[#allocation2 + $0x70] sm:$0xff]
      %v270 = vld [vmem:[#allocation2 + $0x78] sm:$0xff]
      %v271 = vld [vmem:[#allocation2 + $0x80] sm:$0xff]
      %v272 = vld [vmem:[#allocation2 + $0x88] sm:$0xff]
      %v273 = vld [vmem:[#allocation2 + $0x90] sm:$0xff]
      %v274 = vld [vmem:[#allocation2 + $0x98] sm:$0xff]
      %v275 = vld [vmem:[#allocation2 + $0xa0] sm:$0xff]
      %v276 = vld [vmem:[#allocation2 + $0xa8] sm:$0xff]
      %v277 = vld [vmem:[#allocation2 + $0xb0] sm:$0xff]
      %v278 = vld [vmem:[#allocation2 + $0xb8] sm:$0xff]
      %v279 = vld [vmem:[#allocation2 + $0xc0] sm:$0xff]
      %v280 = vld [vmem:[#allocation2 + $0xc8] sm:$0xff]
      %v281 = vld [vmem:[#allocation2 + $0xd0] sm:$0xff]
      %v282 = vld [vmem:[#allocation2 + $0xd8] sm:$0xff]
      %v283 = vld [vmem:[#allocation2 + $0xe0] sm:$0xff]
      %v284 = vld [vmem:[#allocation2 + $0xe8] sm:$0xff]
      %v285 = vld [vmem:[#allocation2 + $0xf0] sm:$0xff]
      %v286 = vld [vmem:[#allocation2 + $0xf8] sm:$0xff]
      %v287 = vld [vmem:[%s198] sm:$0xf]
      %v288 = vld [vmem:[%s198 + $0x4] sm:$0xf]
      %v289 = vld [vmem:[%s198 + $0x8] sm:$0xf]
      %v290 = vld [vmem:[%s198 + $0xc] sm:$0xf]
      %v291 = vld [vmem:[%s198 + $0x10] sm:$0xf]
      %v292 = vld [vmem:[%s198 + $0x14] sm:$0xf]
      %v293 = vld [vmem:[%s198 + $0x18] sm:$0xf]
      %v294 = vld [vmem:[%s198 + $0x1c] sm:$0xf]
      %v295 = vld [vmem:[%s198 + $0x20] sm:$0xf]
      %v296 = vld [vmem:[%s198 + $0x24] sm:$0xf]
      %v297 = vld [vmem:[%s198 + $0x28] sm:$0xf]
      %v298 = vld [vmem:[%s198 + $0x2c] sm:$0xf]
      %v299 = vld [vmem:[%s198 + $0x30] sm:$0xf]
      %v300 = vld [vmem:[%s198 + $0x34] sm:$0xf]
      %v301 = vld [vmem:[%s198 + $0x38] sm:$0xf]
      %v302 = vld [vmem:[%s198 + $0x3c] sm:$0xf]
      %v303 = vld [vmem:[%s198 + $0x40] sm:$0xf]
      %v304 = vld [vmem:[%s198 + $0x44] sm:$0xf]
      %v305 = vld [vmem:[%s198 + $0x48] sm:$0xf]
      %v306 = vld [vmem:[%s198 + $0x4c] sm:$0xf]
      %v307 = vld [vmem:[%s198 + $0x50] sm:$0xf]
      %v308 = vld [vmem:[%s198 + $0x54] sm:$0xf]
      %v309 = vld [vmem:[%s198 + $0x58] sm:$0xf]
      %v310 = vld [vmem:[%s198 + $0x5c] sm:$0xf]
      %v311 = vld [vmem:[%s198 + $0x60] sm:$0xf]
      %v312 = vld [vmem:[%s198 + $0x64] sm:$0xf]
      %v313 = vld [vmem:[%s198 + $0x68] sm:$0xf]
      %v314 = vld [vmem:[%s198 + $0x6c] sm:$0xf]
      %v315 = vld [vmem:[%s198 + $0x70] sm:$0xf]
      %v316 = vld [vmem:[%s198 + $0x74] sm:$0xf]
      %v317 = vld [vmem:[%s198 + $0x78] sm:$0xf]
      %v318 = vld [vmem:[%s198 + $0x7c] sm:$0xf]
      %v319 = vld [vmem:[%s207] sm:$0xf]
      %v320 = vld [vmem:[%s207 + $0x4] sm:$0xf]
      %v321 = vld [vmem:[%s207 + $0x8] sm:$0xf]
      %v322 = vld [vmem:[%s207 + $0xc] sm:$0xf]
      %v323 = vld [vmem:[%s207 + $0x10] sm:$0xf]
      %v324 = vld [vmem:[%s207 + $0x14] sm:$0xf]
      %v325 = vld [vmem:[%s207 + $0x18] sm:$0xf]
      %v326 = vld [vmem:[%s207 + $0x1c] sm:$0xf]
      %v327 = vld [vmem:[%s207 + $0x20] sm:$0xf]
      %v328 = vld [vmem:[%s207 + $0x24] sm:$0xf]
      %v329 = vld [vmem:[%s207 + $0x28] sm:$0xf]
      %v330 = vld [vmem:[%s207 + $0x2c] sm:$0xf]
      %v331 = vld [vmem:[%s207 + $0x30] sm:$0xf]
      %v332 = vld [vmem:[%s207 + $0x34] sm:$0xf]
      %v333 = vld [vmem:[%s207 + $0x38] sm:$0xf]
      %v334 = vld [vmem:[%s207 + $0x3c] sm:$0xf]
      %v367 = vunpack.c.l.b16 %v287
      %v368 = vunpack.c.l.b16 %v288
      %v369 = vunpack.c.l.b16 %v289
      %v370 = vunpack.c.l.b16 %v290
      %v371 = vunpack.c.l.b16 %v291
      %v372 = vunpack.c.l.b16 %v292
      %v373 = vunpack.c.l.b16 %v293
      %v374 = vunpack.c.l.b16 %v294
      %v375 = vunpack.c.l.b16 %v295
      %v376 = vunpack.c.l.b16 %v296
      %v377 = vunpack.c.l.b16 %v297
      %v378 = vunpack.c.l.b16 %v298
      %v379 = vunpack.c.l.b16 %v299
      %v380 = vunpack.c.l.b16 %v300
      %v381 = vunpack.c.l.b16 %v301
      %v382 = vunpack.c.l.b16 %v302
      %v383 = vunpack.c.l.b16 %v303
      %v384 = vunpack.c.l.b16 %v304
      %v385 = vunpack.c.l.b16 %v305
      %v386 = vunpack.c.l.b16 %v306
      %v387 = vunpack.c.l.b16 %v307
      %v388 = vunpack.c.l.b16 %v308
      %v389 = vunpack.c.l.b16 %v309
      %v390 = vunpack.c.l.b16 %v310
      %v391 = vunpack.c.l.b16 %v311
      %v392 = vunpack.c.l.b16 %v312
      %v393 = vunpack.c.l.b16 %v313
      %v394 = vunpack.c.l.b16 %v314
      %v395 = vunpack.c.l.b16 %v315
      %v396 = vunpack.c.l.b16 %v316
      %v397 = vunpack.c.l.b16 %v317
      %v398 = vunpack.c.l.b16 %v318
      %v399 = vpack.c.b16 %v368, %v367
      %v400 = vpack.c.b16 %v370, %v369
      %v401 = vpack.c.b16 %v372, %v371
      %v402 = vpack.c.b16 %v374, %v373
      %v403 = vpack.c.b16 %v376, %v375
      %v404 = vpack.c.b16 %v378, %v377
      %v405 = vpack.c.b16 %v380, %v379
      %v406 = vpack.c.b16 %v382, %v381
      %v407 = vpack.c.b16 %v384, %v383
      %v408 = vpack.c.b16 %v386, %v385
      %v409 = vpack.c.b16 %v388, %v387
      %v410 = vpack.c.b16 %v390, %v389
      %v411 = vpack.c.b16 %v392, %v391
      %v412 = vpack.c.b16 %v394, %v393
      %v413 = vpack.c.b16 %v396, %v395
      %v414 = vpack.c.b16 %v398, %v397
      %v447 = vunpack.c.l.b16 %v319
      %v448 = vunpack.c.l.b16 %v320
      %v449 = vunpack.c.l.b16 %v321
      %v450 = vunpack.c.l.b16 %v322
      %v451 = vunpack.c.l.b16 %v323
      %v452 = vunpack.c.l.b16 %v324
      %v453 = vunpack.c.l.b16 %v325
      %v454 = vunpack.c.l.b16 %v326
      %v455 = vunpack.c.l.b16 %v327
      %v456 = vunpack.c.l.b16 %v328
      %v457 = vunpack.c.l.b16 %v329
      %v458 = vunpack.c.l.b16 %v330
      %v459 = vunpack.c.l.b16 %v331
      %v460 = vunpack.c.l.b16 %v332
      %v461 = vunpack.c.l.b16 %v333
      %v462 = vunpack.c.l.b16 %v334
      %v463 = vpack.c.b16 %v448, %v447
      %v464 = vpack.c.b16 %v450, %v449
      %v465 = vpack.c.b16 %v452, %v451
      %v466 = vpack.c.b16 %v454, %v453
      %v467 = vpack.c.b16 %v456, %v455
      %v468 = vpack.c.b16 %v458, %v457
      %v469 = vpack.c.b16 %v460, %v459
      %v470 = vpack.c.b16 %v462, %v461
      %479 = vmatprep.subr.bf16.mxu0 0
      %480 = vmatpush1.bf16.msra.mxu0 %v470
      %481 = vmatprep.subr.bf16.mxu0 0
      %482 = vmatpush1.bf16.msra.mxu0 %v469
      %483 = vmatprep.subr.bf16.mxu0 0
      %484 = vmatpush1.bf16.msra.mxu0 %v468
      %485 = vmatprep.subr.bf16.mxu0 0
      %486 = vmatpush1.bf16.msra.mxu0 %v467
      %487 = vmatprep.subr.bf16.mxu0 0
      %488 = vmatpush1.bf16.msra.mxu0 %v466
      %489 = vmatprep.subr.bf16.mxu0 0
      %490 = vmatpush1.bf16.msra.mxu0 %v465
      %491 = vmatprep.subr.bf16.mxu0 0
      %492 = vmatpush1.bf16.msra.mxu0 %v464
      %493 = vmatprep.subr.bf16.mxu0 0
      %494 = vmatpush1.bf16.msra.mxu0 %v463
      %495 = vmatprep.subr.bf16.mxu0 0
      %496 = vmatpush2.bf16.msra.mxu0 0
      %497 = vmatprep.subr.bf16.mxu0 0
      %498 = vmatpush2.bf16.msra.mxu0 0
      %499 = vmatprep.subr.bf16.mxu0 0
      %500 = vmatpush2.bf16.msra.mxu0 0
      %501 = vmatprep.subr.bf16.mxu0 0
      %502 = vmatpush2.bf16.msra.mxu0 0
      %503 = vmatprep.subr.bf16.mxu0 0
      %504 = vmatpush2.bf16.msra.mxu0 0
      %505 = vmatprep.subr.bf16.mxu0 0
      %506 = vmatpush2.bf16.msra.mxu0 0
      %507 = vmatprep.subr.bf16.mxu0 0
      %508 = vmatpush2.bf16.msra.mxu0 0
      %509 = vmatprep.subr.bf16.mxu0 0
      %510 = vmatpush2.bf16.msra.mxu0 0
      %511 = vmatprep.mubr.bf16.mxu0 0
      %512 = vmatmul.mubr.bf16.gmra.mxu0 %v399
      %v513 = vpop.f32.mrf.mxu0
      %v514 = vadd.f32 0.0, %v513
      %v515 = vpop.f32.mrf.mxu0
      %v516 = vpop.f32.mrf.mxu0
      %v517 = vadd.f32 0.0, %v516
      %v518 = vpop.f32.mrf.mxu0
      %519 = vmatprep.mubr.bf16.mxu0 0
      %520 = vmatmul.mubr.bf16.gmra.mxu0 %v400
      %v521 = vpop.f32.mrf.mxu0
      %v522 = vadd.f32 0.0, %v521
      %v523 = vpop.f32.mrf.mxu0
      %v524 = vpop.f32.mrf.mxu0
      %v525 = vadd.f32 0.0, %v524
      %v526 = vpop.f32.mrf.mxu0
      %527 = vmatprep.mubr.bf16.mxu0 0
      %528 = vmatmul.mubr.bf16.gmra.mxu0 %v401
      %v529 = vpop.f32.mrf.mxu0
      %v530 = vadd.f32 0.0, %v529
      %v531 = vpop.f32.mrf.mxu0
      %v532 = vpop.f32.mrf.mxu0
      %v533 = vadd.f32 0.0, %v532
      %v534 = vpop.f32.mrf.mxu0
      %535 = vmatprep.mubr.bf16.mxu0 0
      %536 = vmatmul.mubr.bf16.gmra.mxu0 %v402
      %v537 = vpop.f32.mrf.mxu0
      %v538 = vadd.f32 0.0, %v537
      %v539 = vpop.f32.mrf.mxu0
      %v540 = vpop.f32.mrf.mxu0
      %v541 = vadd.f32 0.0, %v540
      %v542 = vpop.f32.mrf.mxu0
      %543 = vmatprep.mubr.bf16.mxu0 0
      %544 = vmatmul.mubr.bf16.gmra.mxu0 %v403
      %v545 = vpop.f32.mrf.mxu0
      %v546 = vadd.f32 0.0, %v545
      %v547 = vpop.f32.mrf.mxu0
      %v548 = vpop.f32.mrf.mxu0
      %v549 = vadd.f32 0.0, %v548
      %v550 = vpop.f32.mrf.mxu0
      %551 = vmatprep.mubr.bf16.mxu0 0
      %552 = vmatmul.mubr.bf16.gmra.mxu0 %v404
      %v553 = vpop.f32.mrf.mxu0
      %v554 = vadd.f32 0.0, %v553
      %v555 = vpop.f32.mrf.mxu0
      %v556 = vpop.f32.mrf.mxu0
      %v557 = vadd.f32 0.0, %v556
      %v558 = vpop.f32.mrf.mxu0
      %559 = vmatprep.mubr.bf16.mxu0 0
      %560 = vmatmul.mubr.bf16.gmra.mxu0 %v405
      %v561 = vpop.f32.mrf.mxu0
      %v562 = vadd.f32 0.0, %v561
      %v563 = vpop.f32.mrf.mxu0
      %v564 = vpop.f32.mrf.mxu0
      %v565 = vadd.f32 0.0, %v564
      %v566 = vpop.f32.mrf.mxu0
      %567 = vmatprep.mubr.bf16.mxu0 0
      %568 = vmatmul.mubr.bf16.gmra.mxu0 %v406
      %v569 = vpop.f32.mrf.mxu0
      %v570 = vadd.f32 0.0, %v569
      %v571 = vpop.f32.mrf.mxu0
      %v572 = vpop.f32.mrf.mxu0
      %v573 = vadd.f32 0.0, %v572
      %v574 = vpop.f32.mrf.mxu0
      %575 = vmatprep.mubr.bf16.mxu0 0
      %576 = vmatmul.mubr.bf16.gmra.mxu0 %v407
      %v577 = vpop.f32.mrf.mxu0
      %v578 = vadd.f32 0.0, %v577
      %v579 = vpop.f32.mrf.mxu0
      %v580 = vpop.f32.mrf.mxu0
      %v581 = vadd.f32 0.0, %v580
      %v582 = vpop.f32.mrf.mxu0
      %583 = vmatprep.mubr.bf16.mxu0 0
      %584 = vmatmul.mubr.bf16.gmra.mxu0 %v408
      %v585 = vpop.f32.mrf.mxu0
      %v586 = vadd.f32 0.0, %v585
      %v587 = vpop.f32.mrf.mxu0
      %v588 = vpop.f32.mrf.mxu0
      %v589 = vadd.f32 0.0, %v588
      %v590 = vpop.f32.mrf.mxu0
      %591 = vmatprep.mubr.bf16.mxu0 0
      %592 = vmatmul.mubr.bf16.gmra.mxu0 %v409
      %v593 = vpop.f32.mrf.mxu0
      %v594 = vadd.f32 0.0, %v593
      %v595 = vpop.f32.mrf.mxu0
      %v596 = vpop.f32.mrf.mxu0
      %v597 = vadd.f32 0.0, %v596
      %v598 = vpop.f32.mrf.mxu0
      %599 = vmatprep.mubr.bf16.mxu0 0
      %600 = vmatmul.mubr.bf16.gmra.mxu0 %v410
      %v601 = vpop.f32.mrf.mxu0
      %v602 = vadd.f32 0.0, %v601
      %v603 = vpop.f32.mrf.mxu0
      %v604 = vpop.f32.mrf.mxu0
      %v605 = vadd.f32 0.0, %v604
      %v606 = vpop.f32.mrf.mxu0
      %607 = vmatprep.mubr.bf16.mxu0 0
      %608 = vmatmul.mubr.bf16.gmra.mxu0 %v411
      %v609 = vpop.f32.mrf.mxu0
      %v610 = vadd.f32 0.0, %v609
      %v611 = vpop.f32.mrf.mxu0
      %v612 = vpop.f32.mrf.mxu0
      %v613 = vadd.f32 0.0, %v612
      %v614 = vpop.f32.mrf.mxu0
      %615 = vmatprep.mubr.bf16.mxu0 0
      %616 = vmatmul.mubr.bf16.gmra.mxu0 %v412
      %v617 = vpop.f32.mrf.mxu0
      %v618 = vadd.f32 0.0, %v617
      %v619 = vpop.f32.mrf.mxu0
      %v620 = vpop.f32.mrf.mxu0
      %v621 = vadd.f32 0.0, %v620
      %v622 = vpop.f32.mrf.mxu0
      %623 = vmatprep.mubr.bf16.mxu0 0
      %624 = vmatmul.mubr.bf16.gmra.mxu0 %v413
      %v625 = vpop.f32.mrf.mxu0
      %v626 = vadd.f32 0.0, %v625
      %v627 = vpop.f32.mrf.mxu0
      %v628 = vpop.f32.mrf.mxu0
      %v629 = vadd.f32 0.0, %v628
      %v630 = vpop.f32.mrf.mxu0
      %631 = vmatprep.mubr.bf16.mxu0 0
      %632 = vmatmul.mubr.bf16.gmra.mxu0 %v414
      %v633 = vpop.f32.mrf.mxu0
      %v634 = vadd.f32 0.0, %v633
      %v635 = vpop.f32.mrf.mxu0
      %v636 = vpop.f32.mrf.mxu0
      %v637 = vadd.f32 0.0, %v636
      %v638 = vpop.f32.mrf.mxu0
      %639 = vdwg.mxu0
      %v640 = vadd.f32 %v255, %v514
      %v641 = vadd.f32 %v256, %v517
      %v642 = vadd.f32 %v257, %v522
      %v643 = vadd.f32 %v258, %v525
      %v644 = vadd.f32 %v259, %v530
      %v645 = vadd.f32 %v260, %v533
      %v646 = vadd.f32 %v261, %v538
      %v647 = vadd.f32 %v262, %v541
      %v648 = vadd.f32 %v263, %v546
      %v649 = vadd.f32 %v264, %v549
      %v650 = vadd.f32 %v265, %v554
      %v651 = vadd.f32 %v266, %v557
      %v652 = vadd.f32 %v267, %v562
      %v653 = vadd.f32 %v268, %v565
      %v654 = vadd.f32 %v269, %v570
      %v655 = vadd.f32 %v270, %v573
      %v656 = vadd.f32 %v271, %v578
      %v657 = vadd.f32 %v272, %v581
      %v658 = vadd.f32 %v273, %v586
      %v659 = vadd.f32 %v274, %v589
      %v660 = vadd.f32 %v275, %v594
      %v661 = vadd.f32 %v276, %v597
      %v662 = vadd.f32 %v277, %v602
      %v663 = vadd.f32 %v278, %v605
      %v664 = vadd.f32 %v279, %v610
      %v665 = vadd.f32 %v280, %v613
      %v666 = vadd.f32 %v281, %v618
      %v667 = vadd.f32 %v282, %v621
      %v668 = vadd.f32 %v283, %v626
      %v669 = vadd.f32 %v284, %v629
      %v670 = vadd.f32 %v285, %v634
      %v671 = vadd.f32 %v286, %v637
      %672 = vst [vmem:[#allocation2] sm:$0xff] %v640
      %673 = vst [vmem:[#allocation2 + $0x8] sm:$0xff] %v641
      %674 = vst [vmem:[#allocation2 + $0x10] sm:$0xff] %v642
      %675 = vst [vmem:[#allocation2 + $0x18] sm:$0xff] %v643
      %676 = vst [vmem:[#allocation2 + $0x20] sm:$0xff] %v644
      %677 = vst [vmem:[#allocation2 + $0x28] sm:$0xff] %v645
      %678 = vst [vmem:[#allocation2 + $0x30] sm:$0xff] %v646
      %679 = vst [vmem:[#allocation2 + $0x38] sm:$0xff] %v647
      %680 = vst [vmem:[#allocation2 + $0x40] sm:$0xff] %v648
      %681 = vst [vmem:[#allocation2 + $0x48] sm:$0xff] %v649
      %682 = vst [vmem:[#allocation2 + $0x50] sm:$0xff] %v650
      %683 = vst [vmem:[#allocation2 + $0x58] sm:$0xff] %v651
      %684 = vst [vmem:[#allocation2 + $0x60] sm:$0xff] %v652
      %685 = vst [vmem:[#allocation2 + $0x68] sm:$0xff] %v653
      %686 = vst [vmem:[#allocation2 + $0x70] sm:$0xff] %v654
      %687 = vst [vmem:[#allocation2 + $0x78] sm:$0xff] %v655
      %688 = vst [vmem:[#allocation2 + $0x80] sm:$0xff] %v656
      %689 = vst [vmem:[#allocation2 + $0x88] sm:$0xff] %v657
      %690 = vst [vmem:[#allocation2 + $0x90] sm:$0xff] %v658
      %691 = vst [vmem:[#allocation2 + $0x98] sm:$0xff] %v659
      %692 = vst [vmem:[#allocation2 + $0xa0] sm:$0xff] %v660
      %693 = vst [vmem:[#allocation2 + $0xa8] sm:$0xff] %v661
      %694 = vst [vmem:[#allocation2 + $0xb0] sm:$0xff] %v662
      %695 = vst [vmem:[#allocation2 + $0xb8] sm:$0xff] %v663
      %696 = vst [vmem:[#allocation2 + $0xc0] sm:$0xff] %v664
      %697 = vst [vmem:[#allocation2 + $0xc8] sm:$0xff] %v665
      %698 = vst [vmem:[#allocation2 + $0xd0] sm:$0xff] %v666
      %699 = vst [vmem:[#allocation2 + $0xd8] sm:$0xff] %v667
      %700 = vst [vmem:[#allocation2 + $0xe0] sm:$0xff] %v668
      %701 = vst [vmem:[#allocation2 + $0xe8] sm:$0xff] %v669
      %702 = vst [vmem:[#allocation2 + $0xf0] sm:$0xff] %v670
      %703 = vst [vmem:[#allocation2 + $0xf8] sm:$0xff] %v671
      // Predicated region
      $region33: #{model_forward.42} parent=27 // pred_check
        %p704 = pneg %p219
      $region34: #{model_forward.42} parent=27 // pred_check_branch
        %706 = sbr.rel (%p704) target = $region36
      $region35: #{model_forward.42} parent=27 // pred_region
        %v707 = vld [vmem:[#allocation2] sm:$0xff]
        %v708 = vld [vmem:[#allocation2 + $0x8] sm:$0xff]
        %v709 = vld [vmem:[#allocation2 + $0x10] sm:$0xff]
        %v710 = vld [vmem:[#allocation2 + $0x18] sm:$0xff]
        %v711 = vld [vmem:[#allocation2 + $0x20] sm:$0xff]
        %v712 = vld [vmem:[#allocation2 + $0x28] sm:$0xff]
        %v713 = vld [vmem:[#allocation2 + $0x30] sm:$0xff]
        %v714 = vld [vmem:[#allocation2 + $0x38] sm:$0xff]
        %v715 = vld [vmem:[#allocation2 + $0x40] sm:$0xff]
        %v716 = vld [vmem:[#allocation2 + $0x48] sm:$0xff]
        %v717 = vld [vmem:[#allocation2 + $0x50] sm:$0xff]
        %v718 = vld [vmem:[#allocation2 + $0x58] sm:$0xff]
        %v719 = vld [vmem:[#allocation2 + $0x60] sm:$0xff]
        %v720 = vld [vmem:[#allocation2 + $0x68] sm:$0xff]
        %v721 = vld [vmem:[#allocation2 + $0x70] sm:$0xff]
        %v722 = vld [vmem:[#allocation2 + $0x78] sm:$0xff]
        %v723 = vld [vmem:[#allocation2 + $0x80] sm:$0xff]
        %v724 = vld [vmem:[#allocation2 + $0x88] sm:$0xff]
        %v725 = vld [vmem:[#allocation2 + $0x90] sm:$0xff]
        %v726 = vld [vmem:[#allocation2 + $0x98] sm:$0xff]
        %v727 = vld [vmem:[#allocation2 + $0xa0] sm:$0xff]
        %v728 = vld [vmem:[#allocation2 + $0xa8] sm:$0xff]
        %v729 = vld [vmem:[#allocation2 + $0xb0] sm:$0xff]
        %v730 = vld [vmem:[#allocation2 + $0xb8] sm:$0xff]
        %v731 = vld [vmem:[#allocation2 + $0xc0] sm:$0xff]
        %v732 = vld [vmem:[#allocation2 + $0xc8] sm:$0xff]
        %v733 = vld [vmem:[#allocation2 + $0xd0] sm:$0xff]
        %v734 = vld [vmem:[#allocation2 + $0xd8] sm:$0xff]
        %v735 = vld [vmem:[#allocation2 + $0xe0] sm:$0xff]
        %v736 = vld [vmem:[#allocation2 + $0xe8] sm:$0xff]
        %v737 = vld [vmem:[#allocation2 + $0xf0] sm:$0xff]
        %v738 = vld [vmem:[#allocation2 + $0xf8] sm:$0xff]
        %739 = vst [vmem:[%s216] sm:$0xff] %v707
        %740 = vst [vmem:[%s216 + $0x8] sm:$0xff] %v708
        %741 = vst [vmem:[%s216 + $0x10] sm:$0xff] %v709
        %742 = vst [vmem:[%s216 + $0x18] sm:$0xff] %v710
        %743 = vst [vmem:[%s216 + $0x20] sm:$0xff] %v711
        %744 = vst [vmem:[%s216 + $0x28] sm:$0xff] %v712
        %745 = vst [vmem:[%s216 + $0x30] sm:$0xff] %v713
        %746 = vst [vmem:[%s216 + $0x38] sm:$0xff] %v714
        %747 = vst [vmem:[%s216 + $0x40] sm:$0xff] %v715
        %748 = vst [vmem:[%s216 + $0x48] sm:$0xff] %v716
        %749 = vst [vmem:[%s216 + $0x50] sm:$0xff] %v717
        %750 = vst [vmem:[%s216 + $0x58] sm:$0xff] %v718
        %751 = vst [vmem:[%s216 + $0x60] sm:$0xff] %v719
        %752 = vst [vmem:[%s216 + $0x68] sm:$0xff] %v720
        %753 = vst [vmem:[%s216 + $0x70] sm:$0xff] %v721
        %754 = vst [vmem:[%s216 + $0x78] sm:$0xff] %v722
        %755 = vst [vmem:[%s216 + $0x80] sm:$0xff] %v723
        %756 = vst [vmem:[%s216 + $0x88] sm:$0xff] %v724
        %757 = vst [vmem:[%s216 + $0x90] sm:$0xff] %v725
        %758 = vst [vmem:[%s216 + $0x98] sm:$0xff] %v726
        %759 = vst [vmem:[%s216 + $0xa0] sm:$0xff] %v727
        %760 = vst [vmem:[%s216 + $0xa8] sm:$0xff] %v728
        %761 = vst [vmem:[%s216 + $0xb0] sm:$0xff] %v729
        %762 = vst [vmem:[%s216 + $0xb8] sm:$0xff] %v730
        %763 = vst [vmem:[%s216 + $0xc0] sm:$0xff] %v731
        %764 = vst [vmem:[%s216 + $0xc8] sm:$0xff] %v732
        %765 = vst [vmem:[%s216 + $0xd0] sm:$0xff] %v733
        %766 = vst [vmem:[%s216 + $0xd8] sm:$0xff] %v734
        %767 = vst [vmem:[%s216 + $0xe0] sm:$0xff] %v735
        %768 = vst [vmem:[%s216 + $0xe8] sm:$0xff] %v736
        %769 = vst [vmem:[%s216 + $0xf0] sm:$0xff] %v737
        %770 = vst [vmem:[%s216 + $0xf8] sm:$0xff] %v738
      $region36: #{model_forward.42} parent=27 // pred_fallthru
        _
      %s771 = smul.u32 32, %s18
      %p772 = scmp.lt.s32.totalorder %s771, 255
      %s773 = scalar_select %p772, %s771, 255
      %p774 = scmp.lt.s32.totalorder %s19, 0
      %s775 = scalar_select %p774, %s19, 0
      %s776 = sadd.s32 %s775, %s773
      %s777 = smul.addr %s776, 8
      %s778 = scalar_lea.vmem %s2, %s777
      // Predicated region
      $region37: #{model_forward.42} parent=27 // pred_check
        %p779 = pneg %p108
      $region38: #{model_forward.42} parent=27 // pred_check_branch
        %781 = sbr.rel (%p779) target = $region40
      $region39: #{model_forward.42} parent=27 // pred_region
        %s782 = smul.u32 32, %s18
      $region40: #{model_forward.42} parent=27 // pred_fallthru
        _
    $region28: #{model_forward.42} parent=5 // pred_fallthru
      _
    %p783 = scmp.le.s32.totalorder 2, %s8
    // Predicated region
    $region41: #{model_forward.42} parent=5 // pred_check
      %p784 = pneg %p783
    $region42: #{model_forward.42} parent=5 // pred_check_branch
      %786 = sbr.rel (%p784) target = $region44
    $region43: #{model_forward.42} parent=5 // pred_region
      %s787 = ssub.s32 %s8, 2
      // Predicated region
      $region45: #{model_forward.42} parent=43 // pred_check
        %p788 = pneg %p114
      $region46: #{model_forward.42} parent=43 // pred_check_branch
        %790 = sbr.rel (%p788) target = $region48
      $region47: #{model_forward.42} parent=43 // pred_region
        %s791 = smul.u32 32, %s21
        %p792 = scmp.lt.s32.totalorder %s791, 255
        %s793 = scalar_select %p792, %s791, 255
        %p794 = scmp.lt.s32.totalorder %s22, 0
        %s795 = scalar_select %p794, %s22, 0
        %s796 = sadd.s32 %s795, %s793
        %s797 = smul.addr %s796, 8
        %s798 = scalar_lea.vmem %s2, %s797
      $region48: #{model_forward.42} parent=43 // pred_fallthru
        _
    $region44: #{model_forward.42} parent=5 // pred_fallthru
      _
  $region6: #{model_forward.42} parent=0 // loop_footer
    %s12 = sadd.s32 1, %s8
  $region7: #{model_forward.42} parent=0 // loop_footer_branch
    %7 = sbr.rel target = $region3
  $region8: #{model_forward.42} parent=0 // loop_exit
    _

// kernel: model_forward.43
$region0: #{model_forward.43}
  #allocation0 [shape = 'u32[]', space=smem, size = 0x4, offset = 0x4, fixed_abs, tag = 'smem constant byte address 0x4 - core index']
  #allocation1 [shape = 'u32[144,128]{1,0:T(1,128)}', space=vmem, size = 0x12000, scoped, tag = 'internal scratch']
  #allocation2 [shape = 'f32[256,128]{1,0:T(8,128)}', space=vmem, size = 0x20000, scoped, tag = 'scratch operand']
  %s0 = inlined_call_operand.vmem [shape: bf16[512,1152], index: 0, kind: input, shape index: {}]
  %s1 = inlined_call_operand.vmem [shape: bf16[1152,128], index: 1, kind: input, shape index: {}]
  %s2 = inlined_call_operand.vmem [shape: f32[512,128], index: 2, kind: output, shape index: {}]
  %s3 = sld [smem:[#allocation0]]
  $region90: #{model_forward.43} parent=0
    _
  %s5 = ssub.s32 1, %s3
  %s6 = scalar_select 0, %s5, %s3
  $region1: #{model_forward.43} parent=0
    #allocation3 [shape = 'u8[131072]{0}', space=vmem, size = 0x20000, scoped, tag = 'input window, operand 0']
    loop: start=0, step=1, limit=20
    $region2: #{model_forward.43} parent=1 // loop_pre_header
      _
    $region3: #{model_forward.43} parent=1 // loop_header
      %s8 = sphi 0, %s12
      %p9 = scmp.ge.s32.totalorder %s8, 20
      %s15 = sphi 0, %s34
      %s16 = sphi 0, %s30
      %s17 = sphi 0, %s26
      %s18 = sphi 0, %s15
      %s19 = sphi 0, %s16
      %s20 = sphi 0, %s17
      %s21 = sphi 0, %s18
      %s22 = sphi 0, %s19
      %s23 = sphi 0, %s20
      %s39 = sphi 0, %s41
      %s42 = sphi 0, %s39
      %s43 = sphi 0, %s42
      %s59 = sphi 0, %s43
      %s67 = sphi 0, %s69
      %s70 = sphi 0, %s67
      %s71 = sphi 0, %s70
      %s87 = sphi 0, %s71
      %s95 = sphi 0, %s97
      %s98 = sphi 0, %s95
      %s99 = sphi 0, %s98
      %s115 = sphi 0, %s99
    $region4: #{model_forward.43} parent=1 // loop_header_branch
      %11 = sbr.rel (%p9) target = $region8
    $region5: #{model_forward.43} parent=1 // loop_body
      %s13 = ssub.s32 %s8, 1
      %s14 = ssub.s32 %s8, 2
      %s24 = sadd.s32 1, %s17
      %p25 = scmp.ge.s32.totalorder %s24, 9
      %s26 = scalar_select %p25, 0, %s24
      %s27 = sadd.s32 1, %s16
      %s28 = scalar_select %p25, %s27, %s16
      %p29 = scmp.ge.s32.totalorder %s28, 1
      %s30 = scalar_select %p29, 0, %s28
      %s31 = sadd.s32 1, %s15
      %s32 = scalar_select %p29, %s31, %s15
      %p33 = scmp.ge.s32.totalorder %s32, 2
      %s34 = scalar_select %p33, 0, %s32
      %s35 = ssub.s32 %s15, %s34
      %s36 = ssub.s32 %s17, %s26
      %s37 = sor.u32 %s35, %s36
      %p38 = scmp.eq.s32.totalorder %s37, 0
      %s40 = sadd.s32 %s39, 1
      %s41 = scalar_select %p38, %s39, %s40
      %p44 = pneg %p38
      %p45 = scmp.eq.s32.totalorder %s8, 17
      %p46 = por %p44, %p45
      %p47 = scmp.ne.s32.totalorder %s39, %s42
      %p48 = scmp.eq.s32.totalorder %s8, 0
      %p49 = por %p47, %p48
      %p50 = scmp.ne.s32.totalorder %s39, %s42
      %p51 = scmp.eq.s32.totalorder %s13, 17
      %p52 = por %p50, %p51
      %p53 = scmp.ne.s32.totalorder %s42, %s43
      %p54 = scmp.eq.s32.totalorder %s13, 0
      %p55 = por %p53, %p54
      %p56 = scmp.ne.s32.totalorder %s42, %s43
      %p57 = scmp.eq.s32.totalorder %s14, 17
      %p58 = por %p56, %p57
      %p60 = scmp.ne.s32.totalorder %s43, %s59
      %p61 = scmp.eq.s32.totalorder %s14, 0
      %p62 = por %p60, %p61
      %s63 = ssub.s32 %s17, %s26
      %s64 = ssub.s32 %s16, %s30
      %s65 = sor.u32 %s63, %s64
      %p66 = scmp.eq.s32.totalorder %s65, 0
      %s68 = sadd.s32 %s67, 1
      %s69 = scalar_select %p66, %s67, %s68
      %p72 = pneg %p66
      %p73 = scmp.eq.s32.totalorder %s8, 17
      %p74 = por %p72, %p73
      %p75 = scmp.ne.s32.totalorder %s67, %s70
      %p76 = scmp.eq.s32.totalorder %s8, 0
      %p77 = por %p75, %p76
      %p78 = scmp.ne.s32.totalorder %s67, %s70
      %p79 = scmp.eq.s32.totalorder %s13, 17
      %p80 = por %p78, %p79
      %p81 = scmp.ne.s32.totalorder %s70, %s71
      %p82 = scmp.eq.s32.totalorder %s13, 0
      %p83 = por %p81, %p82
      %p84 = scmp.ne.s32.totalorder %s70, %s71
      %p85 = scmp.eq.s32.totalorder %s14, 17
      %p86 = por %p84, %p85
      %p88 = scmp.ne.s32.totalorder %s71, %s87
      %p89 = scmp.eq.s32.totalorder %s14, 0
      %p90 = por %p88, %p89
      %s91 = ssub.s32 %s15, %s34
      %s92 = ssub.s32 %s16, %s30
      %s93 = sor.u32 %s91, %s92
      %p94 = scmp.eq.s32.totalorder %s93, 0
      %s96 = sadd.s32 %s95, 1
      %s97 = scalar_select %p94, %s95, %s96
      %p100 = pneg %p94
      %p101 = scmp.eq.s32.totalorder %s8, 17
      %p102 = por %p100, %p101
      %p103 = scmp.ne.s32.totalorder %s95, %s98
      %p104 = scmp.eq.s32.totalorder %s8, 0
      %p105 = por %p103, %p104
      %p106 = scmp.ne.s32.totalorder %s95, %s98
      %p107 = scmp.eq.s32.totalorder %s13, 17
      %p108 = por %p106, %p107
      %p109 = scmp.ne.s32.totalorder %s98, %s99
      %p110 = scmp.eq.s32.totalorder %s13, 0
      %p111 = por %p109, %p110
      %p112 = scmp.ne.s32.totalorder %s98, %s99
      %p113 = scmp.eq.s32.totalorder %s14, 17
      %p114 = por %p112, %p113
      %p116 = scmp.ne.s32.totalorder %s99, %s115
      %p117 = scmp.eq.s32.totalorder %s14, 0
      %p118 = por %p116, %p117
      %p119 = scmp.le.s32.totalorder 1, %s8
      %p120 = scmp.lt.s32.totalorder %s8, 19
      %p121 = pnand %p119, %p120
      %p122 = pneg %p121
      // Predicated region
      $region9: #{model_forward.43} parent=5 // pred_check
        _
      $region10: #{model_forward.43} parent=5 // pred_check_branch
        %124 = sbr.rel (%p121) target = $region12
      $region11: #{model_forward.43} parent=5 // pred_region
        %s125 = ssub.s32 %s8, 1
      $region12: #{model_forward.43} parent=5 // pred_fallthru
        _
      %p126 = scmp.lt.s32.totalorder %s8, 18
      // Predicated region
      $region13: #{model_forward.43} parent=5 // pred_check
        %p127 = pneg %p126
      $region14: #{model_forward.43} parent=5 // pred_check_branch
        %129 = sbr.rel (%p127) target = $region16
      $region15: #{model_forward.43} parent=5 // pred_region
        // Predicated region
        $region17: #{model_forward.43} parent=15 // pred_check
          %p130 = pneg %p49
        $region18: #{model_forward.43} parent=15 // pred_check_branch
          %132 = sbr.rel (%p130) target = $region20
        $region19: #{model_forward.43} parent=15 // pred_region
          %s133 = sand.u32 %s39, 1
          %s134 = sand.u32 %s39, 1
          %s135 = smul.addr %s134, 128
          %s136 = scalar_lea.vmem [#allocation3], %s135
          %s137 = smul.u32 32, %s15
          %s138 = smul.addr %s137, 9
          %s139 = sadd.s32 %s17, %s138
          %s140 = smul.addr %s139, 4
          %s141 = scalar_lea.vmem %s0, %s140
          // Predicated region
          $region21: #{model_forward.43} parent=19 // pred_check
            _
          $region22: #{model_forward.43} parent=19 // pred_check_branch
            %143 = sbr.rel (0) target = $region24
          $region23: #{model_forward.43} parent=19 // pred_region
            // Predicated region
            $region25: #{model_forward.43} parent=23 // pred_check
              _
            $region26: #{model_forward.43} parent=23 // pred_check_branch
              %145 = sbr.rel target = $region28
            $region27: #{model_forward.43} parent=23 // pred_region
              // Predicated region
              $region40: #{model_forward.43} parent=27 // pred_check
                _
              $region41: #{model_forward.43} parent=27 // pred_check_branch
                %223 = sbr.rel (0) target = $region43
              $region42: #{model_forward.43} parent=27 // pred_region
                loop: start=0, step=1, limit=1
                $region44: #{model_forward.43} parent=42 // loop_pre_header
                  _
                $region45: #{model_forward.43} parent=42 // loop_header
                  %s225 = sphi 0, %s229
                  %p226 = scmp.ge.s32.totalorder %s225, 1
                  %s230 = sphi %s141, %s141
                  %s231 = sphi %s136, %s136
                $region46: #{model_forward.43} parent=42 // loop_header_branch
                  %228 = sbr.rel (%p226) target = $region50
                $region47: #{model_forward.43} parent=42 // loop_body
                  _
                $region48: #{model_forward.43} parent=42 // loop_footer
                  %s229 = sadd.s32 1, %s225
                $region49: #{model_forward.43} parent=42 // loop_footer_branch
                  %224 = sbr.rel target = $region45
                $region50: #{model_forward.43} parent=42 // loop_exit
                  _
                %s233 = ssub.s32 16, 1
                loop: start=0, step=1, limit=1
                $region51: #{model_forward.43} parent=42 // loop_pre_header
                  _
                $region52: #{model_forward.43} parent=42 // loop_header
                  %s235 = sphi 0, %s239
                  %p236 = scmp.ge.s32.totalorder %s235, 1
                  %s240 = sphi %s141, %s141
                  %s241 = sphi %s136, %s136
                $region53: #{model_forward.43} parent=42 // loop_header_branch
                  %238 = sbr.rel (%p236) target = $region57
                $region54: #{model_forward.43} parent=42 // loop_body
                  %v242 = vld [vmem:[%s240] sm:%s233]
                  %243 = vst [vmem:[%s241] sm:%s233] %v242
                  %v244 = vld [vmem:[%s240 + $0x24] sm:%s233]
                  %245 = vst [vmem:[%s241 + $0x4] sm:%s233] %v244
                  %v246 = vld [vmem:[%s240 + $0x48] sm:%s233]
                  %247 = vst [vmem:[%s241 + $0x8] sm:%s233] %v246
                  %v248 = vld [vmem:[%s240 + $0x6c] sm:%s233]
                  %249 = vst [vmem:[%s241 + $0xc] sm:%s233] %v248
                  %v250 = vld [vmem:[%s240 + $0x90] sm:%s233]
                  %251 = vst [vmem:[%s241 + $0x10] sm:%s233] %v250
                  %v252 = vld [vmem:[%s240 + $0xb4] sm:%s233]
                  %253 = vst [vmem:[%s241 + $0x14] sm:%s233] %v252
                  %v254 = vld [vmem:[%s240 + $0xd8] sm:%s233]
                  %255 = vst [vmem:[%s241 + $0x18] sm:%s233] %v254
                  %v256 = vld [vmem:[%s240 + $0xfc] sm:%s233]
                  %257 = vst [vmem:[%s241 + $0x1c] sm:%s233] %v256
                  %v258 = vld [vmem:[%s240 + $0x120] sm:%s233]
                  %259 = vst [vmem:[%s241 + $0x20] sm:%s233] %v258
                  %v260 = vld [vmem:[%s240 + $0x144] sm:%s233]
                  %261 = vst [vmem:[%s241 + $0x24] sm:%s233] %v260
                  %v262 = vld [vmem:[%s240 + $0x168] sm:%s233]
                  %263 = vst [vmem:[%s241 + $0x28] sm:%s233] %v262
                  %v264 = vld [vmem:[%s240 + $0x18c] sm:%s233]
                  %265 = vst [vmem:[%s241 + $0x2c] sm:%s233] %v264
                  %v266 = vld [vmem:[%s240 + $0x1b0] sm:%s233]
                  %267 = vst [vmem:[%s241 + $0x30] sm:%s233] %v266
                  %v268 = vld [vmem:[%s240 + $0x1d4] sm:%s233]
                  %269 = vst [vmem:[%s241 + $0x34] sm:%s233] %v268
                  %v270 = vld [vmem:[%s240 + $0x1f8] sm:%s233]
                  %271 = vst [vmem:[%s241 + $0x38] sm:%s233] %v270
                  %v272 = vld [vmem:[%s240 + $0x21c] sm:%s233]
                  %273 = vst [vmem:[%s241 + $0x3c] sm:%s233] %v272
                  %v274 = vld [vmem:[%s240 + $0x240] sm:%s233]
                  %275 = vst [vmem:[%s241 + $0x40] sm:%s233] %v274
                  %v276 = vld [vmem:[%s240 + $0x264] sm:%s233]
                  %277 = vst [vmem:[%s241 + $0x44] sm:%s233] %v276
                  %v278 = vld [vmem:[%s240 + $0x288] sm:%s233]
                  %279 = vst [vmem:[%s241 + $0x48] sm:%s233] %v278
                  %v280 = vld [vmem:[%s240 + $0x2ac] sm:%s233]
                  %281 = vst [vmem:[%s241 + $0x4c] sm:%s233] %v280
                  %v282 = vld [vmem:[%s240 + $0x2d0] sm:%s233]
                  %283 = vst [vmem:[%s241 + $0x50] sm:%s233] %v282
                  %v284 = vld [vmem:[%s240 + $0x2f4] sm:%s233]
                  %285 = vst [vmem:[%s241 + $0x54] sm:%s233] %v284
                  %v286 = vld [vmem:[%s240 + $0x318] sm:%s233]
                  %287 = vst [vmem:[%s241 + $0x58] sm:%s233] %v286
                  %v288 = vld [vmem:[%s240 + $0x33c] sm:%s233]
                  %289 = vst [vmem:[%s241 + $0x5c] sm:%s233] %v288
                  %v290 = vld [vmem:[%s240 + $0x360] sm:%s233]
                  %291 = vst [vmem:[%s241 + $0x60] sm:%s233] %v290
                  %v292 = vld [vmem:[%s240 + $0x384] sm:%s233]
                  %293 = vst [vmem:[%s241 + $0x64] sm:%s233] %v292
                  %v294 = vld [vmem:[%s240 + $0x3a8] sm:%s233]
                  %295 = vst [vmem:[%s241 + $0x68] sm:%s233] %v294
                  %v296 = vld [vmem:[%s240 + $0x3cc] sm:%s233]
                  %297 = vst [vmem:[%s241 + $0x6c] sm:%s233] %v296
                  %v298 = vld [vmem:[%s240 + $0x3f0] sm:%s233]
                  %299 = vst [vmem:[%s241 + $0x70] sm:%s233] %v298
                  %v300 = vld [vmem:[%s240 + $0x414] sm:%s233]
                  %301 = vst [vmem:[%s241 + $0x74] sm:%s233] %v300
                  %v302 = vld [vmem:[%s240 + $0x438] sm:%s233]
                  %303 = vst [vmem:[%s241 + $0x78] sm:%s233] %v302
                  %v304 = vld [vmem:[%s240 + $0x45c] sm:%s233]
                  %305 = vst [vmem:[%s241 + $0x7c] sm:%s233] %v304
                $region55: #{model_forward.43} parent=42 // loop_footer
                  %s239 = sadd.s32 1, %s235
                $region56: #{model_forward.43} parent=42 // loop_footer_branch
                  %234 = sbr.rel target = $region52
                $region57: #{model_forward.43} parent=42 // loop_exit
                  _
              $region43: #{model_forward.43} parent=27 // pred_fallthru
                _
            $region28: #{model_forward.43} parent=23 // pred_fallthru
              _
            // Predicated region
            $region29: #{model_forward.43} parent=23 // pred_check
              _
            $region30: #{model_forward.43} parent=23 // pred_check_branch
              %147 = sbr.rel (0) target = $region32
            $region31: #{model_forward.43} parent=23 // pred_region
              %s149 = ssub.s32 16, 1
              loop: start=0, step=1, limit=1
              $region33: #{model_forward.43} parent=31 // loop_pre_header
                _
              $region34: #{model_forward.43} parent=31 // loop_header
                %s151 = sphi 0, %s155
                %p152 = scmp.ge.s32.totalorder %s151, 1
                %s156 = sphi %s141, %s141
                %s157 = sphi %s136, %s136
              $region35: #{model_forward.43} parent=31 // loop_header_branch
                %154 = sbr.rel (%p152) target = $region39
              $region36: #{model_forward.43} parent=31 // loop_body
                %v158 = vld [vmem:[%s156] sm:%s149]
                %159 = vst [vmem:[%s157] sm:%s149] %v158
                %v160 = vld [vmem:[%s156 + $0x24] sm:%s149]
                %161 = vst [vmem:[%s157 + $0x4] sm:%s149] %v160
                %v162 = vld [vmem:[%s156 + $0x48] sm:%s149]
                %163 = vst [vmem:[%s157 + $0x8] sm:%s149] %v162
                %v164 = vld [vmem:[%s156 + $0x6c] sm:%s149]
                %165 = vst [vmem:[%s157 + $0xc] sm:%s149] %v164
                %v166 = vld [vmem:[%s156 + $0x90] sm:%s149]
                %167 = vst [vmem:[%s157 + $0x10] sm:%s149] %v166
                %v168 = vld [vmem:[%s156 + $0xb4] sm:%s149]
                %169 = vst [vmem:[%s157 + $0x14] sm:%s149] %v168
                %v170 = vld [vmem:[%s156 + $0xd8] sm:%s149]
                %171 = vst [vmem:[%s157 + $0x18] sm:%s149] %v170
                %v172 = vld [vmem:[%s156 + $0xfc] sm:%s149]
                %173 = vst [vmem:[%s157 + $0x1c] sm:%s149] %v172
                %v174 = vld [vmem:[%s156 + $0x120] sm:%s149]
                %175 = vst [vmem:[%s157 + $0x20] sm:%s149] %v174
                %v176 = vld [vmem:[%s156 + $0x144] sm:%s149]
                %177 = vst [vmem:[%s157 + $0x24] sm:%s149] %v176
                %v178 = vld [vmem:[%s156 + $0x168] sm:%s149]
                %179 = vst [vmem:[%s157 + $0x28] sm:%s149] %v178
                %v180 = vld [vmem:[%s156 + $0x18c] sm:%s149]
                %181 = vst [vmem:[%s157 + $0x2c] sm:%s149] %v180
                %v182 = vld [vmem:[%s156 + $0x1b0] sm:%s149]
                %183 = vst [vmem:[%s157 + $0x30] sm:%s149] %v182
                %v184 = vld [vmem:[%s156 + $0x1d4] sm:%s149]
                %185 = vst [vmem:[%s157 + $0x34] sm:%s149] %v184
                %v186 = vld [vmem:[%s156 + $0x1f8] sm:%s149]
                %187 = vst [vmem:[%s157 + $0x38] sm:%s149] %v186
                %v188 = vld [vmem:[%s156 + $0x21c] sm:%s149]
                %189 = vst [vmem:[%s157 + $0x3c] sm:%s149] %v188
                %v190 = vld [vmem:[%s156 + $0x240] sm:%s149]
                %191 = vst [vmem:[%s157 + $0x40] sm:%s149] %v190
                %v192 = vld [vmem:[%s156 + $0x264] sm:%s149]
                %193 = vst [vmem:[%s157 + $0x44] sm:%s149] %v192
                %v194 = vld [vmem:[%s156 + $0x288] sm:%s149]
                %195 = vst [vmem:[%s157 + $0x48] sm:%s149] %v194
                %v196 = vld [vmem:[%s156 + $0x2ac] sm:%s149]
                %197 = vst [vmem:[%s157 + $0x4c] sm:%s149] %v196
                %v198 = vld [vmem:[%s156 + $0x2d0] sm:%s149]
                %199 = vst [vmem:[%s157 + $0x50] sm:%s149] %v198
                %v200 = vld [vmem:[%s156 + $0x2f4] sm:%s149]
                %201 = vst [vmem:[%s157 + $0x54] sm:%s149] %v200
                %v202 = vld [vmem:[%s156 + $0x318] sm:%s149]
                %203 = vst [vmem:[%s157 + $0x58] sm:%s149] %v202
                %v204 = vld [vmem:[%s156 + $0x33c] sm:%s149]
                %205 = vst [vmem:[%s157 + $0x5c] sm:%s149] %v204
                %v206 = vld [vmem:[%s156 + $0x360] sm:%s149]
                %207 = vst [vmem:[%s157 + $0x60] sm:%s149] %v206
                %v208 = vld [vmem:[%s156 + $0x384] sm:%s149]
                %209 = vst [vmem:[%s157 + $0x64] sm:%s149] %v208
                %v210 = vld [vmem:[%s156 + $0x3a8] sm:%s149]
                %211 = vst [vmem:[%s157 + $0x68] sm:%s149] %v210
                %v212 = vld [vmem:[%s156 + $0x3cc] sm:%s149]
                %213 = vst [vmem:[%s157 + $0x6c] sm:%s149] %v212
                %v214 = vld [vmem:[%s156 + $0x3f0] sm:%s149]
                %215 = vst [vmem:[%s157 + $0x70] sm:%s149] %v214
                %v216 = vld [vmem:[%s156 + $0x414] sm:%s149]
                %217 = vst [vmem:[%s157 + $0x74] sm:%s149] %v216
                %v218 = vld [vmem:[%s156 + $0x438] sm:%s149]
                %219 = vst [vmem:[%s157 + $0x78] sm:%s149] %v218
                %v220 = vld [vmem:[%s156 + $0x45c] sm:%s149]
                %221 = vst [vmem:[%s157 + $0x7c] sm:%s149] %v220
              $region37: #{model_forward.43} parent=31 // loop_footer
                %s155 = sadd.s32 1, %s151
              $region38: #{model_forward.43} parent=31 // loop_footer_branch
                %150 = sbr.rel target = $region34
              $region39: #{model_forward.43} parent=31 // loop_exit
                _
            $region32: #{model_forward.43} parent=23 // pred_fallthru
              _
          $region24: #{model_forward.43} parent=19 // pred_fallthru
            _
          %306 = vnop
        $region20: #{model_forward.43} parent=15 // pred_fallthru
          _
        // Predicated region
        $region58: #{model_forward.43} parent=15 // pred_check
          %p307 = pneg %p77
        $region59: #{model_forward.43} parent=15 // pred_check_branch
          %309 = sbr.rel (%p307) target = $region61
        $region60: #{model_forward.43} parent=15 // pred_region
          %s310 = smul.u32 16, %s17
          %p311 = scmp.lt.s32.totalorder %s310, 143
          %s312 = scalar_select %p311, %s310, 143
          %p313 = scmp.lt.s32.totalorder %s16, 0
          %s314 = scalar_select %p313, %s16, 0
          %s315 = sadd.s32 %s314, %s312
          %s316 = smul.addr %s315, 4
          %s317 = scalar_lea.vmem %s1, %s316
          %s318 = smul.u32 16, %s17
        $region61: #{model_forward.43} parent=15 // pred_fallthru
          _
      $region16: #{model_forward.43} parent=5 // pred_fallthru
        _
      %p319 = scmp.le.s32.totalorder 1, %s8
      %p320 = scmp.lt.s32.totalorder %s8, 19
      %p321 = pnand %p319, %p320
      %p322 = pneg %p321
      // Predicated region
      $region62: #{model_forward.43} parent=5 // pred_check
        _
      $region63: #{model_forward.43} parent=5 // pred_check_branch
        %324 = sbr.rel (%p321) target = $region65
      $region64: #{model_forward.43} parent=5 // pred_region
        %s325 = ssub.s32 %s8, 1
        %s326 = sand.u32 %s42, 1
        %s327 = sand.u32 %s42, 1
        %s328 = smul.addr %s327, 128
        %s329 = scalar_lea.vmem [#allocation3], %s328
        // Predicated region
        $region66: #{model_forward.43} parent=64 // pred_check
          %p330 = pneg %p55
        $region67: #{model_forward.43} parent=64 // pred_check_branch
          %332 = sbr.rel (%p330) target = $region69
        $region68: #{model_forward.43} parent=64 // pred_region
          _
        $region69: #{model_forward.43} parent=64 // pred_fallthru
          _
        %s333 = sand.u32 %s42, 1
        %s334 = sand.u32 %s42, 1
        %s335 = smul.addr %s334, 128
        %s336 = scalar_lea.vmem [#allocation3], %s335
        %p337 = pneg %p55
        %p338 = pneg %p52
        %s339 = smul.u32 16, %s20
        %p340 = scmp.lt.s32.totalorder %s339, 143
        %s341 = scalar_select %p340, %s339, 143
        %p342 = scmp.lt.s32.totalorder %s19, 0
        %s343 = scalar_select %p342, %s19, 0
        %s344 = sadd.s32 %s343, %s341
        %s345 = smul.addr %s344, 4
        %s346 = scalar_lea.vmem %s1, %s345
        %p347 = pneg %p83
        %p348 = pneg %p80
        %p349 = pneg %p111
        %p350 = pneg %p108
        %s351 = smul.u32 32, %s18
        %p352 = scmp.lt.s32.totalorder %s351, 63
        %s353 = scalar_select %p352, %s351, 63
        %p354 = scmp.lt.s32.totalorder %s19, 0
        %s355 = scalar_select %p354, %s19, 0
        %s356 = sadd.s32 %s355, %s353
        %s357 = smul.addr %s356, 8
        %s358 = scalar_lea.vmem %s2, %s357
        %s359 = smul.u32 32, %s18
        %s360 = smul.u32 16, %s20
        %p361 = scmp.lt.s32.totalorder %s360, 143
        %s362 = scalar_select %p361, %s360, 143
        %p363 = scmp.lt.s32.totalorder %s19, 0
        %s364 = scalar_select %p363, %s19, 0
        %s365 = sadd.s32 %s364, %s362
        %s366 = smul.addr %s365, 4
        %s367 = scalar_lea.vmem %s1, %s366
        %s368 = smul.u32 16, %s20
        %s369 = smul.u32 32, %s18
        %p370 = scmp.lt.s32.totalorder %s369, 63
        %s371 = scalar_select %p370, %s369, 63
        %p372 = scmp.lt.s32.totalorder %s19, 0
        %s373 = scalar_select %p372, %s19, 0
        %s374 = sadd.s32 %s373, %s371
        %s375 = smul.addr %s374, 8
        %s376 = scalar_lea.vmem %s2, %s375
        %s377 = smul.u32 32, %s18
        %p379 = scmp.eq.s32.totalorder %s20, 0
        // Predicated region
        $region70: #{model_forward.43} parent=64 // pred_check
          %p380 = pneg %p379
        $region71: #{model_forward.43} parent=64 // pred_check_branch
          %382 = sbr.rel (%p380) target = $region73
        $region72: #{model_forward.43} parent=64 // pred_region
          %383 = vst [vmem:[#allocation2] sm:$0xff] 0.0
          %384 = vst [vmem:[#allocation2 + $0x8] sm:$0xff] 0.0
          %385 = vst [vmem:[#allocation2 + $0x10] sm:$0xff] 0.0
          %386 = vst [vmem:[#allocation2 + $0x18] sm:$0xff] 0.0
          %387 = vst [vmem:[#allocation2 + $0x20] sm:$0xff] 0.0
          %388 = vst [vmem:[#allocation2 + $0x28] sm:$0xff] 0.0
          %389 = vst [vmem:[#allocation2 + $0x30] sm:$0xff] 0.0
          %390 = vst [vmem:[#allocation2 + $0x38] sm:$0xff] 0.0
          %391 = vst [vmem:[#allocation2 + $0x40] sm:$0xff] 0.0
          %392 = vst [vmem:[#allocation2 + $0x48] sm:$0xff] 0.0
          %393 = vst [vmem:[#allocation2 + $0x50] sm:$0xff] 0.0
          %394 = vst [vmem:[#allocation2 + $0x58] sm:$0xff] 0.0
          %395 = vst [vmem:[#allocation2 + $0x60] sm:$0xff] 0.0
          %396 = vst [vmem:[#allocation2 + $0x68] sm:$0xff] 0.0
          %397 = vst [vmem:[#allocation2 + $0x70] sm:$0xff] 0.0
          %398 = vst [vmem:[#allocation2 + $0x78] sm:$0xff] 0.0
          %399 = vst [vmem:[#allocation2 + $0x80] sm:$0xff] 0.0
          %400 = vst [vmem:[#allocation2 + $0x88] sm:$0xff] 0.0
          %401 = vst [vmem:[#allocation2 + $0x90] sm:$0xff] 0.0
          %402 = vst [vmem:[#allocation2 + $0x98] sm:$0xff] 0.0
          %403 = vst [vmem:[#allocation2 + $0xa0] sm:$0xff] 0.0
          %404 = vst [vmem:[#allocation2 + $0xa8] sm:$0xff] 0.0
          %405 = vst [vmem:[#allocation2 + $0xb0] sm:$0xff] 0.0
          %406 = vst [vmem:[#allocation2 + $0xb8] sm:$0xff] 0.0
          %407 = vst [vmem:[#allocation2 + $0xc0] sm:$0xff] 0.0
          %408 = vst [vmem:[#allocation2 + $0xc8] sm:$0xff] 0.0
          %409 = vst [vmem:[#allocation2 + $0xd0] sm:$0xff] 0.0
          %410 = vst [vmem:[#allocation2 + $0xd8] sm:$0xff] 0.0
          %411 = vst [vmem:[#allocation2 + $0xe0] sm:$0xff] 0.0
          %412 = vst [vmem:[#allocation2 + $0xe8] sm:$0xff] 0.0
          %413 = vst [vmem:[#allocation2 + $0xf0] sm:$0xff] 0.0
          %414 = vst [vmem:[#allocation2 + $0xf8] sm:$0xff] 0.0
        $region73: #{model_forward.43} parent=64 // pred_fallthru
          _
        %v415 = vld [vmem:[#allocation2] sm:$0xff]
        %v416 = vld [vmem:[#allocation2 + $0x8] sm:$0xff]
        %v417 = vld [vmem:[#allocation2 + $0x10] sm:$0xff]
        %v418 = vld [vmem:[#allocation2 + $0x18] sm:$0xff]
        %v419 = vld [vmem:[#allocation2 + $0x20] sm:$0xff]
        %v420 = vld [vmem:[#allocation2 + $0x28] sm:$0xff]
        %v421 = vld [vmem:[#allocation2 + $0x30] sm:$0xff]
        %v422 = vld [vmem:[#allocation2 + $0x38] sm:$0xff]
        %v423 = vld [vmem:[#allocation2 + $0x40] sm:$0xff]
        %v424 = vld [vmem:[#allocation2 + $0x48] sm:$0xff]
        %v425 = vld [vmem:[#allocation2 + $0x50] sm:$0xff]
        %v426 = vld [vmem:[#allocation2 + $0x58] sm:$0xff]
        %v427 = vld [vmem:[#allocation2 + $0x60] sm:$0xff]
        %v428 = vld [vmem:[#allocation2 + $0x68] sm:$0xff]
        %v429 = vld [vmem:[#allocation2 + $0x70] sm:$0xff]
        %v430 = vld [vmem:[#allocation2 + $0x78] sm:$0xff]
        %v431 = vld [vmem:[#allocation2 + $0x80] sm:$0xff]
        %v432 = vld [vmem:[#allocation2 + $0x88] sm:$0xff]
        %v433 = vld [vmem:[#allocation2 + $0x90] sm:$0xff]
        %v434 = vld [vmem:[#allocation2 + $0x98] sm:$0xff]
        %v435 = vld [vmem:[#allocation2 + $0xa0] sm:$0xff]
        %v436 = vld [vmem:[#allocation2 + $0xa8] sm:$0xff]
        %v437 = vld [vmem:[#allocation2 + $0xb0] sm:$0xff]
        %v438 = vld [vmem:[#allocation2 + $0xb8] sm:$0xff]
        %v439 = vld [vmem:[#allocation2 + $0xc0] sm:$0xff]
        %v440 = vld [vmem:[#allocation2 + $0xc8] sm:$0xff]
        %v441 = vld [vmem:[#allocation2 + $0xd0] sm:$0xff]
        %v442 = vld [vmem:[#allocation2 + $0xd8] sm:$0xff]
        %v443 = vld [vmem:[#allocation2 + $0xe0] sm:$0xff]
        %v444 = vld [vmem:[#allocation2 + $0xe8] sm:$0xff]
        %v445 = vld [vmem:[#allocation2 + $0xf0] sm:$0xff]
        %v446 = vld [vmem:[#allocation2 + $0xf8] sm:$0xff]
        %v447 = vld [vmem:[%s329] sm:$0xf]
        %v448 = vld [vmem:[%s329 + $0x4] sm:$0xf]
        %v449 = vld [vmem:[%s329 + $0x8] sm:$0xf]
        %v450 = vld [vmem:[%s329 + $0xc] sm:$0xf]
        %v451 = vld [vmem:[%s329 + $0x10] sm:$0xf]
        %v452 = vld [vmem:[%s329 + $0x14] sm:$0xf]
        %v453 = vld [vmem:[%s329 + $0x18] sm:$0xf]
        %v454 = vld [vmem:[%s329 + $0x1c] sm:$0xf]
        %v455 = vld [vmem:[%s329 + $0x20] sm:$0xf]
        %v456 = vld [vmem:[%s329 + $0x24] sm:$0xf]
        %v457 = vld [vmem:[%s329 + $0x28] sm:$0xf]
        %v458 = vld [vmem:[%s329 + $0x2c] sm:$0xf]
        %v459 = vld [vmem:[%s329 + $0x30] sm:$0xf]
        %v460 = vld [vmem:[%s329 + $0x34] sm:$0xf]
        %v461 = vld [vmem:[%s329 + $0x38] sm:$0xf]
        %v462 = vld [vmem:[%s329 + $0x3c] sm:$0xf]
        %v463 = vld [vmem:[%s329 + $0x40] sm:$0xf]
        %v464 = vld [vmem:[%s329 + $0x44] sm:$0xf]
        %v465 = vld [vmem:[%s329 + $0x48] sm:$0xf]
        %v466 = vld [vmem:[%s329 + $0x4c] sm:$0xf]
        %v467 = vld [vmem:[%s329 + $0x50] sm:$0xf]
        %v468 = vld [vmem:[%s329 + $0x54] sm:$0xf]
        %v469 = vld [vmem:[%s329 + $0x58] sm:$0xf]
        %v470 = vld [vmem:[%s329 + $0x5c] sm:$0xf]
        %v471 = vld [vmem:[%s329 + $0x60] sm:$0xf]
        %v472 = vld [vmem:[%s329 + $0x64] sm:$0xf]
        %v473 = vld [vmem:[%s329 + $0x68] sm:$0xf]
        %v474 = vld [vmem:[%s329 + $0x6c] sm:$0xf]
        %v475 = vld [vmem:[%s329 + $0x70] sm:$0xf]
        %v476 = vld [vmem:[%s329 + $0x74] sm:$0xf]
        %v477 = vld [vmem:[%s329 + $0x78] sm:$0xf]
        %v478 = vld [vmem:[%s329 + $0x7c] sm:$0xf]
        %v479 = vld [vmem:[%s367] sm:$0xf]
        %v480 = vld [vmem:[%s367 + $0x4] sm:$0xf]
        %v481 = vld [vmem:[%s367 + $0x8] sm:$0xf]
        %v482 = vld [vmem:[%s367 + $0xc] sm:$0xf]
        %v483 = vld [vmem:[%s367 + $0x10] sm:$0xf]
        %v484 = vld [vmem:[%s367 + $0x14] sm:$0xf]
        %v485 = vld [vmem:[%s367 + $0x18] sm:$0xf]
        %v486 = vld [vmem:[%s367 + $0x1c] sm:$0xf]
        %v487 = vld [vmem:[%s367 + $0x20] sm:$0xf]
        %v488 = vld [vmem:[%s367 + $0x24] sm:$0xf]
        %v489 = vld [vmem:[%s367 + $0x28] sm:$0xf]
        %v490 = vld [vmem:[%s367 + $0x2c] sm:$0xf]
        %v491 = vld [vmem:[%s367 + $0x30] sm:$0xf]
        %v492 = vld [vmem:[%s367 + $0x34] sm:$0xf]
        %v493 = vld [vmem:[%s367 + $0x38] sm:$0xf]
        %v494 = vld [vmem:[%s367 + $0x3c] sm:$0xf]
        %v527 = vunpack.c.l.b16 %v447
        %v528 = vunpack.c.l.b16 %v448
        %v529 = vunpack.c.l.b16 %v449
        %v530 = vunpack.c.l.b16 %v450
        %v531 = vunpack.c.l.b16 %v451
        %v532 = vunpack.c.l.b16 %v452
        %v533 = vunpack.c.l.b16 %v453
        %v534 = vunpack.c.l.b16 %v454
        %v535 = vunpack.c.l.b16 %v455
        %v536 = vunpack.c.l.b16 %v456
        %v537 = vunpack.c.l.b16 %v457
        %v538 = vunpack.c.l.b16 %v458
        %v539 = vunpack.c.l.b16 %v459
        %v540 = vunpack.c.l.b16 %v460
        %v541 = vunpack.c.l.b16 %v461
        %v542 = vunpack.c.l.b16 %v462
        %v543 = vunpack.c.l.b16 %v463
        %v544 = vunpack.c.l.b16 %v464
        %v545 = vunpack.c.l.b16 %v465
        %v546 = vunpack.c.l.b16 %v466
        %v547 = vunpack.c.l.b16 %v467
        %v548 = vunpack.c.l.b16 %v468
        %v549 = vunpack.c.l.b16 %v469
        %v550 = vunpack.c.l.b16 %v470
        %v551 = vunpack.c.l.b16 %v471
        %v552 = vunpack.c.l.b16 %v472
        %v553 = vunpack.c.l.b16 %v473
        %v554 = vunpack.c.l.b16 %v474
        %v555 = vunpack.c.l.b16 %v475
        %v556 = vunpack.c.l.b16 %v476
        %v557 = vunpack.c.l.b16 %v477
        %v558 = vunpack.c.l.b16 %v478
        %v559 = vpack.c.b16 %v528, %v527
        %v560 = vpack.c.b16 %v530, %v529
        %v561 = vpack.c.b16 %v532, %v531
        %v562 = vpack.c.b16 %v534, %v533
        %v563 = vpack.c.b16 %v536, %v535
        %v564 = vpack.c.b16 %v538, %v537
        %v565 = vpack.c.b16 %v540, %v539
        %v566 = vpack.c.b16 %v542, %v541
        %v567 = vpack.c.b16 %v544, %v543
        %v568 = vpack.c.b16 %v546, %v545
        %v569 = vpack.c.b16 %v548, %v547
        %v570 = vpack.c.b16 %v550, %v549
        %v571 = vpack.c.b16 %v552, %v551
        %v572 = vpack.c.b16 %v554, %v553
        %v573 = vpack.c.b16 %v556, %v555
        %v574 = vpack.c.b16 %v558, %v557
        %v607 = vunpack.c.l.b16 %v479
        %v608 = vunpack.c.l.b16 %v480
        %v609 = vunpack.c.l.b16 %v481
        %v610 = vunpack.c.l.b16 %v482
        %v611 = vunpack.c.l.b16 %v483
        %v612 = vunpack.c.l.b16 %v484
        %v613 = vunpack.c.l.b16 %v485
        %v614 = vunpack.c.l.b16 %v486
        %v615 = vunpack.c.l.b16 %v487
        %v616 = vunpack.c.l.b16 %v488
        %v617 = vunpack.c.l.b16 %v489
        %v618 = vunpack.c.l.b16 %v490
        %v619 = vunpack.c.l.b16 %v491
        %v620 = vunpack.c.l.b16 %v492
        %v621 = vunpack.c.l.b16 %v493
        %v622 = vunpack.c.l.b16 %v494
        %v623 = vpack.c.b16 %v608, %v607
        %v624 = vpack.c.b16 %v610, %v609
        %v625 = vpack.c.b16 %v612, %v611
        %v626 = vpack.c.b16 %v614, %v613
        %v627 = vpack.c.b16 %v616, %v615
        %v628 = vpack.c.b16 %v618, %v617
        %v629 = vpack.c.b16 %v620, %v619
        %v630 = vpack.c.b16 %v622, %v621
        %639 = vmatprep.subr.bf16.mxu0 0
        %640 = vmatpush1.bf16.msra.mxu0 %v630
        %641 = vmatprep.subr.bf16.mxu0 0
        %642 = vmatpush1.bf16.msra.mxu0 %v629
        %643 = vmatprep.subr.bf16.mxu0 0
        %644 = vmatpush1.bf16.msra.mxu0 %v628
        %645 = vmatprep.subr.bf16.mxu0 0
        %646 = vmatpush1.bf16.msra.mxu0 %v627
        %647 = vmatprep.subr.bf16.mxu0 0
        %648 = vmatpush1.bf16.msra.mxu0 %v626
        %649 = vmatprep.subr.bf16.mxu0 0
        %650 = vmatpush1.bf16.msra.mxu0 %v625
        %651 = vmatprep.subr.bf16.mxu0 0
        %652 = vmatpush1.bf16.msra.mxu0 %v624
        %653 = vmatprep.subr.bf16.mxu0 0
        %654 = vmatpush1.bf16.msra.mxu0 %v623
        %655 = vmatprep.subr.bf16.mxu0 0
        %656 = vmatpush2.bf16.msra.mxu0 0
        %657 = vmatprep.subr.bf16.mxu0 0
        %658 = vmatpush2.bf16.msra.mxu0 0
        %659 = vmatprep.subr.bf16.mxu0 0
        %660 = vmatpush2.bf16.msra.mxu0 0
        %661 = vmatprep.subr.bf16.mxu0 0
        %662 = vmatpush2.bf16.msra.mxu0 0
        %663 = vmatprep.subr.bf16.mxu0 0
        %664 = vmatpush2.bf16.msra.mxu0 0
        %665 = vmatprep.subr.bf16.mxu0 0
        %666 = vmatpush2.bf16.msra.mxu0 0
        %667 = vmatprep.subr.bf16.mxu0 0
        %668 = vmatpush2.bf16.msra.mxu0 0
        %669 = vmatprep.subr.bf16.mxu0 0
        %670 = vmatpush2.bf16.msra.mxu0 0
        %671 = vmatprep.mubr.bf16.mxu0 0
        %672 = vmatmul.mubr.bf16.gmra.mxu0 %v559
        %v673 = vpop.f32.mrf.mxu0
        %v674 = vadd.f32 0.0, %v673
        %v675 = vpop.f32.mrf.mxu0
        %v676 = vpop.f32.mrf.mxu0
        %v677 = vadd.f32 0.0, %v676
        %v678 = vpop.f32.mrf.mxu0
        %679 = vmatprep.mubr.bf16.mxu0 0
        %680 = vmatmul.mubr.bf16.gmra.mxu0 %v560
        %v681 = vpop.f32.mrf.mxu0
        %v682 = vadd.f32 0.0, %v681
        %v683 = vpop.f32.mrf.mxu0
        %v684 = vpop.f32.mrf.mxu0
        %v685 = vadd.f32 0.0, %v684
        %v686 = vpop.f32.mrf.mxu0
        %687 = vmatprep.mubr.bf16.mxu0 0
        %688 = vmatmul.mubr.bf16.gmra.mxu0 %v561
        %v689 = vpop.f32.mrf.mxu0
        %v690 = vadd.f32 0.0, %v689
        %v691 = vpop.f32.mrf.mxu0
        %v692 = vpop.f32.mrf.mxu0
        %v693 = vadd.f32 0.0, %v692
        %v694 = vpop.f32.mrf.mxu0
        %695 = vmatprep.mubr.bf16.mxu0 0
        %696 = vmatmul.mubr.bf16.gmra.mxu0 %v562
        %v697 = vpop.f32.mrf.mxu0
        %v698 = vadd.f32 0.0, %v697
        %v699 = vpop.f32.mrf.mxu0
        %v700 = vpop.f32.mrf.mxu0
        %v701 = vadd.f32 0.0, %v700
        %v702 = vpop.f32.mrf.mxu0
        %703 = vmatprep.mubr.bf16.mxu0 0
        %704 = vmatmul.mubr.bf16.gmra.mxu0 %v563
        %v705 = vpop.f32.mrf.mxu0
        %v706 = vadd.f32 0.0, %v705
        %v707 = vpop.f32.mrf.mxu0
        %v708 = vpop.f32.mrf.mxu0
        %v709 = vadd.f32 0.0, %v708
        %v710 = vpop.f32.mrf.mxu0
        %711 = vmatprep.mubr.bf16.mxu0 0
        %712 = vmatmul.mubr.bf16.gmra.mxu0 %v564
        %v713 = vpop.f32.mrf.mxu0
        %v714 = vadd.f32 0.0, %v713
        %v715 = vpop.f32.mrf.mxu0
        %v716 = vpop.f32.mrf.mxu0
        %v717 = vadd.f32 0.0, %v716
        %v718 = vpop.f32.mrf.mxu0
        %719 = vmatprep.mubr.bf16.mxu0 0
        %720 = vmatmul.mubr.bf16.gmra.mxu0 %v565
        %v721 = vpop.f32.mrf.mxu0
        %v722 = vadd.f32 0.0, %v721
        %v723 = vpop.f32.mrf.mxu0
        %v724 = vpop.f32.mrf.mxu0
        %v725 = vadd.f32 0.0, %v724
        %v726 = vpop.f32.mrf.mxu0
        %727 = vmatprep.mubr.bf16.mxu0 0
        %728 = vmatmul.mubr.bf16.gmra.mxu0 %v566
        %v729 = vpop.f32.mrf.mxu0
        %v730 = vadd.f32 0.0, %v729
        %v731 = vpop.f32.mrf.mxu0
        %v732 = vpop.f32.mrf.mxu0
        %v733 = vadd.f32 0.0, %v732
        %v734 = vpop.f32.mrf.mxu0
        %735 = vmatprep.mubr.bf16.mxu0 0
        %736 = vmatmul.mubr.bf16.gmra.mxu0 %v567
        %v737 = vpop.f32.mrf.mxu0
        %v738 = vadd.f32 0.0, %v737
        %v739 = vpop.f32.mrf.mxu0
        %v740 = vpop.f32.mrf.mxu0
        %v741 = vadd.f32 0.0, %v740
        %v742 = vpop.f32.mrf.mxu0
        %743 = vmatprep.mubr.bf16.mxu0 0
        %744 = vmatmul.mubr.bf16.gmra.mxu0 %v568
        %v745 = vpop.f32.mrf.mxu0
        %v746 = vadd.f32 0.0, %v745
        %v747 = vpop.f32.mrf.mxu0
        %v748 = vpop.f32.mrf.mxu0
        %v749 = vadd.f32 0.0, %v748
        %v750 = vpop.f32.mrf.mxu0
        %751 = vmatprep.mubr.bf16.mxu0 0
        %752 = vmatmul.mubr.bf16.gmra.mxu0 %v569
        %v753 = vpop.f32.mrf.mxu0
        %v754 = vadd.f32 0.0, %v753
        %v755 = vpop.f32.mrf.mxu0
        %v756 = vpop.f32.mrf.mxu0
        %v757 = vadd.f32 0.0, %v756
        %v758 = vpop.f32.mrf.mxu0
        %759 = vmatprep.mubr.bf16.mxu0 0
        %760 = vmatmul.mubr.bf16.gmra.mxu0 %v570
        %v761 = vpop.f32.mrf.mxu0
        %v762 = vadd.f32 0.0, %v761
        %v763 = vpop.f32.mrf.mxu0
        %v764 = vpop.f32.mrf.mxu0
        %v765 = vadd.f32 0.0, %v764
        %v766 = vpop.f32.mrf.mxu0
        %767 = vmatprep.mubr.bf16.mxu0 0
        %768 = vmatmul.mubr.bf16.gmra.mxu0 %v571
        %v769 = vpop.f32.mrf.mxu0
        %v770 = vadd.f32 0.0, %v769
        %v771 = vpop.f32.mrf.mxu0
        %v772 = vpop.f32.mrf.mxu0
        %v773 = vadd.f32 0.0, %v772
        %v774 = vpop.f32.mrf.mxu0
        %775 = vmatprep.mubr.bf16.mxu0 0
        %776 = vmatmul.mubr.bf16.gmra.mxu0 %v572
        %v777 = vpop.f32.mrf.mxu0
        %v778 = vadd.f32 0.0, %v777
        %v779 = vpop.f32.mrf.mxu0
        %v780 = vpop.f32.mrf.mxu0
        %v781 = vadd.f32 0.0, %v780
        %v782 = vpop.f32.mrf.mxu0
        %783 = vmatprep.mubr.bf16.mxu0 0
        %784 = vmatmul.mubr.bf16.gmra.mxu0 %v573
        %v785 = vpop.f32.mrf.mxu0
        %v786 = vadd.f32 0.0, %v785
        %v787 = vpop.f32.mrf.mxu0
        %v788 = vpop.f32.mrf.mxu0
        %v789 = vadd.f32 0.0, %v788
        %v790 = vpop.f32.mrf.mxu0
        %791 = vmatprep.mubr.bf16.mxu0 0
        %792 = vmatmul.mubr.bf16.gmra.mxu0 %v574
        %v793 = vpop.f32.mrf.mxu0
        %v794 = vadd.f32 0.0, %v793
        %v795 = vpop.f32.mrf.mxu0
        %v796 = vpop.f32.mrf.mxu0
        %v797 = vadd.f32 0.0, %v796
        %v798 = vpop.f32.mrf.mxu0
        %799 = vdwg.mxu0
        %v800 = vadd.f32 %v415, %v674
        %v801 = vadd.f32 %v416, %v677
        %v802 = vadd.f32 %v417, %v682
        %v803 = vadd.f32 %v418, %v685
        %v804 = vadd.f32 %v419, %v690
        %v805 = vadd.f32 %v420, %v693
        %v806 = vadd.f32 %v421, %v698
        %v807 = vadd.f32 %v422, %v701
        %v808 = vadd.f32 %v423, %v706
        %v809 = vadd.f32 %v424, %v709
        %v810 = vadd.f32 %v425, %v714
        %v811 = vadd.f32 %v426, %v717
        %v812 = vadd.f32 %v427, %v722
        %v813 = vadd.f32 %v428, %v725
        %v814 = vadd.f32 %v429, %v730
        %v815 = vadd.f32 %v430, %v733
        %v816 = vadd.f32 %v431, %v738
        %v817 = vadd.f32 %v432, %v741
        %v818 = vadd.f32 %v433, %v746
        %v819 = vadd.f32 %v434, %v749
        %v820 = vadd.f32 %v435, %v754
        %v821 = vadd.f32 %v436, %v757
        %v822 = vadd.f32 %v437, %v762
        %v823 = vadd.f32 %v438, %v765
        %v824 = vadd.f32 %v439, %v770
        %v825 = vadd.f32 %v440, %v773
        %v826 = vadd.f32 %v441, %v778
        %v827 = vadd.f32 %v442, %v781
        %v828 = vadd.f32 %v443, %v786
        %v829 = vadd.f32 %v444, %v789
        %v830 = vadd.f32 %v445, %v794
        %v831 = vadd.f32 %v446, %v797
        %832 = vst [vmem:[#allocation2] sm:$0xff] %v800
        %833 = vst [vmem:[#allocation2 + $0x8] sm:$0xff] %v801
        %834 = vst [vmem:[#allocation2 + $0x10] sm:$0xff] %v802
        %835 = vst [vmem:[#allocation2 + $0x18] sm:$0xff] %v803
        %836 = vst [vmem:[#allocation2 + $0x20] sm:$0xff] %v804
        %837 = vst [vmem:[#allocation2 + $0x28] sm:$0xff] %v805
        %838 = vst [vmem:[#allocation2 + $0x30] sm:$0xff] %v806
        %839 = vst [vmem:[#allocation2 + $0x38] sm:$0xff] %v807
        %840 = vst [vmem:[#allocation2 + $0x40] sm:$0xff] %v808
        %841 = vst [vmem:[#allocation2 + $0x48] sm:$0xff] %v809
        %842 = vst [vmem:[#allocation2 + $0x50] sm:$0xff] %v810
        %843 = vst [vmem:[#allocation2 + $0x58] sm:$0xff] %v811
        %844 = vst [vmem:[#allocation2 + $0x60] sm:$0xff] %v812
        %845 = vst [vmem:[#allocation2 + $0x68] sm:$0xff] %v813
        %846 = vst [vmem:[#allocation2 + $0x70] sm:$0xff] %v814
        %847 = vst [vmem:[#allocation2 + $0x78] sm:$0xff] %v815
        %848 = vst [vmem:[#allocation2 + $0x80] sm:$0xff] %v816
        %849 = vst [vmem:[#allocation2 + $0x88] sm:$0xff] %v817
        %850 = vst [vmem:[#allocation2 + $0x90] sm:$0xff] %v818
        %851 = vst [vmem:[#allocation2 + $0x98] sm:$0xff] %v819
        %852 = vst [vmem:[#allocation2 + $0xa0] sm:$0xff] %v820
        %853 = vst [vmem:[#allocation2 + $0xa8] sm:$0xff] %v821
        %854 = vst [vmem:[#allocation2 + $0xb0] sm:$0xff] %v822
        %855 = vst [vmem:[#allocation2 + $0xb8] sm:$0xff] %v823
        %856 = vst [vmem:[#allocation2 + $0xc0] sm:$0xff] %v824
        %857 = vst [vmem:[#allocation2 + $0xc8] sm:$0xff] %v825
        %858 = vst [vmem:[#allocation2 + $0xd0] sm:$0xff] %v826
        %859 = vst [vmem:[#allocation2 + $0xd8] sm:$0xff] %v827
        %860 = vst [vmem:[#allocation2 + $0xe0] sm:$0xff] %v828
        %861 = vst [vmem:[#allocation2 + $0xe8] sm:$0xff] %v829
        %862 = vst [vmem:[#allocation2 + $0xf0] sm:$0xff] %v830
        %863 = vst [vmem:[#allocation2 + $0xf8] sm:$0xff] %v831
        %p864 = scmp.eq.s32.totalorder %s20, 8
        // Predicated region
        $region74: #{model_forward.43} parent=64 // pred_check
          %p865 = pneg %p864
        $region75: #{model_forward.43} parent=64 // pred_check_branch
          %867 = sbr.rel (%p865) target = $region77
        $region76: #{model_forward.43} parent=64 // pred_region
          %v868 = vld [vmem:[#allocation2] sm:$0xff]
          %v869 = vld [vmem:[#allocation2 + $0x8] sm:$0xff]
          %v870 = vld [vmem:[#allocation2 + $0x10] sm:$0xff]
          %v871 = vld [vmem:[#allocation2 + $0x18] sm:$0xff]
          %v872 = vld [vmem:[#allocation2 + $0x20] sm:$0xff]
          %v873 = vld [vmem:[#allocation2 + $0x28] sm:$0xff]
          %v874 = vld [vmem:[#allocation2 + $0x30] sm:$0xff]
          %v875 = vld [vmem:[#allocation2 + $0x38] sm:$0xff]
          %v876 = vld [vmem:[#allocation2 + $0x40] sm:$0xff]
          %v877 = vld [vmem:[#allocation2 + $0x48] sm:$0xff]
          %v878 = vld [vmem:[#allocation2 + $0x50] sm:$0xff]
          %v879 = vld [vmem:[#allocation2 + $0x58] sm:$0xff]
          %v880 = vld [vmem:[#allocation2 + $0x60] sm:$0xff]
          %v881 = vld [vmem:[#allocation2 + $0x68] sm:$0xff]
          %v882 = vld [vmem:[#allocation2 + $0x70] sm:$0xff]
          %v883 = vld [vmem:[#allocation2 + $0x78] sm:$0xff]
          %v884 = vld [vmem:[#allocation2 + $0x80] sm:$0xff]
          %v885 = vld [vmem:[#allocation2 + $0x88] sm:$0xff]
          %v886 = vld [vmem:[#allocation2 + $0x90] sm:$0xff]
          %v887 = vld [vmem:[#allocation2 + $0x98] sm:$0xff]
          %v888 = vld [vmem:[#allocation2 + $0xa0] sm:$0xff]
          %v889 = vld [vmem:[#allocation2 + $0xa8] sm:$0xff]
          %v890 = vld [vmem:[#allocation2 + $0xb0] sm:$0xff]
          %v891 = vld [vmem:[#allocation2 + $0xb8] sm:$0xff]
          %v892 = vld [vmem:[#allocation2 + $0xc0] sm:$0xff]
          %v893 = vld [vmem:[#allocation2 + $0xc8] sm:$0xff]
          %v894 = vld [vmem:[#allocation2 + $0xd0] sm:$0xff]
          %v895 = vld [vmem:[#allocation2 + $0xd8] sm:$0xff]
          %v896 = vld [vmem:[#allocation2 + $0xe0] sm:$0xff]
          %v897 = vld [vmem:[#allocation2 + $0xe8] sm:$0xff]
          %v898 = vld [vmem:[#allocation2 + $0xf0] sm:$0xff]
          %v899 = vld [vmem:[#allocation2 + $0xf8] sm:$0xff]
          %900 = vst [vmem:[%s376] sm:$0xff] %v868
          %901 = vst [vmem:[%s376 + $0x8] sm:$0xff] %v869
          %902 = vst [vmem:[%s376 + $0x10] sm:$0xff] %v870
          %903 = vst [vmem:[%s376 + $0x18] sm:$0xff] %v871
          %904 = vst [vmem:[%s376 + $0x20] sm:$0xff] %v872
          %905 = vst [vmem:[%s376 + $0x28] sm:$0xff] %v873
          %906 = vst [vmem:[%s376 + $0x30] sm:$0xff] %v874
          %907 = vst [vmem:[%s376 + $0x38] sm:$0xff] %v875
          %908 = vst [vmem:[%s376 + $0x40] sm:$0xff] %v876
          %909 = vst [vmem:[%s376 + $0x48] sm:$0xff] %v877
          %910 = vst [vmem:[%s376 + $0x50] sm:$0xff] %v878
          %911 = vst [vmem:[%s376 + $0x58] sm:$0xff] %v879
          %912 = vst [vmem:[%s376 + $0x60] sm:$0xff] %v880
          %913 = vst [vmem:[%s376 + $0x68] sm:$0xff] %v881
          %914 = vst [vmem:[%s376 + $0x70] sm:$0xff] %v882
          %915 = vst [vmem:[%s376 + $0x78] sm:$0xff] %v883
          %916 = vst [vmem:[%s376 + $0x80] sm:$0xff] %v884
          %917 = vst [vmem:[%s376 + $0x88] sm:$0xff] %v885
          %918 = vst [vmem:[%s376 + $0x90] sm:$0xff] %v886
          %919 = vst [vmem:[%s376 + $0x98] sm:$0xff] %v887
          %920 = vst [vmem:[%s376 + $0xa0] sm:$0xff] %v888
          %921 = vst [vmem:[%s376 + $0xa8] sm:$0xff] %v889
          %922 = vst [vmem:[%s376 + $0xb0] sm:$0xff] %v890
          %923 = vst [vmem:[%s376 + $0xb8] sm:$0xff] %v891
          %924 = vst [vmem:[%s376 + $0xc0] sm:$0xff] %v892
          %925 = vst [vmem:[%s376 + $0xc8] sm:$0xff] %v893
          %926 = vst [vmem:[%s376 + $0xd0] sm:$0xff] %v894
          %927 = vst [vmem:[%s376 + $0xd8] sm:$0xff] %v895
          %928 = vst [vmem:[%s376 + $0xe0] sm:$0xff] %v896
          %929 = vst [vmem:[%s376 + $0xe8] sm:$0xff] %v897
          %930 = vst [vmem:[%s376 + $0xf0] sm:$0xff] %v898
          %931 = vst [vmem:[%s376 + $0xf8] sm:$0xff] %v899
        $region77: #{model_forward.43} parent=64 // pred_fallthru
          _
        %s932 = smul.u32 32, %s18
        %p933 = scmp.lt.s32.totalorder %s932, 63
        %s934 = scalar_select %p933, %s932, 63
        %p935 = scmp.lt.s32.totalorder %s19, 0
        %s936 = scalar_select %p935, %s19, 0
        %s937 = sadd.s32 %s936, %s934
        %s938 = smul.addr %s937, 8
        %s939 = scalar_lea.vmem %s2, %s938
        // Predicated region
        $region78: #{model_forward.43} parent=64 // pred_check
          %p940 = pneg %p108
        $region79: #{model_forward.43} parent=64 // pred_check_branch
          %942 = sbr.rel (%p940) target = $region81
        $region80: #{model_forward.43} parent=64 // pred_region
          %s943 = smul.u32 32, %s18
        $region81: #{model_forward.43} parent=64 // pred_fallthru
          _
      $region65: #{model_forward.43} parent=5 // pred_fallthru
        _
      %p944 = scmp.le.s32.totalorder 2, %s8
      // Predicated region
      $region82: #{model_forward.43} parent=5 // pred_check
        %p945 = pneg %p944
      $region83: #{model_forward.43} parent=5 // pred_check_branch
        %947 = sbr.rel (%p945) target = $region85
      $region84: #{model_forward.43} parent=5 // pred_region
        %s948 = ssub.s32 %s8, 2
        // Predicated region
        $region86: #{model_forward.43} parent=84 // pred_check
          %p949 = pneg %p114
        $region87: #{model_forward.43} parent=84 // pred_check_branch
          %951 = sbr.rel (%p949) target = $region89
        $region88: #{model_forward.43} parent=84 // pred_region
          %s952 = smul.u32 32, %s21
          %p953 = scmp.lt.s32.totalorder %s952, 63
          %s954 = scalar_select %p953, %s952, 63
          %p955 = scmp.lt.s32.totalorder %s22, 0
          %s956 = scalar_select %p955, %s22, 0
          %s957 = sadd.s32 %s956, %s954
          %s958 = smul.addr %s957, 8
          %s959 = scalar_lea.vmem %s2, %s958
        $region89: #{model_forward.43} parent=84 // pred_fallthru
          _
      $region85: #{model_forward.43} parent=5 // pred_fallthru
        _
    $region6: #{model_forward.43} parent=1 // loop_footer
      %s12 = sadd.s32 1, %s8
    $region7: #{model_forward.43} parent=1 // loop_footer_branch
      %7 = sbr.rel target = $region3
    $region8: #{model_forward.43} parent=1 // loop_exit
      _

// kernel: model_forward.63
$region0: #{model_forward.63}
  #allocation0 [shape = 'u32[]', space=smem, size = 0x4, offset = 0x4, fixed_abs, tag = 'smem constant byte address 0x4 - core index']
  #allocation1 [shape = 'u32[144,128]{1,0:T(1,128)}', space=vmem, size = 0x12000, scoped, tag = 'internal scratch']
  %s0 = inlined_call_operand.vmem [shape: f32[2,16,256], index: 0, kind: input, shape index: {}]
  %s1 = inlined_call_operand.vmem [shape: f32[2,3,256], index: 1, kind: input, shape index: {}]
  %s2 = inlined_call_operand.vmem [shape: f32[2,3,256], index: 2, kind: output, shape index: {}]
  %s3 = sld [smem:[#allocation0]]
  $region41: #{model_forward.63} parent=0
    _
  %s5 = ssub.s32 1, %s3
  %s6 = scalar_select 0, %s5, %s3
  loop: start=0, step=1, limit=4
  $region2: #{model_forward.63} parent=0 // loop_pre_header
    _
  $region3: #{model_forward.63} parent=0 // loop_header
    %s8 = sphi 0, %s12
    %p9 = scmp.ge.s32.totalorder %s8, 4
    %s18 = sphi 0, %s20
    %s21 = sphi 0, %s18
    %s22 = sphi 0, %s21
    %s38 = sphi 0, %s22
    %s44 = sphi 0, %s46
    %s47 = sphi 0, %s44
    %s48 = sphi 0, %s47
    %s64 = sphi 0, %s48
    %s70 = sphi 0, %s72
    %s73 = sphi 0, %s70
    %s74 = sphi 0, %s73
    %s90 = sphi 0, %s74
  $region4: #{model_forward.63} parent=0 // loop_header_branch
    %11 = sbr.rel (%p9) target = $region8
  $region5: #{model_forward.63} parent=0 // loop_body
    %s13 = ssub.s32 %s8, 1
    %s14 = ssub.s32 %s8, 2
    %s15 = sadd.s32 %s8, 1
    %s16 = ssub.s32 %s8, %s15
    %p17 = scmp.eq.s32.totalorder %s16, 0
    %s19 = sadd.s32 %s18, 1
    %s20 = scalar_select %p17, %s18, %s19
    %p23 = pneg %p17
    %p24 = scmp.eq.s32.totalorder %s8, 1
    %p25 = por %p23, %p24
    %p26 = scmp.ne.s32.totalorder %s18, %s21
    %p27 = scmp.eq.s32.totalorder %s8, 0
    %p28 = por %p26, %p27
    %p29 = scmp.ne.s32.totalorder %s18, %s21
    %p30 = scmp.eq.s32.totalorder %s13, 1
    %p31 = por %p29, %p30
    %p32 = scmp.ne.s32.totalorder %s21, %s22
    %p33 = scmp.eq.s32.totalorder %s13, 0
    %p34 = por %p32, %p33
    %p35 = scmp.ne.s32.totalorder %s21, %s22
    %p36 = scmp.eq.s32.totalorder %s14, 1
    %p37 = por %p35, %p36
    %p39 = scmp.ne.s32.totalorder %s22, %s38
    %p40 = scmp.eq.s32.totalorder %s14, 0
    %p41 = por %p39, %p40
    %s42 = ssub.s32 %s8, %s15
    %p43 = scmp.eq.s32.totalorder %s42, 0
    %s45 = sadd.s32 %s44, 1
    %s46 = scalar_select %p43, %s44, %s45
    %p49 = pneg %p43
    %p50 = scmp.eq.s32.totalorder %s8, 1
    %p51 = por %p49, %p50
    %p52 = scmp.ne.s32.totalorder %s44, %s47
    %p53 = scmp.eq.s32.totalorder %s8, 0
    %p54 = por %p52, %p53
    %p55 = scmp.ne.s32.totalorder %s44, %s47
    %p56 = scmp.eq.s32.totalorder %s13, 1
    %p57 = por %p55, %p56
    %p58 = scmp.ne.s32.totalorder %s47, %s48
    %p59 = scmp.eq.s32.totalorder %s13, 0
    %p60 = por %p58, %p59
    %p61 = scmp.ne.s32.totalorder %s47, %s48
    %p62 = scmp.eq.s32.totalorder %s14, 1
    %p63 = por %p61, %p62
    %p65 = scmp.ne.s32.totalorder %s48, %s64
    %p66 = scmp.eq.s32.totalorder %s14, 0
    %p67 = por %p65, %p66
    %s68 = ssub.s32 %s8, %s15
    %p69 = scmp.eq.s32.totalorder %s68, 0
    %s71 = sadd.s32 %s70, 1
    %s72 = scalar_select %p69, %s70, %s71
    %p75 = pneg %p69
    %p76 = scmp.eq.s32.totalorder %s8, 1
    %p77 = por %p75, %p76
    %p78 = scmp.ne.s32.totalorder %s70, %s73
    %p79 = scmp.eq.s32.totalorder %s8, 0
    %p80 = por %p78, %p79
    %p81 = scmp.ne.s32.totalorder %s70, %s73
    %p82 = scmp.eq.s32.totalorder %s13, 1
    %p83 = por %p81, %p82
    %p84 = scmp.ne.s32.totalorder %s73, %s74
    %p85 = scmp.eq.s32.totalorder %s13, 0
    %p86 = por %p84, %p85
    %p87 = scmp.ne.s32.totalorder %s73, %s74
    %p88 = scmp.eq.s32.totalorder %s14, 1
    %p89 = por %p87, %p88
    %p91 = scmp.ne.s32.totalorder %s74, %s90
    %p92 = scmp.eq.s32.totalorder %s14, 0
    %p93 = por %p91, %p92
    %p94 = scmp.le.s32.totalorder 1, %s8
    %p95 = scmp.lt.s32.totalorder %s8, 3
    %p96 = pnand %p94, %p95
    %p97 = pneg %p96
    // Predicated region
    $region9: #{model_forward.63} parent=5 // pred_check
      _
    $region10: #{model_forward.63} parent=5 // pred_check_branch
      %99 = sbr.rel (%p96) target = $region12
    $region11: #{model_forward.63} parent=5 // pred_region
      %s100 = ssub.s32 %s8, 1
    $region12: #{model_forward.63} parent=5 // pred_fallthru
      _
    %p101 = scmp.lt.s32.totalorder %s8, 2
    // Predicated region
    $region13: #{model_forward.63} parent=5 // pred_check
      %p102 = pneg %p101
    $region14: #{model_forward.63} parent=5 // pred_check_branch
      %104 = sbr.rel (%p102) target = $region16
    $region15: #{model_forward.63} parent=5 // pred_region
      // Predicated region
      $region17: #{model_forward.63} parent=15 // pred_check
        %p105 = pneg %p28
      $region18: #{model_forward.63} parent=15 // pred_check_branch
        %107 = sbr.rel (%p105) target = $region20
      $region19: #{model_forward.63} parent=15 // pred_region
        %p108 = scmp.lt.s32.totalorder %s8, 1
        %s109 = scalar_select %p108, %s8, 1
        %s110 = smul.addr %s109, 4
        %s111 = smul.addr %s110, 8
        %s112 = scalar_lea.vmem %s0, %s111
      $region20: #{model_forward.63} parent=15 // pred_fallthru
        _
      // Predicated region
      $region21: #{model_forward.63} parent=15 // pred_check
        %p113 = pneg %p54
      $region22: #{model_forward.63} parent=15 // pred_check_branch
        %115 = sbr.rel (%p113) target = $region24
      $region23: #{model_forward.63} parent=15 // pred_region
        %p116 = scmp.lt.s32.totalorder %s8, 1
        %s117 = scalar_select %p116, %s8, 1
        %s118 = smul.addr %s117, 2
        %s119 = smul.addr %s118, 4
        %s120 = scalar_lea.vmem %s1, %s119
      $region24: #{model_forward.63} parent=15 // pred_fallthru
        _
    $region16: #{model_forward.63} parent=5 // pred_fallthru
      _
    %p121 = scmp.le.s32.totalorder 1, %s8
    %p122 = scmp.lt.s32.totalorder %s8, 3
    %p123 = pnand %p121, %p122
    %p124 = pneg %p123
    // Predicated region
    $region25: #{model_forward.63} parent=5 // pred_check
      _
    $region26: #{model_forward.63} parent=5 // pred_check_branch
      %126 = sbr.rel (%p123) target = $region28
    $region27: #{model_forward.63} parent=5 // pred_region
      %s127 = ssub.s32 %s8, 1
      %p128 = scmp.lt.s32.totalorder %s13, 1
      %s129 = scalar_select %p128, %s13, 1
      %s130 = smul.addr %s129, 4
      %s131 = smul.addr %s130, 8
      %s132 = scalar_lea.vmem %s0, %s131
      %p133 = pneg %p34
      %p134 = pneg %p31
      %p135 = scmp.lt.s32.totalorder %s13, 1
      %s136 = scalar_select %p135, %s13, 1
      %s137 = smul.addr %s136, 2
      %s138 = smul.addr %s137, 4
      %s139 = scalar_lea.vmem %s1, %s138
      %p140 = pneg %p60
      %p141 = pneg %p57
      %p142 = pneg %p86
      %p143 = pneg %p83
      %p144 = scmp.lt.s32.totalorder %s13, 1
      %s145 = scalar_select %p144, %s13, 1
      %s146 = smul.addr %s145, 2
      %s147 = smul.addr %s146, 4
      %s148 = scalar_lea.vmem %s2, %s147
      %p149 = scmp.lt.s32.totalorder %s13, 1
      %s150 = scalar_select %p149, %s13, 1
      %s151 = smul.addr %s150, 4
      %s152 = smul.addr %s151, 8
      %s153 = scalar_lea.vmem %s0, %s152
      %p154 = scmp.lt.s32.totalorder %s13, 1
      %s155 = scalar_select %p154, %s13, 1
      %s156 = smul.addr %s155, 2
      %s157 = smul.addr %s156, 4
      %s158 = scalar_lea.vmem %s1, %s157
      %p159 = scmp.lt.s32.totalorder %s13, 1
      %s160 = scalar_select %p159, %s13, 1
      %s161 = smul.addr %s160, 2
      %s162 = smul.addr %s161, 4
      %s163 = scalar_lea.vmem %s2, %s162
      %v164 = vld [vmem:[%s153] sm:$0xff]
      %v165 = vld [vmem:[%s153 + $0x8] sm:$0xff]
      %v166 = vld [vmem:[%s153 + $0x10] sm:$0xff]
      %v167 = vld [vmem:[%s153 + $0x18] sm:$0xff]
      %v168 = vld [vmem:[%s158] sm:$0x77]
      %v169 = vsub.f32 1.0, %v164
      %v170 = vsub.f32 1.0, %v165
      %v171 = vlaneseq
      %v172 = vshrl.u32 %v171, 7
      %v173 = vsub.s32 3, %v172
      %v174 = vrot.slane %v169, %v173
      %v175 = vlaneseq
      %v176 = vshrl.u32 %v175, 7
      %v177 = vsub.s32 3, %v176
      %v178 = vrot.slane %v170, %v177
      %v180 = vcombine.high %v168, %v168
      %v182 = vmul.f32 %v174, %v168
      %v183 = vmul.f32 %v178, %v180
      %v184 = vlaneseq
      %v185 = vshrl.u32 %v184, 7
      %v186 = vsub.s32 3, %v185
      %v187 = vrot.slane %v164, %v186
      %v188 = vlaneseq
      %v189 = vshrl.u32 %v188, 7
      %v190 = vsub.s32 3, %v189
      %v191 = vrot.slane %v165, %v190
      %v192 = vmul.f32 %v187, %v164
      %v193 = vmul.f32 %v191, %v165
      %v194 = vadd.f32 %v182, %v192
      %v195 = vadd.f32 %v183, %v193
      %v196 = vlaneseq
      %v197 = vshrl.u32 %v196, 7
      %v198 = vsub.s32 7, %v197
      %v199 = vrot.slane %v169, %v198
      %v200 = vlaneseq
      %v201 = vshrl.u32 %v200, 7
      %v202 = vsub.s32 7, %v201
      %v203 = vrot.slane %v170, %v202
      %v204 = vmul.f32 %v199, %v194
      %v205 = vmul.f32 %v203, %v195
      %v206 = vlaneseq
      %v207 = vshrl.u32 %v206, 7
      %v208 = vsub.s32 7, %v207
      %v209 = vrot.slane %v164, %v208
      %v210 = vlaneseq
      %v211 = vshrl.u32 %v210, 7
      %v212 = vsub.s32 7, %v211
      %v213 = vrot.slane %v165, %v212
      %v214 = vmul.f32 %v209, %v164
      %v215 = vmul.f32 %v213, %v165
      %v218 = vrot.slane %v214, 4
      %v219 = vrot.slane %v215, 4
      %v222 = vadd.f32 %v204, %v218
      %v223 = vadd.f32 %v205, %v219
      %v224 = vsub.f32 1.0, %v166
      %v225 = vsub.f32 1.0, %v167
      %v226 = vlaneseq
      %v227 = vshrl.u32 %v226, 7
      %v228 = vsub.s32 3, %v227
      %v229 = vrot.slane %v224, %v228
      %v230 = vlaneseq
      %v231 = vshrl.u32 %v230, 7
      %v232 = vsub.s32 3, %v231
      %v233 = vrot.slane %v225, %v232
      %v234 = vmul.f32 %v229, %v222
      %v235 = vmul.f32 %v233, %v223
      %v236 = vlaneseq
      %v237 = vshrl.u32 %v236, 7
      %v238 = vsub.s32 3, %v237
      %v239 = vrot.slane %v166, %v238
      %v240 = vlaneseq
      %v241 = vshrl.u32 %v240, 7
      %v242 = vsub.s32 3, %v241
      %v243 = vrot.slane %v167, %v242
      %v244 = vmul.f32 %v239, %v166
      %v245 = vmul.f32 %v243, %v167
      %v246 = vadd.f32 %v234, %v244
      %v247 = vadd.f32 %v235, %v245
      %v248 = vlaneseq
      %v249 = vshrl.u32 %v248, 7
      %v250 = vsub.s32 7, %v249
      %v251 = vrot.slane %v224, %v250
      %v252 = vlaneseq
      %v253 = vshrl.u32 %v252, 7
      %v254 = vsub.s32 7, %v253
      %v255 = vrot.slane %v225, %v254
      %v256 = vmul.f32 %v251, %v246
      %v257 = vmul.f32 %v255, %v247
      %v258 = vlaneseq
      %v259 = vshrl.u32 %v258, 7
      %v260 = vsub.s32 7, %v259
      %v261 = vrot.slane %v166, %v260
      %v262 = vlaneseq
      %v263 = vshrl.u32 %v262, 7
      %v264 = vsub.s32 7, %v263
      %v265 = vrot.slane %v167, %v264
      %v266 = vmul.f32 %v261, %v166
      %v267 = vmul.f32 %v265, %v167
      %v270 = vrot.slane %v266, 4
      %v271 = vrot.slane %v267, 4
      %v274 = vadd.f32 %v256, %v270
      %v275 = vadd.f32 %v257, %v271
      %v278 = vcombine.low %v274, %v275
      %280 = vst [vmem:[%s163] sm:$0x77] %v278
      %p281 = scmp.lt.s32.totalorder %s13, 1
      %s282 = scalar_select %p281, %s13, 1
      %s283 = smul.addr %s282, 2
      %s284 = smul.addr %s283, 4
      %s285 = scalar_lea.vmem %s2, %s284
      // Predicated region
      $region29: #{model_forward.63} parent=27 // pred_check
        %p286 = pneg %p83
      $region30: #{model_forward.63} parent=27 // pred_check_branch
        %288 = sbr.rel (%p286) target = $region32
      $region31: #{model_forward.63} parent=27 // pred_region
        _
      $region32: #{model_forward.63} parent=27 // pred_fallthru
        _
    $region28: #{model_forward.63} parent=5 // pred_fallthru
      _
    %p289 = scmp.le.s32.totalorder 2, %s8
    // Predicated region
    $region33: #{model_forward.63} parent=5 // pred_check
      %p290 = pneg %p289
    $region34: #{model_forward.63} parent=5 // pred_check_branch
      %292 = sbr.rel (%p290) target = $region36
    $region35: #{model_forward.63} parent=5 // pred_region
      %s293 = ssub.s32 %s8, 2
      // Predicated region
      $region37: #{model_forward.63} parent=35 // pred_check
        %p294 = pneg %p89
      $region38: #{model_forward.63} parent=35 // pred_check_branch
        %296 = sbr.rel (%p294) target = $region40
      $region39: #{model_forward.63} parent=35 // pred_region
        %p297 = scmp.lt.s32.totalorder %s14, 1
        %s298 = scalar_select %p297, %s14, 1
        %s299 = smul.addr %s298, 2
        %s300 = smul.addr %s299, 4
        %s301 = scalar_lea.vmem %s2, %s300
      $region40: #{model_forward.63} parent=35 // pred_fallthru
        _
    $region36: #{model_forward.63} parent=5 // pred_fallthru
      _
  $region6: #{model_forward.63} parent=0 // loop_footer
    %s12 = sadd.s32 1, %s8
  $region7: #{model_forward.63} parent=0 // loop_footer_branch
    %7 = sbr.rel target = $region3
  $region8: #{model_forward.63} parent=0 // loop_exit
    _

</llo_original>
